<compile_context>
chip_gen: v7x
topology: tpu7x:2x2x1
jax: 0.10.0
libtpu: 0.0.40
codegen_flags: <defaults>
</compile_context>

<pallas_src>
import functools

import jax
import jax.numpy as jnp
from jax.experimental import pallas as pl
from jax.experimental.pallas import tpu as pltpu

LN_EPS = 1e-5  # nn.LayerNorm default


# --------------------------------------------------------------------------------------
# kernel-side math helpers
# --------------------------------------------------------------------------------------
def _layernorm(x, w, b):
    # Two-pass (x - mu) formulation; rsqrt goes to the EUP.
    mu = jnp.mean(x, axis=-1, keepdims=True)
    xc = x - mu
    var = jnp.mean(xc * xc, axis=-1, keepdims=True)
    return xc * jax.lax.rsqrt(var + LN_EPS) * w + b


def _stem(x_ref, stem_w_ref, stem_b_ref, in_chans, mm_dtype):
    xin = x_ref[...].astype(jnp.float32)
    if in_chans <= 8:
        # tiny-K matmul wastes an MXU pass -> VPU broadcast FMAs instead
        x = xin[:, 0:1] * stem_w_ref[0:1, :].astype(jnp.float32)
        for c in range(1, in_chans):
            x = x + xin[:, c:c + 1] * stem_w_ref[c:c + 1, :].astype(jnp.float32)
        return x + stem_b_ref[...]
    return jnp.dot(xin.astype(mm_dtype), stem_w_ref[...].astype(mm_dtype),
                   preferred_element_type=jnp.float32) + stem_b_ref[...]


def _block(x, ln_w, ln_b, f_ws, g_w, g_b, *, mode, mm_dtype, fuse_f):
    residual = x
    xn = _layernorm(x, ln_w, ln_b)
    xn_mm = xn.astype(mm_dtype)
    if fuse_f:
        f_w, f_b = f_ws
        h = jnp.dot(xn_mm, f_w, preferred_element_type=jnp.float32) + f_b
        half = h.shape[-1] // 2                       # lane-aligned (3*dim % 128 == 0)
        h1, h2 = h[:, :half], h[:, half:]
    else:
        f1_w, f1_b, f2_w, f2_b = f_ws
        h1 = jnp.dot(xn_mm, f1_w, preferred_element_type=jnp.float32) + f1_b
        h2 = jnp.dot(xn_mm, f2_w, preferred_element_type=jnp.float32) + f2_b
    a = jnp.maximum(h1, 0.0)                          # ReLU
    h = a + h2 if mode == "sum" else a * h2
    h = jnp.dot(h.astype(mm_dtype), g_w, preferred_element_type=jnp.float32) + g_b
    return residual + h


# --------------------------------------------------------------------------------------
# kernels
# --------------------------------------------------------------------------------------
def _demonet_resident_kernel(x_ref, stem_w_ref, stem_b_ref, ln_w_ref, ln_b_ref,
                             *rest, depth, mode, in_chans, mm_dtype, fuse_f,
                             unroll_depth):
    n_f = 2 if fuse_f else 4
    f_refs = rest[:n_f]
    (g_w_ref, g_b_ref, fln_w_ref, fln_b_ref,
     head_w_ref, head_b_ref, out_ref) = rest[n_f:]

    x = _stem(x_ref, stem_w_ref, stem_b_ref, in_chans, mm_dtype)

    def body(d, x):
        return _block(x, ln_w_ref[d], ln_b_ref[d],
                      tuple(r[d] for r in f_refs), g_w_ref[d], g_b_ref[d],
                      mode=mode, mm_dtype=mm_dtype, fuse_f=fuse_f)

    if depth <= unroll_depth:
        for d in range(depth):            # small depth: unrolled -> LLO visibility
            x = body(d, x)
    else:
        x = jax.lax.fori_loop(0, depth, body, x)   # large depth: dynamic ref[d]

    x = _layernorm(x, fln_w_ref[...], fln_b_ref[...])
    x = jnp.dot(x.astype(mm_dtype), head_w_ref[...],
                preferred_element_type=jnp.float32) + head_b_ref[...]
    out_ref[...] = x.astype(out_ref.dtype)


def _demonet_stream_kernel(x_ref, stem_w_ref, stem_b_ref, ln_w_ref, ln_b_ref,
                           *rest, depth, mode, in_chans, mm_dtype, fuse_f):
    n_f = 2 if fuse_f else 4
    f_refs = rest[:n_f]
    (g_w_ref, g_b_ref, fln_w_ref, fln_b_ref,
     head_w_ref, head_b_ref, out_ref, xacc_ref) = rest[n_f:]

    d = pl.program_id(1)                  # innermost "arbitrary" depth axis

    @pl.when(d == 0)
    def _():
        xacc_ref[...] = _stem(x_ref, stem_w_ref, stem_b_ref, in_chans, mm_dtype)

    x = _block(xacc_ref[...], ln_w_ref[0], ln_b_ref[0],
               tuple(r[0] for r in f_refs), g_w_ref[0], g_b_ref[0],
               mode=mode, mm_dtype=mm_dtype, fuse_f=fuse_f)
    xacc_ref[...] = x

    @pl.when(d == depth - 1)
    def _():
        xf = _layernorm(xacc_ref[...], fln_w_ref[...], fln_b_ref[...])
        y = jnp.dot(xf.astype(mm_dtype), head_w_ref[...],
                    preferred_element_type=jnp.float32) + head_b_ref[...]
        out_ref[...] = y.astype(out_ref.dtype)


# --------------------------------------------------------------------------------------
# wrapper
# --------------------------------------------------------------------------------------
def _tpu_vmem_budget():
    """Per-generation VMEM budget (not hardcoded): ~0.85 * capacity, with >=8 MiB
    headroom for Mosaic internal scratch (matters on v7x's 64 MiB/TC)."""
    vmem_cap = 64 * 1024 * 1024            # conservative fallback (v7x per-TC)
    try:
        info = pltpu.get_tpu_info()
        cap = getattr(info, "vmem_capacity_bytes", None)
        if cap:
            vmem_cap = int(cap)
    except Exception:
        pass
    vmem_limit = min(int(0.85 * vmem_cap), vmem_cap - 8 * 1024 * 1024)
    return max(vmem_limit, 32 * 1024 * 1024)


def _resident_spec(a, single_buffer=True):
    # Constant block index -> DMA'd once, stays in VMEM across grid steps.
    shape = a.shape
    idx = lambda *_: (0,) * len(shape)
    if single_buffer:
        try:
            # Single-buffer constant-index inputs: halves resident-weight VMEM.
            return pl.BlockSpec(shape, idx, pipeline_mode=pl.Buffered(1))
        except Exception:
            pass
    return pl.BlockSpec(shape, idx)


def _per_layer_spec(a):
    # Stream one layer's slab per depth grid step (default double-buffering
    # prefetches layer d+1 while layer d's matmuls run on the MXU).
    nrest = a.ndim - 1
    return pl.BlockSpec((1,) + a.shape[1:],
                        lambda i, d, _n=nrest: (d,) + (0,) * _n)


def demonet_forward(x, params, *, depth, mode="sum", tile_b=256,
                    matmul_dtype=jnp.bfloat16, stream_depth=None,
                    unroll_depth=8, single_buffer_weights=True):
    assert mode in ("sum", "mul")
    B, in_chans = x.shape
    dim = params["stem_w"].shape[-1]
    num_classes = params["head_w"].shape[-1]
    three_dim = 3 * dim
    itemsize = jnp.dtype(matmul_dtype).itemsize

    vmem_limit = _tpu_vmem_budget()

    # ---- parameter prep ------------------------------------------------------------
    # f-projection: fused single (dim, 6*dim) matmul when the 3*dim split point is
    # lane aligned (free f32 slice); otherwise pre-split into two (dim, 3*dim) halves.
    fuse_f = (three_dim % 128) == 0
    mm = lambda a: a.astype(matmul_dtype)
    if fuse_f:
        f_args = (mm(params["blk_f_w"]), params["blk_f_b"])
    else:
        f_args = (mm(params["blk_f_w"][..., :three_dim]),
                  params["blk_f_b"][..., :three_dim],
                  mm(params["blk_f_w"][..., three_dim:]),
                  params["blk_f_b"][..., three_dim:])
    g_w = mm(params["blk_g_w"])

    nc_pad = 128 * pl.cdiv(num_classes, 128)
    head_w = jnp.zeros((dim, nc_pad), jnp.float32).at[:, :num_classes].set(
        params["head_w"])
    head_b = jnp.zeros((1, nc_pad), jnp.float32).at[:, :num_classes].set(
        params["head_b"])
    head_w = mm(head_w)

    # Resident vs streamed-over-depth decision: 18*depth*dim^2 bytes of bf16 block
    # weights does not fit v7x's 64 MiB/TC at production dims -> stream per layer.
    resident_bytes = depth * 9 * dim * dim * itemsize + depth * 9 * dim * 4
    if stream_depth is None:
        stream_depth = resident_bytes > 0.45 * vmem_limit

    # ---- batch padding to a tile multiple --------------------------------------------
    n_tiles = pl.cdiv(B, tile_b)
    b_pad = n_tiles * tile_b
    x_pad = x if b_pad == B else jnp.zeros((b_pad, in_chans), x.dtype).at[:B].set(x)

    head_args = (params["stem_w"], params["stem_b"])
    layer_args = ((params["blk_norm_w"], params["blk_norm_b"]) + f_args
                  + (g_w, params["blk_g_b"]))
    tail_args = (params["final_norm_w"], params["final_norm_b"], head_w, head_b)
    args = (x_pad,) + head_args + layer_args + tail_args

    # cost hint so XLA can overlap surrounding cast/pad/slice ops with the kernel
    flops = 2 * b_pad * (in_chans * dim + depth * 9 * dim * dim + dim * nc_pad)
    transcendentals = b_pad * (depth + 1)                 # one rsqrt/row per LayerNorm
    bytes_accessed = int(sum(int(a.size) * a.dtype.itemsize for a in args)
                         + b_pad * nc_pad * 4)
    cost = pl.CostEstimate(flops=int(flops), transcendentals=int(transcendentals),
                           bytes_accessed=bytes_accessed)

    if not stream_depth:
        grid = (n_tiles,)
        in_specs = ([pl.BlockSpec((tile_b, in_chans), lambda i: (i, 0))]
                    + [_resident_spec(a, single_buffer_weights) for a in args[1:]])
        out_specs = pl.BlockSpec((tile_b, nc_pad), lambda i: (i, 0))
        scratch_shapes = ()
        dims = ("parallel",)                 # megacore sharding over batch tiles
        kernel = functools.partial(
            _demonet_resident_kernel, depth=depth, mode=mode, in_chans=in_chans,
            mm_dtype=matmul_dtype, fuse_f=fuse_f, unroll_depth=unroll_depth)
    else:
        grid = (n_tiles, depth)
        in_specs = ([pl.BlockSpec((tile_b, in_chans), lambda i, d: (i, 0))]
                    + [_resident_spec(a, single_buffer_weights) for a in head_args]
                    + [_per_layer_spec(a) for a in layer_args]
                    + [_resident_spec(a, single_buffer_weights) for a in tail_args])
        out_specs = pl.BlockSpec((tile_b, nc_pad), lambda i, d: (i, 0))
        scratch_shapes = (pltpu.VMEM((tile_b, dim), jnp.float32),)  # x carried over d
        dims = ("parallel", "arbitrary")
        kernel = functools.partial(
            _demonet_stream_kernel, depth=depth, mode=mode, in_chans=in_chans,
            mm_dtype=matmul_dtype, fuse_f=fuse_f)

    out = pl.pallas_call(
        kernel,
        grid=grid,
        out_shape=jax.ShapeDtypeStruct((b_pad, nc_pad), jnp.float32),
        in_specs=in_specs,
        out_specs=out_specs,
        scratch_shapes=scratch_shapes,
        cost_estimate=cost,
        compiler_params=pltpu.CompilerParams(
            dimension_semantics=dims,
            vmem_limit_bytes=vmem_limit,
        ),
    )(*args)
    return out[:B, :num_classes]


# --------------------------------------------------------------------------------------
# params / reference
# --------------------------------------------------------------------------------------
def init_params(key, *, in_chans, dim, depth, num_classes):
    """Deterministic init mirroring DemoNet._init_weights:
    Linear weights ~ trunc_normal(std=0.02), Linear biases = 0, LayerNorm w=1, b=0.
    Linear weights are stored pre-transposed as (in, out)."""
    def trunc(key, shape, std=0.02):
        return (std * jax.random.truncated_normal(key, -2.0, 2.0, shape)).astype(jnp.float32)

    keys = jax.random.split(key, 3 + 2 * depth)
    p = {}
    p["stem_w"] = trunc(keys[0], (in_chans, dim))
    p["stem_b"] = jnp.zeros((1, dim), jnp.float32)

    f_w, g_w = [], []
    for d in range(depth):
        f_w.append(trunc(keys[1 + 2 * d], (dim, 6 * dim)))
        g_w.append(trunc(keys[2 + 2 * d], (3 * dim, dim)))
    p["blk_f_w"] = jnp.stack(f_w)                              # (depth, dim, 6*dim)
    p["blk_f_b"] = jnp.zeros((depth, 1, 6 * dim), jnp.float32)
    p["blk_g_w"] = jnp.stack(g_w)                              # (depth, 3*dim, dim)
    p["blk_g_b"] = jnp.zeros((depth, 1, dim), jnp.float32)
    p["blk_norm_w"] = jnp.ones((depth, 1, dim), jnp.float32)
    p["blk_norm_b"] = jnp.zeros((depth, 1, dim), jnp.float32)

    p["final_norm_w"] = jnp.ones((1, dim), jnp.float32)
    p["final_norm_b"] = jnp.zeros((1, dim), jnp.float32)
    p["head_w"] = trunc(keys[-1], (dim, num_classes))
    p["head_b"] = jnp.zeros((1, num_classes), jnp.float32)
    return p


def demonet_reference(x, params, *, depth, mode="sum"):
    """Pure-JAX (all-f32) reference of the PyTorch forward."""
    def ln(x, w, b):
        mu = jnp.mean(x, -1, keepdims=True)
        var = jnp.mean((x - mu) ** 2, -1, keepdims=True)
        return (x - mu) / jnp.sqrt(var + LN_EPS) * w + b

    x = x @ params["stem_w"] + params["stem_b"]
    for d in range(depth):
        inp = x
        h = ln(x, params["blk_norm_w"][d], params["blk_norm_b"][d])
        h = h @ params["blk_f_w"][d] + params["blk_f_b"][d]
        half = h.shape[-1] // 2
        x1, x2 = h[:, :half], h[:, half:]
        a = jnp.maximum(x1, 0.0)
        h = a + x2 if mode == "sum" else a * x2
        h = h @ params["blk_g_w"][d] + params["blk_g_b"][d]
        x = inp + h
    x = ln(x, params["final_norm_w"], params["final_norm_b"])
    return x @ params["head_w"] + params["head_b"]


# --------------------------------------------------------------------------------------
# demo / self-test (small shapes consistent with DemoNet(in_chans=2, num_classes=2, ...))
# --------------------------------------------------------------------------------------
if __name__ == "__main__":
    IN_CHANS, NUM_CLASSES = 2, 2
    key = jax.random.PRNGKey(0)

    configs = [
        # name,                          dim, depth, B,  mode,  force-stream
        ("resident / split f / unroll",  32,  4,     8,  "sum", False),
        ("resident / split f / fori",    32,  10,    8,  "mul", False),
        ("resident / fused f",           128, 3,     16, "sum", False),
        ("streamed / fused f",           128, 3,     16, "sum", True),
        ("streamed / split f",           32,  4,     8,  "sum", True),
    ]

    for name, dim, depth, bsz, mode, stream in configs:
        kx, kp, key = jax.random.split(key, 3)
        x = jax.random.normal(kx, (bsz, IN_CHANS), dtype=jnp.float32)
        params = init_params(kp, in_chans=IN_CHANS, dim=dim, depth=depth,
                             num_classes=NUM_CLASSES)

        out = demonet_forward(x, params, depth=depth, mode=mode, stream_depth=stream)
        out = jax.block_until_ready(out)

        ref = demonet_reference(x, params, depth=depth, mode=mode)
        assert out.shape == (bsz, NUM_CLASSES), f"bad shape: {name}"
        # bf16 matmuls (f32 accumulation) vs the all-f32 reference -> relaxed tolerance
        assert jnp.allclose(out, ref, atol=2e-2, rtol=2e-2), f"mismatch vs ref: {name}"

    print("KERNEL_OK")
</pallas_src>

<mosaic_0001>
module attributes {stable_mosaic.version = 11 : i64} {
  func.func @_demonet_resident_kernel(%arg0: i32, %arg1: memref<256x2xf32, #tpu.memory_space<vmem>>, %arg2: memref<2x32xf32, #tpu.memory_space<vmem>>, %arg3: memref<1x32xf32, #tpu.memory_space<vmem>>, %arg4: memref<4x1x32xf32, #tpu.memory_space<vmem>>, %arg5: memref<4x1x32xf32, #tpu.memory_space<vmem>>, %arg6: memref<4x32x96xbf16, #tpu.memory_space<vmem>>, %arg7: memref<4x1x96xf32, #tpu.memory_space<vmem>>, %arg8: memref<4x32x96xbf16, #tpu.memory_space<vmem>>, %arg9: memref<4x1x96xf32, #tpu.memory_space<vmem>>, %arg10: memref<4x96x32xbf16, #tpu.memory_space<vmem>>, %arg11: memref<4x1x32xf32, #tpu.memory_space<vmem>>, %arg12: memref<1x32xf32, #tpu.memory_space<vmem>>, %arg13: memref<1x32xf32, #tpu.memory_space<vmem>>, %arg14: memref<32x128xbf16, #tpu.memory_space<vmem>>, %arg15: memref<1x128xf32, #tpu.memory_space<vmem>>, %arg16: memref<256x128xf32, #tpu.memory_space<vmem>>) attributes {dimension_semantics = [#tpu.dimension_semantics<parallel>], iteration_bounds = array<i64: 1>, scalar_prefetch = 0 : i64, scratch_operands = 0 : i64, tpu.core_type = #tpu.core_type<tc>, window_params = [{transform_indices = @transform_0, window_bounds = array<i64: 256, 2>}, {pipeline_mode = #tpu.pipeline_mode<synchronous>, transform_indices = @transform_1, window_bounds = array<i64: 2, 32>}, {pipeline_mode = #tpu.pipeline_mode<synchronous>, transform_indices = @transform_2, window_bounds = array<i64: 1, 32>}, {pipeline_mode = #tpu.pipeline_mode<synchronous>, transform_indices = @transform_3, window_bounds = array<i64: 4, 1, 32>}, {pipeline_mode = #tpu.pipeline_mode<synchronous>, transform_indices = @transform_4, window_bounds = array<i64: 4, 1, 32>}, {pipeline_mode = #tpu.pipeline_mode<synchronous>, transform_indices = @transform_5, window_bounds = array<i64: 4, 32, 96>}, {pipeline_mode = #tpu.pipeline_mode<synchronous>, transform_indices = @transform_6, window_bounds = array<i64: 4, 1, 96>}, {pipeline_mode = #tpu.pipeline_mode<synchronous>, transform_indices = @transform_7, window_bounds = array<i64: 4, 32, 96>}, {pipeline_mode = #tpu.pipeline_mode<synchronous>, transform_indices = @transform_8, window_bounds = array<i64: 4, 1, 96>}, {pipeline_mode = #tpu.pipeline_mode<synchronous>, transform_indices = @transform_9, window_bounds = array<i64: 4, 96, 32>}, {pipeline_mode = #tpu.pipeline_mode<synchronous>, transform_indices = @transform_10, window_bounds = array<i64: 4, 1, 32>}, {pipeline_mode = #tpu.pipeline_mode<synchronous>, transform_indices = @transform_11, window_bounds = array<i64: 1, 32>}, {pipeline_mode = #tpu.pipeline_mode<synchronous>, transform_indices = @transform_12, window_bounds = array<i64: 1, 32>}, {pipeline_mode = #tpu.pipeline_mode<synchronous>, transform_indices = @transform_13, window_bounds = array<i64: 32, 128>}, {pipeline_mode = #tpu.pipeline_mode<synchronous>, transform_indices = @transform_14, window_bounds = array<i64: 1, 128>}, {transform_indices = @transform_15, window_bounds = array<i64: 256, 128>}]} {
    %c0 = arith.constant 0 : index
    %c0_0 = arith.constant 0 : index
    %0 = vector.load %arg1[%c0, %c0_0] : memref<256x2xf32, #tpu.memory_space<vmem>>, vector<256x2xf32>
    %1 = vector.extract_strided_slice %0 {offsets = [0, 0], sizes = [256, 1], strides = [1, 1]} : vector<256x2xf32> to vector<256x1xf32>
    %c0_1 = arith.constant 0 : index
    %c0_2 = arith.constant 0 : index
    %2 = vector.load %arg2[%c0_1, %c0_2] : memref<2x32xf32, #tpu.memory_space<vmem>>, vector<1x32xf32>
    %3 = vector.broadcast %1 : vector<256x1xf32> to vector<256x32xf32>
    %4 = vector.broadcast %2 : vector<1x32xf32> to vector<256x32xf32>
    %5 = arith.mulf %3, %4 : vector<256x32xf32>
    %6 = vector.extract_strided_slice %0 {offsets = [0, 1], sizes = [256, 1], strides = [1, 1]} : vector<256x2xf32> to vector<256x1xf32>
    %c1 = arith.constant 1 : index
    %c0_3 = arith.constant 0 : index
    %7 = vector.load %arg2[%c1, %c0_3] : memref<2x32xf32, #tpu.memory_space<vmem>>, vector<1x32xf32>
    %8 = vector.broadcast %6 : vector<256x1xf32> to vector<256x32xf32>
    %9 = vector.broadcast %7 : vector<1x32xf32> to vector<256x32xf32>
    %10 = arith.mulf %8, %9 : vector<256x32xf32>
    %11 = arith.addf %5, %10 : vector<256x32xf32>
    %c0_4 = arith.constant 0 : index
    %c0_5 = arith.constant 0 : index
    %12 = vector.load %arg3[%c0_4, %c0_5] : memref<1x32xf32, #tpu.memory_space<vmem>>, vector<1x32xf32>
    %13 = vector.broadcast %12 : vector<1x32xf32> to vector<256x32xf32>
    %14 = arith.addf %11, %13 : vector<256x32xf32>
    %c0_6 = arith.constant 0 : index
    %c0_7 = arith.constant 0 : index
    %c0_8 = arith.constant 0 : index
    %15 = vector.load %arg4[%c0_6, %c0_7, %c0_8] : memref<4x1x32xf32, #tpu.memory_space<vmem>>, vector<1x1x32xf32>
    %16 = vector.shape_cast %15 : vector<1x1x32xf32> to vector<1x32xf32>
    %c0_9 = arith.constant 0 : index
    %c0_10 = arith.constant 0 : index
    %c0_11 = arith.constant 0 : index
    %17 = vector.load %arg5[%c0_9, %c0_10, %c0_11] : memref<4x1x32xf32, #tpu.memory_space<vmem>>, vector<1x1x32xf32>
    %18 = vector.shape_cast %17 : vector<1x1x32xf32> to vector<1x32xf32>
    %c0_12 = arith.constant 0 : index
    %c0_13 = arith.constant 0 : index
    %c0_14 = arith.constant 0 : index
    %19 = vector.load %arg6[%c0_12, %c0_13, %c0_14] : memref<4x32x96xbf16, #tpu.memory_space<vmem>>, vector<1x32x96xbf16>
    %20 = vector.shape_cast %19 : vector<1x32x96xbf16> to vector<32x96xbf16>
    %c0_15 = arith.constant 0 : index
    %c0_16 = arith.constant 0 : index
    %c0_17 = arith.constant 0 : index
    %21 = vector.load %arg7[%c0_15, %c0_16, %c0_17] : memref<4x1x96xf32, #tpu.memory_space<vmem>>, vector<1x1x96xf32>
    %22 = vector.shape_cast %21 : vector<1x1x96xf32> to vector<1x96xf32>
    %c0_18 = arith.constant 0 : index
    %c0_19 = arith.constant 0 : index
    %c0_20 = arith.constant 0 : index
    %23 = vector.load %arg8[%c0_18, %c0_19, %c0_20] : memref<4x32x96xbf16, #tpu.memory_space<vmem>>, vector<1x32x96xbf16>
    %24 = vector.shape_cast %23 : vector<1x32x96xbf16> to vector<32x96xbf16>
    %c0_21 = arith.constant 0 : index
    %c0_22 = arith.constant 0 : index
    %c0_23 = arith.constant 0 : index
    %25 = vector.load %arg9[%c0_21, %c0_22, %c0_23] : memref<4x1x96xf32, #tpu.memory_space<vmem>>, vector<1x1x96xf32>
    %26 = vector.shape_cast %25 : vector<1x1x96xf32> to vector<1x96xf32>
    %c0_24 = arith.constant 0 : index
    %c0_25 = arith.constant 0 : index
    %c0_26 = arith.constant 0 : index
    %27 = vector.load %arg10[%c0_24, %c0_25, %c0_26] : memref<4x96x32xbf16, #tpu.memory_space<vmem>>, vector<1x96x32xbf16>
    %28 = vector.shape_cast %27 : vector<1x96x32xbf16> to vector<96x32xbf16>
    %c0_27 = arith.constant 0 : index
    %c0_28 = arith.constant 0 : index
    %c0_29 = arith.constant 0 : index
    %29 = vector.load %arg11[%c0_27, %c0_28, %c0_29] : memref<4x1x32xf32, #tpu.memory_space<vmem>>, vector<1x1x32xf32>
    %30 = vector.shape_cast %29 : vector<1x1x32xf32> to vector<1x32xf32>
    %cst = arith.constant dense<0.000000e+00> : vector<256xf32>
    %31 = vector.multi_reduction <add>, %14, %cst [1] : vector<256x32xf32> to vector<256xf32>
    %32 = vector.shape_cast %31 : vector<256xf32> to vector<256x1xf32>
    %cst_30 = arith.constant 3.200000e+01 : f32
    %33 = vector.broadcast %cst_30 : f32 to vector<256x1xf32>
    %34 = arith.divf %32, %33 : vector<256x1xf32>
    %35 = vector.broadcast %34 : vector<256x1xf32> to vector<256x32xf32>
    %36 = arith.subf %14, %35 : vector<256x32xf32>
    %37 = arith.mulf %36, %36 : vector<256x32xf32>
    %cst_31 = arith.constant dense<0.000000e+00> : vector<256xf32>
    %38 = vector.multi_reduction <add>, %37, %cst_31 [1] : vector<256x32xf32> to vector<256xf32>
    %39 = vector.shape_cast %38 : vector<256xf32> to vector<256x1xf32>
    %cst_32 = arith.constant 3.200000e+01 : f32
    %40 = vector.broadcast %cst_32 : f32 to vector<256x1xf32>
    %41 = arith.divf %39, %40 : vector<256x1xf32>
    %cst_33 = arith.constant 9.99999974E-6 : f32
    %42 = vector.broadcast %cst_33 : f32 to vector<256x1xf32>
    %43 = arith.addf %41, %42 : vector<256x1xf32>
    %44 = math.rsqrt %43 : vector<256x1xf32>
    %45 = vector.broadcast %44 : vector<256x1xf32> to vector<256x32xf32>
    %46 = arith.mulf %36, %45 : vector<256x32xf32>
    %47 = vector.broadcast %16 : vector<1x32xf32> to vector<256x32xf32>
    %48 = arith.mulf %46, %47 : vector<256x32xf32>
    %49 = vector.broadcast %18 : vector<1x32xf32> to vector<256x32xf32>
    %50 = arith.addf %48, %49 : vector<256x32xf32>
    %51 = arith.truncf %50 : vector<256x32xf32> to vector<256x32xbf16>
    %cst_34 = arith.constant dense<0.000000e+00> : vector<256x96xf32>
    %52 = tpu.matmul %51, %20, %cst_34 {dimension_numbers = #tpu.dot_dimension_numbers<[1], [0], [0], [1], [0, 0, 1, 1], [], []>} : vector<256x32xbf16>, vector<32x96xbf16>, vector<256x96xf32> -> vector<256x96xf32>
    %53 = vector.broadcast %22 : vector<1x96xf32> to vector<256x96xf32>
    %54 = arith.addf %52, %53 : vector<256x96xf32>
    %cst_35 = arith.constant dense<0.000000e+00> : vector<256x96xf32>
    %55 = tpu.matmul %51, %24, %cst_35 {dimension_numbers = #tpu.dot_dimension_numbers<[1], [0], [0], [1], [0, 0, 1, 1], [], []>} : vector<256x32xbf16>, vector<32x96xbf16>, vector<256x96xf32> -> vector<256x96xf32>
    %56 = vector.broadcast %26 : vector<1x96xf32> to vector<256x96xf32>
    %57 = arith.addf %55, %56 : vector<256x96xf32>
    %cst_36 = arith.constant 0.000000e+00 : f32
    %58 = vector.broadcast %cst_36 : f32 to vector<256x96xf32>
    %59 = arith.maximumf %54, %58 : vector<256x96xf32>
    %60 = arith.addf %59, %57 : vector<256x96xf32>
    %61 = arith.truncf %60 : vector<256x96xf32> to vector<256x96xbf16>
    %cst_37 = arith.constant dense<0.000000e+00> : vector<256x32xf32>
    %62 = tpu.matmul %61, %28, %cst_37 {dimension_numbers = #tpu.dot_dimension_numbers<[1], [0], [0], [1], [0, 0, 1, 1], [], []>} : vector<256x96xbf16>, vector<96x32xbf16>, vector<256x32xf32> -> vector<256x32xf32>
    %63 = vector.broadcast %30 : vector<1x32xf32> to vector<256x32xf32>
    %64 = arith.addf %62, %63 : vector<256x32xf32>
    %65 = arith.addf %14, %64 : vector<256x32xf32>
    %c1_38 = arith.constant 1 : index
    %c0_39 = arith.constant 0 : index
    %c0_40 = arith.constant 0 : index
    %66 = vector.load %arg4[%c1_38, %c0_39, %c0_40] : memref<4x1x32xf32, #tpu.memory_space<vmem>>, vector<1x1x32xf32>
    %67 = vector.shape_cast %66 : vector<1x1x32xf32> to vector<1x32xf32>
    %c1_41 = arith.constant 1 : index
    %c0_42 = arith.constant 0 : index
    %c0_43 = arith.constant 0 : index
    %68 = vector.load %arg5[%c1_41, %c0_42, %c0_43] : memref<4x1x32xf32, #tpu.memory_space<vmem>>, vector<1x1x32xf32>
    %69 = vector.shape_cast %68 : vector<1x1x32xf32> to vector<1x32xf32>
    %c1_44 = arith.constant 1 : index
    %c0_45 = arith.constant 0 : index
    %c0_46 = arith.constant 0 : index
    %70 = vector.load %arg6[%c1_44, %c0_45, %c0_46] : memref<4x32x96xbf16, #tpu.memory_space<vmem>>, vector<1x32x96xbf16>
    %71 = vector.shape_cast %70 : vector<1x32x96xbf16> to vector<32x96xbf16>
    %c1_47 = arith.constant 1 : index
    %c0_48 = arith.constant 0 : index
    %c0_49 = arith.constant 0 : index
    %72 = vector.load %arg7[%c1_47, %c0_48, %c0_49] : memref<4x1x96xf32, #tpu.memory_space<vmem>>, vector<1x1x96xf32>
    %73 = vector.shape_cast %72 : vector<1x1x96xf32> to vector<1x96xf32>
    %c1_50 = arith.constant 1 : index
    %c0_51 = arith.constant 0 : index
    %c0_52 = arith.constant 0 : index
    %74 = vector.load %arg8[%c1_50, %c0_51, %c0_52] : memref<4x32x96xbf16, #tpu.memory_space<vmem>>, vector<1x32x96xbf16>
    %75 = vector.shape_cast %74 : vector<1x32x96xbf16> to vector<32x96xbf16>
    %c1_53 = arith.constant 1 : index
    %c0_54 = arith.constant 0 : index
    %c0_55 = arith.constant 0 : index
    %76 = vector.load %arg9[%c1_53, %c0_54, %c0_55] : memref<4x1x96xf32, #tpu.memory_space<vmem>>, vector<1x1x96xf32>
    %77 = vector.shape_cast %76 : vector<1x1x96xf32> to vector<1x96xf32>
    %c1_56 = arith.constant 1 : index
    %c0_57 = arith.constant 0 : index
    %c0_58 = arith.constant 0 : index
    %78 = vector.load %arg10[%c1_56, %c0_57, %c0_58] : memref<4x96x32xbf16, #tpu.memory_space<vmem>>, vector<1x96x32xbf16>
    %79 = vector.shape_cast %78 : vector<1x96x32xbf16> to vector<96x32xbf16>
    %c1_59 = arith.constant 1 : index
    %c0_60 = arith.constant 0 : index
    %c0_61 = arith.constant 0 : index
    %80 = vector.load %arg11[%c1_59, %c0_60, %c0_61] : memref<4x1x32xf32, #tpu.memory_space<vmem>>, vector<1x1x32xf32>
    %81 = vector.shape_cast %80 : vector<1x1x32xf32> to vector<1x32xf32>
    %cst_62 = arith.constant dense<0.000000e+00> : vector<256xf32>
    %82 = vector.multi_reduction <add>, %65, %cst_62 [1] : vector<256x32xf32> to vector<256xf32>
    %83 = vector.shape_cast %82 : vector<256xf32> to vector<256x1xf32>
    %cst_63 = arith.constant 3.200000e+01 : f32
    %84 = vector.broadcast %cst_63 : f32 to vector<256x1xf32>
    %85 = arith.divf %83, %84 : vector<256x1xf32>
    %86 = vector.broadcast %85 : vector<256x1xf32> to vector<256x32xf32>
    %87 = arith.subf %65, %86 : vector<256x32xf32>
    %88 = arith.mulf %87, %87 : vector<256x32xf32>
    %cst_64 = arith.constant dense<0.000000e+00> : vector<256xf32>
    %89 = vector.multi_reduction <add>, %88, %cst_64 [1] : vector<256x32xf32> to vector<256xf32>
    %90 = vector.shape_cast %89 : vector<256xf32> to vector<256x1xf32>
    %cst_65 = arith.constant 3.200000e+01 : f32
    %91 = vector.broadcast %cst_65 : f32 to vector<256x1xf32>
    %92 = arith.divf %90, %91 : vector<256x1xf32>
    %cst_66 = arith.constant 9.99999974E-6 : f32
    %93 = vector.broadcast %cst_66 : f32 to vector<256x1xf32>
    %94 = arith.addf %92, %93 : vector<256x1xf32>
    %95 = math.rsqrt %94 : vector<256x1xf32>
    %96 = vector.broadcast %95 : vector<256x1xf32> to vector<256x32xf32>
    %97 = arith.mulf %87, %96 : vector<256x32xf32>
    %98 = vector.broadcast %67 : vector<1x32xf32> to vector<256x32xf32>
    %99 = arith.mulf %97, %98 : vector<256x32xf32>
    %100 = vector.broadcast %69 : vector<1x32xf32> to vector<256x32xf32>
    %101 = arith.addf %99, %100 : vector<256x32xf32>
    %102 = arith.truncf %101 : vector<256x32xf32> to vector<256x32xbf16>
    %cst_67 = arith.constant dense<0.000000e+00> : vector<256x96xf32>
    %103 = tpu.matmul %102, %71, %cst_67 {dimension_numbers = #tpu.dot_dimension_numbers<[1], [0], [0], [1], [0, 0, 1, 1], [], []>} : vector<256x32xbf16>, vector<32x96xbf16>, vector<256x96xf32> -> vector<256x96xf32>
    %104 = vector.broadcast %73 : vector<1x96xf32> to vector<256x96xf32>
    %105 = arith.addf %103, %104 : vector<256x96xf32>
    %cst_68 = arith.constant dense<0.000000e+00> : vector<256x96xf32>
    %106 = tpu.matmul %102, %75, %cst_68 {dimension_numbers = #tpu.dot_dimension_numbers<[1], [0], [0], [1], [0, 0, 1, 1], [], []>} : vector<256x32xbf16>, vector<32x96xbf16>, vector<256x96xf32> -> vector<256x96xf32>
    %107 = vector.broadcast %77 : vector<1x96xf32> to vector<256x96xf32>
    %108 = arith.addf %106, %107 : vector<256x96xf32>
    %cst_69 = arith.constant 0.000000e+00 : f32
    %109 = vector.broadcast %cst_69 : f32 to vector<256x96xf32>
    %110 = arith.maximumf %105, %109 : vector<256x96xf32>
    %111 = arith.addf %110, %108 : vector<256x96xf32>
    %112 = arith.truncf %111 : vector<256x96xf32> to vector<256x96xbf16>
    %cst_70 = arith.constant dense<0.000000e+00> : vector<256x32xf32>
    %113 = tpu.matmul %112, %79, %cst_70 {dimension_numbers = #tpu.dot_dimension_numbers<[1], [0], [0], [1], [0, 0, 1, 1], [], []>} : vector<256x96xbf16>, vector<96x32xbf16>, vector<256x32xf32> -> vector<256x32xf32>
    %114 = vector.broadcast %81 : vector<1x32xf32> to vector<256x32xf32>
    %115 = arith.addf %113, %114 : vector<256x32xf32>
    %116 = arith.addf %65, %115 : vector<256x32xf32>
    %c2 = arith.constant 2 : index
    %c0_71 = arith.constant 0 : index
    %c0_72 = arith.constant 0 : index
    %117 = vector.load %arg4[%c2, %c0_71, %c0_72] : memref<4x1x32xf32, #tpu.memory_space<vmem>>, vector<1x1x32xf32>
    %118 = vector.shape_cast %117 : vector<1x1x32xf32> to vector<1x32xf32>
    %c2_73 = arith.constant 2 : index
    %c0_74 = arith.constant 0 : index
    %c0_75 = arith.constant 0 : index
    %119 = vector.load %arg5[%c2_73, %c0_74, %c0_75] : memref<4x1x32xf32, #tpu.memory_space<vmem>>, vector<1x1x32xf32>
    %120 = vector.shape_cast %119 : vector<1x1x32xf32> to vector<1x32xf32>
    %c2_76 = arith.constant 2 : index
    %c0_77 = arith.constant 0 : index
    %c0_78 = arith.constant 0 : index
    %121 = vector.load %arg6[%c2_76, %c0_77, %c0_78] : memref<4x32x96xbf16, #tpu.memory_space<vmem>>, vector<1x32x96xbf16>
    %122 = vector.shape_cast %121 : vector<1x32x96xbf16> to vector<32x96xbf16>
    %c2_79 = arith.constant 2 : index
    %c0_80 = arith.constant 0 : index
    %c0_81 = arith.constant 0 : index
    %123 = vector.load %arg7[%c2_79, %c0_80, %c0_81] : memref<4x1x96xf32, #tpu.memory_space<vmem>>, vector<1x1x96xf32>
    %124 = vector.shape_cast %123 : vector<1x1x96xf32> to vector<1x96xf32>
    %c2_82 = arith.constant 2 : index
    %c0_83 = arith.constant 0 : index
    %c0_84 = arith.constant 0 : index
    %125 = vector.load %arg8[%c2_82, %c0_83, %c0_84] : memref<4x32x96xbf16, #tpu.memory_space<vmem>>, vector<1x32x96xbf16>
    %126 = vector.shape_cast %125 : vector<1x32x96xbf16> to vector<32x96xbf16>
    %c2_85 = arith.constant 2 : index
    %c0_86 = arith.constant 0 : index
    %c0_87 = arith.constant 0 : index
    %127 = vector.load %arg9[%c2_85, %c0_86, %c0_87] : memref<4x1x96xf32, #tpu.memory_space<vmem>>, vector<1x1x96xf32>
    %128 = vector.shape_cast %127 : vector<1x1x96xf32> to vector<1x96xf32>
    %c2_88 = arith.constant 2 : index
    %c0_89 = arith.constant 0 : index
    %c0_90 = arith.constant 0 : index
    %129 = vector.load %arg10[%c2_88, %c0_89, %c0_90] : memref<4x96x32xbf16, #tpu.memory_space<vmem>>, vector<1x96x32xbf16>
    %130 = vector.shape_cast %129 : vector<1x96x32xbf16> to vector<96x32xbf16>
    %c2_91 = arith.constant 2 : index
    %c0_92 = arith.constant 0 : index
    %c0_93 = arith.constant 0 : index
    %131 = vector.load %arg11[%c2_91, %c0_92, %c0_93] : memref<4x1x32xf32, #tpu.memory_space<vmem>>, vector<1x1x32xf32>
    %132 = vector.shape_cast %131 : vector<1x1x32xf32> to vector<1x32xf32>
    %cst_94 = arith.constant dense<0.000000e+00> : vector<256xf32>
    %133 = vector.multi_reduction <add>, %116, %cst_94 [1] : vector<256x32xf32> to vector<256xf32>
    %134 = vector.shape_cast %133 : vector<256xf32> to vector<256x1xf32>
    %cst_95 = arith.constant 3.200000e+01 : f32
    %135 = vector.broadcast %cst_95 : f32 to vector<256x1xf32>
    %136 = arith.divf %134, %135 : vector<256x1xf32>
    %137 = vector.broadcast %136 : vector<256x1xf32> to vector<256x32xf32>
    %138 = arith.subf %116, %137 : vector<256x32xf32>
    %139 = arith.mulf %138, %138 : vector<256x32xf32>
    %cst_96 = arith.constant dense<0.000000e+00> : vector<256xf32>
    %140 = vector.multi_reduction <add>, %139, %cst_96 [1] : vector<256x32xf32> to vector<256xf32>
    %141 = vector.shape_cast %140 : vector<256xf32> to vector<256x1xf32>
    %cst_97 = arith.constant 3.200000e+01 : f32
    %142 = vector.broadcast %cst_97 : f32 to vector<256x1xf32>
    %143 = arith.divf %141, %142 : vector<256x1xf32>
    %cst_98 = arith.constant 9.99999974E-6 : f32
    %144 = vector.broadcast %cst_98 : f32 to vector<256x1xf32>
    %145 = arith.addf %143, %144 : vector<256x1xf32>
    %146 = math.rsqrt %145 : vector<256x1xf32>
    %147 = vector.broadcast %146 : vector<256x1xf32> to vector<256x32xf32>
    %148 = arith.mulf %138, %147 : vector<256x32xf32>
    %149 = vector.broadcast %118 : vector<1x32xf32> to vector<256x32xf32>
    %150 = arith.mulf %148, %149 : vector<256x32xf32>
    %151 = vector.broadcast %120 : vector<1x32xf32> to vector<256x32xf32>
    %152 = arith.addf %150, %151 : vector<256x32xf32>
    %153 = arith.truncf %152 : vector<256x32xf32> to vector<256x32xbf16>
    %cst_99 = arith.constant dense<0.000000e+00> : vector<256x96xf32>
    %154 = tpu.matmul %153, %122, %cst_99 {dimension_numbers = #tpu.dot_dimension_numbers<[1], [0], [0], [1], [0, 0, 1, 1], [], []>} : vector<256x32xbf16>, vector<32x96xbf16>, vector<256x96xf32> -> vector<256x96xf32>
    %155 = vector.broadcast %124 : vector<1x96xf32> to vector<256x96xf32>
    %156 = arith.addf %154, %155 : vector<256x96xf32>
    %cst_100 = arith.constant dense<0.000000e+00> : vector<256x96xf32>
    %157 = tpu.matmul %153, %126, %cst_100 {dimension_numbers = #tpu.dot_dimension_numbers<[1], [0], [0], [1], [0, 0, 1, 1], [], []>} : vector<256x32xbf16>, vector<32x96xbf16>, vector<256x96xf32> -> vector<256x96xf32>
    %158 = vector.broadcast %128 : vector<1x96xf32> to vector<256x96xf32>
    %159 = arith.addf %157, %158 : vector<256x96xf32>
    %cst_101 = arith.constant 0.000000e+00 : f32
    %160 = vector.broadcast %cst_101 : f32 to vector<256x96xf32>
    %161 = arith.maximumf %156, %160 : vector<256x96xf32>
    %162 = arith.addf %161, %159 : vector<256x96xf32>
    %163 = arith.truncf %162 : vector<256x96xf32> to vector<256x96xbf16>
    %cst_102 = arith.constant dense<0.000000e+00> : vector<256x32xf32>
    %164 = tpu.matmul %163, %130, %cst_102 {dimension_numbers = #tpu.dot_dimension_numbers<[1], [0], [0], [1], [0, 0, 1, 1], [], []>} : vector<256x96xbf16>, vector<96x32xbf16>, vector<256x32xf32> -> vector<256x32xf32>
    %165 = vector.broadcast %132 : vector<1x32xf32> to vector<256x32xf32>
    %166 = arith.addf %164, %165 : vector<256x32xf32>
    %167 = arith.addf %116, %166 : vector<256x32xf32>
    %c3 = arith.constant 3 : index
    %c0_103 = arith.constant 0 : index
    %c0_104 = arith.constant 0 : index
    %168 = vector.load %arg4[%c3, %c0_103, %c0_104] : memref<4x1x32xf32, #tpu.memory_space<vmem>>, vector<1x1x32xf32>
    %169 = vector.shape_cast %168 : vector<1x1x32xf32> to vector<1x32xf32>
    %c3_105 = arith.constant 3 : index
    %c0_106 = arith.constant 0 : index
    %c0_107 = arith.constant 0 : index
    %170 = vector.load %arg5[%c3_105, %c0_106, %c0_107] : memref<4x1x32xf32, #tpu.memory_space<vmem>>, vector<1x1x32xf32>
    %171 = vector.shape_cast %170 : vector<1x1x32xf32> to vector<1x32xf32>
    %c3_108 = arith.constant 3 : index
    %c0_109 = arith.constant 0 : index
    %c0_110 = arith.constant 0 : index
    %172 = vector.load %arg6[%c3_108, %c0_109, %c0_110] : memref<4x32x96xbf16, #tpu.memory_space<vmem>>, vector<1x32x96xbf16>
    %173 = vector.shape_cast %172 : vector<1x32x96xbf16> to vector<32x96xbf16>
    %c3_111 = arith.constant 3 : index
    %c0_112 = arith.constant 0 : index
    %c0_113 = arith.constant 0 : index
    %174 = vector.load %arg7[%c3_111, %c0_112, %c0_113] : memref<4x1x96xf32, #tpu.memory_space<vmem>>, vector<1x1x96xf32>
    %175 = vector.shape_cast %174 : vector<1x1x96xf32> to vector<1x96xf32>
    %c3_114 = arith.constant 3 : index
    %c0_115 = arith.constant 0 : index
    %c0_116 = arith.constant 0 : index
    %176 = vector.load %arg8[%c3_114, %c0_115, %c0_116] : memref<4x32x96xbf16, #tpu.memory_space<vmem>>, vector<1x32x96xbf16>
    %177 = vector.shape_cast %176 : vector<1x32x96xbf16> to vector<32x96xbf16>
    %c3_117 = arith.constant 3 : index
    %c0_118 = arith.constant 0 : index
    %c0_119 = arith.constant 0 : index
    %178 = vector.load %arg9[%c3_117, %c0_118, %c0_119] : memref<4x1x96xf32, #tpu.memory_space<vmem>>, vector<1x1x96xf32>
    %179 = vector.shape_cast %178 : vector<1x1x96xf32> to vector<1x96xf32>
    %c3_120 = arith.constant 3 : index
    %c0_121 = arith.constant 0 : index
    %c0_122 = arith.constant 0 : index
    %180 = vector.load %arg10[%c3_120, %c0_121, %c0_122] : memref<4x96x32xbf16, #tpu.memory_space<vmem>>, vector<1x96x32xbf16>
    %181 = vector.shape_cast %180 : vector<1x96x32xbf16> to vector<96x32xbf16>
    %c3_123 = arith.constant 3 : index
    %c0_124 = arith.constant 0 : index
    %c0_125 = arith.constant 0 : index
    %182 = vector.load %arg11[%c3_123, %c0_124, %c0_125] : memref<4x1x32xf32, #tpu.memory_space<vmem>>, vector<1x1x32xf32>
    %183 = vector.shape_cast %182 : vector<1x1x32xf32> to vector<1x32xf32>
    %cst_126 = arith.constant dense<0.000000e+00> : vector<256xf32>
    %184 = vector.multi_reduction <add>, %167, %cst_126 [1] : vector<256x32xf32> to vector<256xf32>
    %185 = vector.shape_cast %184 : vector<256xf32> to vector<256x1xf32>
    %cst_127 = arith.constant 3.200000e+01 : f32
    %186 = vector.broadcast %cst_127 : f32 to vector<256x1xf32>
    %187 = arith.divf %185, %186 : vector<256x1xf32>
    %188 = vector.broadcast %187 : vector<256x1xf32> to vector<256x32xf32>
    %189 = arith.subf %167, %188 : vector<256x32xf32>
    %190 = arith.mulf %189, %189 : vector<256x32xf32>
    %cst_128 = arith.constant dense<0.000000e+00> : vector<256xf32>
    %191 = vector.multi_reduction <add>, %190, %cst_128 [1] : vector<256x32xf32> to vector<256xf32>
    %192 = vector.shape_cast %191 : vector<256xf32> to vector<256x1xf32>
    %cst_129 = arith.constant 3.200000e+01 : f32
    %193 = vector.broadcast %cst_129 : f32 to vector<256x1xf32>
    %194 = arith.divf %192, %193 : vector<256x1xf32>
    %cst_130 = arith.constant 9.99999974E-6 : f32
    %195 = vector.broadcast %cst_130 : f32 to vector<256x1xf32>
    %196 = arith.addf %194, %195 : vector<256x1xf32>
    %197 = math.rsqrt %196 : vector<256x1xf32>
    %198 = vector.broadcast %197 : vector<256x1xf32> to vector<256x32xf32>
    %199 = arith.mulf %189, %198 : vector<256x32xf32>
    %200 = vector.broadcast %169 : vector<1x32xf32> to vector<256x32xf32>
    %201 = arith.mulf %199, %200 : vector<256x32xf32>
    %202 = vector.broadcast %171 : vector<1x32xf32> to vector<256x32xf32>
    %203 = arith.addf %201, %202 : vector<256x32xf32>
    %204 = arith.truncf %203 : vector<256x32xf32> to vector<256x32xbf16>
    %cst_131 = arith.constant dense<0.000000e+00> : vector<256x96xf32>
    %205 = tpu.matmul %204, %173, %cst_131 {dimension_numbers = #tpu.dot_dimension_numbers<[1], [0], [0], [1], [0, 0, 1, 1], [], []>} : vector<256x32xbf16>, vector<32x96xbf16>, vector<256x96xf32> -> vector<256x96xf32>
    %206 = vector.broadcast %175 : vector<1x96xf32> to vector<256x96xf32>
    %207 = arith.addf %205, %206 : vector<256x96xf32>
    %cst_132 = arith.constant dense<0.000000e+00> : vector<256x96xf32>
    %208 = tpu.matmul %204, %177, %cst_132 {dimension_numbers = #tpu.dot_dimension_numbers<[1], [0], [0], [1], [0, 0, 1, 1], [], []>} : vector<256x32xbf16>, vector<32x96xbf16>, vector<256x96xf32> -> vector<256x96xf32>
    %209 = vector.broadcast %179 : vector<1x96xf32> to vector<256x96xf32>
    %210 = arith.addf %208, %209 : vector<256x96xf32>
    %cst_133 = arith.constant 0.000000e+00 : f32
    %211 = vector.broadcast %cst_133 : f32 to vector<256x96xf32>
    %212 = arith.maximumf %207, %211 : vector<256x96xf32>
    %213 = arith.addf %212, %210 : vector<256x96xf32>
    %214 = arith.truncf %213 : vector<256x96xf32> to vector<256x96xbf16>
    %cst_134 = arith.constant dense<0.000000e+00> : vector<256x32xf32>
    %215 = tpu.matmul %214, %181, %cst_134 {dimension_numbers = #tpu.dot_dimension_numbers<[1], [0], [0], [1], [0, 0, 1, 1], [], []>} : vector<256x96xbf16>, vector<96x32xbf16>, vector<256x32xf32> -> vector<256x32xf32>
    %216 = vector.broadcast %183 : vector<1x32xf32> to vector<256x32xf32>
    %217 = arith.addf %215, %216 : vector<256x32xf32>
    %218 = arith.addf %167, %217 : vector<256x32xf32>
    %c0_135 = arith.constant 0 : index
    %c0_136 = arith.constant 0 : index
    %219 = vector.load %arg12[%c0_135, %c0_136] : memref<1x32xf32, #tpu.memory_space<vmem>>, vector<1x32xf32>
    %c0_137 = arith.constant 0 : index
    %c0_138 = arith.constant 0 : index
    %220 = vector.load %arg13[%c0_137, %c0_138] : memref<1x32xf32, #tpu.memory_space<vmem>>, vector<1x32xf32>
    %cst_139 = arith.constant dense<0.000000e+00> : vector<256xf32>
    %221 = vector.multi_reduction <add>, %218, %cst_139 [1] : vector<256x32xf32> to vector<256xf32>
    %222 = vector.shape_cast %221 : vector<256xf32> to vector<256x1xf32>
    %cst_140 = arith.constant 3.200000e+01 : f32
    %223 = vector.broadcast %cst_140 : f32 to vector<256x1xf32>
    %224 = arith.divf %222, %223 : vector<256x1xf32>
    %225 = vector.broadcast %224 : vector<256x1xf32> to vector<256x32xf32>
    %226 = arith.subf %218, %225 : vector<256x32xf32>
    %227 = arith.mulf %226, %226 : vector<256x32xf32>
    %cst_141 = arith.constant dense<0.000000e+00> : vector<256xf32>
    %228 = vector.multi_reduction <add>, %227, %cst_141 [1] : vector<256x32xf32> to vector<256xf32>
    %229 = vector.shape_cast %228 : vector<256xf32> to vector<256x1xf32>
    %cst_142 = arith.constant 3.200000e+01 : f32
    %230 = vector.broadcast %cst_142 : f32 to vector<256x1xf32>
    %231 = arith.divf %229, %230 : vector<256x1xf32>
    %cst_143 = arith.constant 9.99999974E-6 : f32
    %232 = vector.broadcast %cst_143 : f32 to vector<256x1xf32>
    %233 = arith.addf %231, %232 : vector<256x1xf32>
    %234 = math.rsqrt %233 : vector<256x1xf32>
    %235 = vector.broadcast %234 : vector<256x1xf32> to vector<256x32xf32>
    %236 = arith.mulf %226, %235 : vector<256x32xf32>
    %237 = vector.broadcast %219 : vector<1x32xf32> to vector<256x32xf32>
    %238 = arith.mulf %236, %237 : vector<256x32xf32>
    %239 = vector.broadcast %220 : vector<1x32xf32> to vector<256x32xf32>
    %240 = arith.addf %238, %239 : vector<256x32xf32>
    %241 = arith.truncf %240 : vector<256x32xf32> to vector<256x32xbf16>
    %c0_144 = arith.constant 0 : index
    %c0_145 = arith.constant 0 : index
    %242 = vector.load %arg14[%c0_144, %c0_145] : memref<32x128xbf16, #tpu.memory_space<vmem>>, vector<32x128xbf16>
    %cst_146 = arith.constant dense<0.000000e+00> : vector<256x128xf32>
    %243 = tpu.matmul %241, %242, %cst_146 {dimension_numbers = #tpu.dot_dimension_numbers<[1], [0], [0], [1], [0, 0, 1, 1], [], []>} : vector<256x32xbf16>, vector<32x128xbf16>, vector<256x128xf32> -> vector<256x128xf32>
    %c0_147 = arith.constant 0 : index
    %c0_148 = arith.constant 0 : index
    %244 = vector.load %arg15[%c0_147, %c0_148] : memref<1x128xf32, #tpu.memory_space<vmem>>, vector<1x128xf32>
    %245 = vector.broadcast %244 : vector<1x128xf32> to vector<256x128xf32>
    %246 = arith.addf %243, %245 : vector<256x128xf32>
    %c0_149 = arith.constant 0 : index
    %c0_150 = arith.constant 0 : index
    %247 = vector.load %arg16[%c0_149, %c0_150] : memref<256x128xf32, #tpu.memory_space<vmem>>, vector<256x128xf32>
    tpu.vector_store %arg16[%c0_149, %c0_150], %246 {strides = array<i32>} : memref<256x128xf32, #tpu.memory_space<vmem>>, vector<256x128xf32>,
    return
  }
  func.func @transform_0(%arg0: i32) -> (i32, i32) {
    %c0_i32 = arith.constant 0 : i32
    %c0_i32_0 = arith.constant 0 : i32
    return %arg0, %c0_i32 : i32, i32
  }
  func.func @transform_1(%arg0: i32) -> (i32, i32) {
    %c0_i32 = arith.constant 0 : i32
    %c0_i32_0 = arith.constant 0 : i32
    %c0_i32_1 = arith.constant 0 : i32
    return %c0_i32, %c0_i32_0 : i32, i32
  }
  func.func @transform_2(%arg0: i32) -> (i32, i32) {
    %c0_i32 = arith.constant 0 : i32
    %c0_i32_0 = arith.constant 0 : i32
    %c0_i32_1 = arith.constant 0 : i32
    return %c0_i32, %c0_i32_0 : i32, i32
  }
  func.func @transform_3(%arg0: i32) -> (i32, i32, i32) {
    %c0_i32 = arith.constant 0 : i32
    %c0_i32_0 = arith.constant 0 : i32
    %c0_i32_1 = arith.constant 0 : i32
    %c0_i32_2 = arith.constant 0 : i32
    return %c0_i32, %c0_i32_0, %c0_i32_1 : i32, i32, i32
  }
  func.func @transform_4(%arg0: i32) -> (i32, i32, i32) {
    %c0_i32 = arith.constant 0 : i32
    %c0_i32_0 = arith.constant 0 : i32
    %c0_i32_1 = arith.constant 0 : i32
    %c0_i32_2 = arith.constant 0 : i32
    return %c0_i32, %c0_i32_0, %c0_i32_1 : i32, i32, i32
  }
  func.func @transform_5(%arg0: i32) -> (i32, i32, i32) {
    %c0_i32 = arith.constant 0 : i32
    %c0_i32_0 = arith.constant 0 : i32
    %c0_i32_1 = arith.constant 0 : i32
    %c0_i32_2 = arith.constant 0 : i32
    return %c0_i32, %c0_i32_0, %c0_i32_1 : i32, i32, i32
  }
  func.func @transform_6(%arg0: i32) -> (i32, i32, i32) {
    %c0_i32 = arith.constant 0 : i32
    %c0_i32_0 = arith.constant 0 : i32
    %c0_i32_1 = arith.constant 0 : i32
    %c0_i32_2 = arith.constant 0 : i32
    return %c0_i32, %c0_i32_0, %c0_i32_1 : i32, i32, i32
  }
  func.func @transform_7(%arg0: i32) -> (i32, i32, i32) {
    %c0_i32 = arith.constant 0 : i32
    %c0_i32_0 = arith.constant 0 : i32
    %c0_i32_1 = arith.constant 0 : i32
    %c0_i32_2 = arith.constant 0 : i32
    return %c0_i32, %c0_i32_0, %c0_i32_1 : i32, i32, i32
  }
  func.func @transform_8(%arg0: i32) -> (i32, i32, i32) {
    %c0_i32 = arith.constant 0 : i32
    %c0_i32_0 = arith.constant 0 : i32
    %c0_i32_1 = arith.constant 0 : i32
    %c0_i32_2 = arith.constant 0 : i32
    return %c0_i32, %c0_i32_0, %c0_i32_1 : i32, i32, i32
  }
  func.func @transform_9(%arg0: i32) -> (i32, i32, i32) {
    %c0_i32 = arith.constant 0 : i32
    %c0_i32_0 = arith.constant 0 : i32
    %c0_i32_1 = arith.constant 0 : i32
    %c0_i32_2 = arith.constant 0 : i32
    return %c0_i32, %c0_i32_0, %c0_i32_1 : i32, i32, i32
  }
  func.func @transform_10(%arg0: i32) -> (i32, i32, i32) {
    %c0_i32 = arith.constant 0 : i32
    %c0_i32_0 = arith.constant 0 : i32
    %c0_i32_1 = arith.constant 0 : i32
    %c0_i32_2 = arith.constant 0 : i32
    return %c0_i32, %c0_i32_0, %c0_i32_1 : i32, i32, i32
  }
  func.func @transform_11(%arg0: i32) -> (i32, i32) {
    %c0_i32 = arith.constant 0 : i32
    %c0_i32_0 = arith.constant 0 : i32
    %c0_i32_1 = arith.constant 0 : i32
    return %c0_i32, %c0_i32_0 : i32, i32
  }
  func.func @transform_12(%arg0: i32) -> (i32, i32) {
    %c0_i32 = arith.constant 0 : i32
    %c0_i32_0 = arith.constant 0 : i32
    %c0_i32_1 = arith.constant 0 : i32
    return %c0_i32, %c0_i32_0 : i32, i32
  }
  func.func @transform_13(%arg0: i32) -> (i32, i32) {
    %c0_i32 = arith.constant 0 : i32
    %c0_i32_0 = arith.constant 0 : i32
    %c0_i32_1 = arith.constant 0 : i32
    return %c0_i32, %c0_i32_0 : i32, i32
  }
  func.func @transform_14(%arg0: i32) -> (i32, i32) {
    %c0_i32 = arith.constant 0 : i32
    %c0_i32_0 = arith.constant 0 : i32
    %c0_i32_1 = arith.constant 0 : i32
    return %c0_i32, %c0_i32_0 : i32, i32
  }
  func.func @transform_15(%arg0: i32) -> (i32, i32) {
    %c0_i32 = arith.constant 0 : i32
    %c0_i32_0 = arith.constant 0 : i32
    return %arg0, %c0_i32 : i32, i32
  }
}

</mosaic_0001>

<llo_original>
// kernel: tpu_custom_call.1
$region0: #{tpu_custom_call.1}
  #allocation0 [shape = 'u32[]', space=smem, size = 0x4, offset = 0x4, fixed_abs, tag = 'smem constant byte address 0x4 - core index']
  #allocation1 [shape = 'u32[144,128]{1,0:T(1,128)}', space=vmem, size = 0x12000, scoped, tag = 'internal scratch']
  %s0 = inlined_call_operand.vmem [shape: f32[256,2], index: 0, kind: input, shape index: {}]
  %s1 = inlined_call_operand.vmem [shape: f32[2,32], index: 1, kind: input, shape index: {}]
  %s2 = inlined_call_operand.vmem [shape: f32[1,32], index: 2, kind: input, shape index: {}]
  %s3 = inlined_call_operand.vmem [shape: f32[4,1,32], index: 3, kind: input, shape index: {}]
  %s4 = inlined_call_operand.vmem [shape: f32[4,1,32], index: 4, kind: input, shape index: {}]
  %s5 = inlined_call_operand.vmem [shape: bf16[4,32,96], index: 5, kind: input, shape index: {}]
  %s6 = inlined_call_operand.vmem [shape: f32[4,1,96], index: 6, kind: input, shape index: {}]
  %s7 = inlined_call_operand.vmem [shape: bf16[4,32,96], index: 7, kind: input, shape index: {}]
  %s8 = inlined_call_operand.vmem [shape: f32[4,1,96], index: 8, kind: input, shape index: {}]
  %s9 = inlined_call_operand.vmem [shape: bf16[4,96,32], index: 9, kind: input, shape index: {}]
  %s10 = inlined_call_operand.vmem [shape: f32[4,1,32], index: 10, kind: input, shape index: {}]
  %s11 = inlined_call_operand.vmem [shape: f32[1,32], index: 11, kind: input, shape index: {}]
  %s12 = inlined_call_operand.vmem [shape: f32[1,32], index: 12, kind: input, shape index: {}]
  %s13 = inlined_call_operand.vmem [shape: bf16[32,128], index: 13, kind: input, shape index: {}]
  %s14 = inlined_call_operand.vmem [shape: f32[1,128], index: 14, kind: input, shape index: {}]
  %s15 = inlined_call_operand.hbm [shape: f32[256,128], index: 15, kind: output, shape index: {}]
  %s16 = sld [smem:[#allocation0]]
  $region70: #{tpu_custom_call.1} parent=0
    _
  %s18 = ssub.s32 1, %s16
  %s19 = scalar_select 0, %s18, %s16
  $region1: #{tpu_custom_call.1} parent=0
    #allocation2 [shape = 'u8[131072]{0}', space=vmem, size = 0x20000, scoped, tag = 'output window, operand 0, single buffered']
    #allocation3 [shape = 's32[1]{0}', space=sflag, size = 0x4, scoped, tag = 'scoped memory for tpu_custom_call.1']
    %20 = vsyncpa [#allocation3], 0
    // Predicated region
    $region2: #{tpu_custom_call.1} parent=1 // pred_check
      _
    $region3: #{tpu_custom_call.1} parent=1 // pred_check_branch
      %22 = sbr.rel (0) target = $region5
    $region4: #{tpu_custom_call.1} parent=1 // pred_region
      _
    $region5: #{tpu_custom_call.1} parent=1 // pred_fallthru
      _
    // Predicated region
    $region6: #{tpu_custom_call.1} parent=1 // pred_check
      _
    $region7: #{tpu_custom_call.1} parent=1 // pred_check_branch
      %24 = sbr.rel (0) target = $region9
    $region8: #{tpu_custom_call.1} parent=1 // pred_region
      _
    $region9: #{tpu_custom_call.1} parent=1 // pred_fallthru
      _
    // Predicated region
    $region10: #{tpu_custom_call.1} parent=1 // pred_check
      _
    $region11: #{tpu_custom_call.1} parent=1 // pred_check_branch
      %26 = sbr.rel (0) target = $region13
    $region12: #{tpu_custom_call.1} parent=1 // pred_region
      _
    $region13: #{tpu_custom_call.1} parent=1 // pred_fallthru
      _
    // Predicated region
    $region14: #{tpu_custom_call.1} parent=1 // pred_check
      _
    $region15: #{tpu_custom_call.1} parent=1 // pred_check_branch
      %28 = sbr.rel (0) target = $region17
    $region16: #{tpu_custom_call.1} parent=1 // pred_region
      _
    $region17: #{tpu_custom_call.1} parent=1 // pred_fallthru
      _
    // Predicated region
    $region18: #{tpu_custom_call.1} parent=1 // pred_check
      _
    $region19: #{tpu_custom_call.1} parent=1 // pred_check_branch
      %30 = sbr.rel (0) target = $region21
    $region20: #{tpu_custom_call.1} parent=1 // pred_region
      _
    $region21: #{tpu_custom_call.1} parent=1 // pred_fallthru
      _
    // Predicated region
    $region22: #{tpu_custom_call.1} parent=1 // pred_check
      _
    $region23: #{tpu_custom_call.1} parent=1 // pred_check_branch
      %32 = sbr.rel (0) target = $region25
    $region24: #{tpu_custom_call.1} parent=1 // pred_region
      _
    $region25: #{tpu_custom_call.1} parent=1 // pred_fallthru
      _
    // Predicated region
    $region26: #{tpu_custom_call.1} parent=1 // pred_check
      _
    $region27: #{tpu_custom_call.1} parent=1 // pred_check_branch
      %34 = sbr.rel (0) target = $region29
    $region28: #{tpu_custom_call.1} parent=1 // pred_region
      _
    $region29: #{tpu_custom_call.1} parent=1 // pred_fallthru
      _
    // Predicated region
    $region30: #{tpu_custom_call.1} parent=1 // pred_check
      _
    $region31: #{tpu_custom_call.1} parent=1 // pred_check_branch
      %36 = sbr.rel (0) target = $region33
    $region32: #{tpu_custom_call.1} parent=1 // pred_region
      _
    $region33: #{tpu_custom_call.1} parent=1 // pred_fallthru
      _
    // Predicated region
    $region34: #{tpu_custom_call.1} parent=1 // pred_check
      _
    $region35: #{tpu_custom_call.1} parent=1 // pred_check_branch
      %38 = sbr.rel (0) target = $region37
    $region36: #{tpu_custom_call.1} parent=1 // pred_region
      _
    $region37: #{tpu_custom_call.1} parent=1 // pred_fallthru
      _
    // Predicated region
    $region38: #{tpu_custom_call.1} parent=1 // pred_check
      _
    $region39: #{tpu_custom_call.1} parent=1 // pred_check_branch
      %40 = sbr.rel (0) target = $region41
    $region40: #{tpu_custom_call.1} parent=1 // pred_region
      _
    $region41: #{tpu_custom_call.1} parent=1 // pred_fallthru
      _
    // Predicated region
    $region42: #{tpu_custom_call.1} parent=1 // pred_check
      _
    $region43: #{tpu_custom_call.1} parent=1 // pred_check_branch
      %42 = sbr.rel (0) target = $region45
    $region44: #{tpu_custom_call.1} parent=1 // pred_region
      _
    $region45: #{tpu_custom_call.1} parent=1 // pred_fallthru
      _
    // Predicated region
    $region46: #{tpu_custom_call.1} parent=1 // pred_check
      _
    $region47: #{tpu_custom_call.1} parent=1 // pred_check_branch
      %44 = sbr.rel (0) target = $region49
    $region48: #{tpu_custom_call.1} parent=1 // pred_region
      _
    $region49: #{tpu_custom_call.1} parent=1 // pred_fallthru
      _
    // Predicated region
    $region50: #{tpu_custom_call.1} parent=1 // pred_check
      _
    $region51: #{tpu_custom_call.1} parent=1 // pred_check_branch
      %46 = sbr.rel (0) target = $region53
    $region52: #{tpu_custom_call.1} parent=1 // pred_region
      _
    $region53: #{tpu_custom_call.1} parent=1 // pred_fallthru
      _
    // Predicated region
    $region54: #{tpu_custom_call.1} parent=1 // pred_check
      _
    $region55: #{tpu_custom_call.1} parent=1 // pred_check_branch
      %48 = sbr.rel (0) target = $region57
    $region56: #{tpu_custom_call.1} parent=1 // pred_region
      _
    $region57: #{tpu_custom_call.1} parent=1 // pred_fallthru
      _
    // Predicated region
    $region58: #{tpu_custom_call.1} parent=1 // pred_check
      _
    $region59: #{tpu_custom_call.1} parent=1 // pred_check_branch
      %50 = sbr.rel (0) target = $region61
    $region60: #{tpu_custom_call.1} parent=1 // pred_region
      _
    $region61: #{tpu_custom_call.1} parent=1 // pred_fallthru
      _
    %v52 = vld [vmem:[%s0] sm:$0xff]
    %v53 = vld [vmem:[%s0 + $0x8] sm:$0xff]
    %v54 = vld [vmem:[%s0 + $0x10] sm:$0xff]
    %v55 = vld [vmem:[%s0 + $0x18] sm:$0xff]
    %v56 = vld [vmem:[%s0 + $0x20] sm:$0xff]
    %v57 = vld [vmem:[%s0 + $0x28] sm:$0xff]
    %v58 = vld [vmem:[%s0 + $0x30] sm:$0xff]
    %v59 = vld [vmem:[%s0 + $0x38] sm:$0xff]
    %v60 = vld [vmem:[%s0 + $0x40] sm:$0xff]
    %v61 = vld [vmem:[%s0 + $0x48] sm:$0xff]
    %v62 = vld [vmem:[%s0 + $0x50] sm:$0xff]
    %v63 = vld [vmem:[%s0 + $0x58] sm:$0xff]
    %v64 = vld [vmem:[%s0 + $0x60] sm:$0xff]
    %v65 = vld [vmem:[%s0 + $0x68] sm:$0xff]
    %v66 = vld [vmem:[%s0 + $0x70] sm:$0xff]
    %v67 = vld [vmem:[%s0 + $0x78] sm:$0xff]
    %v68 = vld [vmem:[%s0 + $0x80] sm:$0xff]
    %v69 = vld [vmem:[%s0 + $0x88] sm:$0xff]
    %v70 = vld [vmem:[%s0 + $0x90] sm:$0xff]
    %v71 = vld [vmem:[%s0 + $0x98] sm:$0xff]
    %v72 = vld [vmem:[%s0 + $0xa0] sm:$0xff]
    %v73 = vld [vmem:[%s0 + $0xa8] sm:$0xff]
    %v74 = vld [vmem:[%s0 + $0xb0] sm:$0xff]
    %v75 = vld [vmem:[%s0 + $0xb8] sm:$0xff]
    %v76 = vld [vmem:[%s0 + $0xc0] sm:$0xff]
    %v77 = vld [vmem:[%s0 + $0xc8] sm:$0xff]
    %v78 = vld [vmem:[%s0 + $0xd0] sm:$0xff]
    %v79 = vld [vmem:[%s0 + $0xd8] sm:$0xff]
    %v80 = vld [vmem:[%s0 + $0xe0] sm:$0xff]
    %v81 = vld [vmem:[%s0 + $0xe8] sm:$0xff]
    %v82 = vld [vmem:[%s0 + $0xf0] sm:$0xff]
    %v83 = vld [vmem:[%s0 + $0xf8] sm:$0xff]
    %v84 = vld [vmem:[%s1] sm:$0x1]
    %86 = vset.pattern.permute.xlu0 0
    %87 = vperm.xlu0 %86, %v52
    %v88 = vpop.permute.xlu0 %87
    %91 = vset.pattern.permute.xlu0 0
    %92 = vperm.xlu0 %91, %v53
    %v93 = vpop.permute.xlu0 %92
    %96 = vset.pattern.permute.xlu0 0
    %97 = vperm.xlu0 %96, %v54
    %v98 = vpop.permute.xlu0 %97
    %101 = vset.pattern.permute.xlu0 0
    %102 = vperm.xlu0 %101, %v55
    %v103 = vpop.permute.xlu0 %102
    %106 = vset.pattern.permute.xlu0 0
    %107 = vperm.xlu0 %106, %v56
    %v108 = vpop.permute.xlu0 %107
    %111 = vset.pattern.permute.xlu0 0
    %112 = vperm.xlu0 %111, %v57
    %v113 = vpop.permute.xlu0 %112
    %116 = vset.pattern.permute.xlu0 0
    %117 = vperm.xlu0 %116, %v58
    %v118 = vpop.permute.xlu0 %117
    %121 = vset.pattern.permute.xlu0 0
    %122 = vperm.xlu0 %121, %v59
    %v123 = vpop.permute.xlu0 %122
    %126 = vset.pattern.permute.xlu0 0
    %127 = vperm.xlu0 %126, %v60
    %v128 = vpop.permute.xlu0 %127
    %131 = vset.pattern.permute.xlu0 0
    %132 = vperm.xlu0 %131, %v61
    %v133 = vpop.permute.xlu0 %132
    %136 = vset.pattern.permute.xlu0 0
    %137 = vperm.xlu0 %136, %v62
    %v138 = vpop.permute.xlu0 %137
    %141 = vset.pattern.permute.xlu0 0
    %142 = vperm.xlu0 %141, %v63
    %v143 = vpop.permute.xlu0 %142
    %146 = vset.pattern.permute.xlu0 0
    %147 = vperm.xlu0 %146, %v64
    %v148 = vpop.permute.xlu0 %147
    %151 = vset.pattern.permute.xlu0 0
    %152 = vperm.xlu0 %151, %v65
    %v153 = vpop.permute.xlu0 %152
    %156 = vset.pattern.permute.xlu0 0
    %157 = vperm.xlu0 %156, %v66
    %v158 = vpop.permute.xlu0 %157
    %161 = vset.pattern.permute.xlu0 0
    %162 = vperm.xlu0 %161, %v67
    %v163 = vpop.permute.xlu0 %162
    %166 = vset.pattern.permute.xlu0 0
    %167 = vperm.xlu0 %166, %v68
    %v168 = vpop.permute.xlu0 %167
    %171 = vset.pattern.permute.xlu0 0
    %172 = vperm.xlu0 %171, %v69
    %v173 = vpop.permute.xlu0 %172
    %176 = vset.pattern.permute.xlu0 0
    %177 = vperm.xlu0 %176, %v70
    %v178 = vpop.permute.xlu0 %177
    %181 = vset.pattern.permute.xlu0 0
    %182 = vperm.xlu0 %181, %v71
    %v183 = vpop.permute.xlu0 %182
    %186 = vset.pattern.permute.xlu0 0
    %187 = vperm.xlu0 %186, %v72
    %v188 = vpop.permute.xlu0 %187
    %191 = vset.pattern.permute.xlu0 0
    %192 = vperm.xlu0 %191, %v73
    %v193 = vpop.permute.xlu0 %192
    %196 = vset.pattern.permute.xlu0 0
    %197 = vperm.xlu0 %196, %v74
    %v198 = vpop.permute.xlu0 %197
    %201 = vset.pattern.permute.xlu0 0
    %202 = vperm.xlu0 %201, %v75
    %v203 = vpop.permute.xlu0 %202
    %206 = vset.pattern.permute.xlu0 0
    %207 = vperm.xlu0 %206, %v76
    %v208 = vpop.permute.xlu0 %207
    %211 = vset.pattern.permute.xlu0 0
    %212 = vperm.xlu0 %211, %v77
    %v213 = vpop.permute.xlu0 %212
    %216 = vset.pattern.permute.xlu0 0
    %217 = vperm.xlu0 %216, %v78
    %v218 = vpop.permute.xlu0 %217
    %221 = vset.pattern.permute.xlu0 0
    %222 = vperm.xlu0 %221, %v79
    %v223 = vpop.permute.xlu0 %222
    %226 = vset.pattern.permute.xlu0 0
    %227 = vperm.xlu0 %226, %v80
    %v228 = vpop.permute.xlu0 %227
    %231 = vset.pattern.permute.xlu0 0
    %232 = vperm.xlu0 %231, %v81
    %v233 = vpop.permute.xlu0 %232
    %236 = vset.pattern.permute.xlu0 0
    %237 = vperm.xlu0 %236, %v82
    %v238 = vpop.permute.xlu0 %237
    %241 = vset.pattern.permute.xlu0 0
    %242 = vperm.xlu0 %241, %v83
    %v243 = vpop.permute.xlu0 %242
    %v245 = vlaneseq
    %v246 = vshrl.u32 %v245, 7
    %v247 = vsub.s32 0, %v246
    %v248 = vrot.slane %v84, %v247
    %v249 = vmul.f32 %v88, %v248
    %v250 = vmul.f32 %v93, %v248
    %v251 = vmul.f32 %v98, %v248
    %v252 = vmul.f32 %v103, %v248
    %v253 = vmul.f32 %v108, %v248
    %v254 = vmul.f32 %v113, %v248
    %v255 = vmul.f32 %v118, %v248
    %v256 = vmul.f32 %v123, %v248
    %v257 = vmul.f32 %v128, %v248
    %v258 = vmul.f32 %v133, %v248
    %v259 = vmul.f32 %v138, %v248
    %v260 = vmul.f32 %v143, %v248
    %v261 = vmul.f32 %v148, %v248
    %v262 = vmul.f32 %v153, %v248
    %v263 = vmul.f32 %v158, %v248
    %v264 = vmul.f32 %v163, %v248
    %v265 = vmul.f32 %v168, %v248
    %v266 = vmul.f32 %v173, %v248
    %v267 = vmul.f32 %v178, %v248
    %v268 = vmul.f32 %v183, %v248
    %v269 = vmul.f32 %v188, %v248
    %v270 = vmul.f32 %v193, %v248
    %v271 = vmul.f32 %v198, %v248
    %v272 = vmul.f32 %v203, %v248
    %v273 = vmul.f32 %v208, %v248
    %v274 = vmul.f32 %v213, %v248
    %v275 = vmul.f32 %v218, %v248
    %v276 = vmul.f32 %v223, %v248
    %v277 = vmul.f32 %v228, %v248
    %v278 = vmul.f32 %v233, %v248
    %v279 = vmul.f32 %v238, %v248
    %v280 = vmul.f32 %v243, %v248
    %v281 = vld [vmem:[%s1 + $0x1] sm:$0x1]
    %282 = vset.pattern.permute.xlu0 1
    %283 = vperm.xlu0 %282, %v52
    %v284 = vpop.permute.xlu0 %283
    %286 = vset.pattern.permute.xlu0 1
    %287 = vperm.xlu0 %286, %v53
    %v288 = vpop.permute.xlu0 %287
    %290 = vset.pattern.permute.xlu0 1
    %291 = vperm.xlu0 %290, %v54
    %v292 = vpop.permute.xlu0 %291
    %294 = vset.pattern.permute.xlu0 1
    %295 = vperm.xlu0 %294, %v55
    %v296 = vpop.permute.xlu0 %295
    %298 = vset.pattern.permute.xlu0 1
    %299 = vperm.xlu0 %298, %v56
    %v300 = vpop.permute.xlu0 %299
    %302 = vset.pattern.permute.xlu0 1
    %303 = vperm.xlu0 %302, %v57
    %v304 = vpop.permute.xlu0 %303
    %306 = vset.pattern.permute.xlu0 1
    %307 = vperm.xlu0 %306, %v58
    %v308 = vpop.permute.xlu0 %307
    %310 = vset.pattern.permute.xlu0 1
    %311 = vperm.xlu0 %310, %v59
    %v312 = vpop.permute.xlu0 %311
    %314 = vset.pattern.permute.xlu0 1
    %315 = vperm.xlu0 %314, %v60
    %v316 = vpop.permute.xlu0 %315
    %318 = vset.pattern.permute.xlu0 1
    %319 = vperm.xlu0 %318, %v61
    %v320 = vpop.permute.xlu0 %319
    %322 = vset.pattern.permute.xlu0 1
    %323 = vperm.xlu0 %322, %v62
    %v324 = vpop.permute.xlu0 %323
    %326 = vset.pattern.permute.xlu0 1
    %327 = vperm.xlu0 %326, %v63
    %v328 = vpop.permute.xlu0 %327
    %330 = vset.pattern.permute.xlu0 1
    %331 = vperm.xlu0 %330, %v64
    %v332 = vpop.permute.xlu0 %331
    %334 = vset.pattern.permute.xlu0 1
    %335 = vperm.xlu0 %334, %v65
    %v336 = vpop.permute.xlu0 %335
    %338 = vset.pattern.permute.xlu0 1
    %339 = vperm.xlu0 %338, %v66
    %v340 = vpop.permute.xlu0 %339
    %342 = vset.pattern.permute.xlu0 1
    %343 = vperm.xlu0 %342, %v67
    %v344 = vpop.permute.xlu0 %343
    %346 = vset.pattern.permute.xlu0 1
    %347 = vperm.xlu0 %346, %v68
    %v348 = vpop.permute.xlu0 %347
    %350 = vset.pattern.permute.xlu0 1
    %351 = vperm.xlu0 %350, %v69
    %v352 = vpop.permute.xlu0 %351
    %354 = vset.pattern.permute.xlu0 1
    %355 = vperm.xlu0 %354, %v70
    %v356 = vpop.permute.xlu0 %355
    %358 = vset.pattern.permute.xlu0 1
    %359 = vperm.xlu0 %358, %v71
    %v360 = vpop.permute.xlu0 %359
    %362 = vset.pattern.permute.xlu0 1
    %363 = vperm.xlu0 %362, %v72
    %v364 = vpop.permute.xlu0 %363
    %366 = vset.pattern.permute.xlu0 1
    %367 = vperm.xlu0 %366, %v73
    %v368 = vpop.permute.xlu0 %367
    %370 = vset.pattern.permute.xlu0 1
    %371 = vperm.xlu0 %370, %v74
    %v372 = vpop.permute.xlu0 %371
    %374 = vset.pattern.permute.xlu0 1
    %375 = vperm.xlu0 %374, %v75
    %v376 = vpop.permute.xlu0 %375
    %378 = vset.pattern.permute.xlu0 1
    %379 = vperm.xlu0 %378, %v76
    %v380 = vpop.permute.xlu0 %379
    %382 = vset.pattern.permute.xlu0 1
    %383 = vperm.xlu0 %382, %v77
    %v384 = vpop.permute.xlu0 %383
    %386 = vset.pattern.permute.xlu0 1
    %387 = vperm.xlu0 %386, %v78
    %v388 = vpop.permute.xlu0 %387
    %390 = vset.pattern.permute.xlu0 1
    %391 = vperm.xlu0 %390, %v79
    %v392 = vpop.permute.xlu0 %391
    %394 = vset.pattern.permute.xlu0 1
    %395 = vperm.xlu0 %394, %v80
    %v396 = vpop.permute.xlu0 %395
    %398 = vset.pattern.permute.xlu0 1
    %399 = vperm.xlu0 %398, %v81
    %v400 = vpop.permute.xlu0 %399
    %402 = vset.pattern.permute.xlu0 1
    %403 = vperm.xlu0 %402, %v82
    %v404 = vpop.permute.xlu0 %403
    %406 = vset.pattern.permute.xlu0 1
    %407 = vperm.xlu0 %406, %v83
    %v408 = vpop.permute.xlu0 %407
    %v410 = vlaneseq
    %v411 = vshrl.u32 %v410, 7
    %v412 = vsub.s32 0, %v411
    %v413 = vrot.slane %v281, %v412
    %v414 = vmul.f32 %v284, %v413
    %v415 = vmul.f32 %v288, %v413
    %v416 = vmul.f32 %v292, %v413
    %v417 = vmul.f32 %v296, %v413
    %v418 = vmul.f32 %v300, %v413
    %v419 = vmul.f32 %v304, %v413
    %v420 = vmul.f32 %v308, %v413
    %v421 = vmul.f32 %v312, %v413
    %v422 = vmul.f32 %v316, %v413
    %v423 = vmul.f32 %v320, %v413
    %v424 = vmul.f32 %v324, %v413
    %v425 = vmul.f32 %v328, %v413
    %v426 = vmul.f32 %v332, %v413
    %v427 = vmul.f32 %v336, %v413
    %v428 = vmul.f32 %v340, %v413
    %v429 = vmul.f32 %v344, %v413
    %v430 = vmul.f32 %v348, %v413
    %v431 = vmul.f32 %v352, %v413
    %v432 = vmul.f32 %v356, %v413
    %v433 = vmul.f32 %v360, %v413
    %v434 = vmul.f32 %v364, %v413
    %v435 = vmul.f32 %v368, %v413
    %v436 = vmul.f32 %v372, %v413
    %v437 = vmul.f32 %v376, %v413
    %v438 = vmul.f32 %v380, %v413
    %v439 = vmul.f32 %v384, %v413
    %v440 = vmul.f32 %v388, %v413
    %v441 = vmul.f32 %v392, %v413
    %v442 = vmul.f32 %v396, %v413
    %v443 = vmul.f32 %v400, %v413
    %v444 = vmul.f32 %v404, %v413
    %v445 = vmul.f32 %v408, %v413
    %v446 = vadd.f32 %v249, %v414
    %v447 = vadd.f32 %v250, %v415
    %v448 = vadd.f32 %v251, %v416
    %v449 = vadd.f32 %v252, %v417
    %v450 = vadd.f32 %v253, %v418
    %v451 = vadd.f32 %v254, %v419
    %v452 = vadd.f32 %v255, %v420
    %v453 = vadd.f32 %v256, %v421
    %v454 = vadd.f32 %v257, %v422
    %v455 = vadd.f32 %v258, %v423
    %v456 = vadd.f32 %v259, %v424
    %v457 = vadd.f32 %v260, %v425
    %v458 = vadd.f32 %v261, %v426
    %v459 = vadd.f32 %v262, %v427
    %v460 = vadd.f32 %v263, %v428
    %v461 = vadd.f32 %v264, %v429
    %v462 = vadd.f32 %v265, %v430
    %v463 = vadd.f32 %v266, %v431
    %v464 = vadd.f32 %v267, %v432
    %v465 = vadd.f32 %v268, %v433
    %v466 = vadd.f32 %v269, %v434
    %v467 = vadd.f32 %v270, %v435
    %v468 = vadd.f32 %v271, %v436
    %v469 = vadd.f32 %v272, %v437
    %v470 = vadd.f32 %v273, %v438
    %v471 = vadd.f32 %v274, %v439
    %v472 = vadd.f32 %v275, %v440
    %v473 = vadd.f32 %v276, %v441
    %v474 = vadd.f32 %v277, %v442
    %v475 = vadd.f32 %v278, %v443
    %v476 = vadd.f32 %v279, %v444
    %v477 = vadd.f32 %v280, %v445
    %v478 = vld [vmem:[%s2] sm:$0x1]
    %v480 = vlaneseq
    %v481 = vshrl.u32 %v480, 7
    %v482 = vsub.s32 0, %v481
    %v483 = vrot.slane %v478, %v482
    %v485 = vadd.f32 %v446, %v483
    %v486 = vadd.f32 %v447, %v483
    %v487 = vadd.f32 %v448, %v483
    %v488 = vadd.f32 %v449, %v483
    %v489 = vadd.f32 %v450, %v483
    %v490 = vadd.f32 %v451, %v483
    %v491 = vadd.f32 %v452, %v483
    %v492 = vadd.f32 %v453, %v483
    %v493 = vadd.f32 %v454, %v483
    %v494 = vadd.f32 %v455, %v483
    %v495 = vadd.f32 %v456, %v483
    %v496 = vadd.f32 %v457, %v483
    %v497 = vadd.f32 %v458, %v483
    %v498 = vadd.f32 %v459, %v483
    %v499 = vadd.f32 %v460, %v483
    %v500 = vadd.f32 %v461, %v483
    %v501 = vadd.f32 %v462, %v483
    %v502 = vadd.f32 %v463, %v483
    %v503 = vadd.f32 %v464, %v483
    %v504 = vadd.f32 %v465, %v483
    %v505 = vadd.f32 %v466, %v483
    %v506 = vadd.f32 %v467, %v483
    %v507 = vadd.f32 %v468, %v483
    %v508 = vadd.f32 %v469, %v483
    %v509 = vadd.f32 %v470, %v483
    %v510 = vadd.f32 %v471, %v483
    %v511 = vadd.f32 %v472, %v483
    %v512 = vadd.f32 %v473, %v483
    %v513 = vadd.f32 %v474, %v483
    %v514 = vadd.f32 %v475, %v483
    %v515 = vadd.f32 %v476, %v483
    %v516 = vadd.f32 %v477, %v483
    %v517 = vld [vmem:[%s3] sm:$0x1]
    %v518 = vld [vmem:[%s4] sm:$0x1]
    %v519 = vld [vmem:[%s5] sm:$0xf]
    %v520 = vld [vmem:[%s5 + $0x4] sm:$0xf]
    %v521 = vld [vmem:[%s5 + $0x8] sm:$0xf]
    %v522 = vld [vmem:[%s5 + $0xc] sm:$0xf]
    %v523 = vld [vmem:[%s6] sm:$0x1]
    %v524 = vld [vmem:[%s7] sm:$0xf]
    %v525 = vld [vmem:[%s7 + $0x4] sm:$0xf]
    %v526 = vld [vmem:[%s7 + $0x8] sm:$0xf]
    %v527 = vld [vmem:[%s7 + $0xc] sm:$0xf]
    %v528 = vld [vmem:[%s8] sm:$0x1]
    %v529 = vld [vmem:[%s9] sm:$0xf]
    %v530 = vld [vmem:[%s9 + $0x4] sm:$0xf]
    %v531 = vld [vmem:[%s9 + $0x8] sm:$0xf]
    %v532 = vld [vmem:[%s9 + $0xc] sm:$0xf]
    %v533 = vld [vmem:[%s9 + $0x10] sm:$0xf]
    %v534 = vld [vmem:[%s9 + $0x14] sm:$0xf]
    %v535 = vld [vmem:[%s9 + $0x18] sm:$0xf]
    %v536 = vld [vmem:[%s9 + $0x1c] sm:$0xf]
    %v537 = vld [vmem:[%s9 + $0x20] sm:$0xf]
    %v538 = vld [vmem:[%s9 + $0x24] sm:$0xf]
    %v539 = vld [vmem:[%s9 + $0x28] sm:$0xf]
    %v540 = vld [vmem:[%s9 + $0x2c] sm:$0xf]
    %v541 = vld [vmem:[%s10] sm:$0x1]
    %vm542 = vcmask 261120
    %v543 = vsel %vm542, %v485, 0.0
    %544 = vadd.xlane.f32.xlu0 %v543
    %v545 = vpop.xlane.xlu0 %544
    %v546 = vsel %vm542, %v486, 0.0
    %547 = vadd.xlane.f32.xlu0 %v546
    %v548 = vpop.xlane.xlu0 %547
    %v549 = vsel %vm542, %v487, 0.0
    %550 = vadd.xlane.f32.xlu0 %v549
    %v551 = vpop.xlane.xlu0 %550
    %v552 = vsel %vm542, %v488, 0.0
    %553 = vadd.xlane.f32.xlu0 %v552
    %v554 = vpop.xlane.xlu0 %553
    %v555 = vsel %vm542, %v489, 0.0
    %556 = vadd.xlane.f32.xlu0 %v555
    %v557 = vpop.xlane.xlu0 %556
    %v558 = vsel %vm542, %v490, 0.0
    %559 = vadd.xlane.f32.xlu0 %v558
    %v560 = vpop.xlane.xlu0 %559
    %v561 = vsel %vm542, %v491, 0.0
    %562 = vadd.xlane.f32.xlu0 %v561
    %v563 = vpop.xlane.xlu0 %562
    %v564 = vsel %vm542, %v492, 0.0
    %565 = vadd.xlane.f32.xlu0 %v564
    %v566 = vpop.xlane.xlu0 %565
    %v567 = vsel %vm542, %v493, 0.0
    %568 = vadd.xlane.f32.xlu0 %v567
    %v569 = vpop.xlane.xlu0 %568
    %v570 = vsel %vm542, %v494, 0.0
    %571 = vadd.xlane.f32.xlu0 %v570
    %v572 = vpop.xlane.xlu0 %571
    %v573 = vsel %vm542, %v495, 0.0
    %574 = vadd.xlane.f32.xlu0 %v573
    %v575 = vpop.xlane.xlu0 %574
    %v576 = vsel %vm542, %v496, 0.0
    %577 = vadd.xlane.f32.xlu0 %v576
    %v578 = vpop.xlane.xlu0 %577
    %v579 = vsel %vm542, %v497, 0.0
    %580 = vadd.xlane.f32.xlu0 %v579
    %v581 = vpop.xlane.xlu0 %580
    %v582 = vsel %vm542, %v498, 0.0
    %583 = vadd.xlane.f32.xlu0 %v582
    %v584 = vpop.xlane.xlu0 %583
    %v585 = vsel %vm542, %v499, 0.0
    %586 = vadd.xlane.f32.xlu0 %v585
    %v587 = vpop.xlane.xlu0 %586
    %v588 = vsel %vm542, %v500, 0.0
    %589 = vadd.xlane.f32.xlu0 %v588
    %v590 = vpop.xlane.xlu0 %589
    %v591 = vsel %vm542, %v501, 0.0
    %592 = vadd.xlane.f32.xlu0 %v591
    %v593 = vpop.xlane.xlu0 %592
    %v594 = vsel %vm542, %v502, 0.0
    %595 = vadd.xlane.f32.xlu0 %v594
    %v596 = vpop.xlane.xlu0 %595
    %v597 = vsel %vm542, %v503, 0.0
    %598 = vadd.xlane.f32.xlu0 %v597
    %v599 = vpop.xlane.xlu0 %598
    %v600 = vsel %vm542, %v504, 0.0
    %601 = vadd.xlane.f32.xlu0 %v600
    %v602 = vpop.xlane.xlu0 %601
    %v603 = vsel %vm542, %v505, 0.0
    %604 = vadd.xlane.f32.xlu0 %v603
    %v605 = vpop.xlane.xlu0 %604
    %v606 = vsel %vm542, %v506, 0.0
    %607 = vadd.xlane.f32.xlu0 %v606
    %v608 = vpop.xlane.xlu0 %607
    %v609 = vsel %vm542, %v507, 0.0
    %610 = vadd.xlane.f32.xlu0 %v609
    %v611 = vpop.xlane.xlu0 %610
    %v612 = vsel %vm542, %v508, 0.0
    %613 = vadd.xlane.f32.xlu0 %v612
    %v614 = vpop.xlane.xlu0 %613
    %v615 = vsel %vm542, %v509, 0.0
    %616 = vadd.xlane.f32.xlu0 %v615
    %v617 = vpop.xlane.xlu0 %616
    %v618 = vsel %vm542, %v510, 0.0
    %619 = vadd.xlane.f32.xlu0 %v618
    %v620 = vpop.xlane.xlu0 %619
    %v621 = vsel %vm542, %v511, 0.0
    %622 = vadd.xlane.f32.xlu0 %v621
    %v623 = vpop.xlane.xlu0 %622
    %v624 = vsel %vm542, %v512, 0.0
    %625 = vadd.xlane.f32.xlu0 %v624
    %v626 = vpop.xlane.xlu0 %625
    %v627 = vsel %vm542, %v513, 0.0
    %628 = vadd.xlane.f32.xlu0 %v627
    %v629 = vpop.xlane.xlu0 %628
    %v630 = vsel %vm542, %v514, 0.0
    %631 = vadd.xlane.f32.xlu0 %v630
    %v632 = vpop.xlane.xlu0 %631
    %v633 = vsel %vm542, %v515, 0.0
    %634 = vadd.xlane.f32.xlu0 %v633
    %v635 = vpop.xlane.xlu0 %634
    %v636 = vsel %vm542, %v516, 0.0
    %637 = vadd.xlane.f32.xlu0 %v636
    %v638 = vpop.xlane.xlu0 %637
    %v639 = vrcp.pop 32.0
    %v640 = vmul.f32 %v545, %v639
    %v641 = vmul.f32 %v548, %v639
    %v642 = vmul.f32 %v551, %v639
    %v643 = vmul.f32 %v554, %v639
    %v644 = vmul.f32 %v557, %v639
    %v645 = vmul.f32 %v560, %v639
    %v646 = vmul.f32 %v563, %v639
    %v647 = vmul.f32 %v566, %v639
    %v648 = vmul.f32 %v569, %v639
    %v649 = vmul.f32 %v572, %v639
    %v650 = vmul.f32 %v575, %v639
    %v651 = vmul.f32 %v578, %v639
    %v652 = vmul.f32 %v581, %v639
    %v653 = vmul.f32 %v584, %v639
    %v654 = vmul.f32 %v587, %v639
    %v655 = vmul.f32 %v590, %v639
    %v656 = vmul.f32 %v593, %v639
    %v657 = vmul.f32 %v596, %v639
    %v658 = vmul.f32 %v599, %v639
    %v659 = vmul.f32 %v602, %v639
    %v660 = vmul.f32 %v605, %v639
    %v661 = vmul.f32 %v608, %v639
    %v662 = vmul.f32 %v611, %v639
    %v663 = vmul.f32 %v614, %v639
    %v664 = vmul.f32 %v617, %v639
    %v665 = vmul.f32 %v620, %v639
    %v666 = vmul.f32 %v623, %v639
    %v667 = vmul.f32 %v626, %v639
    %v668 = vmul.f32 %v629, %v639
    %v669 = vmul.f32 %v632, %v639
    %v670 = vmul.f32 %v635, %v639
    %v671 = vmul.f32 %v638, %v639
    %v672 = vsub.f32 %v485, %v640
    %v673 = vsub.f32 %v486, %v641
    %v674 = vsub.f32 %v487, %v642
    %v675 = vsub.f32 %v488, %v643
    %v676 = vsub.f32 %v489, %v644
    %v677 = vsub.f32 %v490, %v645
    %v678 = vsub.f32 %v491, %v646
    %v679 = vsub.f32 %v492, %v647
    %v680 = vsub.f32 %v493, %v648
    %v681 = vsub.f32 %v494, %v649
    %v682 = vsub.f32 %v495, %v650
    %v683 = vsub.f32 %v496, %v651
    %v684 = vsub.f32 %v497, %v652
    %v685 = vsub.f32 %v498, %v653
    %v686 = vsub.f32 %v499, %v654
    %v687 = vsub.f32 %v500, %v655
    %v688 = vsub.f32 %v501, %v656
    %v689 = vsub.f32 %v502, %v657
    %v690 = vsub.f32 %v503, %v658
    %v691 = vsub.f32 %v504, %v659
    %v692 = vsub.f32 %v505, %v660
    %v693 = vsub.f32 %v506, %v661
    %v694 = vsub.f32 %v507, %v662
    %v695 = vsub.f32 %v508, %v663
    %v696 = vsub.f32 %v509, %v664
    %v697 = vsub.f32 %v510, %v665
    %v698 = vsub.f32 %v511, %v666
    %v699 = vsub.f32 %v512, %v667
    %v700 = vsub.f32 %v513, %v668
    %v701 = vsub.f32 %v514, %v669
    %v702 = vsub.f32 %v515, %v670
    %v703 = vsub.f32 %v516, %v671
    %v704 = vmul.f32 %v672, %v672
    %v705 = vmul.f32 %v673, %v673
    %v706 = vmul.f32 %v674, %v674
    %v707 = vmul.f32 %v675, %v675
    %v708 = vmul.f32 %v676, %v676
    %v709 = vmul.f32 %v677, %v677
    %v710 = vmul.f32 %v678, %v678
    %v711 = vmul.f32 %v679, %v679
    %v712 = vmul.f32 %v680, %v680
    %v713 = vmul.f32 %v681, %v681
    %v714 = vmul.f32 %v682, %v682
    %v715 = vmul.f32 %v683, %v683
    %v716 = vmul.f32 %v684, %v684
    %v717 = vmul.f32 %v685, %v685
    %v718 = vmul.f32 %v686, %v686
    %v719 = vmul.f32 %v687, %v687
    %v720 = vmul.f32 %v688, %v688
    %v721 = vmul.f32 %v689, %v689
    %v722 = vmul.f32 %v690, %v690
    %v723 = vmul.f32 %v691, %v691
    %v724 = vmul.f32 %v692, %v692
    %v725 = vmul.f32 %v693, %v693
    %v726 = vmul.f32 %v694, %v694
    %v727 = vmul.f32 %v695, %v695
    %v728 = vmul.f32 %v696, %v696
    %v729 = vmul.f32 %v697, %v697
    %v730 = vmul.f32 %v698, %v698
    %v731 = vmul.f32 %v699, %v699
    %v732 = vmul.f32 %v700, %v700
    %v733 = vmul.f32 %v701, %v701
    %v734 = vmul.f32 %v702, %v702
    %v735 = vmul.f32 %v703, %v703
    %v736 = vsel %vm542, %v704, 0.0
    %737 = vadd.xlane.f32.xlu0 %v736
    %v738 = vpop.xlane.xlu0 %737
    %v739 = vsel %vm542, %v705, 0.0
    %740 = vadd.xlane.f32.xlu0 %v739
    %v741 = vpop.xlane.xlu0 %740
    %v742 = vsel %vm542, %v706, 0.0
    %743 = vadd.xlane.f32.xlu0 %v742
    %v744 = vpop.xlane.xlu0 %743
    %v745 = vsel %vm542, %v707, 0.0
    %746 = vadd.xlane.f32.xlu0 %v745
    %v747 = vpop.xlane.xlu0 %746
    %v748 = vsel %vm542, %v708, 0.0
    %749 = vadd.xlane.f32.xlu0 %v748
    %v750 = vpop.xlane.xlu0 %749
    %v751 = vsel %vm542, %v709, 0.0
    %752 = vadd.xlane.f32.xlu0 %v751
    %v753 = vpop.xlane.xlu0 %752
    %v754 = vsel %vm542, %v710, 0.0
    %755 = vadd.xlane.f32.xlu0 %v754
    %v756 = vpop.xlane.xlu0 %755
    %v757 = vsel %vm542, %v711, 0.0
    %758 = vadd.xlane.f32.xlu0 %v757
    %v759 = vpop.xlane.xlu0 %758
    %v760 = vsel %vm542, %v712, 0.0
    %761 = vadd.xlane.f32.xlu0 %v760
    %v762 = vpop.xlane.xlu0 %761
    %v763 = vsel %vm542, %v713, 0.0
    %764 = vadd.xlane.f32.xlu0 %v763
    %v765 = vpop.xlane.xlu0 %764
    %v766 = vsel %vm542, %v714, 0.0
    %767 = vadd.xlane.f32.xlu0 %v766
    %v768 = vpop.xlane.xlu0 %767
    %v769 = vsel %vm542, %v715, 0.0
    %770 = vadd.xlane.f32.xlu0 %v769
    %v771 = vpop.xlane.xlu0 %770
    %v772 = vsel %vm542, %v716, 0.0
    %773 = vadd.xlane.f32.xlu0 %v772
    %v774 = vpop.xlane.xlu0 %773
    %v775 = vsel %vm542, %v717, 0.0
    %776 = vadd.xlane.f32.xlu0 %v775
    %v777 = vpop.xlane.xlu0 %776
    %v778 = vsel %vm542, %v718, 0.0
    %779 = vadd.xlane.f32.xlu0 %v778
    %v780 = vpop.xlane.xlu0 %779
    %v781 = vsel %vm542, %v719, 0.0
    %782 = vadd.xlane.f32.xlu0 %v781
    %v783 = vpop.xlane.xlu0 %782
    %v784 = vsel %vm542, %v720, 0.0
    %785 = vadd.xlane.f32.xlu0 %v784
    %v786 = vpop.xlane.xlu0 %785
    %v787 = vsel %vm542, %v721, 0.0
    %788 = vadd.xlane.f32.xlu0 %v787
    %v789 = vpop.xlane.xlu0 %788
    %v790 = vsel %vm542, %v722, 0.0
    %791 = vadd.xlane.f32.xlu0 %v790
    %v792 = vpop.xlane.xlu0 %791
    %v793 = vsel %vm542, %v723, 0.0
    %794 = vadd.xlane.f32.xlu0 %v793
    %v795 = vpop.xlane.xlu0 %794
    %v796 = vsel %vm542, %v724, 0.0
    %797 = vadd.xlane.f32.xlu0 %v796
    %v798 = vpop.xlane.xlu0 %797
    %v799 = vsel %vm542, %v725, 0.0
    %800 = vadd.xlane.f32.xlu0 %v799
    %v801 = vpop.xlane.xlu0 %800
    %v802 = vsel %vm542, %v726, 0.0
    %803 = vadd.xlane.f32.xlu0 %v802
    %v804 = vpop.xlane.xlu0 %803
    %v805 = vsel %vm542, %v727, 0.0
    %806 = vadd.xlane.f32.xlu0 %v805
    %v807 = vpop.xlane.xlu0 %806
    %v808 = vsel %vm542, %v728, 0.0
    %809 = vadd.xlane.f32.xlu0 %v808
    %v810 = vpop.xlane.xlu0 %809
    %v811 = vsel %vm542, %v729, 0.0
    %812 = vadd.xlane.f32.xlu0 %v811
    %v813 = vpop.xlane.xlu0 %812
    %v814 = vsel %vm542, %v730, 0.0
    %815 = vadd.xlane.f32.xlu0 %v814
    %v816 = vpop.xlane.xlu0 %815
    %v817 = vsel %vm542, %v731, 0.0
    %818 = vadd.xlane.f32.xlu0 %v817
    %v819 = vpop.xlane.xlu0 %818
    %v820 = vsel %vm542, %v732, 0.0
    %821 = vadd.xlane.f32.xlu0 %v820
    %v822 = vpop.xlane.xlu0 %821
    %v823 = vsel %vm542, %v733, 0.0
    %824 = vadd.xlane.f32.xlu0 %v823
    %v825 = vpop.xlane.xlu0 %824
    %v826 = vsel %vm542, %v734, 0.0
    %827 = vadd.xlane.f32.xlu0 %v826
    %v828 = vpop.xlane.xlu0 %827
    %v829 = vsel %vm542, %v735, 0.0
    %830 = vadd.xlane.f32.xlu0 %v829
    %v831 = vpop.xlane.xlu0 %830
    %v832 = vmul.f32 %v738, %v639
    %v833 = vmul.f32 %v741, %v639
    %v834 = vmul.f32 %v744, %v639
    %v835 = vmul.f32 %v747, %v639
    %v836 = vmul.f32 %v750, %v639
    %v837 = vmul.f32 %v753, %v639
    %v838 = vmul.f32 %v756, %v639
    %v839 = vmul.f32 %v759, %v639
    %v840 = vmul.f32 %v762, %v639
    %v841 = vmul.f32 %v765, %v639
    %v842 = vmul.f32 %v768, %v639
    %v843 = vmul.f32 %v771, %v639
    %v844 = vmul.f32 %v774, %v639
    %v845 = vmul.f32 %v777, %v639
    %v846 = vmul.f32 %v780, %v639
    %v847 = vmul.f32 %v783, %v639
    %v848 = vmul.f32 %v786, %v639
    %v849 = vmul.f32 %v789, %v639
    %v850 = vmul.f32 %v792, %v639
    %v851 = vmul.f32 %v795, %v639
    %v852 = vmul.f32 %v798, %v639
    %v853 = vmul.f32 %v801, %v639
    %v854 = vmul.f32 %v804, %v639
    %v855 = vmul.f32 %v807, %v639
    %v856 = vmul.f32 %v810, %v639
    %v857 = vmul.f32 %v813, %v639
    %v858 = vmul.f32 %v816, %v639
    %v859 = vmul.f32 %v819, %v639
    %v860 = vmul.f32 %v822, %v639
    %v861 = vmul.f32 %v825, %v639
    %v862 = vmul.f32 %v828, %v639
    %v863 = vmul.f32 %v831, %v639
    %v864 = vadd.f32 %v832, 1e-05
    %v865 = vadd.f32 %v833, 1e-05
    %v866 = vadd.f32 %v834, 1e-05
    %v867 = vadd.f32 %v835, 1e-05
    %v868 = vadd.f32 %v836, 1e-05
    %v869 = vadd.f32 %v837, 1e-05
    %v870 = vadd.f32 %v838, 1e-05
    %v871 = vadd.f32 %v839, 1e-05
    %v872 = vadd.f32 %v840, 1e-05
    %v873 = vadd.f32 %v841, 1e-05
    %v874 = vadd.f32 %v842, 1e-05
    %v875 = vadd.f32 %v843, 1e-05
    %v876 = vadd.f32 %v844, 1e-05
    %v877 = vadd.f32 %v845, 1e-05
    %v878 = vadd.f32 %v846, 1e-05
    %v879 = vadd.f32 %v847, 1e-05
    %v880 = vadd.f32 %v848, 1e-05
    %v881 = vadd.f32 %v849, 1e-05
    %v882 = vadd.f32 %v850, 1e-05
    %v883 = vadd.f32 %v851, 1e-05
    %v884 = vadd.f32 %v852, 1e-05
    %v885 = vadd.f32 %v853, 1e-05
    %v886 = vadd.f32 %v854, 1e-05
    %v887 = vadd.f32 %v855, 1e-05
    %v888 = vadd.f32 %v856, 1e-05
    %v889 = vadd.f32 %v857, 1e-05
    %v890 = vadd.f32 %v858, 1e-05
    %v891 = vadd.f32 %v859, 1e-05
    %v892 = vadd.f32 %v860, 1e-05
    %v893 = vadd.f32 %v861, 1e-05
    %v894 = vadd.f32 %v862, 1e-05
    %v895 = vadd.f32 %v863, 1e-05
    %v896 = vrsqrt.pop %v864
    %v897 = vrsqrt.pop %v865
    %v898 = vrsqrt.pop %v866
    %v899 = vrsqrt.pop %v867
    %v900 = vrsqrt.pop %v868
    %v901 = vrsqrt.pop %v869
    %v902 = vrsqrt.pop %v870
    %v903 = vrsqrt.pop %v871
    %v904 = vrsqrt.pop %v872
    %v905 = vrsqrt.pop %v873
    %v906 = vrsqrt.pop %v874
    %v907 = vrsqrt.pop %v875
    %v908 = vrsqrt.pop %v876
    %v909 = vrsqrt.pop %v877
    %v910 = vrsqrt.pop %v878
    %v911 = vrsqrt.pop %v879
    %v912 = vrsqrt.pop %v880
    %v913 = vrsqrt.pop %v881
    %v914 = vrsqrt.pop %v882
    %v915 = vrsqrt.pop %v883
    %v916 = vrsqrt.pop %v884
    %v917 = vrsqrt.pop %v885
    %v918 = vrsqrt.pop %v886
    %v919 = vrsqrt.pop %v887
    %v920 = vrsqrt.pop %v888
    %v921 = vrsqrt.pop %v889
    %v922 = vrsqrt.pop %v890
    %v923 = vrsqrt.pop %v891
    %v924 = vrsqrt.pop %v892
    %v925 = vrsqrt.pop %v893
    %v926 = vrsqrt.pop %v894
    %v927 = vrsqrt.pop %v895
    %v928 = vmul.f32 %v672, %v896
    %v929 = vmul.f32 %v673, %v897
    %v930 = vmul.f32 %v674, %v898
    %v931 = vmul.f32 %v675, %v899
    %v932 = vmul.f32 %v676, %v900
    %v933 = vmul.f32 %v677, %v901
    %v934 = vmul.f32 %v678, %v902
    %v935 = vmul.f32 %v679, %v903
    %v936 = vmul.f32 %v680, %v904
    %v937 = vmul.f32 %v681, %v905
    %v938 = vmul.f32 %v682, %v906
    %v939 = vmul.f32 %v683, %v907
    %v940 = vmul.f32 %v684, %v908
    %v941 = vmul.f32 %v685, %v909
    %v942 = vmul.f32 %v686, %v910
    %v943 = vmul.f32 %v687, %v911
    %v944 = vmul.f32 %v688, %v912
    %v945 = vmul.f32 %v689, %v913
    %v946 = vmul.f32 %v690, %v914
    %v947 = vmul.f32 %v691, %v915
    %v948 = vmul.f32 %v692, %v916
    %v949 = vmul.f32 %v693, %v917
    %v950 = vmul.f32 %v694, %v918
    %v951 = vmul.f32 %v695, %v919
    %v952 = vmul.f32 %v696, %v920
    %v953 = vmul.f32 %v697, %v921
    %v954 = vmul.f32 %v698, %v922
    %v955 = vmul.f32 %v699, %v923
    %v956 = vmul.f32 %v700, %v924
    %v957 = vmul.f32 %v701, %v925
    %v958 = vmul.f32 %v702, %v926
    %v959 = vmul.f32 %v703, %v927
    %v961 = vlaneseq
    %v962 = vshrl.u32 %v961, 7
    %v963 = vsub.s32 0, %v962
    %v964 = vrot.slane %v517, %v963
    %v966 = vmul.f32 %v928, %v964
    %v967 = vmul.f32 %v929, %v964
    %v968 = vmul.f32 %v930, %v964
    %v969 = vmul.f32 %v931, %v964
    %v970 = vmul.f32 %v932, %v964
    %v971 = vmul.f32 %v933, %v964
    %v972 = vmul.f32 %v934, %v964
    %v973 = vmul.f32 %v935, %v964
    %v974 = vmul.f32 %v936, %v964
    %v975 = vmul.f32 %v937, %v964
    %v976 = vmul.f32 %v938, %v964
    %v977 = vmul.f32 %v939, %v964
    %v978 = vmul.f32 %v940, %v964
    %v979 = vmul.f32 %v941, %v964
    %v980 = vmul.f32 %v942, %v964
    %v981 = vmul.f32 %v943, %v964
    %v982 = vmul.f32 %v944, %v964
    %v983 = vmul.f32 %v945, %v964
    %v984 = vmul.f32 %v946, %v964
    %v985 = vmul.f32 %v947, %v964
    %v986 = vmul.f32 %v948, %v964
    %v987 = vmul.f32 %v949, %v964
    %v988 = vmul.f32 %v950, %v964
    %v989 = vmul.f32 %v951, %v964
    %v990 = vmul.f32 %v952, %v964
    %v991 = vmul.f32 %v953, %v964
    %v992 = vmul.f32 %v954, %v964
    %v993 = vmul.f32 %v955, %v964
    %v994 = vmul.f32 %v956, %v964
    %v995 = vmul.f32 %v957, %v964
    %v996 = vmul.f32 %v958, %v964
    %v997 = vmul.f32 %v959, %v964
    %v999 = vlaneseq
    %v1000 = vshrl.u32 %v999, 7
    %v1001 = vsub.s32 0, %v1000
    %v1002 = vrot.slane %v518, %v1001
    %v1004 = vadd.f32 %v966, %v1002
    %v1005 = vadd.f32 %v967, %v1002
    %v1006 = vadd.f32 %v968, %v1002
    %v1007 = vadd.f32 %v969, %v1002
    %v1008 = vadd.f32 %v970, %v1002
    %v1009 = vadd.f32 %v971, %v1002
    %v1010 = vadd.f32 %v972, %v1002
    %v1011 = vadd.f32 %v973, %v1002
    %v1012 = vadd.f32 %v974, %v1002
    %v1013 = vadd.f32 %v975, %v1002
    %v1014 = vadd.f32 %v976, %v1002
    %v1015 = vadd.f32 %v977, %v1002
    %v1016 = vadd.f32 %v978, %v1002
    %v1017 = vadd.f32 %v979, %v1002
    %v1018 = vadd.f32 %v980, %v1002
    %v1019 = vadd.f32 %v981, %v1002
    %v1020 = vadd.f32 %v982, %v1002
    %v1021 = vadd.f32 %v983, %v1002
    %v1022 = vadd.f32 %v984, %v1002
    %v1023 = vadd.f32 %v985, %v1002
    %v1024 = vadd.f32 %v986, %v1002
    %v1025 = vadd.f32 %v987, %v1002
    %v1026 = vadd.f32 %v988, %v1002
    %v1027 = vadd.f32 %v989, %v1002
    %v1028 = vadd.f32 %v990, %v1002
    %v1029 = vadd.f32 %v991, %v1002
    %v1030 = vadd.f32 %v992, %v1002
    %v1031 = vadd.f32 %v993, %v1002
    %v1032 = vadd.f32 %v994, %v1002
    %v1033 = vadd.f32 %v995, %v1002
    %v1034 = vadd.f32 %v996, %v1002
    %v1035 = vadd.f32 %v997, %v1002
    %v1036 = vpack.c.bf16 %v1005, %v1004
    %v1037 = vpack.c.bf16 %v1007, %v1006
    %v1038 = vpack.c.bf16 %v1009, %v1008
    %v1039 = vpack.c.bf16 %v1011, %v1010
    %v1040 = vpack.c.bf16 %v1013, %v1012
    %v1041 = vpack.c.bf16 %v1015, %v1014
    %v1042 = vpack.c.bf16 %v1017, %v1016
    %v1043 = vpack.c.bf16 %v1019, %v1018
    %v1044 = vpack.c.bf16 %v1021, %v1020
    %v1045 = vpack.c.bf16 %v1023, %v1022
    %v1046 = vpack.c.bf16 %v1025, %v1024
    %v1047 = vpack.c.bf16 %v1027, %v1026
    %v1048 = vpack.c.bf16 %v1029, %v1028
    %v1049 = vpack.c.bf16 %v1031, %v1030
    %v1050 = vpack.c.bf16 %v1033, %v1032
    %v1051 = vpack.c.bf16 %v1035, %v1034
    %v1053 = vlaneseq
    %v1054 = vshrl.u32 %v1053, 7
    %v1055 = vsub.s32 0, %v1054
    %v1056 = vrot.slane %v523, %v1055
    %v1062 = vunpack.c.l.b16 %v519
    %v1063 = vunpack.c.l.b16 %v520
    %v1064 = vunpack.c.l.b16 %v521
    %v1065 = vunpack.c.l.b16 %v522
    %v1066 = vpack.c.b16 %v1063, %v1062
    %v1067 = vpack.c.b16 %v1065, %v1064
    %v1071 = vsel %vm542, %v1036, 0
    %v1074 = vsel %vm542, %v1037, 0
    %v1077 = vsel %vm542, %v1038, 0
    %v1080 = vsel %vm542, %v1039, 0
    %v1083 = vsel %vm542, %v1040, 0
    %v1086 = vsel %vm542, %v1041, 0
    %v1089 = vsel %vm542, %v1042, 0
    %v1092 = vsel %vm542, %v1043, 0
    %v1095 = vsel %vm542, %v1044, 0
    %v1098 = vsel %vm542, %v1045, 0
    %v1101 = vsel %vm542, %v1046, 0
    %v1104 = vsel %vm542, %v1047, 0
    %v1107 = vsel %vm542, %v1048, 0
    %v1110 = vsel %vm542, %v1049, 0
    %v1113 = vsel %vm542, %v1050, 0
    %v1116 = vsel %vm542, %v1051, 0
    %1118 = vmatprep.subr.bf16.mxu0 0
    %1119 = vmatpush1.bf16.msra.mxu0 %v1066
    %1120 = vmatprep.subr.bf16.mxu0 0
    %1121 = vmatpush1.bf16.msra.mxu0 %v1067
    %1122 = vmatprep.subr.bf16.mxu0 0
    %1123 = vmatpush1.bf16.msra.mxu0 0
    %1124 = vmatprep.subr.bf16.mxu0 0
    %1125 = vmatpush1.bf16.msra.mxu0 0
    %1126 = vmatprep.subr.bf16.mxu0 0
    %1127 = vmatpush1.bf16.msra.mxu0 0
    %1128 = vmatprep.subr.bf16.mxu0 0
    %1129 = vmatpush1.bf16.msra.mxu0 0
    %1130 = vmatprep.subr.bf16.mxu0 0
    %1131 = vmatpush1.bf16.msra.mxu0 0
    %1132 = vmatprep.subr.bf16.mxu0 0
    %1133 = vmatpush1.bf16.msra.mxu0 0
    %1134 = vmatprep.subr.bf16.mxu0 0
    %1135 = vmatpush1.bf16.msra.mxu0 0
    %1136 = vmatprep.subr.bf16.mxu0 0
    %1137 = vmatpush1.bf16.msra.mxu0 0
    %1138 = vmatprep.subr.bf16.mxu0 0
    %1139 = vmatpush1.bf16.msra.mxu0 0
    %1140 = vmatprep.subr.bf16.mxu0 0
    %1141 = vmatpush1.bf16.msra.mxu0 0
    %1142 = vmatprep.subr.bf16.mxu0 0
    %1143 = vmatpush1.bf16.msra.mxu0 0
    %1144 = vmatprep.subr.bf16.mxu0 0
    %1145 = vmatpush1.bf16.msra.mxu0 0
    %1146 = vmatprep.subr.bf16.mxu0 0
    %1147 = vmatpush1.bf16.msra.mxu0 0
    %1148 = vmatprep.subr.bf16.mxu0 0
    %1149 = vmatpush1.bf16.msra.mxu0 0
    %1150 = vmatprep.mubr.bf16.mxu0 0
    %1151 = vmatmul.mubr.bf16.gmra.mrb[0].mxu0 %v1071
    %v1152 = vpop.f32.mrb[0].mxu0
    %v1153 = vadd.f32 %v1056, %v1152
    %v1154 = vpop.f32.mrb[0].mxu0
    %v1155 = vpop.f32.mrb[0].mxu0
    %v1156 = vadd.f32 %v1056, %v1155
    %v1157 = vpop.f32.mrb[0].mxu0
    %1158 = vmatprep.mubr.bf16.mxu0 0
    %1159 = vmatmul.mubr.bf16.gmra.mrb[0].mxu0 %v1074
    %v1160 = vpop.f32.mrb[0].mxu0
    %v1161 = vadd.f32 %v1056, %v1160
    %v1162 = vpop.f32.mrb[0].mxu0
    %v1163 = vpop.f32.mrb[0].mxu0
    %v1164 = vadd.f32 %v1056, %v1163
    %v1165 = vpop.f32.mrb[0].mxu0
    %1166 = vmatprep.mubr.bf16.mxu0 0
    %1167 = vmatmul.mubr.bf16.gmra.mrb[0].mxu0 %v1077
    %v1168 = vpop.f32.mrb[0].mxu0
    %v1169 = vadd.f32 %v1056, %v1168
    %v1170 = vpop.f32.mrb[0].mxu0
    %v1171 = vpop.f32.mrb[0].mxu0
    %v1172 = vadd.f32 %v1056, %v1171
    %v1173 = vpop.f32.mrb[0].mxu0
    %1174 = vmatprep.mubr.bf16.mxu0 0
    %1175 = vmatmul.mubr.bf16.gmra.mrb[0].mxu0 %v1080
    %v1176 = vpop.f32.mrb[0].mxu0
    %v1177 = vadd.f32 %v1056, %v1176
    %v1178 = vpop.f32.mrb[0].mxu0
    %v1179 = vpop.f32.mrb[0].mxu0
    %v1180 = vadd.f32 %v1056, %v1179
    %v1181 = vpop.f32.mrb[0].mxu0
    %1182 = vmatprep.mubr.bf16.mxu0 0
    %1183 = vmatmul.mubr.bf16.gmra.mrb[0].mxu0 %v1083
    %v1184 = vpop.f32.mrb[0].mxu0
    %v1185 = vadd.f32 %v1056, %v1184
    %v1186 = vpop.f32.mrb[0].mxu0
    %v1187 = vpop.f32.mrb[0].mxu0
    %v1188 = vadd.f32 %v1056, %v1187
    %v1189 = vpop.f32.mrb[0].mxu0
    %1190 = vmatprep.mubr.bf16.mxu0 0
    %1191 = vmatmul.mubr.bf16.gmra.mrb[0].mxu0 %v1086
    %v1192 = vpop.f32.mrb[0].mxu0
    %v1193 = vadd.f32 %v1056, %v1192
    %v1194 = vpop.f32.mrb[0].mxu0
    %v1195 = vpop.f32.mrb[0].mxu0
    %v1196 = vadd.f32 %v1056, %v1195
    %v1197 = vpop.f32.mrb[0].mxu0
    %1198 = vmatprep.mubr.bf16.mxu0 0
    %1199 = vmatmul.mubr.bf16.gmra.mrb[0].mxu0 %v1089
    %v1200 = vpop.f32.mrb[0].mxu0
    %v1201 = vadd.f32 %v1056, %v1200
    %v1202 = vpop.f32.mrb[0].mxu0
    %v1203 = vpop.f32.mrb[0].mxu0
    %v1204 = vadd.f32 %v1056, %v1203
    %v1205 = vpop.f32.mrb[0].mxu0
    %1206 = vmatprep.mubr.bf16.mxu0 0
    %1207 = vmatmul.mubr.bf16.gmra.mrb[0].mxu0 %v1092
    %v1208 = vpop.f32.mrb[0].mxu0
    %v1209 = vadd.f32 %v1056, %v1208
    %v1210 = vpop.f32.mrb[0].mxu0
    %v1211 = vpop.f32.mrb[0].mxu0
    %v1212 = vadd.f32 %v1056, %v1211
    %v1213 = vpop.f32.mrb[0].mxu0
    %1214 = vmatprep.mubr.bf16.mxu0 0
    %1215 = vmatmul.mubr.bf16.gmra.mrb[0].mxu0 %v1095
    %v1216 = vpop.f32.mrb[0].mxu0
    %v1217 = vadd.f32 %v1056, %v1216
    %v1218 = vpop.f32.mrb[0].mxu0
    %v1219 = vpop.f32.mrb[0].mxu0
    %v1220 = vadd.f32 %v1056, %v1219
    %v1221 = vpop.f32.mrb[0].mxu0
    %1222 = vmatprep.mubr.bf16.mxu0 0
    %1223 = vmatmul.mubr.bf16.gmra.mrb[0].mxu0 %v1098
    %v1224 = vpop.f32.mrb[0].mxu0
    %v1225 = vadd.f32 %v1056, %v1224
    %v1226 = vpop.f32.mrb[0].mxu0
    %v1227 = vpop.f32.mrb[0].mxu0
    %v1228 = vadd.f32 %v1056, %v1227
    %v1229 = vpop.f32.mrb[0].mxu0
    %1230 = vmatprep.mubr.bf16.mxu0 0
    %1231 = vmatmul.mubr.bf16.gmra.mrb[0].mxu0 %v1101
    %v1232 = vpop.f32.mrb[0].mxu0
    %v1233 = vadd.f32 %v1056, %v1232
    %v1234 = vpop.f32.mrb[0].mxu0
    %v1235 = vpop.f32.mrb[0].mxu0
    %v1236 = vadd.f32 %v1056, %v1235
    %v1237 = vpop.f32.mrb[0].mxu0
    %1238 = vmatprep.mubr.bf16.mxu0 0
    %1239 = vmatmul.mubr.bf16.gmra.mrb[0].mxu0 %v1104
    %v1240 = vpop.f32.mrb[0].mxu0
    %v1241 = vadd.f32 %v1056, %v1240
    %v1242 = vpop.f32.mrb[0].mxu0
    %v1243 = vpop.f32.mrb[0].mxu0
    %v1244 = vadd.f32 %v1056, %v1243
    %v1245 = vpop.f32.mrb[0].mxu0
    %1246 = vmatprep.mubr.bf16.mxu0 0
    %1247 = vmatmul.mubr.bf16.gmra.mrb[0].mxu0 %v1107
    %v1248 = vpop.f32.mrb[0].mxu0
    %v1249 = vadd.f32 %v1056, %v1248
    %v1250 = vpop.f32.mrb[0].mxu0
    %v1251 = vpop.f32.mrb[0].mxu0
    %v1252 = vadd.f32 %v1056, %v1251
    %v1253 = vpop.f32.mrb[0].mxu0
    %1254 = vmatprep.mubr.bf16.mxu0 0
    %1255 = vmatmul.mubr.bf16.gmra.mrb[0].mxu0 %v1110
    %v1256 = vpop.f32.mrb[0].mxu0
    %v1257 = vadd.f32 %v1056, %v1256
    %v1258 = vpop.f32.mrb[0].mxu0
    %v1259 = vpop.f32.mrb[0].mxu0
    %v1260 = vadd.f32 %v1056, %v1259
    %v1261 = vpop.f32.mrb[0].mxu0
    %1262 = vmatprep.mubr.bf16.mxu0 0
    %1263 = vmatmul.mubr.bf16.gmra.mrb[0].mxu0 %v1113
    %v1264 = vpop.f32.mrb[0].mxu0
    %v1265 = vadd.f32 %v1056, %v1264
    %v1266 = vpop.f32.mrb[0].mxu0
    %v1267 = vpop.f32.mrb[0].mxu0
    %v1268 = vadd.f32 %v1056, %v1267
    %v1269 = vpop.f32.mrb[0].mxu0
    %1270 = vmatprep.mubr.bf16.mxu0 0
    %1271 = vmatmul.mubr.bf16.gmra.mrb[0].mxu0 %v1116
    %v1272 = vpop.f32.mrb[0].mxu0
    %v1273 = vadd.f32 %v1056, %v1272
    %v1274 = vpop.f32.mrb[0].mxu0
    %v1275 = vpop.f32.mrb[0].mxu0
    %v1276 = vadd.f32 %v1056, %v1275
    %v1277 = vpop.f32.mrb[0].mxu0
    %1278 = vdwg.mxu0
    %v1280 = vlaneseq
    %v1281 = vshrl.u32 %v1280, 7
    %v1282 = vsub.s32 0, %v1281
    %v1283 = vrot.slane %v528, %v1282
    %v1289 = vunpack.c.l.b16 %v524
    %v1290 = vunpack.c.l.b16 %v525
    %v1291 = vunpack.c.l.b16 %v526
    %v1292 = vunpack.c.l.b16 %v527
    %v1293 = vpack.c.b16 %v1290, %v1289
    %v1294 = vpack.c.b16 %v1292, %v1291
    %1297 = vmatprep.subr.bf16.mxu0 0
    %1298 = vmatpush1.bf16.msra.mxu0 %v1293
    %1299 = vmatprep.subr.bf16.mxu0 0
    %1300 = vmatpush1.bf16.msra.mxu0 %v1294
    %1301 = vmatprep.subr.bf16.mxu0 0
    %1302 = vmatpush1.bf16.msra.mxu0 0
    %1303 = vmatprep.subr.bf16.mxu0 0
    %1304 = vmatpush1.bf16.msra.mxu0 0
    %1305 = vmatprep.subr.bf16.mxu0 0
    %1306 = vmatpush1.bf16.msra.mxu0 0
    %1307 = vmatprep.subr.bf16.mxu0 0
    %1308 = vmatpush1.bf16.msra.mxu0 0
    %1309 = vmatprep.subr.bf16.mxu0 0
    %1310 = vmatpush1.bf16.msra.mxu0 0
    %1311 = vmatprep.subr.bf16.mxu0 0
    %1312 = vmatpush1.bf16.msra.mxu0 0
    %1313 = vmatprep.subr.bf16.mxu0 0
    %1314 = vmatpush1.bf16.msra.mxu0 0
    %1315 = vmatprep.subr.bf16.mxu0 0
    %1316 = vmatpush1.bf16.msra.mxu0 0
    %1317 = vmatprep.subr.bf16.mxu0 0
    %1318 = vmatpush1.bf16.msra.mxu0 0
    %1319 = vmatprep.subr.bf16.mxu0 0
    %1320 = vmatpush1.bf16.msra.mxu0 0
    %1321 = vmatprep.subr.bf16.mxu0 0
    %1322 = vmatpush1.bf16.msra.mxu0 0
    %1323 = vmatprep.subr.bf16.mxu0 0
    %1324 = vmatpush1.bf16.msra.mxu0 0
    %1325 = vmatprep.subr.bf16.mxu0 0
    %1326 = vmatpush1.bf16.msra.mxu0 0
    %1327 = vmatprep.subr.bf16.mxu0 0
    %1328 = vmatpush1.bf16.msra.mxu0 0
    %1329 = vmatprep.mubr.bf16.mxu0 0
    %1330 = vmatmul.mubr.bf16.gmra.mrb[0].mxu0 %v1071
    %v1331 = vpop.f32.mrb[0].mxu0
    %v1332 = vadd.f32 %v1283, %v1331
    %v1333 = vpop.f32.mrb[0].mxu0
    %v1334 = vpop.f32.mrb[0].mxu0
    %v1335 = vadd.f32 %v1283, %v1334
    %v1336 = vpop.f32.mrb[0].mxu0
    %1337 = vmatprep.mubr.bf16.mxu0 0
    %1338 = vmatmul.mubr.bf16.gmra.mrb[0].mxu0 %v1074
    %v1339 = vpop.f32.mrb[0].mxu0
    %v1340 = vadd.f32 %v1283, %v1339
    %v1341 = vpop.f32.mrb[0].mxu0
    %v1342 = vpop.f32.mrb[0].mxu0
    %v1343 = vadd.f32 %v1283, %v1342
    %v1344 = vpop.f32.mrb[0].mxu0
    %1345 = vmatprep.mubr.bf16.mxu0 0
    %1346 = vmatmul.mubr.bf16.gmra.mrb[0].mxu0 %v1077
    %v1347 = vpop.f32.mrb[0].mxu0
    %v1348 = vadd.f32 %v1283, %v1347
    %v1349 = vpop.f32.mrb[0].mxu0
    %v1350 = vpop.f32.mrb[0].mxu0
    %v1351 = vadd.f32 %v1283, %v1350
    %v1352 = vpop.f32.mrb[0].mxu0
    %1353 = vmatprep.mubr.bf16.mxu0 0
    %1354 = vmatmul.mubr.bf16.gmra.mrb[0].mxu0 %v1080
    %v1355 = vpop.f32.mrb[0].mxu0
    %v1356 = vadd.f32 %v1283, %v1355
    %v1357 = vpop.f32.mrb[0].mxu0
    %v1358 = vpop.f32.mrb[0].mxu0
    %v1359 = vadd.f32 %v1283, %v1358
    %v1360 = vpop.f32.mrb[0].mxu0
    %1361 = vmatprep.mubr.bf16.mxu0 0
    %1362 = vmatmul.mubr.bf16.gmra.mrb[0].mxu0 %v1083
    %v1363 = vpop.f32.mrb[0].mxu0
    %v1364 = vadd.f32 %v1283, %v1363
    %v1365 = vpop.f32.mrb[0].mxu0
    %v1366 = vpop.f32.mrb[0].mxu0
    %v1367 = vadd.f32 %v1283, %v1366
    %v1368 = vpop.f32.mrb[0].mxu0
    %1369 = vmatprep.mubr.bf16.mxu0 0
    %1370 = vmatmul.mubr.bf16.gmra.mrb[0].mxu0 %v1086
    %v1371 = vpop.f32.mrb[0].mxu0
    %v1372 = vadd.f32 %v1283, %v1371
    %v1373 = vpop.f32.mrb[0].mxu0
    %v1374 = vpop.f32.mrb[0].mxu0
    %v1375 = vadd.f32 %v1283, %v1374
    %v1376 = vpop.f32.mrb[0].mxu0
    %1377 = vmatprep.mubr.bf16.mxu0 0
    %1378 = vmatmul.mubr.bf16.gmra.mrb[0].mxu0 %v1089
    %v1379 = vpop.f32.mrb[0].mxu0
    %v1380 = vadd.f32 %v1283, %v1379
    %v1381 = vpop.f32.mrb[0].mxu0
    %v1382 = vpop.f32.mrb[0].mxu0
    %v1383 = vadd.f32 %v1283, %v1382
    %v1384 = vpop.f32.mrb[0].mxu0
    %1385 = vmatprep.mubr.bf16.mxu0 0
    %1386 = vmatmul.mubr.bf16.gmra.mrb[0].mxu0 %v1092
    %v1387 = vpop.f32.mrb[0].mxu0
    %v1388 = vadd.f32 %v1283, %v1387
    %v1389 = vpop.f32.mrb[0].mxu0
    %v1390 = vpop.f32.mrb[0].mxu0
    %v1391 = vadd.f32 %v1283, %v1390
    %v1392 = vpop.f32.mrb[0].mxu0
    %1393 = vmatprep.mubr.bf16.mxu0 0
    %1394 = vmatmul.mubr.bf16.gmra.mrb[0].mxu0 %v1095
    %v1395 = vpop.f32.mrb[0].mxu0
    %v1396 = vadd.f32 %v1283, %v1395
    %v1397 = vpop.f32.mrb[0].mxu0
    %v1398 = vpop.f32.mrb[0].mxu0
    %v1399 = vadd.f32 %v1283, %v1398
    %v1400 = vpop.f32.mrb[0].mxu0
    %1401 = vmatprep.mubr.bf16.mxu0 0
    %1402 = vmatmul.mubr.bf16.gmra.mrb[0].mxu0 %v1098
    %v1403 = vpop.f32.mrb[0].mxu0
    %v1404 = vadd.f32 %v1283, %v1403
    %v1405 = vpop.f32.mrb[0].mxu0
    %v1406 = vpop.f32.mrb[0].mxu0
    %v1407 = vadd.f32 %v1283, %v1406
    %v1408 = vpop.f32.mrb[0].mxu0
    %1409 = vmatprep.mubr.bf16.mxu0 0
    %1410 = vmatmul.mubr.bf16.gmra.mrb[0].mxu0 %v1101
    %v1411 = vpop.f32.mrb[0].mxu0
    %v1412 = vadd.f32 %v1283, %v1411
    %v1413 = vpop.f32.mrb[0].mxu0
    %v1414 = vpop.f32.mrb[0].mxu0
    %v1415 = vadd.f32 %v1283, %v1414
    %v1416 = vpop.f32.mrb[0].mxu0
    %1417 = vmatprep.mubr.bf16.mxu0 0
    %1418 = vmatmul.mubr.bf16.gmra.mrb[0].mxu0 %v1104
    %v1419 = vpop.f32.mrb[0].mxu0
    %v1420 = vadd.f32 %v1283, %v1419
    %v1421 = vpop.f32.mrb[0].mxu0
    %v1422 = vpop.f32.mrb[0].mxu0
    %v1423 = vadd.f32 %v1283, %v1422
    %v1424 = vpop.f32.mrb[0].mxu0
    %1425 = vmatprep.mubr.bf16.mxu0 0
    %1426 = vmatmul.mubr.bf16.gmra.mrb[0].mxu0 %v1107
    %v1427 = vpop.f32.mrb[0].mxu0
    %v1428 = vadd.f32 %v1283, %v1427
    %v1429 = vpop.f32.mrb[0].mxu0
    %v1430 = vpop.f32.mrb[0].mxu0
    %v1431 = vadd.f32 %v1283, %v1430
    %v1432 = vpop.f32.mrb[0].mxu0
    %1433 = vmatprep.mubr.bf16.mxu0 0
    %1434 = vmatmul.mubr.bf16.gmra.mrb[0].mxu0 %v1110
    %v1435 = vpop.f32.mrb[0].mxu0
    %v1436 = vadd.f32 %v1283, %v1435
    %v1437 = vpop.f32.mrb[0].mxu0
    %v1438 = vpop.f32.mrb[0].mxu0
    %v1439 = vadd.f32 %v1283, %v1438
    %v1440 = vpop.f32.mrb[0].mxu0
    %1441 = vmatprep.mubr.bf16.mxu0 0
    %1442 = vmatmul.mubr.bf16.gmra.mrb[0].mxu0 %v1113
    %v1443 = vpop.f32.mrb[0].mxu0
    %v1444 = vadd.f32 %v1283, %v1443
    %v1445 = vpop.f32.mrb[0].mxu0
    %v1446 = vpop.f32.mrb[0].mxu0
    %v1447 = vadd.f32 %v1283, %v1446
    %v1448 = vpop.f32.mrb[0].mxu0
    %1449 = vmatprep.mubr.bf16.mxu0 0
    %1450 = vmatmul.mubr.bf16.gmra.mrb[0].mxu0 %v1116
    %v1451 = vpop.f32.mrb[0].mxu0
    %v1452 = vadd.f32 %v1283, %v1451
    %v1453 = vpop.f32.mrb[0].mxu0
    %v1454 = vpop.f32.mrb[0].mxu0
    %v1455 = vadd.f32 %v1283, %v1454
    %v1456 = vpop.f32.mrb[0].mxu0
    %1457 = vdwg.mxu0
    %v1458 = vmax.f32 %v1153, 0.0
    %v1459 = vmax.f32 %v1156, 0.0
    %v1460 = vmax.f32 %v1161, 0.0
    %v1461 = vmax.f32 %v1164, 0.0
    %v1462 = vmax.f32 %v1169, 0.0
    %v1463 = vmax.f32 %v1172, 0.0
    %v1464 = vmax.f32 %v1177, 0.0
    %v1465 = vmax.f32 %v1180, 0.0
    %v1466 = vmax.f32 %v1185, 0.0
    %v1467 = vmax.f32 %v1188, 0.0
    %v1468 = vmax.f32 %v1193, 0.0
    %v1469 = vmax.f32 %v1196, 0.0
    %v1470 = vmax.f32 %v1201, 0.0
    %v1471 = vmax.f32 %v1204, 0.0
    %v1472 = vmax.f32 %v1209, 0.0
    %v1473 = vmax.f32 %v1212, 0.0
    %v1474 = vmax.f32 %v1217, 0.0
    %v1475 = vmax.f32 %v1220, 0.0
    %v1476 = vmax.f32 %v1225, 0.0
    %v1477 = vmax.f32 %v1228, 0.0
    %v1478 = vmax.f32 %v1233, 0.0
    %v1479 = vmax.f32 %v1236, 0.0
    %v1480 = vmax.f32 %v1241, 0.0
    %v1481 = vmax.f32 %v1244, 0.0
    %v1482 = vmax.f32 %v1249, 0.0
    %v1483 = vmax.f32 %v1252, 0.0
    %v1484 = vmax.f32 %v1257, 0.0
    %v1485 = vmax.f32 %v1260, 0.0
    %v1486 = vmax.f32 %v1265, 0.0
    %v1487 = vmax.f32 %v1268, 0.0
    %v1488 = vmax.f32 %v1273, 0.0
    %v1489 = vmax.f32 %v1276, 0.0
    %v1490 = vadd.f32 %v1458, %v1332
    %v1491 = vadd.f32 %v1459, %v1335
    %v1492 = vadd.f32 %v1460, %v1340
    %v1493 = vadd.f32 %v1461, %v1343
    %v1494 = vadd.f32 %v1462, %v1348
    %v1495 = vadd.f32 %v1463, %v1351
    %v1496 = vadd.f32 %v1464, %v1356
    %v1497 = vadd.f32 %v1465, %v1359
    %v1498 = vadd.f32 %v1466, %v1364
    %v1499 = vadd.f32 %v1467, %v1367
    %v1500 = vadd.f32 %v1468, %v1372
    %v1501 = vadd.f32 %v1469, %v1375
    %v1502 = vadd.f32 %v1470, %v1380
    %v1503 = vadd.f32 %v1471, %v1383
    %v1504 = vadd.f32 %v1472, %v1388
    %v1505 = vadd.f32 %v1473, %v1391
    %v1506 = vadd.f32 %v1474, %v1396
    %v1507 = vadd.f32 %v1475, %v1399
    %v1508 = vadd.f32 %v1476, %v1404
    %v1509 = vadd.f32 %v1477, %v1407
    %v1510 = vadd.f32 %v1478, %v1412
    %v1511 = vadd.f32 %v1479, %v1415
    %v1512 = vadd.f32 %v1480, %v1420
    %v1513 = vadd.f32 %v1481, %v1423
    %v1514 = vadd.f32 %v1482, %v1428
    %v1515 = vadd.f32 %v1483, %v1431
    %v1516 = vadd.f32 %v1484, %v1436
    %v1517 = vadd.f32 %v1485, %v1439
    %v1518 = vadd.f32 %v1486, %v1444
    %v1519 = vadd.f32 %v1487, %v1447
    %v1520 = vadd.f32 %v1488, %v1452
    %v1521 = vadd.f32 %v1489, %v1455
    %v1522 = vpack.c.bf16 %v1491, %v1490
    %v1523 = vpack.c.bf16 %v1493, %v1492
    %v1524 = vpack.c.bf16 %v1495, %v1494
    %v1525 = vpack.c.bf16 %v1497, %v1496
    %v1526 = vpack.c.bf16 %v1499, %v1498
    %v1527 = vpack.c.bf16 %v1501, %v1500
    %v1528 = vpack.c.bf16 %v1503, %v1502
    %v1529 = vpack.c.bf16 %v1505, %v1504
    %v1530 = vpack.c.bf16 %v1507, %v1506
    %v1531 = vpack.c.bf16 %v1509, %v1508
    %v1532 = vpack.c.bf16 %v1511, %v1510
    %v1533 = vpack.c.bf16 %v1513, %v1512
    %v1534 = vpack.c.bf16 %v1515, %v1514
    %v1535 = vpack.c.bf16 %v1517, %v1516
    %v1536 = vpack.c.bf16 %v1519, %v1518
    %v1537 = vpack.c.bf16 %v1521, %v1520
    %v1539 = vlaneseq
    %v1540 = vshrl.u32 %v1539, 7
    %v1541 = vsub.s32 0, %v1540
    %v1542 = vrot.slane %v541, %v1541
    %v1556 = vunpack.c.l.b16 %v529
    %v1557 = vunpack.c.l.b16 %v530
    %v1558 = vunpack.c.l.b16 %v531
    %v1559 = vunpack.c.l.b16 %v532
    %v1560 = vunpack.c.l.b16 %v533
    %v1561 = vunpack.c.l.b16 %v534
    %v1562 = vunpack.c.l.b16 %v535
    %v1563 = vunpack.c.l.b16 %v536
    %v1564 = vunpack.c.l.b16 %v537
    %v1565 = vunpack.c.l.b16 %v538
    %v1566 = vunpack.c.l.b16 %v539
    %v1567 = vunpack.c.l.b16 %v540
    %v1568 = vpack.c.b16 %v1557, %v1556
    %v1569 = vpack.c.b16 %v1559, %v1558
    %v1570 = vpack.c.b16 %v1561, %v1560
    %v1571 = vpack.c.b16 %v1563, %v1562
    %v1572 = vpack.c.b16 %v1565, %v1564
    %v1573 = vpack.c.b16 %v1567, %v1566
    %vm1580 = vcmask 785408
    %v1582 = vsel %vm1580, %v1522, 0
    %v1585 = vsel %vm1580, %v1523, 0
    %v1588 = vsel %vm1580, %v1524, 0
    %v1591 = vsel %vm1580, %v1525, 0
    %v1594 = vsel %vm1580, %v1526, 0
    %v1597 = vsel %vm1580, %v1527, 0
    %v1600 = vsel %vm1580, %v1528, 0
    %v1603 = vsel %vm1580, %v1529, 0
    %v1606 = vsel %vm1580, %v1530, 0
    %v1609 = vsel %vm1580, %v1531, 0
    %v1612 = vsel %vm1580, %v1532, 0
    %v1615 = vsel %vm1580, %v1533, 0
    %v1618 = vsel %vm1580, %v1534, 0
    %v1621 = vsel %vm1580, %v1535, 0
    %v1624 = vsel %vm1580, %v1536, 0
    %v1627 = vsel %vm1580, %v1537, 0
    %1629 = vmatprep.subr.bf16.mxu0 0
    %1630 = vmatpush1.bf16.msra.mxu0 %v1568
    %1631 = vmatprep.subr.bf16.mxu0 0
    %1632 = vmatpush1.bf16.msra.mxu0 %v1569
    %1633 = vmatprep.subr.bf16.mxu0 0
    %1634 = vmatpush1.bf16.msra.mxu0 %v1570
    %1635 = vmatprep.subr.bf16.mxu0 0
    %1636 = vmatpush1.bf16.msra.mxu0 %v1571
    %1637 = vmatprep.subr.bf16.mxu0 0
    %1638 = vmatpush1.bf16.msra.mxu0 %v1572
    %1639 = vmatprep.subr.bf16.mxu0 0
    %1640 = vmatpush1.bf16.msra.mxu0 %v1573
    %1641 = vmatprep.subr.bf16.mxu0 0
    %1642 = vmatpush1.bf16.msra.mxu0 0
    %1643 = vmatprep.subr.bf16.mxu0 0
    %1644 = vmatpush1.bf16.msra.mxu0 0
    %1645 = vmatprep.subr.bf16.mxu0 0
    %1646 = vmatpush1.bf16.msra.mxu0 0
    %1647 = vmatprep.subr.bf16.mxu0 0
    %1648 = vmatpush1.bf16.msra.mxu0 0
    %1649 = vmatprep.subr.bf16.mxu0 0
    %1650 = vmatpush1.bf16.msra.mxu0 0
    %1651 = vmatprep.subr.bf16.mxu0 0
    %1652 = vmatpush1.bf16.msra.mxu0 0
    %1653 = vmatprep.subr.bf16.mxu0 0
    %1654 = vmatpush1.bf16.msra.mxu0 0
    %1655 = vmatprep.subr.bf16.mxu0 0
    %1656 = vmatpush1.bf16.msra.mxu0 0
    %1657 = vmatprep.subr.bf16.mxu0 0
    %1658 = vmatpush1.bf16.msra.mxu0 0
    %1659 = vmatprep.subr.bf16.mxu0 0
    %1660 = vmatpush1.bf16.msra.mxu0 0
    %1661 = vmatprep.mubr.bf16.mxu0 0
    %1662 = vmatmul.mubr.bf16.gmra.mrb[0].mxu0 %v1582
    %v1663 = vpop.f32.mrb[0].mxu0
    %v1664 = vadd.f32 %v1542, %v1663
    %v1665 = vpop.f32.mrb[0].mxu0
    %v1666 = vpop.f32.mrb[0].mxu0
    %v1667 = vadd.f32 %v1542, %v1666
    %v1668 = vpop.f32.mrb[0].mxu0
    %1669 = vmatprep.mubr.bf16.mxu0 0
    %1670 = vmatmul.mubr.bf16.gmra.mrb[0].mxu0 %v1585
    %v1671 = vpop.f32.mrb[0].mxu0
    %v1672 = vadd.f32 %v1542, %v1671
    %v1673 = vpop.f32.mrb[0].mxu0
    %v1674 = vpop.f32.mrb[0].mxu0
    %v1675 = vadd.f32 %v1542, %v1674
    %v1676 = vpop.f32.mrb[0].mxu0
    %1677 = vmatprep.mubr.bf16.mxu0 0
    %1678 = vmatmul.mubr.bf16.gmra.mrb[0].mxu0 %v1588
    %v1679 = vpop.f32.mrb[0].mxu0
    %v1680 = vadd.f32 %v1542, %v1679
    %v1681 = vpop.f32.mrb[0].mxu0
    %v1682 = vpop.f32.mrb[0].mxu0
    %v1683 = vadd.f32 %v1542, %v1682
    %v1684 = vpop.f32.mrb[0].mxu0
    %1685 = vmatprep.mubr.bf16.mxu0 0
    %1686 = vmatmul.mubr.bf16.gmra.mrb[0].mxu0 %v1591
    %v1687 = vpop.f32.mrb[0].mxu0
    %v1688 = vadd.f32 %v1542, %v1687
    %v1689 = vpop.f32.mrb[0].mxu0
    %v1690 = vpop.f32.mrb[0].mxu0
    %v1691 = vadd.f32 %v1542, %v1690
    %v1692 = vpop.f32.mrb[0].mxu0
    %1693 = vmatprep.mubr.bf16.mxu0 0
    %1694 = vmatmul.mubr.bf16.gmra.mrb[0].mxu0 %v1594
    %v1695 = vpop.f32.mrb[0].mxu0
    %v1696 = vadd.f32 %v1542, %v1695
    %v1697 = vpop.f32.mrb[0].mxu0
    %v1698 = vpop.f32.mrb[0].mxu0
    %v1699 = vadd.f32 %v1542, %v1698
    %v1700 = vpop.f32.mrb[0].mxu0
    %1701 = vmatprep.mubr.bf16.mxu0 0
    %1702 = vmatmul.mubr.bf16.gmra.mrb[0].mxu0 %v1597
    %v1703 = vpop.f32.mrb[0].mxu0
    %v1704 = vadd.f32 %v1542, %v1703
    %v1705 = vpop.f32.mrb[0].mxu0
    %v1706 = vpop.f32.mrb[0].mxu0
    %v1707 = vadd.f32 %v1542, %v1706
    %v1708 = vpop.f32.mrb[0].mxu0
    %1709 = vmatprep.mubr.bf16.mxu0 0
    %1710 = vmatmul.mubr.bf16.gmra.mrb[0].mxu0 %v1600
    %v1711 = vpop.f32.mrb[0].mxu0
    %v1712 = vadd.f32 %v1542, %v1711
    %v1713 = vpop.f32.mrb[0].mxu0
    %v1714 = vpop.f32.mrb[0].mxu0
    %v1715 = vadd.f32 %v1542, %v1714
    %v1716 = vpop.f32.mrb[0].mxu0
    %1717 = vmatprep.mubr.bf16.mxu0 0
    %1718 = vmatmul.mubr.bf16.gmra.mrb[0].mxu0 %v1603
    %v1719 = vpop.f32.mrb[0].mxu0
    %v1720 = vadd.f32 %v1542, %v1719
    %v1721 = vpop.f32.mrb[0].mxu0
    %v1722 = vpop.f32.mrb[0].mxu0
    %v1723 = vadd.f32 %v1542, %v1722
    %v1724 = vpop.f32.mrb[0].mxu0
    %1725 = vmatprep.mubr.bf16.mxu0 0
    %1726 = vmatmul.mubr.bf16.gmra.mrb[0].mxu0 %v1606
    %v1727 = vpop.f32.mrb[0].mxu0
    %v1728 = vadd.f32 %v1542, %v1727
    %v1729 = vpop.f32.mrb[0].mxu0
    %v1730 = vpop.f32.mrb[0].mxu0
    %v1731 = vadd.f32 %v1542, %v1730
    %v1732 = vpop.f32.mrb[0].mxu0
    %1733 = vmatprep.mubr.bf16.mxu0 0
    %1734 = vmatmul.mubr.bf16.gmra.mrb[0].mxu0 %v1609
    %v1735 = vpop.f32.mrb[0].mxu0
    %v1736 = vadd.f32 %v1542, %v1735
    %v1737 = vpop.f32.mrb[0].mxu0
    %v1738 = vpop.f32.mrb[0].mxu0
    %v1739 = vadd.f32 %v1542, %v1738
    %v1740 = vpop.f32.mrb[0].mxu0
    %1741 = vmatprep.mubr.bf16.mxu0 0
    %1742 = vmatmul.mubr.bf16.gmra.mrb[0].mxu0 %v1612
    %v1743 = vpop.f32.mrb[0].mxu0
    %v1744 = vadd.f32 %v1542, %v1743
    %v1745 = vpop.f32.mrb[0].mxu0
    %v1746 = vpop.f32.mrb[0].mxu0
    %v1747 = vadd.f32 %v1542, %v1746
    %v1748 = vpop.f32.mrb[0].mxu0
    %1749 = vmatprep.mubr.bf16.mxu0 0
    %1750 = vmatmul.mubr.bf16.gmra.mrb[0].mxu0 %v1615
    %v1751 = vpop.f32.mrb[0].mxu0
    %v1752 = vadd.f32 %v1542, %v1751
    %v1753 = vpop.f32.mrb[0].mxu0
    %v1754 = vpop.f32.mrb[0].mxu0
    %v1755 = vadd.f32 %v1542, %v1754
    %v1756 = vpop.f32.mrb[0].mxu0
    %1757 = vmatprep.mubr.bf16.mxu0 0
    %1758 = vmatmul.mubr.bf16.gmra.mrb[0].mxu0 %v1618
    %v1759 = vpop.f32.mrb[0].mxu0
    %v1760 = vadd.f32 %v1542, %v1759
    %v1761 = vpop.f32.mrb[0].mxu0
    %v1762 = vpop.f32.mrb[0].mxu0
    %v1763 = vadd.f32 %v1542, %v1762
    %v1764 = vpop.f32.mrb[0].mxu0
    %1765 = vmatprep.mubr.bf16.mxu0 0
    %1766 = vmatmul.mubr.bf16.gmra.mrb[0].mxu0 %v1621
    %v1767 = vpop.f32.mrb[0].mxu0
    %v1768 = vadd.f32 %v1542, %v1767
    %v1769 = vpop.f32.mrb[0].mxu0
    %v1770 = vpop.f32.mrb[0].mxu0
    %v1771 = vadd.f32 %v1542, %v1770
    %v1772 = vpop.f32.mrb[0].mxu0
    %1773 = vmatprep.mubr.bf16.mxu0 0
    %1774 = vmatmul.mubr.bf16.gmra.mrb[0].mxu0 %v1624
    %v1775 = vpop.f32.mrb[0].mxu0
    %v1776 = vadd.f32 %v1542, %v1775
    %v1777 = vpop.f32.mrb[0].mxu0
    %v1778 = vpop.f32.mrb[0].mxu0
    %v1779 = vadd.f32 %v1542, %v1778
    %v1780 = vpop.f32.mrb[0].mxu0
    %1781 = vmatprep.mubr.bf16.mxu0 0
    %1782 = vmatmul.mubr.bf16.gmra.mrb[0].mxu0 %v1627
    %v1783 = vpop.f32.mrb[0].mxu0
    %v1784 = vadd.f32 %v1542, %v1783
    %v1785 = vpop.f32.mrb[0].mxu0
    %v1786 = vpop.f32.mrb[0].mxu0
    %v1787 = vadd.f32 %v1542, %v1786
    %v1788 = vpop.f32.mrb[0].mxu0
    %1789 = vdwg.mxu0
    %v1790 = vadd.f32 %v485, %v1664
    %v1791 = vadd.f32 %v486, %v1667
    %v1792 = vadd.f32 %v487, %v1672
    %v1793 = vadd.f32 %v488, %v1675
    %v1794 = vadd.f32 %v489, %v1680
    %v1795 = vadd.f32 %v490, %v1683
    %v1796 = vadd.f32 %v491, %v1688
    %v1797 = vadd.f32 %v492, %v1691
    %v1798 = vadd.f32 %v493, %v1696
    %v1799 = vadd.f32 %v494, %v1699
    %v1800 = vadd.f32 %v495, %v1704
    %v1801 = vadd.f32 %v496, %v1707
    %v1802 = vadd.f32 %v497, %v1712
    %v1803 = vadd.f32 %v498, %v1715
    %v1804 = vadd.f32 %v499, %v1720
    %v1805 = vadd.f32 %v500, %v1723
    %v1806 = vadd.f32 %v501, %v1728
    %v1807 = vadd.f32 %v502, %v1731
    %v1808 = vadd.f32 %v503, %v1736
    %v1809 = vadd.f32 %v504, %v1739
    %v1810 = vadd.f32 %v505, %v1744
    %v1811 = vadd.f32 %v506, %v1747
    %v1812 = vadd.f32 %v507, %v1752
    %v1813 = vadd.f32 %v508, %v1755
    %v1814 = vadd.f32 %v509, %v1760
    %v1815 = vadd.f32 %v510, %v1763
    %v1816 = vadd.f32 %v511, %v1768
    %v1817 = vadd.f32 %v512, %v1771
    %v1818 = vadd.f32 %v513, %v1776
    %v1819 = vadd.f32 %v514, %v1779
    %v1820 = vadd.f32 %v515, %v1784
    %v1821 = vadd.f32 %v516, %v1787
    %s1822 = scalar_lea.vmem %s3, 1
    %v1823 = vld [vmem:[%s1822] sm:$0x1]
    %s1824 = scalar_lea.vmem %s4, 1
    %v1825 = vld [vmem:[%s1824] sm:$0x1]
    %s1826 = scalar_lea.vmem %s5, 16
    %v1827 = vld [vmem:[%s1826] sm:$0xf]
    %v1828 = vld [vmem:[%s1826 + $0x4] sm:$0xf]
    %v1829 = vld [vmem:[%s1826 + $0x8] sm:$0xf]
    %v1830 = vld [vmem:[%s1826 + $0xc] sm:$0xf]
    %s1831 = scalar_lea.vmem %s6, 1
    %v1832 = vld [vmem:[%s1831] sm:$0x1]
    %s1833 = scalar_lea.vmem %s7, 16
    %v1834 = vld [vmem:[%s1833] sm:$0xf]
    %v1835 = vld [vmem:[%s1833 + $0x4] sm:$0xf]
    %v1836 = vld [vmem:[%s1833 + $0x8] sm:$0xf]
    %v1837 = vld [vmem:[%s1833 + $0xc] sm:$0xf]
    %s1838 = scalar_lea.vmem %s8, 1
    %v1839 = vld [vmem:[%s1838] sm:$0x1]
    %s1840 = scalar_lea.vmem %s9, 48
    %v1841 = vld [vmem:[%s1840] sm:$0xf]
    %v1842 = vld [vmem:[%s1840 + $0x4] sm:$0xf]
    %v1843 = vld [vmem:[%s1840 + $0x8] sm:$0xf]
    %v1844 = vld [vmem:[%s1840 + $0xc] sm:$0xf]
    %v1845 = vld [vmem:[%s1840 + $0x10] sm:$0xf]
    %v1846 = vld [vmem:[%s1840 + $0x14] sm:$0xf]
    %v1847 = vld [vmem:[%s1840 + $0x18] sm:$0xf]
    %v1848 = vld [vmem:[%s1840 + $0x1c] sm:$0xf]
    %v1849 = vld [vmem:[%s1840 + $0x20] sm:$0xf]
    %v1850 = vld [vmem:[%s1840 + $0x24] sm:$0xf]
    %v1851 = vld [vmem:[%s1840 + $0x28] sm:$0xf]
    %v1852 = vld [vmem:[%s1840 + $0x2c] sm:$0xf]
    %s1853 = scalar_lea.vmem %s10, 1
    %v1854 = vld [vmem:[%s1853] sm:$0x1]
    %v1855 = vsel %vm542, %v1790, 0.0
    %1856 = vadd.xlane.f32.xlu0 %v1855
    %v1857 = vpop.xlane.xlu0 %1856
    %v1858 = vsel %vm542, %v1791, 0.0
    %1859 = vadd.xlane.f32.xlu0 %v1858
    %v1860 = vpop.xlane.xlu0 %1859
    %v1861 = vsel %vm542, %v1792, 0.0
    %1862 = vadd.xlane.f32.xlu0 %v1861
    %v1863 = vpop.xlane.xlu0 %1862
    %v1864 = vsel %vm542, %v1793, 0.0
    %1865 = vadd.xlane.f32.xlu0 %v1864
    %v1866 = vpop.xlane.xlu0 %1865
    %v1867 = vsel %vm542, %v1794, 0.0
    %1868 = vadd.xlane.f32.xlu0 %v1867
    %v1869 = vpop.xlane.xlu0 %1868
    %v1870 = vsel %vm542, %v1795, 0.0
    %1871 = vadd.xlane.f32.xlu0 %v1870
    %v1872 = vpop.xlane.xlu0 %1871
    %v1873 = vsel %vm542, %v1796, 0.0
    %1874 = vadd.xlane.f32.xlu0 %v1873
    %v1875 = vpop.xlane.xlu0 %1874
    %v1876 = vsel %vm542, %v1797, 0.0
    %1877 = vadd.xlane.f32.xlu0 %v1876
    %v1878 = vpop.xlane.xlu0 %1877
    %v1879 = vsel %vm542, %v1798, 0.0
    %1880 = vadd.xlane.f32.xlu0 %v1879
    %v1881 = vpop.xlane.xlu0 %1880
    %v1882 = vsel %vm542, %v1799, 0.0
    %1883 = vadd.xlane.f32.xlu0 %v1882
    %v1884 = vpop.xlane.xlu0 %1883
    %v1885 = vsel %vm542, %v1800, 0.0
    %1886 = vadd.xlane.f32.xlu0 %v1885
    %v1887 = vpop.xlane.xlu0 %1886
    %v1888 = vsel %vm542, %v1801, 0.0
    %1889 = vadd.xlane.f32.xlu0 %v1888
    %v1890 = vpop.xlane.xlu0 %1889
    %v1891 = vsel %vm542, %v1802, 0.0
    %1892 = vadd.xlane.f32.xlu0 %v1891
    %v1893 = vpop.xlane.xlu0 %1892
    %v1894 = vsel %vm542, %v1803, 0.0
    %1895 = vadd.xlane.f32.xlu0 %v1894
    %v1896 = vpop.xlane.xlu0 %1895
    %v1897 = vsel %vm542, %v1804, 0.0
    %1898 = vadd.xlane.f32.xlu0 %v1897
    %v1899 = vpop.xlane.xlu0 %1898
    %v1900 = vsel %vm542, %v1805, 0.0
    %1901 = vadd.xlane.f32.xlu0 %v1900
    %v1902 = vpop.xlane.xlu0 %1901
    %v1903 = vsel %vm542, %v1806, 0.0
    %1904 = vadd.xlane.f32.xlu0 %v1903
    %v1905 = vpop.xlane.xlu0 %1904
    %v1906 = vsel %vm542, %v1807, 0.0
    %1907 = vadd.xlane.f32.xlu0 %v1906
    %v1908 = vpop.xlane.xlu0 %1907
    %v1909 = vsel %vm542, %v1808, 0.0
    %1910 = vadd.xlane.f32.xlu0 %v1909
    %v1911 = vpop.xlane.xlu0 %1910
    %v1912 = vsel %vm542, %v1809, 0.0
    %1913 = vadd.xlane.f32.xlu0 %v1912
    %v1914 = vpop.xlane.xlu0 %1913
    %v1915 = vsel %vm542, %v1810, 0.0
    %1916 = vadd.xlane.f32.xlu0 %v1915
    %v1917 = vpop.xlane.xlu0 %1916
    %v1918 = vsel %vm542, %v1811, 0.0
    %1919 = vadd.xlane.f32.xlu0 %v1918
    %v1920 = vpop.xlane.xlu0 %1919
    %v1921 = vsel %vm542, %v1812, 0.0
    %1922 = vadd.xlane.f32.xlu0 %v1921
    %v1923 = vpop.xlane.xlu0 %1922
    %v1924 = vsel %vm542, %v1813, 0.0
    %1925 = vadd.xlane.f32.xlu0 %v1924
    %v1926 = vpop.xlane.xlu0 %1925
    %v1927 = vsel %vm542, %v1814, 0.0
    %1928 = vadd.xlane.f32.xlu0 %v1927
    %v1929 = vpop.xlane.xlu0 %1928
    %v1930 = vsel %vm542, %v1815, 0.0
    %1931 = vadd.xlane.f32.xlu0 %v1930
    %v1932 = vpop.xlane.xlu0 %1931
    %v1933 = vsel %vm542, %v1816, 0.0
    %1934 = vadd.xlane.f32.xlu0 %v1933
    %v1935 = vpop.xlane.xlu0 %1934
    %v1936 = vsel %vm542, %v1817, 0.0
    %1937 = vadd.xlane.f32.xlu0 %v1936
    %v1938 = vpop.xlane.xlu0 %1937
    %v1939 = vsel %vm542, %v1818, 0.0
    %1940 = vadd.xlane.f32.xlu0 %v1939
    %v1941 = vpop.xlane.xlu0 %1940
    %v1942 = vsel %vm542, %v1819, 0.0
    %1943 = vadd.xlane.f32.xlu0 %v1942
    %v1944 = vpop.xlane.xlu0 %1943
    %v1945 = vsel %vm542, %v1820, 0.0
    %1946 = vadd.xlane.f32.xlu0 %v1945
    %v1947 = vpop.xlane.xlu0 %1946
    %v1948 = vsel %vm542, %v1821, 0.0
    %1949 = vadd.xlane.f32.xlu0 %v1948
    %v1950 = vpop.xlane.xlu0 %1949
    %v1951 = vmul.f32 %v1857, %v639
    %v1952 = vmul.f32 %v1860, %v639
    %v1953 = vmul.f32 %v1863, %v639
    %v1954 = vmul.f32 %v1866, %v639
    %v1955 = vmul.f32 %v1869, %v639
    %v1956 = vmul.f32 %v1872, %v639
    %v1957 = vmul.f32 %v1875, %v639
    %v1958 = vmul.f32 %v1878, %v639
    %v1959 = vmul.f32 %v1881, %v639
    %v1960 = vmul.f32 %v1884, %v639
    %v1961 = vmul.f32 %v1887, %v639
    %v1962 = vmul.f32 %v1890, %v639
    %v1963 = vmul.f32 %v1893, %v639
    %v1964 = vmul.f32 %v1896, %v639
    %v1965 = vmul.f32 %v1899, %v639
    %v1966 = vmul.f32 %v1902, %v639
    %v1967 = vmul.f32 %v1905, %v639
    %v1968 = vmul.f32 %v1908, %v639
    %v1969 = vmul.f32 %v1911, %v639
    %v1970 = vmul.f32 %v1914, %v639
    %v1971 = vmul.f32 %v1917, %v639
    %v1972 = vmul.f32 %v1920, %v639
    %v1973 = vmul.f32 %v1923, %v639
    %v1974 = vmul.f32 %v1926, %v639
    %v1975 = vmul.f32 %v1929, %v639
    %v1976 = vmul.f32 %v1932, %v639
    %v1977 = vmul.f32 %v1935, %v639
    %v1978 = vmul.f32 %v1938, %v639
    %v1979 = vmul.f32 %v1941, %v639
    %v1980 = vmul.f32 %v1944, %v639
    %v1981 = vmul.f32 %v1947, %v639
    %v1982 = vmul.f32 %v1950, %v639
    %v1983 = vsub.f32 %v1790, %v1951
    %v1984 = vsub.f32 %v1791, %v1952
    %v1985 = vsub.f32 %v1792, %v1953
    %v1986 = vsub.f32 %v1793, %v1954
    %v1987 = vsub.f32 %v1794, %v1955
    %v1988 = vsub.f32 %v1795, %v1956
    %v1989 = vsub.f32 %v1796, %v1957
    %v1990 = vsub.f32 %v1797, %v1958
    %v1991 = vsub.f32 %v1798, %v1959
    %v1992 = vsub.f32 %v1799, %v1960
    %v1993 = vsub.f32 %v1800, %v1961
    %v1994 = vsub.f32 %v1801, %v1962
    %v1995 = vsub.f32 %v1802, %v1963
    %v1996 = vsub.f32 %v1803, %v1964
    %v1997 = vsub.f32 %v1804, %v1965
    %v1998 = vsub.f32 %v1805, %v1966
    %v1999 = vsub.f32 %v1806, %v1967
    %v2000 = vsub.f32 %v1807, %v1968
    %v2001 = vsub.f32 %v1808, %v1969
    %v2002 = vsub.f32 %v1809, %v1970
    %v2003 = vsub.f32 %v1810, %v1971
    %v2004 = vsub.f32 %v1811, %v1972
    %v2005 = vsub.f32 %v1812, %v1973
    %v2006 = vsub.f32 %v1813, %v1974
    %v2007 = vsub.f32 %v1814, %v1975
    %v2008 = vsub.f32 %v1815, %v1976
    %v2009 = vsub.f32 %v1816, %v1977
    %v2010 = vsub.f32 %v1817, %v1978
    %v2011 = vsub.f32 %v1818, %v1979
    %v2012 = vsub.f32 %v1819, %v1980
    %v2013 = vsub.f32 %v1820, %v1981
    %v2014 = vsub.f32 %v1821, %v1982
    %v2015 = vmul.f32 %v1983, %v1983
    %v2016 = vmul.f32 %v1984, %v1984
    %v2017 = vmul.f32 %v1985, %v1985
    %v2018 = vmul.f32 %v1986, %v1986
    %v2019 = vmul.f32 %v1987, %v1987
    %v2020 = vmul.f32 %v1988, %v1988
    %v2021 = vmul.f32 %v1989, %v1989
    %v2022 = vmul.f32 %v1990, %v1990
    %v2023 = vmul.f32 %v1991, %v1991
    %v2024 = vmul.f32 %v1992, %v1992
    %v2025 = vmul.f32 %v1993, %v1993
    %v2026 = vmul.f32 %v1994, %v1994
    %v2027 = vmul.f32 %v1995, %v1995
    %v2028 = vmul.f32 %v1996, %v1996
    %v2029 = vmul.f32 %v1997, %v1997
    %v2030 = vmul.f32 %v1998, %v1998
    %v2031 = vmul.f32 %v1999, %v1999
    %v2032 = vmul.f32 %v2000, %v2000
    %v2033 = vmul.f32 %v2001, %v2001
    %v2034 = vmul.f32 %v2002, %v2002
    %v2035 = vmul.f32 %v2003, %v2003
    %v2036 = vmul.f32 %v2004, %v2004
    %v2037 = vmul.f32 %v2005, %v2005
    %v2038 = vmul.f32 %v2006, %v2006
    %v2039 = vmul.f32 %v2007, %v2007
    %v2040 = vmul.f32 %v2008, %v2008
    %v2041 = vmul.f32 %v2009, %v2009
    %v2042 = vmul.f32 %v2010, %v2010
    %v2043 = vmul.f32 %v2011, %v2011
    %v2044 = vmul.f32 %v2012, %v2012
    %v2045 = vmul.f32 %v2013, %v2013
    %v2046 = vmul.f32 %v2014, %v2014
    %v2047 = vsel %vm542, %v2015, 0.0
    %2048 = vadd.xlane.f32.xlu0 %v2047
    %v2049 = vpop.xlane.xlu0 %2048
    %v2050 = vsel %vm542, %v2016, 0.0
    %2051 = vadd.xlane.f32.xlu0 %v2050
    %v2052 = vpop.xlane.xlu0 %2051
    %v2053 = vsel %vm542, %v2017, 0.0
    %2054 = vadd.xlane.f32.xlu0 %v2053
    %v2055 = vpop.xlane.xlu0 %2054
    %v2056 = vsel %vm542, %v2018, 0.0
    %2057 = vadd.xlane.f32.xlu0 %v2056
    %v2058 = vpop.xlane.xlu0 %2057
    %v2059 = vsel %vm542, %v2019, 0.0
    %2060 = vadd.xlane.f32.xlu0 %v2059
    %v2061 = vpop.xlane.xlu0 %2060
    %v2062 = vsel %vm542, %v2020, 0.0
    %2063 = vadd.xlane.f32.xlu0 %v2062
    %v2064 = vpop.xlane.xlu0 %2063
    %v2065 = vsel %vm542, %v2021, 0.0
    %2066 = vadd.xlane.f32.xlu0 %v2065
    %v2067 = vpop.xlane.xlu0 %2066
    %v2068 = vsel %vm542, %v2022, 0.0
    %2069 = vadd.xlane.f32.xlu0 %v2068
    %v2070 = vpop.xlane.xlu0 %2069
    %v2071 = vsel %vm542, %v2023, 0.0
    %2072 = vadd.xlane.f32.xlu0 %v2071
    %v2073 = vpop.xlane.xlu0 %2072
    %v2074 = vsel %vm542, %v2024, 0.0
    %2075 = vadd.xlane.f32.xlu0 %v2074
    %v2076 = vpop.xlane.xlu0 %2075
    %v2077 = vsel %vm542, %v2025, 0.0
    %2078 = vadd.xlane.f32.xlu0 %v2077
    %v2079 = vpop.xlane.xlu0 %2078
    %v2080 = vsel %vm542, %v2026, 0.0
    %2081 = vadd.xlane.f32.xlu0 %v2080
    %v2082 = vpop.xlane.xlu0 %2081
    %v2083 = vsel %vm542, %v2027, 0.0
    %2084 = vadd.xlane.f32.xlu0 %v2083
    %v2085 = vpop.xlane.xlu0 %2084
    %v2086 = vsel %vm542, %v2028, 0.0
    %2087 = vadd.xlane.f32.xlu0 %v2086
    %v2088 = vpop.xlane.xlu0 %2087
    %v2089 = vsel %vm542, %v2029, 0.0
    %2090 = vadd.xlane.f32.xlu0 %v2089
    %v2091 = vpop.xlane.xlu0 %2090
    %v2092 = vsel %vm542, %v2030, 0.0
    %2093 = vadd.xlane.f32.xlu0 %v2092
    %v2094 = vpop.xlane.xlu0 %2093
    %v2095 = vsel %vm542, %v2031, 0.0
    %2096 = vadd.xlane.f32.xlu0 %v2095
    %v2097 = vpop.xlane.xlu0 %2096
    %v2098 = vsel %vm542, %v2032, 0.0
    %2099 = vadd.xlane.f32.xlu0 %v2098
    %v2100 = vpop.xlane.xlu0 %2099
    %v2101 = vsel %vm542, %v2033, 0.0
    %2102 = vadd.xlane.f32.xlu0 %v2101
    %v2103 = vpop.xlane.xlu0 %2102
    %v2104 = vsel %vm542, %v2034, 0.0
    %2105 = vadd.xlane.f32.xlu0 %v2104
    %v2106 = vpop.xlane.xlu0 %2105
    %v2107 = vsel %vm542, %v2035, 0.0
    %2108 = vadd.xlane.f32.xlu0 %v2107
    %v2109 = vpop.xlane.xlu0 %2108
    %v2110 = vsel %vm542, %v2036, 0.0
    %2111 = vadd.xlane.f32.xlu0 %v2110
    %v2112 = vpop.xlane.xlu0 %2111
    %v2113 = vsel %vm542, %v2037, 0.0
    %2114 = vadd.xlane.f32.xlu0 %v2113
    %v2115 = vpop.xlane.xlu0 %2114
    %v2116 = vsel %vm542, %v2038, 0.0
    %2117 = vadd.xlane.f32.xlu0 %v2116
    %v2118 = vpop.xlane.xlu0 %2117
    %v2119 = vsel %vm542, %v2039, 0.0
    %2120 = vadd.xlane.f32.xlu0 %v2119
    %v2121 = vpop.xlane.xlu0 %2120
    %v2122 = vsel %vm542, %v2040, 0.0
    %2123 = vadd.xlane.f32.xlu0 %v2122
    %v2124 = vpop.xlane.xlu0 %2123
    %v2125 = vsel %vm542, %v2041, 0.0
    %2126 = vadd.xlane.f32.xlu0 %v2125
    %v2127 = vpop.xlane.xlu0 %2126
    %v2128 = vsel %vm542, %v2042, 0.0
    %2129 = vadd.xlane.f32.xlu0 %v2128
    %v2130 = vpop.xlane.xlu0 %2129
    %v2131 = vsel %vm542, %v2043, 0.0
    %2132 = vadd.xlane.f32.xlu0 %v2131
    %v2133 = vpop.xlane.xlu0 %2132
    %v2134 = vsel %vm542, %v2044, 0.0
    %2135 = vadd.xlane.f32.xlu0 %v2134
    %v2136 = vpop.xlane.xlu0 %2135
    %v2137 = vsel %vm542, %v2045, 0.0
    %2138 = vadd.xlane.f32.xlu0 %v2137
    %v2139 = vpop.xlane.xlu0 %2138
    %v2140 = vsel %vm542, %v2046, 0.0
    %2141 = vadd.xlane.f32.xlu0 %v2140
    %v2142 = vpop.xlane.xlu0 %2141
    %v2143 = vmul.f32 %v2049, %v639
    %v2144 = vmul.f32 %v2052, %v639
    %v2145 = vmul.f32 %v2055, %v639
    %v2146 = vmul.f32 %v2058, %v639
    %v2147 = vmul.f32 %v2061, %v639
    %v2148 = vmul.f32 %v2064, %v639
    %v2149 = vmul.f32 %v2067, %v639
    %v2150 = vmul.f32 %v2070, %v639
    %v2151 = vmul.f32 %v2073, %v639
    %v2152 = vmul.f32 %v2076, %v639
    %v2153 = vmul.f32 %v2079, %v639
    %v2154 = vmul.f32 %v2082, %v639
    %v2155 = vmul.f32 %v2085, %v639
    %v2156 = vmul.f32 %v2088, %v639
    %v2157 = vmul.f32 %v2091, %v639
    %v2158 = vmul.f32 %v2094, %v639
    %v2159 = vmul.f32 %v2097, %v639
    %v2160 = vmul.f32 %v2100, %v639
    %v2161 = vmul.f32 %v2103, %v639
    %v2162 = vmul.f32 %v2106, %v639
    %v2163 = vmul.f32 %v2109, %v639
    %v2164 = vmul.f32 %v2112, %v639
    %v2165 = vmul.f32 %v2115, %v639
    %v2166 = vmul.f32 %v2118, %v639
    %v2167 = vmul.f32 %v2121, %v639
    %v2168 = vmul.f32 %v2124, %v639
    %v2169 = vmul.f32 %v2127, %v639
    %v2170 = vmul.f32 %v2130, %v639
    %v2171 = vmul.f32 %v2133, %v639
    %v2172 = vmul.f32 %v2136, %v639
    %v2173 = vmul.f32 %v2139, %v639
    %v2174 = vmul.f32 %v2142, %v639
    %v2175 = vadd.f32 %v2143, 1e-05
    %v2176 = vadd.f32 %v2144, 1e-05
    %v2177 = vadd.f32 %v2145, 1e-05
    %v2178 = vadd.f32 %v2146, 1e-05
    %v2179 = vadd.f32 %v2147, 1e-05
    %v2180 = vadd.f32 %v2148, 1e-05
    %v2181 = vadd.f32 %v2149, 1e-05
    %v2182 = vadd.f32 %v2150, 1e-05
    %v2183 = vadd.f32 %v2151, 1e-05
    %v2184 = vadd.f32 %v2152, 1e-05
    %v2185 = vadd.f32 %v2153, 1e-05
    %v2186 = vadd.f32 %v2154, 1e-05
    %v2187 = vadd.f32 %v2155, 1e-05
    %v2188 = vadd.f32 %v2156, 1e-05
    %v2189 = vadd.f32 %v2157, 1e-05
    %v2190 = vadd.f32 %v2158, 1e-05
    %v2191 = vadd.f32 %v2159, 1e-05
    %v2192 = vadd.f32 %v2160, 1e-05
    %v2193 = vadd.f32 %v2161, 1e-05
    %v2194 = vadd.f32 %v2162, 1e-05
    %v2195 = vadd.f32 %v2163, 1e-05
    %v2196 = vadd.f32 %v2164, 1e-05
    %v2197 = vadd.f32 %v2165, 1e-05
    %v2198 = vadd.f32 %v2166, 1e-05
    %v2199 = vadd.f32 %v2167, 1e-05
    %v2200 = vadd.f32 %v2168, 1e-05
    %v2201 = vadd.f32 %v2169, 1e-05
    %v2202 = vadd.f32 %v2170, 1e-05
    %v2203 = vadd.f32 %v2171, 1e-05
    %v2204 = vadd.f32 %v2172, 1e-05
    %v2205 = vadd.f32 %v2173, 1e-05
    %v2206 = vadd.f32 %v2174, 1e-05
    %v2207 = vrsqrt.pop %v2175
    %v2208 = vrsqrt.pop %v2176
    %v2209 = vrsqrt.pop %v2177
    %v2210 = vrsqrt.pop %v2178
    %v2211 = vrsqrt.pop %v2179
    %v2212 = vrsqrt.pop %v2180
    %v2213 = vrsqrt.pop %v2181
    %v2214 = vrsqrt.pop %v2182
    %v2215 = vrsqrt.pop %v2183
    %v2216 = vrsqrt.pop %v2184
    %v2217 = vrsqrt.pop %v2185
    %v2218 = vrsqrt.pop %v2186
    %v2219 = vrsqrt.pop %v2187
    %v2220 = vrsqrt.pop %v2188
    %v2221 = vrsqrt.pop %v2189
    %v2222 = vrsqrt.pop %v2190
    %v2223 = vrsqrt.pop %v2191
    %v2224 = vrsqrt.pop %v2192
    %v2225 = vrsqrt.pop %v2193
    %v2226 = vrsqrt.pop %v2194
    %v2227 = vrsqrt.pop %v2195
    %v2228 = vrsqrt.pop %v2196
    %v2229 = vrsqrt.pop %v2197
    %v2230 = vrsqrt.pop %v2198
    %v2231 = vrsqrt.pop %v2199
    %v2232 = vrsqrt.pop %v2200
    %v2233 = vrsqrt.pop %v2201
    %v2234 = vrsqrt.pop %v2202
    %v2235 = vrsqrt.pop %v2203
    %v2236 = vrsqrt.pop %v2204
    %v2237 = vrsqrt.pop %v2205
    %v2238 = vrsqrt.pop %v2206
    %v2239 = vmul.f32 %v1983, %v2207
    %v2240 = vmul.f32 %v1984, %v2208
    %v2241 = vmul.f32 %v1985, %v2209
    %v2242 = vmul.f32 %v1986, %v2210
    %v2243 = vmul.f32 %v1987, %v2211
    %v2244 = vmul.f32 %v1988, %v2212
    %v2245 = vmul.f32 %v1989, %v2213
    %v2246 = vmul.f32 %v1990, %v2214
    %v2247 = vmul.f32 %v1991, %v2215
    %v2248 = vmul.f32 %v1992, %v2216
    %v2249 = vmul.f32 %v1993, %v2217
    %v2250 = vmul.f32 %v1994, %v2218
    %v2251 = vmul.f32 %v1995, %v2219
    %v2252 = vmul.f32 %v1996, %v2220
    %v2253 = vmul.f32 %v1997, %v2221
    %v2254 = vmul.f32 %v1998, %v2222
    %v2255 = vmul.f32 %v1999, %v2223
    %v2256 = vmul.f32 %v2000, %v2224
    %v2257 = vmul.f32 %v2001, %v2225
    %v2258 = vmul.f32 %v2002, %v2226
    %v2259 = vmul.f32 %v2003, %v2227
    %v2260 = vmul.f32 %v2004, %v2228
    %v2261 = vmul.f32 %v2005, %v2229
    %v2262 = vmul.f32 %v2006, %v2230
    %v2263 = vmul.f32 %v2007, %v2231
    %v2264 = vmul.f32 %v2008, %v2232
    %v2265 = vmul.f32 %v2009, %v2233
    %v2266 = vmul.f32 %v2010, %v2234
    %v2267 = vmul.f32 %v2011, %v2235
    %v2268 = vmul.f32 %v2012, %v2236
    %v2269 = vmul.f32 %v2013, %v2237
    %v2270 = vmul.f32 %v2014, %v2238
    %v2272 = vlaneseq
    %v2273 = vshrl.u32 %v2272, 7
    %v2274 = vsub.s32 0, %v2273
    %v2275 = vrot.slane %v1823, %v2274
    %v2277 = vmul.f32 %v2239, %v2275
    %v2278 = vmul.f32 %v2240, %v2275
    %v2279 = vmul.f32 %v2241, %v2275
    %v2280 = vmul.f32 %v2242, %v2275
    %v2281 = vmul.f32 %v2243, %v2275
    %v2282 = vmul.f32 %v2244, %v2275
    %v2283 = vmul.f32 %v2245, %v2275
    %v2284 = vmul.f32 %v2246, %v2275
    %v2285 = vmul.f32 %v2247, %v2275
    %v2286 = vmul.f32 %v2248, %v2275
    %v2287 = vmul.f32 %v2249, %v2275
    %v2288 = vmul.f32 %v2250, %v2275
    %v2289 = vmul.f32 %v2251, %v2275
    %v2290 = vmul.f32 %v2252, %v2275
    %v2291 = vmul.f32 %v2253, %v2275
    %v2292 = vmul.f32 %v2254, %v2275
    %v2293 = vmul.f32 %v2255, %v2275
    %v2294 = vmul.f32 %v2256, %v2275
    %v2295 = vmul.f32 %v2257, %v2275
    %v2296 = vmul.f32 %v2258, %v2275
    %v2297 = vmul.f32 %v2259, %v2275
    %v2298 = vmul.f32 %v2260, %v2275
    %v2299 = vmul.f32 %v2261, %v2275
    %v2300 = vmul.f32 %v2262, %v2275
    %v2301 = vmul.f32 %v2263, %v2275
    %v2302 = vmul.f32 %v2264, %v2275
    %v2303 = vmul.f32 %v2265, %v2275
    %v2304 = vmul.f32 %v2266, %v2275
    %v2305 = vmul.f32 %v2267, %v2275
    %v2306 = vmul.f32 %v2268, %v2275
    %v2307 = vmul.f32 %v2269, %v2275
    %v2308 = vmul.f32 %v2270, %v2275
    %v2310 = vlaneseq
    %v2311 = vshrl.u32 %v2310, 7
    %v2312 = vsub.s32 0, %v2311
    %v2313 = vrot.slane %v1825, %v2312
    %v2315 = vadd.f32 %v2277, %v2313
    %v2316 = vadd.f32 %v2278, %v2313
    %v2317 = vadd.f32 %v2279, %v2313
    %v2318 = vadd.f32 %v2280, %v2313
    %v2319 = vadd.f32 %v2281, %v2313
    %v2320 = vadd.f32 %v2282, %v2313
    %v2321 = vadd.f32 %v2283, %v2313
    %v2322 = vadd.f32 %v2284, %v2313
    %v2323 = vadd.f32 %v2285, %v2313
    %v2324 = vadd.f32 %v2286, %v2313
    %v2325 = vadd.f32 %v2287, %v2313
    %v2326 = vadd.f32 %v2288, %v2313
    %v2327 = vadd.f32 %v2289, %v2313
    %v2328 = vadd.f32 %v2290, %v2313
    %v2329 = vadd.f32 %v2291, %v2313
    %v2330 = vadd.f32 %v2292, %v2313
    %v2331 = vadd.f32 %v2293, %v2313
    %v2332 = vadd.f32 %v2294, %v2313
    %v2333 = vadd.f32 %v2295, %v2313
    %v2334 = vadd.f32 %v2296, %v2313
    %v2335 = vadd.f32 %v2297, %v2313
    %v2336 = vadd.f32 %v2298, %v2313
    %v2337 = vadd.f32 %v2299, %v2313
    %v2338 = vadd.f32 %v2300, %v2313
    %v2339 = vadd.f32 %v2301, %v2313
    %v2340 = vadd.f32 %v2302, %v2313
    %v2341 = vadd.f32 %v2303, %v2313
    %v2342 = vadd.f32 %v2304, %v2313
    %v2343 = vadd.f32 %v2305, %v2313
    %v2344 = vadd.f32 %v2306, %v2313
    %v2345 = vadd.f32 %v2307, %v2313
    %v2346 = vadd.f32 %v2308, %v2313
    %v2347 = vpack.c.bf16 %v2316, %v2315
    %v2348 = vpack.c.bf16 %v2318, %v2317
    %v2349 = vpack.c.bf16 %v2320, %v2319
    %v2350 = vpack.c.bf16 %v2322, %v2321
    %v2351 = vpack.c.bf16 %v2324, %v2323
    %v2352 = vpack.c.bf16 %v2326, %v2325
    %v2353 = vpack.c.bf16 %v2328, %v2327
    %v2354 = vpack.c.bf16 %v2330, %v2329
    %v2355 = vpack.c.bf16 %v2332, %v2331
    %v2356 = vpack.c.bf16 %v2334, %v2333
    %v2357 = vpack.c.bf16 %v2336, %v2335
    %v2358 = vpack.c.bf16 %v2338, %v2337
    %v2359 = vpack.c.bf16 %v2340, %v2339
    %v2360 = vpack.c.bf16 %v2342, %v2341
    %v2361 = vpack.c.bf16 %v2344, %v2343
    %v2362 = vpack.c.bf16 %v2346, %v2345
    %v2364 = vlaneseq
    %v2365 = vshrl.u32 %v2364, 7
    %v2366 = vsub.s32 0, %v2365
    %v2367 = vrot.slane %v1832, %v2366
    %v2373 = vunpack.c.l.b16 %v1827
    %v2374 = vunpack.c.l.b16 %v1828
    %v2375 = vunpack.c.l.b16 %v1829
    %v2376 = vunpack.c.l.b16 %v1830
    %v2377 = vpack.c.b16 %v2374, %v2373
    %v2378 = vpack.c.b16 %v2376, %v2375
    %v2382 = vsel %vm542, %v2347, 0
    %v2385 = vsel %vm542, %v2348, 0
    %v2388 = vsel %vm542, %v2349, 0
    %v2391 = vsel %vm542, %v2350, 0
    %v2394 = vsel %vm542, %v2351, 0
    %v2397 = vsel %vm542, %v2352, 0
    %v2400 = vsel %vm542, %v2353, 0
    %v2403 = vsel %vm542, %v2354, 0
    %v2406 = vsel %vm542, %v2355, 0
    %v2409 = vsel %vm542, %v2356, 0
    %v2412 = vsel %vm542, %v2357, 0
    %v2415 = vsel %vm542, %v2358, 0
    %v2418 = vsel %vm542, %v2359, 0
    %v2421 = vsel %vm542, %v2360, 0
    %v2424 = vsel %vm542, %v2361, 0
    %v2427 = vsel %vm542, %v2362, 0
    %2429 = vmatprep.subr.bf16.mxu0 0
    %2430 = vmatpush1.bf16.msra.mxu0 %v2377
    %2431 = vmatprep.subr.bf16.mxu0 0
    %2432 = vmatpush1.bf16.msra.mxu0 %v2378
    %2433 = vmatprep.subr.bf16.mxu0 0
    %2434 = vmatpush1.bf16.msra.mxu0 0
    %2435 = vmatprep.subr.bf16.mxu0 0
    %2436 = vmatpush1.bf16.msra.mxu0 0
    %2437 = vmatprep.subr.bf16.mxu0 0
    %2438 = vmatpush1.bf16.msra.mxu0 0
    %2439 = vmatprep.subr.bf16.mxu0 0
    %2440 = vmatpush1.bf16.msra.mxu0 0
    %2441 = vmatprep.subr.bf16.mxu0 0
    %2442 = vmatpush1.bf16.msra.mxu0 0
    %2443 = vmatprep.subr.bf16.mxu0 0
    %2444 = vmatpush1.bf16.msra.mxu0 0
    %2445 = vmatprep.subr.bf16.mxu0 0
    %2446 = vmatpush1.bf16.msra.mxu0 0
    %2447 = vmatprep.subr.bf16.mxu0 0
    %2448 = vmatpush1.bf16.msra.mxu0 0
    %2449 = vmatprep.subr.bf16.mxu0 0
    %2450 = vmatpush1.bf16.msra.mxu0 0
    %2451 = vmatprep.subr.bf16.mxu0 0
    %2452 = vmatpush1.bf16.msra.mxu0 0
    %2453 = vmatprep.subr.bf16.mxu0 0
    %2454 = vmatpush1.bf16.msra.mxu0 0
    %2455 = vmatprep.subr.bf16.mxu0 0
    %2456 = vmatpush1.bf16.msra.mxu0 0
    %2457 = vmatprep.subr.bf16.mxu0 0
    %2458 = vmatpush1.bf16.msra.mxu0 0
    %2459 = vmatprep.subr.bf16.mxu0 0
    %2460 = vmatpush1.bf16.msra.mxu0 0
    %2461 = vmatprep.mubr.bf16.mxu0 0
    %2462 = vmatmul.mubr.bf16.gmra.mrb[0].mxu0 %v2382
    %v2463 = vpop.f32.mrb[0].mxu0
    %v2464 = vadd.f32 %v2367, %v2463
    %v2465 = vpop.f32.mrb[0].mxu0
    %v2466 = vpop.f32.mrb[0].mxu0
    %v2467 = vadd.f32 %v2367, %v2466
    %v2468 = vpop.f32.mrb[0].mxu0
    %2469 = vmatprep.mubr.bf16.mxu0 0
    %2470 = vmatmul.mubr.bf16.gmra.mrb[0].mxu0 %v2385
    %v2471 = vpop.f32.mrb[0].mxu0
    %v2472 = vadd.f32 %v2367, %v2471
    %v2473 = vpop.f32.mrb[0].mxu0
    %v2474 = vpop.f32.mrb[0].mxu0
    %v2475 = vadd.f32 %v2367, %v2474
    %v2476 = vpop.f32.mrb[0].mxu0
    %2477 = vmatprep.mubr.bf16.mxu0 0
    %2478 = vmatmul.mubr.bf16.gmra.mrb[0].mxu0 %v2388
    %v2479 = vpop.f32.mrb[0].mxu0
    %v2480 = vadd.f32 %v2367, %v2479
    %v2481 = vpop.f32.mrb[0].mxu0
    %v2482 = vpop.f32.mrb[0].mxu0
    %v2483 = vadd.f32 %v2367, %v2482
    %v2484 = vpop.f32.mrb[0].mxu0
    %2485 = vmatprep.mubr.bf16.mxu0 0
    %2486 = vmatmul.mubr.bf16.gmra.mrb[0].mxu0 %v2391
    %v2487 = vpop.f32.mrb[0].mxu0
    %v2488 = vadd.f32 %v2367, %v2487
    %v2489 = vpop.f32.mrb[0].mxu0
    %v2490 = vpop.f32.mrb[0].mxu0
    %v2491 = vadd.f32 %v2367, %v2490
    %v2492 = vpop.f32.mrb[0].mxu0
    %2493 = vmatprep.mubr.bf16.mxu0 0
    %2494 = vmatmul.mubr.bf16.gmra.mrb[0].mxu0 %v2394
    %v2495 = vpop.f32.mrb[0].mxu0
    %v2496 = vadd.f32 %v2367, %v2495
    %v2497 = vpop.f32.mrb[0].mxu0
    %v2498 = vpop.f32.mrb[0].mxu0
    %v2499 = vadd.f32 %v2367, %v2498
    %v2500 = vpop.f32.mrb[0].mxu0
    %2501 = vmatprep.mubr.bf16.mxu0 0
    %2502 = vmatmul.mubr.bf16.gmra.mrb[0].mxu0 %v2397
    %v2503 = vpop.f32.mrb[0].mxu0
    %v2504 = vadd.f32 %v2367, %v2503
    %v2505 = vpop.f32.mrb[0].mxu0
    %v2506 = vpop.f32.mrb[0].mxu0
    %v2507 = vadd.f32 %v2367, %v2506
    %v2508 = vpop.f32.mrb[0].mxu0
    %2509 = vmatprep.mubr.bf16.mxu0 0
    %2510 = vmatmul.mubr.bf16.gmra.mrb[0].mxu0 %v2400
    %v2511 = vpop.f32.mrb[0].mxu0
    %v2512 = vadd.f32 %v2367, %v2511
    %v2513 = vpop.f32.mrb[0].mxu0
    %v2514 = vpop.f32.mrb[0].mxu0
    %v2515 = vadd.f32 %v2367, %v2514
    %v2516 = vpop.f32.mrb[0].mxu0
    %2517 = vmatprep.mubr.bf16.mxu0 0
    %2518 = vmatmul.mubr.bf16.gmra.mrb[0].mxu0 %v2403
    %v2519 = vpop.f32.mrb[0].mxu0
    %v2520 = vadd.f32 %v2367, %v2519
    %v2521 = vpop.f32.mrb[0].mxu0
    %v2522 = vpop.f32.mrb[0].mxu0
    %v2523 = vadd.f32 %v2367, %v2522
    %v2524 = vpop.f32.mrb[0].mxu0
    %2525 = vmatprep.mubr.bf16.mxu0 0
    %2526 = vmatmul.mubr.bf16.gmra.mrb[0].mxu0 %v2406
    %v2527 = vpop.f32.mrb[0].mxu0
    %v2528 = vadd.f32 %v2367, %v2527
    %v2529 = vpop.f32.mrb[0].mxu0
    %v2530 = vpop.f32.mrb[0].mxu0
    %v2531 = vadd.f32 %v2367, %v2530
    %v2532 = vpop.f32.mrb[0].mxu0
    %2533 = vmatprep.mubr.bf16.mxu0 0
    %2534 = vmatmul.mubr.bf16.gmra.mrb[0].mxu0 %v2409
    %v2535 = vpop.f32.mrb[0].mxu0
    %v2536 = vadd.f32 %v2367, %v2535
    %v2537 = vpop.f32.mrb[0].mxu0
    %v2538 = vpop.f32.mrb[0].mxu0
    %v2539 = vadd.f32 %v2367, %v2538
    %v2540 = vpop.f32.mrb[0].mxu0
    %2541 = vmatprep.mubr.bf16.mxu0 0
    %2542 = vmatmul.mubr.bf16.gmra.mrb[0].mxu0 %v2412
    %v2543 = vpop.f32.mrb[0].mxu0
    %v2544 = vadd.f32 %v2367, %v2543
    %v2545 = vpop.f32.mrb[0].mxu0
    %v2546 = vpop.f32.mrb[0].mxu0
    %v2547 = vadd.f32 %v2367, %v2546
    %v2548 = vpop.f32.mrb[0].mxu0
    %2549 = vmatprep.mubr.bf16.mxu0 0
    %2550 = vmatmul.mubr.bf16.gmra.mrb[0].mxu0 %v2415
    %v2551 = vpop.f32.mrb[0].mxu0
    %v2552 = vadd.f32 %v2367, %v2551
    %v2553 = vpop.f32.mrb[0].mxu0
    %v2554 = vpop.f32.mrb[0].mxu0
    %v2555 = vadd.f32 %v2367, %v2554
    %v2556 = vpop.f32.mrb[0].mxu0
    %2557 = vmatprep.mubr.bf16.mxu0 0
    %2558 = vmatmul.mubr.bf16.gmra.mrb[0].mxu0 %v2418
    %v2559 = vpop.f32.mrb[0].mxu0
    %v2560 = vadd.f32 %v2367, %v2559
    %v2561 = vpop.f32.mrb[0].mxu0
    %v2562 = vpop.f32.mrb[0].mxu0
    %v2563 = vadd.f32 %v2367, %v2562
    %v2564 = vpop.f32.mrb[0].mxu0
    %2565 = vmatprep.mubr.bf16.mxu0 0
    %2566 = vmatmul.mubr.bf16.gmra.mrb[0].mxu0 %v2421
    %v2567 = vpop.f32.mrb[0].mxu0
    %v2568 = vadd.f32 %v2367, %v2567
    %v2569 = vpop.f32.mrb[0].mxu0
    %v2570 = vpop.f32.mrb[0].mxu0
    %v2571 = vadd.f32 %v2367, %v2570
    %v2572 = vpop.f32.mrb[0].mxu0
    %2573 = vmatprep.mubr.bf16.mxu0 0
    %2574 = vmatmul.mubr.bf16.gmra.mrb[0].mxu0 %v2424
    %v2575 = vpop.f32.mrb[0].mxu0
    %v2576 = vadd.f32 %v2367, %v2575
    %v2577 = vpop.f32.mrb[0].mxu0
    %v2578 = vpop.f32.mrb[0].mxu0
    %v2579 = vadd.f32 %v2367, %v2578
    %v2580 = vpop.f32.mrb[0].mxu0
    %2581 = vmatprep.mubr.bf16.mxu0 0
    %2582 = vmatmul.mubr.bf16.gmra.mrb[0].mxu0 %v2427
    %v2583 = vpop.f32.mrb[0].mxu0
    %v2584 = vadd.f32 %v2367, %v2583
    %v2585 = vpop.f32.mrb[0].mxu0
    %v2586 = vpop.f32.mrb[0].mxu0
    %v2587 = vadd.f32 %v2367, %v2586
    %v2588 = vpop.f32.mrb[0].mxu0
    %2589 = vdwg.mxu0
    %v2591 = vlaneseq
    %v2592 = vshrl.u32 %v2591, 7
    %v2593 = vsub.s32 0, %v2592
    %v2594 = vrot.slane %v1839, %v2593
    %v2600 = vunpack.c.l.b16 %v1834
    %v2601 = vunpack.c.l.b16 %v1835
    %v2602 = vunpack.c.l.b16 %v1836
    %v2603 = vunpack.c.l.b16 %v1837
    %v2604 = vpack.c.b16 %v2601, %v2600
    %v2605 = vpack.c.b16 %v2603, %v2602
    %2608 = vmatprep.subr.bf16.mxu0 0
    %2609 = vmatpush1.bf16.msra.mxu0 %v2604
    %2610 = vmatprep.subr.bf16.mxu0 0
    %2611 = vmatpush1.bf16.msra.mxu0 %v2605
    %2612 = vmatprep.subr.bf16.mxu0 0
    %2613 = vmatpush1.bf16.msra.mxu0 0
    %2614 = vmatprep.subr.bf16.mxu0 0
    %2615 = vmatpush1.bf16.msra.mxu0 0
    %2616 = vmatprep.subr.bf16.mxu0 0
    %2617 = vmatpush1.bf16.msra.mxu0 0
    %2618 = vmatprep.subr.bf16.mxu0 0
    %2619 = vmatpush1.bf16.msra.mxu0 0
    %2620 = vmatprep.subr.bf16.mxu0 0
    %2621 = vmatpush1.bf16.msra.mxu0 0
    %2622 = vmatprep.subr.bf16.mxu0 0
    %2623 = vmatpush1.bf16.msra.mxu0 0
    %2624 = vmatprep.subr.bf16.mxu0 0
    %2625 = vmatpush1.bf16.msra.mxu0 0
    %2626 = vmatprep.subr.bf16.mxu0 0
    %2627 = vmatpush1.bf16.msra.mxu0 0
    %2628 = vmatprep.subr.bf16.mxu0 0
    %2629 = vmatpush1.bf16.msra.mxu0 0
    %2630 = vmatprep.subr.bf16.mxu0 0
    %2631 = vmatpush1.bf16.msra.mxu0 0
    %2632 = vmatprep.subr.bf16.mxu0 0
    %2633 = vmatpush1.bf16.msra.mxu0 0
    %2634 = vmatprep.subr.bf16.mxu0 0
    %2635 = vmatpush1.bf16.msra.mxu0 0
    %2636 = vmatprep.subr.bf16.mxu0 0
    %2637 = vmatpush1.bf16.msra.mxu0 0
    %2638 = vmatprep.subr.bf16.mxu0 0
    %2639 = vmatpush1.bf16.msra.mxu0 0
    %2640 = vmatprep.mubr.bf16.mxu0 0
    %2641 = vmatmul.mubr.bf16.gmra.mrb[0].mxu0 %v2382
    %v2642 = vpop.f32.mrb[0].mxu0
    %v2643 = vadd.f32 %v2594, %v2642
    %v2644 = vpop.f32.mrb[0].mxu0
    %v2645 = vpop.f32.mrb[0].mxu0
    %v2646 = vadd.f32 %v2594, %v2645
    %v2647 = vpop.f32.mrb[0].mxu0
    %2648 = vmatprep.mubr.bf16.mxu0 0
    %2649 = vmatmul.mubr.bf16.gmra.mrb[0].mxu0 %v2385
    %v2650 = vpop.f32.mrb[0].mxu0
    %v2651 = vadd.f32 %v2594, %v2650
    %v2652 = vpop.f32.mrb[0].mxu0
    %v2653 = vpop.f32.mrb[0].mxu0
    %v2654 = vadd.f32 %v2594, %v2653
    %v2655 = vpop.f32.mrb[0].mxu0
    %2656 = vmatprep.mubr.bf16.mxu0 0
    %2657 = vmatmul.mubr.bf16.gmra.mrb[0].mxu0 %v2388
    %v2658 = vpop.f32.mrb[0].mxu0
    %v2659 = vadd.f32 %v2594, %v2658
    %v2660 = vpop.f32.mrb[0].mxu0
    %v2661 = vpop.f32.mrb[0].mxu0
    %v2662 = vadd.f32 %v2594, %v2661
    %v2663 = vpop.f32.mrb[0].mxu0
    %2664 = vmatprep.mubr.bf16.mxu0 0
    %2665 = vmatmul.mubr.bf16.gmra.mrb[0].mxu0 %v2391
    %v2666 = vpop.f32.mrb[0].mxu0
    %v2667 = vadd.f32 %v2594, %v2666
    %v2668 = vpop.f32.mrb[0].mxu0
    %v2669 = vpop.f32.mrb[0].mxu0
    %v2670 = vadd.f32 %v2594, %v2669
    %v2671 = vpop.f32.mrb[0].mxu0
    %2672 = vmatprep.mubr.bf16.mxu0 0
    %2673 = vmatmul.mubr.bf16.gmra.mrb[0].mxu0 %v2394
    %v2674 = vpop.f32.mrb[0].mxu0
    %v2675 = vadd.f32 %v2594, %v2674
    %v2676 = vpop.f32.mrb[0].mxu0
    %v2677 = vpop.f32.mrb[0].mxu0
    %v2678 = vadd.f32 %v2594, %v2677
    %v2679 = vpop.f32.mrb[0].mxu0
    %2680 = vmatprep.mubr.bf16.mxu0 0
    %2681 = vmatmul.mubr.bf16.gmra.mrb[0].mxu0 %v2397
    %v2682 = vpop.f32.mrb[0].mxu0
    %v2683 = vadd.f32 %v2594, %v2682
    %v2684 = vpop.f32.mrb[0].mxu0
    %v2685 = vpop.f32.mrb[0].mxu0
    %v2686 = vadd.f32 %v2594, %v2685
    %v2687 = vpop.f32.mrb[0].mxu0
    %2688 = vmatprep.mubr.bf16.mxu0 0
    %2689 = vmatmul.mubr.bf16.gmra.mrb[0].mxu0 %v2400
    %v2690 = vpop.f32.mrb[0].mxu0
    %v2691 = vadd.f32 %v2594, %v2690
    %v2692 = vpop.f32.mrb[0].mxu0
    %v2693 = vpop.f32.mrb[0].mxu0
    %v2694 = vadd.f32 %v2594, %v2693
    %v2695 = vpop.f32.mrb[0].mxu0
    %2696 = vmatprep.mubr.bf16.mxu0 0
    %2697 = vmatmul.mubr.bf16.gmra.mrb[0].mxu0 %v2403
    %v2698 = vpop.f32.mrb[0].mxu0
    %v2699 = vadd.f32 %v2594, %v2698
    %v2700 = vpop.f32.mrb[0].mxu0
    %v2701 = vpop.f32.mrb[0].mxu0
    %v2702 = vadd.f32 %v2594, %v2701
    %v2703 = vpop.f32.mrb[0].mxu0
    %2704 = vmatprep.mubr.bf16.mxu0 0
    %2705 = vmatmul.mubr.bf16.gmra.mrb[0].mxu0 %v2406
    %v2706 = vpop.f32.mrb[0].mxu0
    %v2707 = vadd.f32 %v2594, %v2706
    %v2708 = vpop.f32.mrb[0].mxu0
    %v2709 = vpop.f32.mrb[0].mxu0
    %v2710 = vadd.f32 %v2594, %v2709
    %v2711 = vpop.f32.mrb[0].mxu0
    %2712 = vmatprep.mubr.bf16.mxu0 0
    %2713 = vmatmul.mubr.bf16.gmra.mrb[0].mxu0 %v2409
    %v2714 = vpop.f32.mrb[0].mxu0
    %v2715 = vadd.f32 %v2594, %v2714
    %v2716 = vpop.f32.mrb[0].mxu0
    %v2717 = vpop.f32.mrb[0].mxu0
    %v2718 = vadd.f32 %v2594, %v2717
    %v2719 = vpop.f32.mrb[0].mxu0
    %2720 = vmatprep.mubr.bf16.mxu0 0
    %2721 = vmatmul.mubr.bf16.gmra.mrb[0].mxu0 %v2412
    %v2722 = vpop.f32.mrb[0].mxu0
    %v2723 = vadd.f32 %v2594, %v2722
    %v2724 = vpop.f32.mrb[0].mxu0
    %v2725 = vpop.f32.mrb[0].mxu0
    %v2726 = vadd.f32 %v2594, %v2725
    %v2727 = vpop.f32.mrb[0].mxu0
    %2728 = vmatprep.mubr.bf16.mxu0 0
    %2729 = vmatmul.mubr.bf16.gmra.mrb[0].mxu0 %v2415
    %v2730 = vpop.f32.mrb[0].mxu0
    %v2731 = vadd.f32 %v2594, %v2730
    %v2732 = vpop.f32.mrb[0].mxu0
    %v2733 = vpop.f32.mrb[0].mxu0
    %v2734 = vadd.f32 %v2594, %v2733
    %v2735 = vpop.f32.mrb[0].mxu0
    %2736 = vmatprep.mubr.bf16.mxu0 0
    %2737 = vmatmul.mubr.bf16.gmra.mrb[0].mxu0 %v2418
    %v2738 = vpop.f32.mrb[0].mxu0
    %v2739 = vadd.f32 %v2594, %v2738
    %v2740 = vpop.f32.mrb[0].mxu0
    %v2741 = vpop.f32.mrb[0].mxu0
    %v2742 = vadd.f32 %v2594, %v2741
    %v2743 = vpop.f32.mrb[0].mxu0
    %2744 = vmatprep.mubr.bf16.mxu0 0
    %2745 = vmatmul.mubr.bf16.gmra.mrb[0].mxu0 %v2421
    %v2746 = vpop.f32.mrb[0].mxu0
    %v2747 = vadd.f32 %v2594, %v2746
    %v2748 = vpop.f32.mrb[0].mxu0
    %v2749 = vpop.f32.mrb[0].mxu0
    %v2750 = vadd.f32 %v2594, %v2749
    %v2751 = vpop.f32.mrb[0].mxu0
    %2752 = vmatprep.mubr.bf16.mxu0 0
    %2753 = vmatmul.mubr.bf16.gmra.mrb[0].mxu0 %v2424
    %v2754 = vpop.f32.mrb[0].mxu0
    %v2755 = vadd.f32 %v2594, %v2754
    %v2756 = vpop.f32.mrb[0].mxu0
    %v2757 = vpop.f32.mrb[0].mxu0
    %v2758 = vadd.f32 %v2594, %v2757
    %v2759 = vpop.f32.mrb[0].mxu0
    %2760 = vmatprep.mubr.bf16.mxu0 0
    %2761 = vmatmul.mubr.bf16.gmra.mrb[0].mxu0 %v2427
    %v2762 = vpop.f32.mrb[0].mxu0
    %v2763 = vadd.f32 %v2594, %v2762
    %v2764 = vpop.f32.mrb[0].mxu0
    %v2765 = vpop.f32.mrb[0].mxu0
    %v2766 = vadd.f32 %v2594, %v2765
    %v2767 = vpop.f32.mrb[0].mxu0
    %2768 = vdwg.mxu0
    %v2769 = vmax.f32 %v2464, 0.0
    %v2770 = vmax.f32 %v2467, 0.0
    %v2771 = vmax.f32 %v2472, 0.0
    %v2772 = vmax.f32 %v2475, 0.0
    %v2773 = vmax.f32 %v2480, 0.0
    %v2774 = vmax.f32 %v2483, 0.0
    %v2775 = vmax.f32 %v2488, 0.0
    %v2776 = vmax.f32 %v2491, 0.0
    %v2777 = vmax.f32 %v2496, 0.0
    %v2778 = vmax.f32 %v2499, 0.0
    %v2779 = vmax.f32 %v2504, 0.0
    %v2780 = vmax.f32 %v2507, 0.0
    %v2781 = vmax.f32 %v2512, 0.0
    %v2782 = vmax.f32 %v2515, 0.0
    %v2783 = vmax.f32 %v2520, 0.0
    %v2784 = vmax.f32 %v2523, 0.0
    %v2785 = vmax.f32 %v2528, 0.0
    %v2786 = vmax.f32 %v2531, 0.0
    %v2787 = vmax.f32 %v2536, 0.0
    %v2788 = vmax.f32 %v2539, 0.0
    %v2789 = vmax.f32 %v2544, 0.0
    %v2790 = vmax.f32 %v2547, 0.0
    %v2791 = vmax.f32 %v2552, 0.0
    %v2792 = vmax.f32 %v2555, 0.0
    %v2793 = vmax.f32 %v2560, 0.0
    %v2794 = vmax.f32 %v2563, 0.0
    %v2795 = vmax.f32 %v2568, 0.0
    %v2796 = vmax.f32 %v2571, 0.0
    %v2797 = vmax.f32 %v2576, 0.0
    %v2798 = vmax.f32 %v2579, 0.0
    %v2799 = vmax.f32 %v2584, 0.0
    %v2800 = vmax.f32 %v2587, 0.0
    %v2801 = vadd.f32 %v2769, %v2643
    %v2802 = vadd.f32 %v2770, %v2646
    %v2803 = vadd.f32 %v2771, %v2651
    %v2804 = vadd.f32 %v2772, %v2654
    %v2805 = vadd.f32 %v2773, %v2659
    %v2806 = vadd.f32 %v2774, %v2662
    %v2807 = vadd.f32 %v2775, %v2667
    %v2808 = vadd.f32 %v2776, %v2670
    %v2809 = vadd.f32 %v2777, %v2675
    %v2810 = vadd.f32 %v2778, %v2678
    %v2811 = vadd.f32 %v2779, %v2683
    %v2812 = vadd.f32 %v2780, %v2686
    %v2813 = vadd.f32 %v2781, %v2691
    %v2814 = vadd.f32 %v2782, %v2694
    %v2815 = vadd.f32 %v2783, %v2699
    %v2816 = vadd.f32 %v2784, %v2702
    %v2817 = vadd.f32 %v2785, %v2707
    %v2818 = vadd.f32 %v2786, %v2710
    %v2819 = vadd.f32 %v2787, %v2715
    %v2820 = vadd.f32 %v2788, %v2718
    %v2821 = vadd.f32 %v2789, %v2723
    %v2822 = vadd.f32 %v2790, %v2726
    %v2823 = vadd.f32 %v2791, %v2731
    %v2824 = vadd.f32 %v2792, %v2734
    %v2825 = vadd.f32 %v2793, %v2739
    %v2826 = vadd.f32 %v2794, %v2742
    %v2827 = vadd.f32 %v2795, %v2747
    %v2828 = vadd.f32 %v2796, %v2750
    %v2829 = vadd.f32 %v2797, %v2755
    %v2830 = vadd.f32 %v2798, %v2758
    %v2831 = vadd.f32 %v2799, %v2763
    %v2832 = vadd.f32 %v2800, %v2766
    %v2833 = vpack.c.bf16 %v2802, %v2801
    %v2834 = vpack.c.bf16 %v2804, %v2803
    %v2835 = vpack.c.bf16 %v2806, %v2805
    %v2836 = vpack.c.bf16 %v2808, %v2807
    %v2837 = vpack.c.bf16 %v2810, %v2809
    %v2838 = vpack.c.bf16 %v2812, %v2811
    %v2839 = vpack.c.bf16 %v2814, %v2813
    %v2840 = vpack.c.bf16 %v2816, %v2815
    %v2841 = vpack.c.bf16 %v2818, %v2817
    %v2842 = vpack.c.bf16 %v2820, %v2819
    %v2843 = vpack.c.bf16 %v2822, %v2821
    %v2844 = vpack.c.bf16 %v2824, %v2823
    %v2845 = vpack.c.bf16 %v2826, %v2825
    %v2846 = vpack.c.bf16 %v2828, %v2827
    %v2847 = vpack.c.bf16 %v2830, %v2829
    %v2848 = vpack.c.bf16 %v2832, %v2831
    %v2850 = vlaneseq
    %v2851 = vshrl.u32 %v2850, 7
    %v2852 = vsub.s32 0, %v2851
    %v2853 = vrot.slane %v1854, %v2852
    %v2867 = vunpack.c.l.b16 %v1841
    %v2868 = vunpack.c.l.b16 %v1842
    %v2869 = vunpack.c.l.b16 %v1843
    %v2870 = vunpack.c.l.b16 %v1844
    %v2871 = vunpack.c.l.b16 %v1845
    %v2872 = vunpack.c.l.b16 %v1846
    %v2873 = vunpack.c.l.b16 %v1847
    %v2874 = vunpack.c.l.b16 %v1848
    %v2875 = vunpack.c.l.b16 %v1849
    %v2876 = vunpack.c.l.b16 %v1850
    %v2877 = vunpack.c.l.b16 %v1851
    %v2878 = vunpack.c.l.b16 %v1852
    %v2879 = vpack.c.b16 %v2868, %v2867
    %v2880 = vpack.c.b16 %v2870, %v2869
    %v2881 = vpack.c.b16 %v2872, %v2871
    %v2882 = vpack.c.b16 %v2874, %v2873
    %v2883 = vpack.c.b16 %v2876, %v2875
    %v2884 = vpack.c.b16 %v2878, %v2877
    %v2892 = vsel %vm1580, %v2833, 0
    %v2895 = vsel %vm1580, %v2834, 0
    %v2898 = vsel %vm1580, %v2835, 0
    %v2901 = vsel %vm1580, %v2836, 0
    %v2904 = vsel %vm1580, %v2837, 0
    %v2907 = vsel %vm1580, %v2838, 0
    %v2910 = vsel %vm1580, %v2839, 0
    %v2913 = vsel %vm1580, %v2840, 0
    %v2916 = vsel %vm1580, %v2841, 0
    %v2919 = vsel %vm1580, %v2842, 0
    %v2922 = vsel %vm1580, %v2843, 0
    %v2925 = vsel %vm1580, %v2844, 0
    %v2928 = vsel %vm1580, %v2845, 0
    %v2931 = vsel %vm1580, %v2846, 0
    %v2934 = vsel %vm1580, %v2847, 0
    %v2937 = vsel %vm1580, %v2848, 0
    %2939 = vmatprep.subr.bf16.mxu0 0
    %2940 = vmatpush1.bf16.msra.mxu0 %v2879
    %2941 = vmatprep.subr.bf16.mxu0 0
    %2942 = vmatpush1.bf16.msra.mxu0 %v2880
    %2943 = vmatprep.subr.bf16.mxu0 0
    %2944 = vmatpush1.bf16.msra.mxu0 %v2881
    %2945 = vmatprep.subr.bf16.mxu0 0
    %2946 = vmatpush1.bf16.msra.mxu0 %v2882
    %2947 = vmatprep.subr.bf16.mxu0 0
    %2948 = vmatpush1.bf16.msra.mxu0 %v2883
    %2949 = vmatprep.subr.bf16.mxu0 0
    %2950 = vmatpush1.bf16.msra.mxu0 %v2884
    %2951 = vmatprep.subr.bf16.mxu0 0
    %2952 = vmatpush1.bf16.msra.mxu0 0
    %2953 = vmatprep.subr.bf16.mxu0 0
    %2954 = vmatpush1.bf16.msra.mxu0 0
    %2955 = vmatprep.subr.bf16.mxu0 0
    %2956 = vmatpush1.bf16.msra.mxu0 0
    %2957 = vmatprep.subr.bf16.mxu0 0
    %2958 = vmatpush1.bf16.msra.mxu0 0
    %2959 = vmatprep.subr.bf16.mxu0 0
    %2960 = vmatpush1.bf16.msra.mxu0 0
    %2961 = vmatprep.subr.bf16.mxu0 0
    %2962 = vmatpush1.bf16.msra.mxu0 0
    %2963 = vmatprep.subr.bf16.mxu0 0
    %2964 = vmatpush1.bf16.msra.mxu0 0
    %2965 = vmatprep.subr.bf16.mxu0 0
    %2966 = vmatpush1.bf16.msra.mxu0 0
    %2967 = vmatprep.subr.bf16.mxu0 0
    %2968 = vmatpush1.bf16.msra.mxu0 0
    %2969 = vmatprep.subr.bf16.mxu0 0
    %2970 = vmatpush1.bf16.msra.mxu0 0
    %2971 = vmatprep.mubr.bf16.mxu0 0
    %2972 = vmatmul.mubr.bf16.gmra.mrb[0].mxu0 %v2892
    %v2973 = vpop.f32.mrb[0].mxu0
    %v2974 = vadd.f32 %v2853, %v2973
    %v2975 = vpop.f32.mrb[0].mxu0
    %v2976 = vpop.f32.mrb[0].mxu0
    %v2977 = vadd.f32 %v2853, %v2976
    %v2978 = vpop.f32.mrb[0].mxu0
    %2979 = vmatprep.mubr.bf16.mxu0 0
    %2980 = vmatmul.mubr.bf16.gmra.mrb[0].mxu0 %v2895
    %v2981 = vpop.f32.mrb[0].mxu0
    %v2982 = vadd.f32 %v2853, %v2981
    %v2983 = vpop.f32.mrb[0].mxu0
    %v2984 = vpop.f32.mrb[0].mxu0
    %v2985 = vadd.f32 %v2853, %v2984
    %v2986 = vpop.f32.mrb[0].mxu0
    %2987 = vmatprep.mubr.bf16.mxu0 0
    %2988 = vmatmul.mubr.bf16.gmra.mrb[0].mxu0 %v2898
    %v2989 = vpop.f32.mrb[0].mxu0
    %v2990 = vadd.f32 %v2853, %v2989
    %v2991 = vpop.f32.mrb[0].mxu0
    %v2992 = vpop.f32.mrb[0].mxu0
    %v2993 = vadd.f32 %v2853, %v2992
    %v2994 = vpop.f32.mrb[0].mxu0
    %2995 = vmatprep.mubr.bf16.mxu0 0
    %2996 = vmatmul.mubr.bf16.gmra.mrb[0].mxu0 %v2901
    %v2997 = vpop.f32.mrb[0].mxu0
    %v2998 = vadd.f32 %v2853, %v2997
    %v2999 = vpop.f32.mrb[0].mxu0
    %v3000 = vpop.f32.mrb[0].mxu0
    %v3001 = vadd.f32 %v2853, %v3000
    %v3002 = vpop.f32.mrb[0].mxu0
    %3003 = vmatprep.mubr.bf16.mxu0 0
    %3004 = vmatmul.mubr.bf16.gmra.mrb[0].mxu0 %v2904
    %v3005 = vpop.f32.mrb[0].mxu0
    %v3006 = vadd.f32 %v2853, %v3005
    %v3007 = vpop.f32.mrb[0].mxu0
    %v3008 = vpop.f32.mrb[0].mxu0
    %v3009 = vadd.f32 %v2853, %v3008
    %v3010 = vpop.f32.mrb[0].mxu0
    %3011 = vmatprep.mubr.bf16.mxu0 0
    %3012 = vmatmul.mubr.bf16.gmra.mrb[0].mxu0 %v2907
    %v3013 = vpop.f32.mrb[0].mxu0
    %v3014 = vadd.f32 %v2853, %v3013
    %v3015 = vpop.f32.mrb[0].mxu0
    %v3016 = vpop.f32.mrb[0].mxu0
    %v3017 = vadd.f32 %v2853, %v3016
    %v3018 = vpop.f32.mrb[0].mxu0
    %3019 = vmatprep.mubr.bf16.mxu0 0
    %3020 = vmatmul.mubr.bf16.gmra.mrb[0].mxu0 %v2910
    %v3021 = vpop.f32.mrb[0].mxu0
    %v3022 = vadd.f32 %v2853, %v3021
    %v3023 = vpop.f32.mrb[0].mxu0
    %v3024 = vpop.f32.mrb[0].mxu0
    %v3025 = vadd.f32 %v2853, %v3024
    %v3026 = vpop.f32.mrb[0].mxu0
    %3027 = vmatprep.mubr.bf16.mxu0 0
    %3028 = vmatmul.mubr.bf16.gmra.mrb[0].mxu0 %v2913
    %v3029 = vpop.f32.mrb[0].mxu0
    %v3030 = vadd.f32 %v2853, %v3029
    %v3031 = vpop.f32.mrb[0].mxu0
    %v3032 = vpop.f32.mrb[0].mxu0
    %v3033 = vadd.f32 %v2853, %v3032
    %v3034 = vpop.f32.mrb[0].mxu0
    %3035 = vmatprep.mubr.bf16.mxu0 0
    %3036 = vmatmul.mubr.bf16.gmra.mrb[0].mxu0 %v2916
    %v3037 = vpop.f32.mrb[0].mxu0
    %v3038 = vadd.f32 %v2853, %v3037
    %v3039 = vpop.f32.mrb[0].mxu0
    %v3040 = vpop.f32.mrb[0].mxu0
    %v3041 = vadd.f32 %v2853, %v3040
    %v3042 = vpop.f32.mrb[0].mxu0
    %3043 = vmatprep.mubr.bf16.mxu0 0
    %3044 = vmatmul.mubr.bf16.gmra.mrb[0].mxu0 %v2919
    %v3045 = vpop.f32.mrb[0].mxu0
    %v3046 = vadd.f32 %v2853, %v3045
    %v3047 = vpop.f32.mrb[0].mxu0
    %v3048 = vpop.f32.mrb[0].mxu0
    %v3049 = vadd.f32 %v2853, %v3048
    %v3050 = vpop.f32.mrb[0].mxu0
    %3051 = vmatprep.mubr.bf16.mxu0 0
    %3052 = vmatmul.mubr.bf16.gmra.mrb[0].mxu0 %v2922
    %v3053 = vpop.f32.mrb[0].mxu0
    %v3054 = vadd.f32 %v2853, %v3053
    %v3055 = vpop.f32.mrb[0].mxu0
    %v3056 = vpop.f32.mrb[0].mxu0
    %v3057 = vadd.f32 %v2853, %v3056
    %v3058 = vpop.f32.mrb[0].mxu0
    %3059 = vmatprep.mubr.bf16.mxu0 0
    %3060 = vmatmul.mubr.bf16.gmra.mrb[0].mxu0 %v2925
    %v3061 = vpop.f32.mrb[0].mxu0
    %v3062 = vadd.f32 %v2853, %v3061
    %v3063 = vpop.f32.mrb[0].mxu0
    %v3064 = vpop.f32.mrb[0].mxu0
    %v3065 = vadd.f32 %v2853, %v3064
    %v3066 = vpop.f32.mrb[0].mxu0
    %3067 = vmatprep.mubr.bf16.mxu0 0
    %3068 = vmatmul.mubr.bf16.gmra.mrb[0].mxu0 %v2928
    %v3069 = vpop.f32.mrb[0].mxu0
    %v3070 = vadd.f32 %v2853, %v3069
    %v3071 = vpop.f32.mrb[0].mxu0
    %v3072 = vpop.f32.mrb[0].mxu0
    %v3073 = vadd.f32 %v2853, %v3072
    %v3074 = vpop.f32.mrb[0].mxu0
    %3075 = vmatprep.mubr.bf16.mxu0 0
    %3076 = vmatmul.mubr.bf16.gmra.mrb[0].mxu0 %v2931
    %v3077 = vpop.f32.mrb[0].mxu0
    %v3078 = vadd.f32 %v2853, %v3077
    %v3079 = vpop.f32.mrb[0].mxu0
    %v3080 = vpop.f32.mrb[0].mxu0
    %v3081 = vadd.f32 %v2853, %v3080
    %v3082 = vpop.f32.mrb[0].mxu0
    %3083 = vmatprep.mubr.bf16.mxu0 0
    %3084 = vmatmul.mubr.bf16.gmra.mrb[0].mxu0 %v2934
    %v3085 = vpop.f32.mrb[0].mxu0
    %v3086 = vadd.f32 %v2853, %v3085
    %v3087 = vpop.f32.mrb[0].mxu0
    %v3088 = vpop.f32.mrb[0].mxu0
    %v3089 = vadd.f32 %v2853, %v3088
    %v3090 = vpop.f32.mrb[0].mxu0
    %3091 = vmatprep.mubr.bf16.mxu0 0
    %3092 = vmatmul.mubr.bf16.gmra.mrb[0].mxu0 %v2937
    %v3093 = vpop.f32.mrb[0].mxu0
    %v3094 = vadd.f32 %v2853, %v3093
    %v3095 = vpop.f32.mrb[0].mxu0
    %v3096 = vpop.f32.mrb[0].mxu0
    %v3097 = vadd.f32 %v2853, %v3096
    %v3098 = vpop.f32.mrb[0].mxu0
    %3099 = vdwg.mxu0
    %v3100 = vadd.f32 %v1790, %v2974
    %v3101 = vadd.f32 %v1791, %v2977
    %v3102 = vadd.f32 %v1792, %v2982
    %v3103 = vadd.f32 %v1793, %v2985
    %v3104 = vadd.f32 %v1794, %v2990
    %v3105 = vadd.f32 %v1795, %v2993
    %v3106 = vadd.f32 %v1796, %v2998
    %v3107 = vadd.f32 %v1797, %v3001
    %v3108 = vadd.f32 %v1798, %v3006
    %v3109 = vadd.f32 %v1799, %v3009
    %v3110 = vadd.f32 %v1800, %v3014
    %v3111 = vadd.f32 %v1801, %v3017
    %v3112 = vadd.f32 %v1802, %v3022
    %v3113 = vadd.f32 %v1803, %v3025
    %v3114 = vadd.f32 %v1804, %v3030
    %v3115 = vadd.f32 %v1805, %v3033
    %v3116 = vadd.f32 %v1806, %v3038
    %v3117 = vadd.f32 %v1807, %v3041
    %v3118 = vadd.f32 %v1808, %v3046
    %v3119 = vadd.f32 %v1809, %v3049
    %v3120 = vadd.f32 %v1810, %v3054
    %v3121 = vadd.f32 %v1811, %v3057
    %v3122 = vadd.f32 %v1812, %v3062
    %v3123 = vadd.f32 %v1813, %v3065
    %v3124 = vadd.f32 %v1814, %v3070
    %v3125 = vadd.f32 %v1815, %v3073
    %v3126 = vadd.f32 %v1816, %v3078
    %v3127 = vadd.f32 %v1817, %v3081
    %v3128 = vadd.f32 %v1818, %v3086
    %v3129 = vadd.f32 %v1819, %v3089
    %v3130 = vadd.f32 %v1820, %v3094
    %v3131 = vadd.f32 %v1821, %v3097
    %s3132 = scalar_lea.vmem %s3, 2
    %v3133 = vld [vmem:[%s3132] sm:$0x1]
    %s3134 = scalar_lea.vmem %s4, 2
    %v3135 = vld [vmem:[%s3134] sm:$0x1]
    %s3136 = scalar_lea.vmem %s5, 32
    %v3137 = vld [vmem:[%s3136] sm:$0xf]
    %v3138 = vld [vmem:[%s3136 + $0x4] sm:$0xf]
    %v3139 = vld [vmem:[%s3136 + $0x8] sm:$0xf]
    %v3140 = vld [vmem:[%s3136 + $0xc] sm:$0xf]
    %s3141 = scalar_lea.vmem %s6, 2
    %v3142 = vld [vmem:[%s3141] sm:$0x1]
    %s3143 = scalar_lea.vmem %s7, 32
    %v3144 = vld [vmem:[%s3143] sm:$0xf]
    %v3145 = vld [vmem:[%s3143 + $0x4] sm:$0xf]
    %v3146 = vld [vmem:[%s3143 + $0x8] sm:$0xf]
    %v3147 = vld [vmem:[%s3143 + $0xc] sm:$0xf]
    %s3148 = scalar_lea.vmem %s8, 2
    %v3149 = vld [vmem:[%s3148] sm:$0x1]
    %s3150 = scalar_lea.vmem %s9, 96
    %v3151 = vld [vmem:[%s3150] sm:$0xf]
    %v3152 = vld [vmem:[%s3150 + $0x4] sm:$0xf]
    %v3153 = vld [vmem:[%s3150 + $0x8] sm:$0xf]
    %v3154 = vld [vmem:[%s3150 + $0xc] sm:$0xf]
    %v3155 = vld [vmem:[%s3150 + $0x10] sm:$0xf]
    %v3156 = vld [vmem:[%s3150 + $0x14] sm:$0xf]
    %v3157 = vld [vmem:[%s3150 + $0x18] sm:$0xf]
    %v3158 = vld [vmem:[%s3150 + $0x1c] sm:$0xf]
    %v3159 = vld [vmem:[%s3150 + $0x20] sm:$0xf]
    %v3160 = vld [vmem:[%s3150 + $0x24] sm:$0xf]
    %v3161 = vld [vmem:[%s3150 + $0x28] sm:$0xf]
    %v3162 = vld [vmem:[%s3150 + $0x2c] sm:$0xf]
    %s3163 = scalar_lea.vmem %s10, 2
    %v3164 = vld [vmem:[%s3163] sm:$0x1]
    %v3165 = vsel %vm542, %v3100, 0.0
    %3166 = vadd.xlane.f32.xlu0 %v3165
    %v3167 = vpop.xlane.xlu0 %3166
    %v3168 = vsel %vm542, %v3101, 0.0
    %3169 = vadd.xlane.f32.xlu0 %v3168
    %v3170 = vpop.xlane.xlu0 %3169
    %v3171 = vsel %vm542, %v3102, 0.0
    %3172 = vadd.xlane.f32.xlu0 %v3171
    %v3173 = vpop.xlane.xlu0 %3172
    %v3174 = vsel %vm542, %v3103, 0.0
    %3175 = vadd.xlane.f32.xlu0 %v3174
    %v3176 = vpop.xlane.xlu0 %3175
    %v3177 = vsel %vm542, %v3104, 0.0
    %3178 = vadd.xlane.f32.xlu0 %v3177
    %v3179 = vpop.xlane.xlu0 %3178
    %v3180 = vsel %vm542, %v3105, 0.0
    %3181 = vadd.xlane.f32.xlu0 %v3180
    %v3182 = vpop.xlane.xlu0 %3181
    %v3183 = vsel %vm542, %v3106, 0.0
    %3184 = vadd.xlane.f32.xlu0 %v3183
    %v3185 = vpop.xlane.xlu0 %3184
    %v3186 = vsel %vm542, %v3107, 0.0
    %3187 = vadd.xlane.f32.xlu0 %v3186
    %v3188 = vpop.xlane.xlu0 %3187
    %v3189 = vsel %vm542, %v3108, 0.0
    %3190 = vadd.xlane.f32.xlu0 %v3189
    %v3191 = vpop.xlane.xlu0 %3190
    %v3192 = vsel %vm542, %v3109, 0.0
    %3193 = vadd.xlane.f32.xlu0 %v3192
    %v3194 = vpop.xlane.xlu0 %3193
    %v3195 = vsel %vm542, %v3110, 0.0
    %3196 = vadd.xlane.f32.xlu0 %v3195
    %v3197 = vpop.xlane.xlu0 %3196
    %v3198 = vsel %vm542, %v3111, 0.0
    %3199 = vadd.xlane.f32.xlu0 %v3198
    %v3200 = vpop.xlane.xlu0 %3199
    %v3201 = vsel %vm542, %v3112, 0.0
    %3202 = vadd.xlane.f32.xlu0 %v3201
    %v3203 = vpop.xlane.xlu0 %3202
    %v3204 = vsel %vm542, %v3113, 0.0
    %3205 = vadd.xlane.f32.xlu0 %v3204
    %v3206 = vpop.xlane.xlu0 %3205
    %v3207 = vsel %vm542, %v3114, 0.0
    %3208 = vadd.xlane.f32.xlu0 %v3207
    %v3209 = vpop.xlane.xlu0 %3208
    %v3210 = vsel %vm542, %v3115, 0.0
    %3211 = vadd.xlane.f32.xlu0 %v3210
    %v3212 = vpop.xlane.xlu0 %3211
    %v3213 = vsel %vm542, %v3116, 0.0
    %3214 = vadd.xlane.f32.xlu0 %v3213
    %v3215 = vpop.xlane.xlu0 %3214
    %v3216 = vsel %vm542, %v3117, 0.0
    %3217 = vadd.xlane.f32.xlu0 %v3216
    %v3218 = vpop.xlane.xlu0 %3217
    %v3219 = vsel %vm542, %v3118, 0.0
    %3220 = vadd.xlane.f32.xlu0 %v3219
    %v3221 = vpop.xlane.xlu0 %3220
    %v3222 = vsel %vm542, %v3119, 0.0
    %3223 = vadd.xlane.f32.xlu0 %v3222
    %v3224 = vpop.xlane.xlu0 %3223
    %v3225 = vsel %vm542, %v3120, 0.0
    %3226 = vadd.xlane.f32.xlu0 %v3225
    %v3227 = vpop.xlane.xlu0 %3226
    %v3228 = vsel %vm542, %v3121, 0.0
    %3229 = vadd.xlane.f32.xlu0 %v3228
    %v3230 = vpop.xlane.xlu0 %3229
    %v3231 = vsel %vm542, %v3122, 0.0
    %3232 = vadd.xlane.f32.xlu0 %v3231
    %v3233 = vpop.xlane.xlu0 %3232
    %v3234 = vsel %vm542, %v3123, 0.0
    %3235 = vadd.xlane.f32.xlu0 %v3234
    %v3236 = vpop.xlane.xlu0 %3235
    %v3237 = vsel %vm542, %v3124, 0.0
    %3238 = vadd.xlane.f32.xlu0 %v3237
    %v3239 = vpop.xlane.xlu0 %3238
    %v3240 = vsel %vm542, %v3125, 0.0
    %3241 = vadd.xlane.f32.xlu0 %v3240
    %v3242 = vpop.xlane.xlu0 %3241
    %v3243 = vsel %vm542, %v3126, 0.0
    %3244 = vadd.xlane.f32.xlu0 %v3243
    %v3245 = vpop.xlane.xlu0 %3244
    %v3246 = vsel %vm542, %v3127, 0.0
    %3247 = vadd.xlane.f32.xlu0 %v3246
    %v3248 = vpop.xlane.xlu0 %3247
    %v3249 = vsel %vm542, %v3128, 0.0
    %3250 = vadd.xlane.f32.xlu0 %v3249
    %v3251 = vpop.xlane.xlu0 %3250
    %v3252 = vsel %vm542, %v3129, 0.0
    %3253 = vadd.xlane.f32.xlu0 %v3252
    %v3254 = vpop.xlane.xlu0 %3253
    %v3255 = vsel %vm542, %v3130, 0.0
    %3256 = vadd.xlane.f32.xlu0 %v3255
    %v3257 = vpop.xlane.xlu0 %3256
    %v3258 = vsel %vm542, %v3131, 0.0
    %3259 = vadd.xlane.f32.xlu0 %v3258
    %v3260 = vpop.xlane.xlu0 %3259
    %v3261 = vmul.f32 %v3167, %v639
    %v3262 = vmul.f32 %v3170, %v639
    %v3263 = vmul.f32 %v3173, %v639
    %v3264 = vmul.f32 %v3176, %v639
    %v3265 = vmul.f32 %v3179, %v639
    %v3266 = vmul.f32 %v3182, %v639
    %v3267 = vmul.f32 %v3185, %v639
    %v3268 = vmul.f32 %v3188, %v639
    %v3269 = vmul.f32 %v3191, %v639
    %v3270 = vmul.f32 %v3194, %v639
    %v3271 = vmul.f32 %v3197, %v639
    %v3272 = vmul.f32 %v3200, %v639
    %v3273 = vmul.f32 %v3203, %v639
    %v3274 = vmul.f32 %v3206, %v639
    %v3275 = vmul.f32 %v3209, %v639
    %v3276 = vmul.f32 %v3212, %v639
    %v3277 = vmul.f32 %v3215, %v639
    %v3278 = vmul.f32 %v3218, %v639
    %v3279 = vmul.f32 %v3221, %v639
    %v3280 = vmul.f32 %v3224, %v639
    %v3281 = vmul.f32 %v3227, %v639
    %v3282 = vmul.f32 %v3230, %v639
    %v3283 = vmul.f32 %v3233, %v639
    %v3284 = vmul.f32 %v3236, %v639
    %v3285 = vmul.f32 %v3239, %v639
    %v3286 = vmul.f32 %v3242, %v639
    %v3287 = vmul.f32 %v3245, %v639
    %v3288 = vmul.f32 %v3248, %v639
    %v3289 = vmul.f32 %v3251, %v639
    %v3290 = vmul.f32 %v3254, %v639
    %v3291 = vmul.f32 %v3257, %v639
    %v3292 = vmul.f32 %v3260, %v639
    %v3293 = vsub.f32 %v3100, %v3261
    %v3294 = vsub.f32 %v3101, %v3262
    %v3295 = vsub.f32 %v3102, %v3263
    %v3296 = vsub.f32 %v3103, %v3264
    %v3297 = vsub.f32 %v3104, %v3265
    %v3298 = vsub.f32 %v3105, %v3266
    %v3299 = vsub.f32 %v3106, %v3267
    %v3300 = vsub.f32 %v3107, %v3268
    %v3301 = vsub.f32 %v3108, %v3269
    %v3302 = vsub.f32 %v3109, %v3270
    %v3303 = vsub.f32 %v3110, %v3271
    %v3304 = vsub.f32 %v3111, %v3272
    %v3305 = vsub.f32 %v3112, %v3273
    %v3306 = vsub.f32 %v3113, %v3274
    %v3307 = vsub.f32 %v3114, %v3275
    %v3308 = vsub.f32 %v3115, %v3276
    %v3309 = vsub.f32 %v3116, %v3277
    %v3310 = vsub.f32 %v3117, %v3278
    %v3311 = vsub.f32 %v3118, %v3279
    %v3312 = vsub.f32 %v3119, %v3280
    %v3313 = vsub.f32 %v3120, %v3281
    %v3314 = vsub.f32 %v3121, %v3282
    %v3315 = vsub.f32 %v3122, %v3283
    %v3316 = vsub.f32 %v3123, %v3284
    %v3317 = vsub.f32 %v3124, %v3285
    %v3318 = vsub.f32 %v3125, %v3286
    %v3319 = vsub.f32 %v3126, %v3287
    %v3320 = vsub.f32 %v3127, %v3288
    %v3321 = vsub.f32 %v3128, %v3289
    %v3322 = vsub.f32 %v3129, %v3290
    %v3323 = vsub.f32 %v3130, %v3291
    %v3324 = vsub.f32 %v3131, %v3292
    %v3325 = vmul.f32 %v3293, %v3293
    %v3326 = vmul.f32 %v3294, %v3294
    %v3327 = vmul.f32 %v3295, %v3295
    %v3328 = vmul.f32 %v3296, %v3296
    %v3329 = vmul.f32 %v3297, %v3297
    %v3330 = vmul.f32 %v3298, %v3298
    %v3331 = vmul.f32 %v3299, %v3299
    %v3332 = vmul.f32 %v3300, %v3300
    %v3333 = vmul.f32 %v3301, %v3301
    %v3334 = vmul.f32 %v3302, %v3302
    %v3335 = vmul.f32 %v3303, %v3303
    %v3336 = vmul.f32 %v3304, %v3304
    %v3337 = vmul.f32 %v3305, %v3305
    %v3338 = vmul.f32 %v3306, %v3306
    %v3339 = vmul.f32 %v3307, %v3307
    %v3340 = vmul.f32 %v3308, %v3308
    %v3341 = vmul.f32 %v3309, %v3309
    %v3342 = vmul.f32 %v3310, %v3310
    %v3343 = vmul.f32 %v3311, %v3311
    %v3344 = vmul.f32 %v3312, %v3312
    %v3345 = vmul.f32 %v3313, %v3313
    %v3346 = vmul.f32 %v3314, %v3314
    %v3347 = vmul.f32 %v3315, %v3315
    %v3348 = vmul.f32 %v3316, %v3316
    %v3349 = vmul.f32 %v3317, %v3317
    %v3350 = vmul.f32 %v3318, %v3318
    %v3351 = vmul.f32 %v3319, %v3319
    %v3352 = vmul.f32 %v3320, %v3320
    %v3353 = vmul.f32 %v3321, %v3321
    %v3354 = vmul.f32 %v3322, %v3322
    %v3355 = vmul.f32 %v3323, %v3323
    %v3356 = vmul.f32 %v3324, %v3324
    %v3357 = vsel %vm542, %v3325, 0.0
    %3358 = vadd.xlane.f32.xlu0 %v3357
    %v3359 = vpop.xlane.xlu0 %3358
    %v3360 = vsel %vm542, %v3326, 0.0
    %3361 = vadd.xlane.f32.xlu0 %v3360
    %v3362 = vpop.xlane.xlu0 %3361
    %v3363 = vsel %vm542, %v3327, 0.0
    %3364 = vadd.xlane.f32.xlu0 %v3363
    %v3365 = vpop.xlane.xlu0 %3364
    %v3366 = vsel %vm542, %v3328, 0.0
    %3367 = vadd.xlane.f32.xlu0 %v3366
    %v3368 = vpop.xlane.xlu0 %3367
    %v3369 = vsel %vm542, %v3329, 0.0
    %3370 = vadd.xlane.f32.xlu0 %v3369
    %v3371 = vpop.xlane.xlu0 %3370
    %v3372 = vsel %vm542, %v3330, 0.0
    %3373 = vadd.xlane.f32.xlu0 %v3372
    %v3374 = vpop.xlane.xlu0 %3373
    %v3375 = vsel %vm542, %v3331, 0.0
    %3376 = vadd.xlane.f32.xlu0 %v3375
    %v3377 = vpop.xlane.xlu0 %3376
    %v3378 = vsel %vm542, %v3332, 0.0
    %3379 = vadd.xlane.f32.xlu0 %v3378
    %v3380 = vpop.xlane.xlu0 %3379
    %v3381 = vsel %vm542, %v3333, 0.0
    %3382 = vadd.xlane.f32.xlu0 %v3381
    %v3383 = vpop.xlane.xlu0 %3382
    %v3384 = vsel %vm542, %v3334, 0.0
    %3385 = vadd.xlane.f32.xlu0 %v3384
    %v3386 = vpop.xlane.xlu0 %3385
    %v3387 = vsel %vm542, %v3335, 0.0
    %3388 = vadd.xlane.f32.xlu0 %v3387
    %v3389 = vpop.xlane.xlu0 %3388
    %v3390 = vsel %vm542, %v3336, 0.0
    %3391 = vadd.xlane.f32.xlu0 %v3390
    %v3392 = vpop.xlane.xlu0 %3391
    %v3393 = vsel %vm542, %v3337, 0.0
    %3394 = vadd.xlane.f32.xlu0 %v3393
    %v3395 = vpop.xlane.xlu0 %3394
    %v3396 = vsel %vm542, %v3338, 0.0
    %3397 = vadd.xlane.f32.xlu0 %v3396
    %v3398 = vpop.xlane.xlu0 %3397
    %v3399 = vsel %vm542, %v3339, 0.0
    %3400 = vadd.xlane.f32.xlu0 %v3399
    %v3401 = vpop.xlane.xlu0 %3400
    %v3402 = vsel %vm542, %v3340, 0.0
    %3403 = vadd.xlane.f32.xlu0 %v3402
    %v3404 = vpop.xlane.xlu0 %3403
    %v3405 = vsel %vm542, %v3341, 0.0
    %3406 = vadd.xlane.f32.xlu0 %v3405
    %v3407 = vpop.xlane.xlu0 %3406
    %v3408 = vsel %vm542, %v3342, 0.0
    %3409 = vadd.xlane.f32.xlu0 %v3408
    %v3410 = vpop.xlane.xlu0 %3409
    %v3411 = vsel %vm542, %v3343, 0.0
    %3412 = vadd.xlane.f32.xlu0 %v3411
    %v3413 = vpop.xlane.xlu0 %3412
    %v3414 = vsel %vm542, %v3344, 0.0
    %3415 = vadd.xlane.f32.xlu0 %v3414
    %v3416 = vpop.xlane.xlu0 %3415
    %v3417 = vsel %vm542, %v3345, 0.0
    %3418 = vadd.xlane.f32.xlu0 %v3417
    %v3419 = vpop.xlane.xlu0 %3418
    %v3420 = vsel %vm542, %v3346, 0.0
    %3421 = vadd.xlane.f32.xlu0 %v3420
    %v3422 = vpop.xlane.xlu0 %3421
    %v3423 = vsel %vm542, %v3347, 0.0
    %3424 = vadd.xlane.f32.xlu0 %v3423
    %v3425 = vpop.xlane.xlu0 %3424
    %v3426 = vsel %vm542, %v3348, 0.0
    %3427 = vadd.xlane.f32.xlu0 %v3426
    %v3428 = vpop.xlane.xlu0 %3427
    %v3429 = vsel %vm542, %v3349, 0.0
    %3430 = vadd.xlane.f32.xlu0 %v3429
    %v3431 = vpop.xlane.xlu0 %3430
    %v3432 = vsel %vm542, %v3350, 0.0
    %3433 = vadd.xlane.f32.xlu0 %v3432
    %v3434 = vpop.xlane.xlu0 %3433
    %v3435 = vsel %vm542, %v3351, 0.0
    %3436 = vadd.xlane.f32.xlu0 %v3435
    %v3437 = vpop.xlane.xlu0 %3436
    %v3438 = vsel %vm542, %v3352, 0.0
    %3439 = vadd.xlane.f32.xlu0 %v3438
    %v3440 = vpop.xlane.xlu0 %3439
    %v3441 = vsel %vm542, %v3353, 0.0
    %3442 = vadd.xlane.f32.xlu0 %v3441
    %v3443 = vpop.xlane.xlu0 %3442
    %v3444 = vsel %vm542, %v3354, 0.0
    %3445 = vadd.xlane.f32.xlu0 %v3444
    %v3446 = vpop.xlane.xlu0 %3445
    %v3447 = vsel %vm542, %v3355, 0.0
    %3448 = vadd.xlane.f32.xlu0 %v3447
    %v3449 = vpop.xlane.xlu0 %3448
    %v3450 = vsel %vm542, %v3356, 0.0
    %3451 = vadd.xlane.f32.xlu0 %v3450
    %v3452 = vpop.xlane.xlu0 %3451
    %v3453 = vmul.f32 %v3359, %v639
    %v3454 = vmul.f32 %v3362, %v639
    %v3455 = vmul.f32 %v3365, %v639
    %v3456 = vmul.f32 %v3368, %v639
    %v3457 = vmul.f32 %v3371, %v639
    %v3458 = vmul.f32 %v3374, %v639
    %v3459 = vmul.f32 %v3377, %v639
    %v3460 = vmul.f32 %v3380, %v639
    %v3461 = vmul.f32 %v3383, %v639
    %v3462 = vmul.f32 %v3386, %v639
    %v3463 = vmul.f32 %v3389, %v639
    %v3464 = vmul.f32 %v3392, %v639
    %v3465 = vmul.f32 %v3395, %v639
    %v3466 = vmul.f32 %v3398, %v639
    %v3467 = vmul.f32 %v3401, %v639
    %v3468 = vmul.f32 %v3404, %v639
    %v3469 = vmul.f32 %v3407, %v639
    %v3470 = vmul.f32 %v3410, %v639
    %v3471 = vmul.f32 %v3413, %v639
    %v3472 = vmul.f32 %v3416, %v639
    %v3473 = vmul.f32 %v3419, %v639
    %v3474 = vmul.f32 %v3422, %v639
    %v3475 = vmul.f32 %v3425, %v639
    %v3476 = vmul.f32 %v3428, %v639
    %v3477 = vmul.f32 %v3431, %v639
    %v3478 = vmul.f32 %v3434, %v639
    %v3479 = vmul.f32 %v3437, %v639
    %v3480 = vmul.f32 %v3440, %v639
    %v3481 = vmul.f32 %v3443, %v639
    %v3482 = vmul.f32 %v3446, %v639
    %v3483 = vmul.f32 %v3449, %v639
    %v3484 = vmul.f32 %v3452, %v639
    %v3485 = vadd.f32 %v3453, 1e-05
    %v3486 = vadd.f32 %v3454, 1e-05
    %v3487 = vadd.f32 %v3455, 1e-05
    %v3488 = vadd.f32 %v3456, 1e-05
    %v3489 = vadd.f32 %v3457, 1e-05
    %v3490 = vadd.f32 %v3458, 1e-05
    %v3491 = vadd.f32 %v3459, 1e-05
    %v3492 = vadd.f32 %v3460, 1e-05
    %v3493 = vadd.f32 %v3461, 1e-05
    %v3494 = vadd.f32 %v3462, 1e-05
    %v3495 = vadd.f32 %v3463, 1e-05
    %v3496 = vadd.f32 %v3464, 1e-05
    %v3497 = vadd.f32 %v3465, 1e-05
    %v3498 = vadd.f32 %v3466, 1e-05
    %v3499 = vadd.f32 %v3467, 1e-05
    %v3500 = vadd.f32 %v3468, 1e-05
    %v3501 = vadd.f32 %v3469, 1e-05
    %v3502 = vadd.f32 %v3470, 1e-05
    %v3503 = vadd.f32 %v3471, 1e-05
    %v3504 = vadd.f32 %v3472, 1e-05
    %v3505 = vadd.f32 %v3473, 1e-05
    %v3506 = vadd.f32 %v3474, 1e-05
    %v3507 = vadd.f32 %v3475, 1e-05
    %v3508 = vadd.f32 %v3476, 1e-05
    %v3509 = vadd.f32 %v3477, 1e-05
    %v3510 = vadd.f32 %v3478, 1e-05
    %v3511 = vadd.f32 %v3479, 1e-05
    %v3512 = vadd.f32 %v3480, 1e-05
    %v3513 = vadd.f32 %v3481, 1e-05
    %v3514 = vadd.f32 %v3482, 1e-05
    %v3515 = vadd.f32 %v3483, 1e-05
    %v3516 = vadd.f32 %v3484, 1e-05
    %v3517 = vrsqrt.pop %v3485
    %v3518 = vrsqrt.pop %v3486
    %v3519 = vrsqrt.pop %v3487
    %v3520 = vrsqrt.pop %v3488
    %v3521 = vrsqrt.pop %v3489
    %v3522 = vrsqrt.pop %v3490
    %v3523 = vrsqrt.pop %v3491
    %v3524 = vrsqrt.pop %v3492
    %v3525 = vrsqrt.pop %v3493
    %v3526 = vrsqrt.pop %v3494
    %v3527 = vrsqrt.pop %v3495
    %v3528 = vrsqrt.pop %v3496
    %v3529 = vrsqrt.pop %v3497
    %v3530 = vrsqrt.pop %v3498
    %v3531 = vrsqrt.pop %v3499
    %v3532 = vrsqrt.pop %v3500
    %v3533 = vrsqrt.pop %v3501
    %v3534 = vrsqrt.pop %v3502
    %v3535 = vrsqrt.pop %v3503
    %v3536 = vrsqrt.pop %v3504
    %v3537 = vrsqrt.pop %v3505
    %v3538 = vrsqrt.pop %v3506
    %v3539 = vrsqrt.pop %v3507
    %v3540 = vrsqrt.pop %v3508
    %v3541 = vrsqrt.pop %v3509
    %v3542 = vrsqrt.pop %v3510
    %v3543 = vrsqrt.pop %v3511
    %v3544 = vrsqrt.pop %v3512
    %v3545 = vrsqrt.pop %v3513
    %v3546 = vrsqrt.pop %v3514
    %v3547 = vrsqrt.pop %v3515
    %v3548 = vrsqrt.pop %v3516
    %v3549 = vmul.f32 %v3293, %v3517
    %v3550 = vmul.f32 %v3294, %v3518
    %v3551 = vmul.f32 %v3295, %v3519
    %v3552 = vmul.f32 %v3296, %v3520
    %v3553 = vmul.f32 %v3297, %v3521
    %v3554 = vmul.f32 %v3298, %v3522
    %v3555 = vmul.f32 %v3299, %v3523
    %v3556 = vmul.f32 %v3300, %v3524
    %v3557 = vmul.f32 %v3301, %v3525
    %v3558 = vmul.f32 %v3302, %v3526
    %v3559 = vmul.f32 %v3303, %v3527
    %v3560 = vmul.f32 %v3304, %v3528
    %v3561 = vmul.f32 %v3305, %v3529
    %v3562 = vmul.f32 %v3306, %v3530
    %v3563 = vmul.f32 %v3307, %v3531
    %v3564 = vmul.f32 %v3308, %v3532
    %v3565 = vmul.f32 %v3309, %v3533
    %v3566 = vmul.f32 %v3310, %v3534
    %v3567 = vmul.f32 %v3311, %v3535
    %v3568 = vmul.f32 %v3312, %v3536
    %v3569 = vmul.f32 %v3313, %v3537
    %v3570 = vmul.f32 %v3314, %v3538
    %v3571 = vmul.f32 %v3315, %v3539
    %v3572 = vmul.f32 %v3316, %v3540
    %v3573 = vmul.f32 %v3317, %v3541
    %v3574 = vmul.f32 %v3318, %v3542
    %v3575 = vmul.f32 %v3319, %v3543
    %v3576 = vmul.f32 %v3320, %v3544
    %v3577 = vmul.f32 %v3321, %v3545
    %v3578 = vmul.f32 %v3322, %v3546
    %v3579 = vmul.f32 %v3323, %v3547
    %v3580 = vmul.f32 %v3324, %v3548
    %v3582 = vlaneseq
    %v3583 = vshrl.u32 %v3582, 7
    %v3584 = vsub.s32 0, %v3583
    %v3585 = vrot.slane %v3133, %v3584
    %v3587 = vmul.f32 %v3549, %v3585
    %v3588 = vmul.f32 %v3550, %v3585
    %v3589 = vmul.f32 %v3551, %v3585
    %v3590 = vmul.f32 %v3552, %v3585
    %v3591 = vmul.f32 %v3553, %v3585
    %v3592 = vmul.f32 %v3554, %v3585
    %v3593 = vmul.f32 %v3555, %v3585
    %v3594 = vmul.f32 %v3556, %v3585
    %v3595 = vmul.f32 %v3557, %v3585
    %v3596 = vmul.f32 %v3558, %v3585
    %v3597 = vmul.f32 %v3559, %v3585
    %v3598 = vmul.f32 %v3560, %v3585
    %v3599 = vmul.f32 %v3561, %v3585
    %v3600 = vmul.f32 %v3562, %v3585
    %v3601 = vmul.f32 %v3563, %v3585
    %v3602 = vmul.f32 %v3564, %v3585
    %v3603 = vmul.f32 %v3565, %v3585
    %v3604 = vmul.f32 %v3566, %v3585
    %v3605 = vmul.f32 %v3567, %v3585
    %v3606 = vmul.f32 %v3568, %v3585
    %v3607 = vmul.f32 %v3569, %v3585
    %v3608 = vmul.f32 %v3570, %v3585
    %v3609 = vmul.f32 %v3571, %v3585
    %v3610 = vmul.f32 %v3572, %v3585
    %v3611 = vmul.f32 %v3573, %v3585
    %v3612 = vmul.f32 %v3574, %v3585
    %v3613 = vmul.f32 %v3575, %v3585
    %v3614 = vmul.f32 %v3576, %v3585
    %v3615 = vmul.f32 %v3577, %v3585
    %v3616 = vmul.f32 %v3578, %v3585
    %v3617 = vmul.f32 %v3579, %v3585
    %v3618 = vmul.f32 %v3580, %v3585
    %v3620 = vlaneseq
    %v3621 = vshrl.u32 %v3620, 7
    %v3622 = vsub.s32 0, %v3621
    %v3623 = vrot.slane %v3135, %v3622
    %v3625 = vadd.f32 %v3587, %v3623
    %v3626 = vadd.f32 %v3588, %v3623
    %v3627 = vadd.f32 %v3589, %v3623
    %v3628 = vadd.f32 %v3590, %v3623
    %v3629 = vadd.f32 %v3591, %v3623
    %v3630 = vadd.f32 %v3592, %v3623
    %v3631 = vadd.f32 %v3593, %v3623
    %v3632 = vadd.f32 %v3594, %v3623
    %v3633 = vadd.f32 %v3595, %v3623
    %v3634 = vadd.f32 %v3596, %v3623
    %v3635 = vadd.f32 %v3597, %v3623
    %v3636 = vadd.f32 %v3598, %v3623
    %v3637 = vadd.f32 %v3599, %v3623
    %v3638 = vadd.f32 %v3600, %v3623
    %v3639 = vadd.f32 %v3601, %v3623
    %v3640 = vadd.f32 %v3602, %v3623
    %v3641 = vadd.f32 %v3603, %v3623
    %v3642 = vadd.f32 %v3604, %v3623
    %v3643 = vadd.f32 %v3605, %v3623
    %v3644 = vadd.f32 %v3606, %v3623
    %v3645 = vadd.f32 %v3607, %v3623
    %v3646 = vadd.f32 %v3608, %v3623
    %v3647 = vadd.f32 %v3609, %v3623
    %v3648 = vadd.f32 %v3610, %v3623
    %v3649 = vadd.f32 %v3611, %v3623
    %v3650 = vadd.f32 %v3612, %v3623
    %v3651 = vadd.f32 %v3613, %v3623
    %v3652 = vadd.f32 %v3614, %v3623
    %v3653 = vadd.f32 %v3615, %v3623
    %v3654 = vadd.f32 %v3616, %v3623
    %v3655 = vadd.f32 %v3617, %v3623
    %v3656 = vadd.f32 %v3618, %v3623
    %v3657 = vpack.c.bf16 %v3626, %v3625
    %v3658 = vpack.c.bf16 %v3628, %v3627
    %v3659 = vpack.c.bf16 %v3630, %v3629
    %v3660 = vpack.c.bf16 %v3632, %v3631
    %v3661 = vpack.c.bf16 %v3634, %v3633
    %v3662 = vpack.c.bf16 %v3636, %v3635
    %v3663 = vpack.c.bf16 %v3638, %v3637
    %v3664 = vpack.c.bf16 %v3640, %v3639
    %v3665 = vpack.c.bf16 %v3642, %v3641
    %v3666 = vpack.c.bf16 %v3644, %v3643
    %v3667 = vpack.c.bf16 %v3646, %v3645
    %v3668 = vpack.c.bf16 %v3648, %v3647
    %v3669 = vpack.c.bf16 %v3650, %v3649
    %v3670 = vpack.c.bf16 %v3652, %v3651
    %v3671 = vpack.c.bf16 %v3654, %v3653
    %v3672 = vpack.c.bf16 %v3656, %v3655
    %v3674 = vlaneseq
    %v3675 = vshrl.u32 %v3674, 7
    %v3676 = vsub.s32 0, %v3675
    %v3677 = vrot.slane %v3142, %v3676
    %v3683 = vunpack.c.l.b16 %v3137
    %v3684 = vunpack.c.l.b16 %v3138
    %v3685 = vunpack.c.l.b16 %v3139
    %v3686 = vunpack.c.l.b16 %v3140
    %v3687 = vpack.c.b16 %v3684, %v3683
    %v3688 = vpack.c.b16 %v3686, %v3685
    %v3692 = vsel %vm542, %v3657, 0
    %v3695 = vsel %vm542, %v3658, 0
    %v3698 = vsel %vm542, %v3659, 0
    %v3701 = vsel %vm542, %v3660, 0
    %v3704 = vsel %vm542, %v3661, 0
    %v3707 = vsel %vm542, %v3662, 0
    %v3710 = vsel %vm542, %v3663, 0
    %v3713 = vsel %vm542, %v3664, 0
    %v3716 = vsel %vm542, %v3665, 0
    %v3719 = vsel %vm542, %v3666, 0
    %v3722 = vsel %vm542, %v3667, 0
    %v3725 = vsel %vm542, %v3668, 0
    %v3728 = vsel %vm542, %v3669, 0
    %v3731 = vsel %vm542, %v3670, 0
    %v3734 = vsel %vm542, %v3671, 0
    %v3737 = vsel %vm542, %v3672, 0
    %3739 = vmatprep.subr.bf16.mxu0 0
    %3740 = vmatpush1.bf16.msra.mxu0 %v3687
    %3741 = vmatprep.subr.bf16.mxu0 0
    %3742 = vmatpush1.bf16.msra.mxu0 %v3688
    %3743 = vmatprep.subr.bf16.mxu0 0
    %3744 = vmatpush1.bf16.msra.mxu0 0
    %3745 = vmatprep.subr.bf16.mxu0 0
    %3746 = vmatpush1.bf16.msra.mxu0 0
    %3747 = vmatprep.subr.bf16.mxu0 0
    %3748 = vmatpush1.bf16.msra.mxu0 0
    %3749 = vmatprep.subr.bf16.mxu0 0
    %3750 = vmatpush1.bf16.msra.mxu0 0
    %3751 = vmatprep.subr.bf16.mxu0 0
    %3752 = vmatpush1.bf16.msra.mxu0 0
    %3753 = vmatprep.subr.bf16.mxu0 0
    %3754 = vmatpush1.bf16.msra.mxu0 0
    %3755 = vmatprep.subr.bf16.mxu0 0
    %3756 = vmatpush1.bf16.msra.mxu0 0
    %3757 = vmatprep.subr.bf16.mxu0 0
    %3758 = vmatpush1.bf16.msra.mxu0 0
    %3759 = vmatprep.subr.bf16.mxu0 0
    %3760 = vmatpush1.bf16.msra.mxu0 0
    %3761 = vmatprep.subr.bf16.mxu0 0
    %3762 = vmatpush1.bf16.msra.mxu0 0
    %3763 = vmatprep.subr.bf16.mxu0 0
    %3764 = vmatpush1.bf16.msra.mxu0 0
    %3765 = vmatprep.subr.bf16.mxu0 0
    %3766 = vmatpush1.bf16.msra.mxu0 0
    %3767 = vmatprep.subr.bf16.mxu0 0
    %3768 = vmatpush1.bf16.msra.mxu0 0
    %3769 = vmatprep.subr.bf16.mxu0 0
    %3770 = vmatpush1.bf16.msra.mxu0 0
    %3771 = vmatprep.mubr.bf16.mxu0 0
    %3772 = vmatmul.mubr.bf16.gmra.mrb[0].mxu0 %v3692
    %v3773 = vpop.f32.mrb[0].mxu0
    %v3774 = vadd.f32 %v3677, %v3773
    %v3775 = vpop.f32.mrb[0].mxu0
    %v3776 = vpop.f32.mrb[0].mxu0
    %v3777 = vadd.f32 %v3677, %v3776
    %v3778 = vpop.f32.mrb[0].mxu0
    %3779 = vmatprep.mubr.bf16.mxu0 0
    %3780 = vmatmul.mubr.bf16.gmra.mrb[0].mxu0 %v3695
    %v3781 = vpop.f32.mrb[0].mxu0
    %v3782 = vadd.f32 %v3677, %v3781
    %v3783 = vpop.f32.mrb[0].mxu0
    %v3784 = vpop.f32.mrb[0].mxu0
    %v3785 = vadd.f32 %v3677, %v3784
    %v3786 = vpop.f32.mrb[0].mxu0
    %3787 = vmatprep.mubr.bf16.mxu0 0
    %3788 = vmatmul.mubr.bf16.gmra.mrb[0].mxu0 %v3698
    %v3789 = vpop.f32.mrb[0].mxu0
    %v3790 = vadd.f32 %v3677, %v3789
    %v3791 = vpop.f32.mrb[0].mxu0
    %v3792 = vpop.f32.mrb[0].mxu0
    %v3793 = vadd.f32 %v3677, %v3792
    %v3794 = vpop.f32.mrb[0].mxu0
    %3795 = vmatprep.mubr.bf16.mxu0 0
    %3796 = vmatmul.mubr.bf16.gmra.mrb[0].mxu0 %v3701
    %v3797 = vpop.f32.mrb[0].mxu0
    %v3798 = vadd.f32 %v3677, %v3797
    %v3799 = vpop.f32.mrb[0].mxu0
    %v3800 = vpop.f32.mrb[0].mxu0
    %v3801 = vadd.f32 %v3677, %v3800
    %v3802 = vpop.f32.mrb[0].mxu0
    %3803 = vmatprep.mubr.bf16.mxu0 0
    %3804 = vmatmul.mubr.bf16.gmra.mrb[0].mxu0 %v3704
    %v3805 = vpop.f32.mrb[0].mxu0
    %v3806 = vadd.f32 %v3677, %v3805
    %v3807 = vpop.f32.mrb[0].mxu0
    %v3808 = vpop.f32.mrb[0].mxu0
    %v3809 = vadd.f32 %v3677, %v3808
    %v3810 = vpop.f32.mrb[0].mxu0
    %3811 = vmatprep.mubr.bf16.mxu0 0
    %3812 = vmatmul.mubr.bf16.gmra.mrb[0].mxu0 %v3707
    %v3813 = vpop.f32.mrb[0].mxu0
    %v3814 = vadd.f32 %v3677, %v3813
    %v3815 = vpop.f32.mrb[0].mxu0
    %v3816 = vpop.f32.mrb[0].mxu0
    %v3817 = vadd.f32 %v3677, %v3816
    %v3818 = vpop.f32.mrb[0].mxu0
    %3819 = vmatprep.mubr.bf16.mxu0 0
    %3820 = vmatmul.mubr.bf16.gmra.mrb[0].mxu0 %v3710
    %v3821 = vpop.f32.mrb[0].mxu0
    %v3822 = vadd.f32 %v3677, %v3821
    %v3823 = vpop.f32.mrb[0].mxu0
    %v3824 = vpop.f32.mrb[0].mxu0
    %v3825 = vadd.f32 %v3677, %v3824
    %v3826 = vpop.f32.mrb[0].mxu0
    %3827 = vmatprep.mubr.bf16.mxu0 0
    %3828 = vmatmul.mubr.bf16.gmra.mrb[0].mxu0 %v3713
    %v3829 = vpop.f32.mrb[0].mxu0
    %v3830 = vadd.f32 %v3677, %v3829
    %v3831 = vpop.f32.mrb[0].mxu0
    %v3832 = vpop.f32.mrb[0].mxu0
    %v3833 = vadd.f32 %v3677, %v3832
    %v3834 = vpop.f32.mrb[0].mxu0
    %3835 = vmatprep.mubr.bf16.mxu0 0
    %3836 = vmatmul.mubr.bf16.gmra.mrb[0].mxu0 %v3716
    %v3837 = vpop.f32.mrb[0].mxu0
    %v3838 = vadd.f32 %v3677, %v3837
    %v3839 = vpop.f32.mrb[0].mxu0
    %v3840 = vpop.f32.mrb[0].mxu0
    %v3841 = vadd.f32 %v3677, %v3840
    %v3842 = vpop.f32.mrb[0].mxu0
    %3843 = vmatprep.mubr.bf16.mxu0 0
    %3844 = vmatmul.mubr.bf16.gmra.mrb[0].mxu0 %v3719
    %v3845 = vpop.f32.mrb[0].mxu0
    %v3846 = vadd.f32 %v3677, %v3845
    %v3847 = vpop.f32.mrb[0].mxu0
    %v3848 = vpop.f32.mrb[0].mxu0
    %v3849 = vadd.f32 %v3677, %v3848
    %v3850 = vpop.f32.mrb[0].mxu0
    %3851 = vmatprep.mubr.bf16.mxu0 0
    %3852 = vmatmul.mubr.bf16.gmra.mrb[0].mxu0 %v3722
    %v3853 = vpop.f32.mrb[0].mxu0
    %v3854 = vadd.f32 %v3677, %v3853
    %v3855 = vpop.f32.mrb[0].mxu0
    %v3856 = vpop.f32.mrb[0].mxu0
    %v3857 = vadd.f32 %v3677, %v3856
    %v3858 = vpop.f32.mrb[0].mxu0
    %3859 = vmatprep.mubr.bf16.mxu0 0
    %3860 = vmatmul.mubr.bf16.gmra.mrb[0].mxu0 %v3725
    %v3861 = vpop.f32.mrb[0].mxu0
    %v3862 = vadd.f32 %v3677, %v3861
    %v3863 = vpop.f32.mrb[0].mxu0
    %v3864 = vpop.f32.mrb[0].mxu0
    %v3865 = vadd.f32 %v3677, %v3864
    %v3866 = vpop.f32.mrb[0].mxu0
    %3867 = vmatprep.mubr.bf16.mxu0 0
    %3868 = vmatmul.mubr.bf16.gmra.mrb[0].mxu0 %v3728
    %v3869 = vpop.f32.mrb[0].mxu0
    %v3870 = vadd.f32 %v3677, %v3869
    %v3871 = vpop.f32.mrb[0].mxu0
    %v3872 = vpop.f32.mrb[0].mxu0
    %v3873 = vadd.f32 %v3677, %v3872
    %v3874 = vpop.f32.mrb[0].mxu0
    %3875 = vmatprep.mubr.bf16.mxu0 0
    %3876 = vmatmul.mubr.bf16.gmra.mrb[0].mxu0 %v3731
    %v3877 = vpop.f32.mrb[0].mxu0
    %v3878 = vadd.f32 %v3677, %v3877
    %v3879 = vpop.f32.mrb[0].mxu0
    %v3880 = vpop.f32.mrb[0].mxu0
    %v3881 = vadd.f32 %v3677, %v3880
    %v3882 = vpop.f32.mrb[0].mxu0
    %3883 = vmatprep.mubr.bf16.mxu0 0
    %3884 = vmatmul.mubr.bf16.gmra.mrb[0].mxu0 %v3734
    %v3885 = vpop.f32.mrb[0].mxu0
    %v3886 = vadd.f32 %v3677, %v3885
    %v3887 = vpop.f32.mrb[0].mxu0
    %v3888 = vpop.f32.mrb[0].mxu0
    %v3889 = vadd.f32 %v3677, %v3888
    %v3890 = vpop.f32.mrb[0].mxu0
    %3891 = vmatprep.mubr.bf16.mxu0 0
    %3892 = vmatmul.mubr.bf16.gmra.mrb[0].mxu0 %v3737
    %v3893 = vpop.f32.mrb[0].mxu0
    %v3894 = vadd.f32 %v3677, %v3893
    %v3895 = vpop.f32.mrb[0].mxu0
    %v3896 = vpop.f32.mrb[0].mxu0
    %v3897 = vadd.f32 %v3677, %v3896
    %v3898 = vpop.f32.mrb[0].mxu0
    %3899 = vdwg.mxu0
    %v3901 = vlaneseq
    %v3902 = vshrl.u32 %v3901, 7
    %v3903 = vsub.s32 0, %v3902
    %v3904 = vrot.slane %v3149, %v3903
    %v3910 = vunpack.c.l.b16 %v3144
    %v3911 = vunpack.c.l.b16 %v3145
    %v3912 = vunpack.c.l.b16 %v3146
    %v3913 = vunpack.c.l.b16 %v3147
    %v3914 = vpack.c.b16 %v3911, %v3910
    %v3915 = vpack.c.b16 %v3913, %v3912
    %3918 = vmatprep.subr.bf16.mxu0 0
    %3919 = vmatpush1.bf16.msra.mxu0 %v3914
    %3920 = vmatprep.subr.bf16.mxu0 0
    %3921 = vmatpush1.bf16.msra.mxu0 %v3915
    %3922 = vmatprep.subr.bf16.mxu0 0
    %3923 = vmatpush1.bf16.msra.mxu0 0
    %3924 = vmatprep.subr.bf16.mxu0 0
    %3925 = vmatpush1.bf16.msra.mxu0 0
    %3926 = vmatprep.subr.bf16.mxu0 0
    %3927 = vmatpush1.bf16.msra.mxu0 0
    %3928 = vmatprep.subr.bf16.mxu0 0
    %3929 = vmatpush1.bf16.msra.mxu0 0
    %3930 = vmatprep.subr.bf16.mxu0 0
    %3931 = vmatpush1.bf16.msra.mxu0 0
    %3932 = vmatprep.subr.bf16.mxu0 0
    %3933 = vmatpush1.bf16.msra.mxu0 0
    %3934 = vmatprep.subr.bf16.mxu0 0
    %3935 = vmatpush1.bf16.msra.mxu0 0
    %3936 = vmatprep.subr.bf16.mxu0 0
    %3937 = vmatpush1.bf16.msra.mxu0 0
    %3938 = vmatprep.subr.bf16.mxu0 0
    %3939 = vmatpush1.bf16.msra.mxu0 0
    %3940 = vmatprep.subr.bf16.mxu0 0
    %3941 = vmatpush1.bf16.msra.mxu0 0
    %3942 = vmatprep.subr.bf16.mxu0 0
    %3943 = vmatpush1.bf16.msra.mxu0 0
    %3944 = vmatprep.subr.bf16.mxu0 0
    %3945 = vmatpush1.bf16.msra.mxu0 0
    %3946 = vmatprep.subr.bf16.mxu0 0
    %3947 = vmatpush1.bf16.msra.mxu0 0
    %3948 = vmatprep.subr.bf16.mxu0 0
    %3949 = vmatpush1.bf16.msra.mxu0 0
    %3950 = vmatprep.mubr.bf16.mxu0 0
    %3951 = vmatmul.mubr.bf16.gmra.mrb[0].mxu0 %v3692
    %v3952 = vpop.f32.mrb[0].mxu0
    %v3953 = vadd.f32 %v3904, %v3952
    %v3954 = vpop.f32.mrb[0].mxu0
    %v3955 = vpop.f32.mrb[0].mxu0
    %v3956 = vadd.f32 %v3904, %v3955
    %v3957 = vpop.f32.mrb[0].mxu0
    %3958 = vmatprep.mubr.bf16.mxu0 0
    %3959 = vmatmul.mubr.bf16.gmra.mrb[0].mxu0 %v3695
    %v3960 = vpop.f32.mrb[0].mxu0
    %v3961 = vadd.f32 %v3904, %v3960
    %v3962 = vpop.f32.mrb[0].mxu0
    %v3963 = vpop.f32.mrb[0].mxu0
    %v3964 = vadd.f32 %v3904, %v3963
    %v3965 = vpop.f32.mrb[0].mxu0
    %3966 = vmatprep.mubr.bf16.mxu0 0
    %3967 = vmatmul.mubr.bf16.gmra.mrb[0].mxu0 %v3698
    %v3968 = vpop.f32.mrb[0].mxu0
    %v3969 = vadd.f32 %v3904, %v3968
    %v3970 = vpop.f32.mrb[0].mxu0
    %v3971 = vpop.f32.mrb[0].mxu0
    %v3972 = vadd.f32 %v3904, %v3971
    %v3973 = vpop.f32.mrb[0].mxu0
    %3974 = vmatprep.mubr.bf16.mxu0 0
    %3975 = vmatmul.mubr.bf16.gmra.mrb[0].mxu0 %v3701
    %v3976 = vpop.f32.mrb[0].mxu0
    %v3977 = vadd.f32 %v3904, %v3976
    %v3978 = vpop.f32.mrb[0].mxu0
    %v3979 = vpop.f32.mrb[0].mxu0
    %v3980 = vadd.f32 %v3904, %v3979
    %v3981 = vpop.f32.mrb[0].mxu0
    %3982 = vmatprep.mubr.bf16.mxu0 0
    %3983 = vmatmul.mubr.bf16.gmra.mrb[0].mxu0 %v3704
    %v3984 = vpop.f32.mrb[0].mxu0
    %v3985 = vadd.f32 %v3904, %v3984
    %v3986 = vpop.f32.mrb[0].mxu0
    %v3987 = vpop.f32.mrb[0].mxu0
    %v3988 = vadd.f32 %v3904, %v3987
    %v3989 = vpop.f32.mrb[0].mxu0
    %3990 = vmatprep.mubr.bf16.mxu0 0
    %3991 = vmatmul.mubr.bf16.gmra.mrb[0].mxu0 %v3707
    %v3992 = vpop.f32.mrb[0].mxu0
    %v3993 = vadd.f32 %v3904, %v3992
    %v3994 = vpop.f32.mrb[0].mxu0
    %v3995 = vpop.f32.mrb[0].mxu0
    %v3996 = vadd.f32 %v3904, %v3995
    %v3997 = vpop.f32.mrb[0].mxu0
    %3998 = vmatprep.mubr.bf16.mxu0 0
    %3999 = vmatmul.mubr.bf16.gmra.mrb[0].mxu0 %v3710
    %v4000 = vpop.f32.mrb[0].mxu0
    %v4001 = vadd.f32 %v3904, %v4000
    %v4002 = vpop.f32.mrb[0].mxu0
    %v4003 = vpop.f32.mrb[0].mxu0
    %v4004 = vadd.f32 %v3904, %v4003
    %v4005 = vpop.f32.mrb[0].mxu0
    %4006 = vmatprep.mubr.bf16.mxu0 0
    %4007 = vmatmul.mubr.bf16.gmra.mrb[0].mxu0 %v3713
    %v4008 = vpop.f32.mrb[0].mxu0
    %v4009 = vadd.f32 %v3904, %v4008
    %v4010 = vpop.f32.mrb[0].mxu0
    %v4011 = vpop.f32.mrb[0].mxu0
    %v4012 = vadd.f32 %v3904, %v4011
    %v4013 = vpop.f32.mrb[0].mxu0
    %4014 = vmatprep.mubr.bf16.mxu0 0
    %4015 = vmatmul.mubr.bf16.gmra.mrb[0].mxu0 %v3716
    %v4016 = vpop.f32.mrb[0].mxu0
    %v4017 = vadd.f32 %v3904, %v4016
    %v4018 = vpop.f32.mrb[0].mxu0
    %v4019 = vpop.f32.mrb[0].mxu0
    %v4020 = vadd.f32 %v3904, %v4019
    %v4021 = vpop.f32.mrb[0].mxu0
    %4022 = vmatprep.mubr.bf16.mxu0 0
    %4023 = vmatmul.mubr.bf16.gmra.mrb[0].mxu0 %v3719
    %v4024 = vpop.f32.mrb[0].mxu0
    %v4025 = vadd.f32 %v3904, %v4024
    %v4026 = vpop.f32.mrb[0].mxu0
    %v4027 = vpop.f32.mrb[0].mxu0
    %v4028 = vadd.f32 %v3904, %v4027
    %v4029 = vpop.f32.mrb[0].mxu0
    %4030 = vmatprep.mubr.bf16.mxu0 0
    %4031 = vmatmul.mubr.bf16.gmra.mrb[0].mxu0 %v3722
    %v4032 = vpop.f32.mrb[0].mxu0
    %v4033 = vadd.f32 %v3904, %v4032
    %v4034 = vpop.f32.mrb[0].mxu0
    %v4035 = vpop.f32.mrb[0].mxu0
    %v4036 = vadd.f32 %v3904, %v4035
    %v4037 = vpop.f32.mrb[0].mxu0
    %4038 = vmatprep.mubr.bf16.mxu0 0
    %4039 = vmatmul.mubr.bf16.gmra.mrb[0].mxu0 %v3725
    %v4040 = vpop.f32.mrb[0].mxu0
    %v4041 = vadd.f32 %v3904, %v4040
    %v4042 = vpop.f32.mrb[0].mxu0
    %v4043 = vpop.f32.mrb[0].mxu0
    %v4044 = vadd.f32 %v3904, %v4043
    %v4045 = vpop.f32.mrb[0].mxu0
    %4046 = vmatprep.mubr.bf16.mxu0 0
    %4047 = vmatmul.mubr.bf16.gmra.mrb[0].mxu0 %v3728
    %v4048 = vpop.f32.mrb[0].mxu0
    %v4049 = vadd.f32 %v3904, %v4048
    %v4050 = vpop.f32.mrb[0].mxu0
    %v4051 = vpop.f32.mrb[0].mxu0
    %v4052 = vadd.f32 %v3904, %v4051
    %v4053 = vpop.f32.mrb[0].mxu0
    %4054 = vmatprep.mubr.bf16.mxu0 0
    %4055 = vmatmul.mubr.bf16.gmra.mrb[0].mxu0 %v3731
    %v4056 = vpop.f32.mrb[0].mxu0
    %v4057 = vadd.f32 %v3904, %v4056
    %v4058 = vpop.f32.mrb[0].mxu0
    %v4059 = vpop.f32.mrb[0].mxu0
    %v4060 = vadd.f32 %v3904, %v4059
    %v4061 = vpop.f32.mrb[0].mxu0
    %4062 = vmatprep.mubr.bf16.mxu0 0
    %4063 = vmatmul.mubr.bf16.gmra.mrb[0].mxu0 %v3734
    %v4064 = vpop.f32.mrb[0].mxu0
    %v4065 = vadd.f32 %v3904, %v4064
    %v4066 = vpop.f32.mrb[0].mxu0
    %v4067 = vpop.f32.mrb[0].mxu0
    %v4068 = vadd.f32 %v3904, %v4067
    %v4069 = vpop.f32.mrb[0].mxu0
    %4070 = vmatprep.mubr.bf16.mxu0 0
    %4071 = vmatmul.mubr.bf16.gmra.mrb[0].mxu0 %v3737
    %v4072 = vpop.f32.mrb[0].mxu0
    %v4073 = vadd.f32 %v3904, %v4072
    %v4074 = vpop.f32.mrb[0].mxu0
    %v4075 = vpop.f32.mrb[0].mxu0
    %v4076 = vadd.f32 %v3904, %v4075
    %v4077 = vpop.f32.mrb[0].mxu0
    %4078 = vdwg.mxu0
    %v4079 = vmax.f32 %v3774, 0.0
    %v4080 = vmax.f32 %v3777, 0.0
    %v4081 = vmax.f32 %v3782, 0.0
    %v4082 = vmax.f32 %v3785, 0.0
    %v4083 = vmax.f32 %v3790, 0.0
    %v4084 = vmax.f32 %v3793, 0.0
    %v4085 = vmax.f32 %v3798, 0.0
    %v4086 = vmax.f32 %v3801, 0.0
    %v4087 = vmax.f32 %v3806, 0.0
    %v4088 = vmax.f32 %v3809, 0.0
    %v4089 = vmax.f32 %v3814, 0.0
    %v4090 = vmax.f32 %v3817, 0.0
    %v4091 = vmax.f32 %v3822, 0.0
    %v4092 = vmax.f32 %v3825, 0.0
    %v4093 = vmax.f32 %v3830, 0.0
    %v4094 = vmax.f32 %v3833, 0.0
    %v4095 = vmax.f32 %v3838, 0.0
    %v4096 = vmax.f32 %v3841, 0.0
    %v4097 = vmax.f32 %v3846, 0.0
    %v4098 = vmax.f32 %v3849, 0.0
    %v4099 = vmax.f32 %v3854, 0.0
    %v4100 = vmax.f32 %v3857, 0.0
    %v4101 = vmax.f32 %v3862, 0.0
    %v4102 = vmax.f32 %v3865, 0.0
    %v4103 = vmax.f32 %v3870, 0.0
    %v4104 = vmax.f32 %v3873, 0.0
    %v4105 = vmax.f32 %v3878, 0.0
    %v4106 = vmax.f32 %v3881, 0.0
    %v4107 = vmax.f32 %v3886, 0.0
    %v4108 = vmax.f32 %v3889, 0.0
    %v4109 = vmax.f32 %v3894, 0.0
    %v4110 = vmax.f32 %v3897, 0.0
    %v4111 = vadd.f32 %v4079, %v3953
    %v4112 = vadd.f32 %v4080, %v3956
    %v4113 = vadd.f32 %v4081, %v3961
    %v4114 = vadd.f32 %v4082, %v3964
    %v4115 = vadd.f32 %v4083, %v3969
    %v4116 = vadd.f32 %v4084, %v3972
    %v4117 = vadd.f32 %v4085, %v3977
    %v4118 = vadd.f32 %v4086, %v3980
    %v4119 = vadd.f32 %v4087, %v3985
    %v4120 = vadd.f32 %v4088, %v3988
    %v4121 = vadd.f32 %v4089, %v3993
    %v4122 = vadd.f32 %v4090, %v3996
    %v4123 = vadd.f32 %v4091, %v4001
    %v4124 = vadd.f32 %v4092, %v4004
    %v4125 = vadd.f32 %v4093, %v4009
    %v4126 = vadd.f32 %v4094, %v4012
    %v4127 = vadd.f32 %v4095, %v4017
    %v4128 = vadd.f32 %v4096, %v4020
    %v4129 = vadd.f32 %v4097, %v4025
    %v4130 = vadd.f32 %v4098, %v4028
    %v4131 = vadd.f32 %v4099, %v4033
    %v4132 = vadd.f32 %v4100, %v4036
    %v4133 = vadd.f32 %v4101, %v4041
    %v4134 = vadd.f32 %v4102, %v4044
    %v4135 = vadd.f32 %v4103, %v4049
    %v4136 = vadd.f32 %v4104, %v4052
    %v4137 = vadd.f32 %v4105, %v4057
    %v4138 = vadd.f32 %v4106, %v4060
    %v4139 = vadd.f32 %v4107, %v4065
    %v4140 = vadd.f32 %v4108, %v4068
    %v4141 = vadd.f32 %v4109, %v4073
    %v4142 = vadd.f32 %v4110, %v4076
    %v4143 = vpack.c.bf16 %v4112, %v4111
    %v4144 = vpack.c.bf16 %v4114, %v4113
    %v4145 = vpack.c.bf16 %v4116, %v4115
    %v4146 = vpack.c.bf16 %v4118, %v4117
    %v4147 = vpack.c.bf16 %v4120, %v4119
    %v4148 = vpack.c.bf16 %v4122, %v4121
    %v4149 = vpack.c.bf16 %v4124, %v4123
    %v4150 = vpack.c.bf16 %v4126, %v4125
    %v4151 = vpack.c.bf16 %v4128, %v4127
    %v4152 = vpack.c.bf16 %v4130, %v4129
    %v4153 = vpack.c.bf16 %v4132, %v4131
    %v4154 = vpack.c.bf16 %v4134, %v4133
    %v4155 = vpack.c.bf16 %v4136, %v4135
    %v4156 = vpack.c.bf16 %v4138, %v4137
    %v4157 = vpack.c.bf16 %v4140, %v4139
    %v4158 = vpack.c.bf16 %v4142, %v4141
    %v4160 = vlaneseq
    %v4161 = vshrl.u32 %v4160, 7
    %v4162 = vsub.s32 0, %v4161
    %v4163 = vrot.slane %v3164, %v4162
    %v4177 = vunpack.c.l.b16 %v3151
    %v4178 = vunpack.c.l.b16 %v3152
    %v4179 = vunpack.c.l.b16 %v3153
    %v4180 = vunpack.c.l.b16 %v3154
    %v4181 = vunpack.c.l.b16 %v3155
    %v4182 = vunpack.c.l.b16 %v3156
    %v4183 = vunpack.c.l.b16 %v3157
    %v4184 = vunpack.c.l.b16 %v3158
    %v4185 = vunpack.c.l.b16 %v3159
    %v4186 = vunpack.c.l.b16 %v3160
    %v4187 = vunpack.c.l.b16 %v3161
    %v4188 = vunpack.c.l.b16 %v3162
    %v4189 = vpack.c.b16 %v4178, %v4177
    %v4190 = vpack.c.b16 %v4180, %v4179
    %v4191 = vpack.c.b16 %v4182, %v4181
    %v4192 = vpack.c.b16 %v4184, %v4183
    %v4193 = vpack.c.b16 %v4186, %v4185
    %v4194 = vpack.c.b16 %v4188, %v4187
    %v4202 = vsel %vm1580, %v4143, 0
    %v4205 = vsel %vm1580, %v4144, 0
    %v4208 = vsel %vm1580, %v4145, 0
    %v4211 = vsel %vm1580, %v4146, 0
    %v4214 = vsel %vm1580, %v4147, 0
    %v4217 = vsel %vm1580, %v4148, 0
    %v4220 = vsel %vm1580, %v4149, 0
    %v4223 = vsel %vm1580, %v4150, 0
    %v4226 = vsel %vm1580, %v4151, 0
    %v4229 = vsel %vm1580, %v4152, 0
    %v4232 = vsel %vm1580, %v4153, 0
    %v4235 = vsel %vm1580, %v4154, 0
    %v4238 = vsel %vm1580, %v4155, 0
    %v4241 = vsel %vm1580, %v4156, 0
    %v4244 = vsel %vm1580, %v4157, 0
    %v4247 = vsel %vm1580, %v4158, 0
    %4249 = vmatprep.subr.bf16.mxu0 0
    %4250 = vmatpush1.bf16.msra.mxu0 %v4189
    %4251 = vmatprep.subr.bf16.mxu0 0
    %4252 = vmatpush1.bf16.msra.mxu0 %v4190
    %4253 = vmatprep.subr.bf16.mxu0 0
    %4254 = vmatpush1.bf16.msra.mxu0 %v4191
    %4255 = vmatprep.subr.bf16.mxu0 0
    %4256 = vmatpush1.bf16.msra.mxu0 %v4192
    %4257 = vmatprep.subr.bf16.mxu0 0
    %4258 = vmatpush1.bf16.msra.mxu0 %v4193
    %4259 = vmatprep.subr.bf16.mxu0 0
    %4260 = vmatpush1.bf16.msra.mxu0 %v4194
    %4261 = vmatprep.subr.bf16.mxu0 0
    %4262 = vmatpush1.bf16.msra.mxu0 0
    %4263 = vmatprep.subr.bf16.mxu0 0
    %4264 = vmatpush1.bf16.msra.mxu0 0
    %4265 = vmatprep.subr.bf16.mxu0 0
    %4266 = vmatpush1.bf16.msra.mxu0 0
    %4267 = vmatprep.subr.bf16.mxu0 0
    %4268 = vmatpush1.bf16.msra.mxu0 0
    %4269 = vmatprep.subr.bf16.mxu0 0
    %4270 = vmatpush1.bf16.msra.mxu0 0
    %4271 = vmatprep.subr.bf16.mxu0 0
    %4272 = vmatpush1.bf16.msra.mxu0 0
    %4273 = vmatprep.subr.bf16.mxu0 0
    %4274 = vmatpush1.bf16.msra.mxu0 0
    %4275 = vmatprep.subr.bf16.mxu0 0
    %4276 = vmatpush1.bf16.msra.mxu0 0
    %4277 = vmatprep.subr.bf16.mxu0 0
    %4278 = vmatpush1.bf16.msra.mxu0 0
    %4279 = vmatprep.subr.bf16.mxu0 0
    %4280 = vmatpush1.bf16.msra.mxu0 0
    %4281 = vmatprep.mubr.bf16.mxu0 0
    %4282 = vmatmul.mubr.bf16.gmra.mrb[0].mxu0 %v4202
    %v4283 = vpop.f32.mrb[0].mxu0
    %v4284 = vadd.f32 %v4163, %v4283
    %v4285 = vpop.f32.mrb[0].mxu0
    %v4286 = vpop.f32.mrb[0].mxu0
    %v4287 = vadd.f32 %v4163, %v4286
    %v4288 = vpop.f32.mrb[0].mxu0
    %4289 = vmatprep.mubr.bf16.mxu0 0
    %4290 = vmatmul.mubr.bf16.gmra.mrb[0].mxu0 %v4205
    %v4291 = vpop.f32.mrb[0].mxu0
    %v4292 = vadd.f32 %v4163, %v4291
    %v4293 = vpop.f32.mrb[0].mxu0
    %v4294 = vpop.f32.mrb[0].mxu0
    %v4295 = vadd.f32 %v4163, %v4294
    %v4296 = vpop.f32.mrb[0].mxu0
    %4297 = vmatprep.mubr.bf16.mxu0 0
    %4298 = vmatmul.mubr.bf16.gmra.mrb[0].mxu0 %v4208
    %v4299 = vpop.f32.mrb[0].mxu0
    %v4300 = vadd.f32 %v4163, %v4299
    %v4301 = vpop.f32.mrb[0].mxu0
    %v4302 = vpop.f32.mrb[0].mxu0
    %v4303 = vadd.f32 %v4163, %v4302
    %v4304 = vpop.f32.mrb[0].mxu0
    %4305 = vmatprep.mubr.bf16.mxu0 0
    %4306 = vmatmul.mubr.bf16.gmra.mrb[0].mxu0 %v4211
    %v4307 = vpop.f32.mrb[0].mxu0
    %v4308 = vadd.f32 %v4163, %v4307
    %v4309 = vpop.f32.mrb[0].mxu0
    %v4310 = vpop.f32.mrb[0].mxu0
    %v4311 = vadd.f32 %v4163, %v4310
    %v4312 = vpop.f32.mrb[0].mxu0
    %4313 = vmatprep.mubr.bf16.mxu0 0
    %4314 = vmatmul.mubr.bf16.gmra.mrb[0].mxu0 %v4214
    %v4315 = vpop.f32.mrb[0].mxu0
    %v4316 = vadd.f32 %v4163, %v4315
    %v4317 = vpop.f32.mrb[0].mxu0
    %v4318 = vpop.f32.mrb[0].mxu0
    %v4319 = vadd.f32 %v4163, %v4318
    %v4320 = vpop.f32.mrb[0].mxu0
    %4321 = vmatprep.mubr.bf16.mxu0 0
    %4322 = vmatmul.mubr.bf16.gmra.mrb[0].mxu0 %v4217
    %v4323 = vpop.f32.mrb[0].mxu0
    %v4324 = vadd.f32 %v4163, %v4323
    %v4325 = vpop.f32.mrb[0].mxu0
    %v4326 = vpop.f32.mrb[0].mxu0
    %v4327 = vadd.f32 %v4163, %v4326
    %v4328 = vpop.f32.mrb[0].mxu0
    %4329 = vmatprep.mubr.bf16.mxu0 0
    %4330 = vmatmul.mubr.bf16.gmra.mrb[0].mxu0 %v4220
    %v4331 = vpop.f32.mrb[0].mxu0
    %v4332 = vadd.f32 %v4163, %v4331
    %v4333 = vpop.f32.mrb[0].mxu0
    %v4334 = vpop.f32.mrb[0].mxu0
    %v4335 = vadd.f32 %v4163, %v4334
    %v4336 = vpop.f32.mrb[0].mxu0
    %4337 = vmatprep.mubr.bf16.mxu0 0
    %4338 = vmatmul.mubr.bf16.gmra.mrb[0].mxu0 %v4223
    %v4339 = vpop.f32.mrb[0].mxu0
    %v4340 = vadd.f32 %v4163, %v4339
    %v4341 = vpop.f32.mrb[0].mxu0
    %v4342 = vpop.f32.mrb[0].mxu0
    %v4343 = vadd.f32 %v4163, %v4342
    %v4344 = vpop.f32.mrb[0].mxu0
    %4345 = vmatprep.mubr.bf16.mxu0 0
    %4346 = vmatmul.mubr.bf16.gmra.mrb[0].mxu0 %v4226
    %v4347 = vpop.f32.mrb[0].mxu0
    %v4348 = vadd.f32 %v4163, %v4347
    %v4349 = vpop.f32.mrb[0].mxu0
    %v4350 = vpop.f32.mrb[0].mxu0
    %v4351 = vadd.f32 %v4163, %v4350
    %v4352 = vpop.f32.mrb[0].mxu0
    %4353 = vmatprep.mubr.bf16.mxu0 0
    %4354 = vmatmul.mubr.bf16.gmra.mrb[0].mxu0 %v4229
    %v4355 = vpop.f32.mrb[0].mxu0
    %v4356 = vadd.f32 %v4163, %v4355
    %v4357 = vpop.f32.mrb[0].mxu0
    %v4358 = vpop.f32.mrb[0].mxu0
    %v4359 = vadd.f32 %v4163, %v4358
    %v4360 = vpop.f32.mrb[0].mxu0
    %4361 = vmatprep.mubr.bf16.mxu0 0
    %4362 = vmatmul.mubr.bf16.gmra.mrb[0].mxu0 %v4232
    %v4363 = vpop.f32.mrb[0].mxu0
    %v4364 = vadd.f32 %v4163, %v4363
    %v4365 = vpop.f32.mrb[0].mxu0
    %v4366 = vpop.f32.mrb[0].mxu0
    %v4367 = vadd.f32 %v4163, %v4366
    %v4368 = vpop.f32.mrb[0].mxu0
    %4369 = vmatprep.mubr.bf16.mxu0 0
    %4370 = vmatmul.mubr.bf16.gmra.mrb[0].mxu0 %v4235
    %v4371 = vpop.f32.mrb[0].mxu0
    %v4372 = vadd.f32 %v4163, %v4371
    %v4373 = vpop.f32.mrb[0].mxu0
    %v4374 = vpop.f32.mrb[0].mxu0
    %v4375 = vadd.f32 %v4163, %v4374
    %v4376 = vpop.f32.mrb[0].mxu0
    %4377 = vmatprep.mubr.bf16.mxu0 0
    %4378 = vmatmul.mubr.bf16.gmra.mrb[0].mxu0 %v4238
    %v4379 = vpop.f32.mrb[0].mxu0
    %v4380 = vadd.f32 %v4163, %v4379
    %v4381 = vpop.f32.mrb[0].mxu0
    %v4382 = vpop.f32.mrb[0].mxu0
    %v4383 = vadd.f32 %v4163, %v4382
    %v4384 = vpop.f32.mrb[0].mxu0
    %4385 = vmatprep.mubr.bf16.mxu0 0
    %4386 = vmatmul.mubr.bf16.gmra.mrb[0].mxu0 %v4241
    %v4387 = vpop.f32.mrb[0].mxu0
    %v4388 = vadd.f32 %v4163, %v4387
    %v4389 = vpop.f32.mrb[0].mxu0
    %v4390 = vpop.f32.mrb[0].mxu0
    %v4391 = vadd.f32 %v4163, %v4390
    %v4392 = vpop.f32.mrb[0].mxu0
    %4393 = vmatprep.mubr.bf16.mxu0 0
    %4394 = vmatmul.mubr.bf16.gmra.mrb[0].mxu0 %v4244
    %v4395 = vpop.f32.mrb[0].mxu0
    %v4396 = vadd.f32 %v4163, %v4395
    %v4397 = vpop.f32.mrb[0].mxu0
    %v4398 = vpop.f32.mrb[0].mxu0
    %v4399 = vadd.f32 %v4163, %v4398
    %v4400 = vpop.f32.mrb[0].mxu0
    %4401 = vmatprep.mubr.bf16.mxu0 0
    %4402 = vmatmul.mubr.bf16.gmra.mrb[0].mxu0 %v4247
    %v4403 = vpop.f32.mrb[0].mxu0
    %v4404 = vadd.f32 %v4163, %v4403
    %v4405 = vpop.f32.mrb[0].mxu0
    %v4406 = vpop.f32.mrb[0].mxu0
    %v4407 = vadd.f32 %v4163, %v4406
    %v4408 = vpop.f32.mrb[0].mxu0
    %4409 = vdwg.mxu0
    %v4410 = vadd.f32 %v3100, %v4284
    %v4411 = vadd.f32 %v3101, %v4287
    %v4412 = vadd.f32 %v3102, %v4292
    %v4413 = vadd.f32 %v3103, %v4295
    %v4414 = vadd.f32 %v3104, %v4300
    %v4415 = vadd.f32 %v3105, %v4303
    %v4416 = vadd.f32 %v3106, %v4308
    %v4417 = vadd.f32 %v3107, %v4311
    %v4418 = vadd.f32 %v3108, %v4316
    %v4419 = vadd.f32 %v3109, %v4319
    %v4420 = vadd.f32 %v3110, %v4324
    %v4421 = vadd.f32 %v3111, %v4327
    %v4422 = vadd.f32 %v3112, %v4332
    %v4423 = vadd.f32 %v3113, %v4335
    %v4424 = vadd.f32 %v3114, %v4340
    %v4425 = vadd.f32 %v3115, %v4343
    %v4426 = vadd.f32 %v3116, %v4348
    %v4427 = vadd.f32 %v3117, %v4351
    %v4428 = vadd.f32 %v3118, %v4356
    %v4429 = vadd.f32 %v3119, %v4359
    %v4430 = vadd.f32 %v3120, %v4364
    %v4431 = vadd.f32 %v3121, %v4367
    %v4432 = vadd.f32 %v3122, %v4372
    %v4433 = vadd.f32 %v3123, %v4375
    %v4434 = vadd.f32 %v3124, %v4380
    %v4435 = vadd.f32 %v3125, %v4383
    %v4436 = vadd.f32 %v3126, %v4388
    %v4437 = vadd.f32 %v3127, %v4391
    %v4438 = vadd.f32 %v3128, %v4396
    %v4439 = vadd.f32 %v3129, %v4399
    %v4440 = vadd.f32 %v3130, %v4404
    %v4441 = vadd.f32 %v3131, %v4407
    %s4442 = scalar_lea.vmem %s3, 3
    %v4443 = vld [vmem:[%s4442] sm:$0x1]
    %s4444 = scalar_lea.vmem %s4, 3
    %v4445 = vld [vmem:[%s4444] sm:$0x1]
    %s4446 = scalar_lea.vmem %s5, 48
    %v4447 = vld [vmem:[%s4446] sm:$0xf]
    %v4448 = vld [vmem:[%s4446 + $0x4] sm:$0xf]
    %v4449 = vld [vmem:[%s4446 + $0x8] sm:$0xf]
    %v4450 = vld [vmem:[%s4446 + $0xc] sm:$0xf]
    %s4451 = scalar_lea.vmem %s6, 3
    %v4452 = vld [vmem:[%s4451] sm:$0x1]
    %s4453 = scalar_lea.vmem %s7, 48
    %v4454 = vld [vmem:[%s4453] sm:$0xf]
    %v4455 = vld [vmem:[%s4453 + $0x4] sm:$0xf]
    %v4456 = vld [vmem:[%s4453 + $0x8] sm:$0xf]
    %v4457 = vld [vmem:[%s4453 + $0xc] sm:$0xf]
    %s4458 = scalar_lea.vmem %s8, 3
    %v4459 = vld [vmem:[%s4458] sm:$0x1]
    %s4460 = scalar_lea.vmem %s9, 144
    %v4461 = vld [vmem:[%s4460] sm:$0xf]
    %v4462 = vld [vmem:[%s4460 + $0x4] sm:$0xf]
    %v4463 = vld [vmem:[%s4460 + $0x8] sm:$0xf]
    %v4464 = vld [vmem:[%s4460 + $0xc] sm:$0xf]
    %v4465 = vld [vmem:[%s4460 + $0x10] sm:$0xf]
    %v4466 = vld [vmem:[%s4460 + $0x14] sm:$0xf]
    %v4467 = vld [vmem:[%s4460 + $0x18] sm:$0xf]
    %v4468 = vld [vmem:[%s4460 + $0x1c] sm:$0xf]
    %v4469 = vld [vmem:[%s4460 + $0x20] sm:$0xf]
    %v4470 = vld [vmem:[%s4460 + $0x24] sm:$0xf]
    %v4471 = vld [vmem:[%s4460 + $0x28] sm:$0xf]
    %v4472 = vld [vmem:[%s4460 + $0x2c] sm:$0xf]
    %s4473 = scalar_lea.vmem %s10, 3
    %v4474 = vld [vmem:[%s4473] sm:$0x1]
    %v4475 = vsel %vm542, %v4410, 0.0
    %4476 = vadd.xlane.f32.xlu0 %v4475
    %v4477 = vpop.xlane.xlu0 %4476
    %v4478 = vsel %vm542, %v4411, 0.0
    %4479 = vadd.xlane.f32.xlu0 %v4478
    %v4480 = vpop.xlane.xlu0 %4479
    %v4481 = vsel %vm542, %v4412, 0.0
    %4482 = vadd.xlane.f32.xlu0 %v4481
    %v4483 = vpop.xlane.xlu0 %4482
    %v4484 = vsel %vm542, %v4413, 0.0
    %4485 = vadd.xlane.f32.xlu0 %v4484
    %v4486 = vpop.xlane.xlu0 %4485
    %v4487 = vsel %vm542, %v4414, 0.0
    %4488 = vadd.xlane.f32.xlu0 %v4487
    %v4489 = vpop.xlane.xlu0 %4488
    %v4490 = vsel %vm542, %v4415, 0.0
    %4491 = vadd.xlane.f32.xlu0 %v4490
    %v4492 = vpop.xlane.xlu0 %4491
    %v4493 = vsel %vm542, %v4416, 0.0
    %4494 = vadd.xlane.f32.xlu0 %v4493
    %v4495 = vpop.xlane.xlu0 %4494
    %v4496 = vsel %vm542, %v4417, 0.0
    %4497 = vadd.xlane.f32.xlu0 %v4496
    %v4498 = vpop.xlane.xlu0 %4497
    %v4499 = vsel %vm542, %v4418, 0.0
    %4500 = vadd.xlane.f32.xlu0 %v4499
    %v4501 = vpop.xlane.xlu0 %4500
    %v4502 = vsel %vm542, %v4419, 0.0
    %4503 = vadd.xlane.f32.xlu0 %v4502
    %v4504 = vpop.xlane.xlu0 %4503
    %v4505 = vsel %vm542, %v4420, 0.0
    %4506 = vadd.xlane.f32.xlu0 %v4505
    %v4507 = vpop.xlane.xlu0 %4506
    %v4508 = vsel %vm542, %v4421, 0.0
    %4509 = vadd.xlane.f32.xlu0 %v4508
    %v4510 = vpop.xlane.xlu0 %4509
    %v4511 = vsel %vm542, %v4422, 0.0
    %4512 = vadd.xlane.f32.xlu0 %v4511
    %v4513 = vpop.xlane.xlu0 %4512
    %v4514 = vsel %vm542, %v4423, 0.0
    %4515 = vadd.xlane.f32.xlu0 %v4514
    %v4516 = vpop.xlane.xlu0 %4515
    %v4517 = vsel %vm542, %v4424, 0.0
    %4518 = vadd.xlane.f32.xlu0 %v4517
    %v4519 = vpop.xlane.xlu0 %4518
    %v4520 = vsel %vm542, %v4425, 0.0
    %4521 = vadd.xlane.f32.xlu0 %v4520
    %v4522 = vpop.xlane.xlu0 %4521
    %v4523 = vsel %vm542, %v4426, 0.0
    %4524 = vadd.xlane.f32.xlu0 %v4523
    %v4525 = vpop.xlane.xlu0 %4524
    %v4526 = vsel %vm542, %v4427, 0.0
    %4527 = vadd.xlane.f32.xlu0 %v4526
    %v4528 = vpop.xlane.xlu0 %4527
    %v4529 = vsel %vm542, %v4428, 0.0
    %4530 = vadd.xlane.f32.xlu0 %v4529
    %v4531 = vpop.xlane.xlu0 %4530
    %v4532 = vsel %vm542, %v4429, 0.0
    %4533 = vadd.xlane.f32.xlu0 %v4532
    %v4534 = vpop.xlane.xlu0 %4533
    %v4535 = vsel %vm542, %v4430, 0.0
    %4536 = vadd.xlane.f32.xlu0 %v4535
    %v4537 = vpop.xlane.xlu0 %4536
    %v4538 = vsel %vm542, %v4431, 0.0
    %4539 = vadd.xlane.f32.xlu0 %v4538
    %v4540 = vpop.xlane.xlu0 %4539
    %v4541 = vsel %vm542, %v4432, 0.0
    %4542 = vadd.xlane.f32.xlu0 %v4541
    %v4543 = vpop.xlane.xlu0 %4542
    %v4544 = vsel %vm542, %v4433, 0.0
    %4545 = vadd.xlane.f32.xlu0 %v4544
    %v4546 = vpop.xlane.xlu0 %4545
    %v4547 = vsel %vm542, %v4434, 0.0
    %4548 = vadd.xlane.f32.xlu0 %v4547
    %v4549 = vpop.xlane.xlu0 %4548
    %v4550 = vsel %vm542, %v4435, 0.0
    %4551 = vadd.xlane.f32.xlu0 %v4550
    %v4552 = vpop.xlane.xlu0 %4551
    %v4553 = vsel %vm542, %v4436, 0.0
    %4554 = vadd.xlane.f32.xlu0 %v4553
    %v4555 = vpop.xlane.xlu0 %4554
    %v4556 = vsel %vm542, %v4437, 0.0
    %4557 = vadd.xlane.f32.xlu0 %v4556
    %v4558 = vpop.xlane.xlu0 %4557
    %v4559 = vsel %vm542, %v4438, 0.0
    %4560 = vadd.xlane.f32.xlu0 %v4559
    %v4561 = vpop.xlane.xlu0 %4560
    %v4562 = vsel %vm542, %v4439, 0.0
    %4563 = vadd.xlane.f32.xlu0 %v4562
    %v4564 = vpop.xlane.xlu0 %4563
    %v4565 = vsel %vm542, %v4440, 0.0
    %4566 = vadd.xlane.f32.xlu0 %v4565
    %v4567 = vpop.xlane.xlu0 %4566
    %v4568 = vsel %vm542, %v4441, 0.0
    %4569 = vadd.xlane.f32.xlu0 %v4568
    %v4570 = vpop.xlane.xlu0 %4569
    %v4571 = vmul.f32 %v4477, %v639
    %v4572 = vmul.f32 %v4480, %v639
    %v4573 = vmul.f32 %v4483, %v639
    %v4574 = vmul.f32 %v4486, %v639
    %v4575 = vmul.f32 %v4489, %v639
    %v4576 = vmul.f32 %v4492, %v639
    %v4577 = vmul.f32 %v4495, %v639
    %v4578 = vmul.f32 %v4498, %v639
    %v4579 = vmul.f32 %v4501, %v639
    %v4580 = vmul.f32 %v4504, %v639
    %v4581 = vmul.f32 %v4507, %v639
    %v4582 = vmul.f32 %v4510, %v639
    %v4583 = vmul.f32 %v4513, %v639
    %v4584 = vmul.f32 %v4516, %v639
    %v4585 = vmul.f32 %v4519, %v639
    %v4586 = vmul.f32 %v4522, %v639
    %v4587 = vmul.f32 %v4525, %v639
    %v4588 = vmul.f32 %v4528, %v639
    %v4589 = vmul.f32 %v4531, %v639
    %v4590 = vmul.f32 %v4534, %v639
    %v4591 = vmul.f32 %v4537, %v639
    %v4592 = vmul.f32 %v4540, %v639
    %v4593 = vmul.f32 %v4543, %v639
    %v4594 = vmul.f32 %v4546, %v639
    %v4595 = vmul.f32 %v4549, %v639
    %v4596 = vmul.f32 %v4552, %v639
    %v4597 = vmul.f32 %v4555, %v639
    %v4598 = vmul.f32 %v4558, %v639
    %v4599 = vmul.f32 %v4561, %v639
    %v4600 = vmul.f32 %v4564, %v639
    %v4601 = vmul.f32 %v4567, %v639
    %v4602 = vmul.f32 %v4570, %v639
    %v4603 = vsub.f32 %v4410, %v4571
    %v4604 = vsub.f32 %v4411, %v4572
    %v4605 = vsub.f32 %v4412, %v4573
    %v4606 = vsub.f32 %v4413, %v4574
    %v4607 = vsub.f32 %v4414, %v4575
    %v4608 = vsub.f32 %v4415, %v4576
    %v4609 = vsub.f32 %v4416, %v4577
    %v4610 = vsub.f32 %v4417, %v4578
    %v4611 = vsub.f32 %v4418, %v4579
    %v4612 = vsub.f32 %v4419, %v4580
    %v4613 = vsub.f32 %v4420, %v4581
    %v4614 = vsub.f32 %v4421, %v4582
    %v4615 = vsub.f32 %v4422, %v4583
    %v4616 = vsub.f32 %v4423, %v4584
    %v4617 = vsub.f32 %v4424, %v4585
    %v4618 = vsub.f32 %v4425, %v4586
    %v4619 = vsub.f32 %v4426, %v4587
    %v4620 = vsub.f32 %v4427, %v4588
    %v4621 = vsub.f32 %v4428, %v4589
    %v4622 = vsub.f32 %v4429, %v4590
    %v4623 = vsub.f32 %v4430, %v4591
    %v4624 = vsub.f32 %v4431, %v4592
    %v4625 = vsub.f32 %v4432, %v4593
    %v4626 = vsub.f32 %v4433, %v4594
    %v4627 = vsub.f32 %v4434, %v4595
    %v4628 = vsub.f32 %v4435, %v4596
    %v4629 = vsub.f32 %v4436, %v4597
    %v4630 = vsub.f32 %v4437, %v4598
    %v4631 = vsub.f32 %v4438, %v4599
    %v4632 = vsub.f32 %v4439, %v4600
    %v4633 = vsub.f32 %v4440, %v4601
    %v4634 = vsub.f32 %v4441, %v4602
    %v4635 = vmul.f32 %v4603, %v4603
    %v4636 = vmul.f32 %v4604, %v4604
    %v4637 = vmul.f32 %v4605, %v4605
    %v4638 = vmul.f32 %v4606, %v4606
    %v4639 = vmul.f32 %v4607, %v4607
    %v4640 = vmul.f32 %v4608, %v4608
    %v4641 = vmul.f32 %v4609, %v4609
    %v4642 = vmul.f32 %v4610, %v4610
    %v4643 = vmul.f32 %v4611, %v4611
    %v4644 = vmul.f32 %v4612, %v4612
    %v4645 = vmul.f32 %v4613, %v4613
    %v4646 = vmul.f32 %v4614, %v4614
    %v4647 = vmul.f32 %v4615, %v4615
    %v4648 = vmul.f32 %v4616, %v4616
    %v4649 = vmul.f32 %v4617, %v4617
    %v4650 = vmul.f32 %v4618, %v4618
    %v4651 = vmul.f32 %v4619, %v4619
    %v4652 = vmul.f32 %v4620, %v4620
    %v4653 = vmul.f32 %v4621, %v4621
    %v4654 = vmul.f32 %v4622, %v4622
    %v4655 = vmul.f32 %v4623, %v4623
    %v4656 = vmul.f32 %v4624, %v4624
    %v4657 = vmul.f32 %v4625, %v4625
    %v4658 = vmul.f32 %v4626, %v4626
    %v4659 = vmul.f32 %v4627, %v4627
    %v4660 = vmul.f32 %v4628, %v4628
    %v4661 = vmul.f32 %v4629, %v4629
    %v4662 = vmul.f32 %v4630, %v4630
    %v4663 = vmul.f32 %v4631, %v4631
    %v4664 = vmul.f32 %v4632, %v4632
    %v4665 = vmul.f32 %v4633, %v4633
    %v4666 = vmul.f32 %v4634, %v4634
    %v4667 = vsel %vm542, %v4635, 0.0
    %4668 = vadd.xlane.f32.xlu0 %v4667
    %v4669 = vpop.xlane.xlu0 %4668
    %v4670 = vsel %vm542, %v4636, 0.0
    %4671 = vadd.xlane.f32.xlu0 %v4670
    %v4672 = vpop.xlane.xlu0 %4671
    %v4673 = vsel %vm542, %v4637, 0.0
    %4674 = vadd.xlane.f32.xlu0 %v4673
    %v4675 = vpop.xlane.xlu0 %4674
    %v4676 = vsel %vm542, %v4638, 0.0
    %4677 = vadd.xlane.f32.xlu0 %v4676
    %v4678 = vpop.xlane.xlu0 %4677
    %v4679 = vsel %vm542, %v4639, 0.0
    %4680 = vadd.xlane.f32.xlu0 %v4679
    %v4681 = vpop.xlane.xlu0 %4680
    %v4682 = vsel %vm542, %v4640, 0.0
    %4683 = vadd.xlane.f32.xlu0 %v4682
    %v4684 = vpop.xlane.xlu0 %4683
    %v4685 = vsel %vm542, %v4641, 0.0
    %4686 = vadd.xlane.f32.xlu0 %v4685
    %v4687 = vpop.xlane.xlu0 %4686
    %v4688 = vsel %vm542, %v4642, 0.0
    %4689 = vadd.xlane.f32.xlu0 %v4688
    %v4690 = vpop.xlane.xlu0 %4689
    %v4691 = vsel %vm542, %v4643, 0.0
    %4692 = vadd.xlane.f32.xlu0 %v4691
    %v4693 = vpop.xlane.xlu0 %4692
    %v4694 = vsel %vm542, %v4644, 0.0
    %4695 = vadd.xlane.f32.xlu0 %v4694
    %v4696 = vpop.xlane.xlu0 %4695
    %v4697 = vsel %vm542, %v4645, 0.0
    %4698 = vadd.xlane.f32.xlu0 %v4697
    %v4699 = vpop.xlane.xlu0 %4698
    %v4700 = vsel %vm542, %v4646, 0.0
    %4701 = vadd.xlane.f32.xlu0 %v4700
    %v4702 = vpop.xlane.xlu0 %4701
    %v4703 = vsel %vm542, %v4647, 0.0
    %4704 = vadd.xlane.f32.xlu0 %v4703
    %v4705 = vpop.xlane.xlu0 %4704
    %v4706 = vsel %vm542, %v4648, 0.0
    %4707 = vadd.xlane.f32.xlu0 %v4706
    %v4708 = vpop.xlane.xlu0 %4707
    %v4709 = vsel %vm542, %v4649, 0.0
    %4710 = vadd.xlane.f32.xlu0 %v4709
    %v4711 = vpop.xlane.xlu0 %4710
    %v4712 = vsel %vm542, %v4650, 0.0
    %4713 = vadd.xlane.f32.xlu0 %v4712
    %v4714 = vpop.xlane.xlu0 %4713
    %v4715 = vsel %vm542, %v4651, 0.0
    %4716 = vadd.xlane.f32.xlu0 %v4715
    %v4717 = vpop.xlane.xlu0 %4716
    %v4718 = vsel %vm542, %v4652, 0.0
    %4719 = vadd.xlane.f32.xlu0 %v4718
    %v4720 = vpop.xlane.xlu0 %4719
    %v4721 = vsel %vm542, %v4653, 0.0
    %4722 = vadd.xlane.f32.xlu0 %v4721
    %v4723 = vpop.xlane.xlu0 %4722
    %v4724 = vsel %vm542, %v4654, 0.0
    %4725 = vadd.xlane.f32.xlu0 %v4724
    %v4726 = vpop.xlane.xlu0 %4725
    %v4727 = vsel %vm542, %v4655, 0.0
    %4728 = vadd.xlane.f32.xlu0 %v4727
    %v4729 = vpop.xlane.xlu0 %4728
    %v4730 = vsel %vm542, %v4656, 0.0
    %4731 = vadd.xlane.f32.xlu0 %v4730
    %v4732 = vpop.xlane.xlu0 %4731
    %v4733 = vsel %vm542, %v4657, 0.0
    %4734 = vadd.xlane.f32.xlu0 %v4733
    %v4735 = vpop.xlane.xlu0 %4734
    %v4736 = vsel %vm542, %v4658, 0.0
    %4737 = vadd.xlane.f32.xlu0 %v4736
    %v4738 = vpop.xlane.xlu0 %4737
    %v4739 = vsel %vm542, %v4659, 0.0
    %4740 = vadd.xlane.f32.xlu0 %v4739
    %v4741 = vpop.xlane.xlu0 %4740
    %v4742 = vsel %vm542, %v4660, 0.0
    %4743 = vadd.xlane.f32.xlu0 %v4742
    %v4744 = vpop.xlane.xlu0 %4743
    %v4745 = vsel %vm542, %v4661, 0.0
    %4746 = vadd.xlane.f32.xlu0 %v4745
    %v4747 = vpop.xlane.xlu0 %4746
    %v4748 = vsel %vm542, %v4662, 0.0
    %4749 = vadd.xlane.f32.xlu0 %v4748
    %v4750 = vpop.xlane.xlu0 %4749
    %v4751 = vsel %vm542, %v4663, 0.0
    %4752 = vadd.xlane.f32.xlu0 %v4751
    %v4753 = vpop.xlane.xlu0 %4752
    %v4754 = vsel %vm542, %v4664, 0.0
    %4755 = vadd.xlane.f32.xlu0 %v4754
    %v4756 = vpop.xlane.xlu0 %4755
    %v4757 = vsel %vm542, %v4665, 0.0
    %4758 = vadd.xlane.f32.xlu0 %v4757
    %v4759 = vpop.xlane.xlu0 %4758
    %v4760 = vsel %vm542, %v4666, 0.0
    %4761 = vadd.xlane.f32.xlu0 %v4760
    %v4762 = vpop.xlane.xlu0 %4761
    %v4763 = vmul.f32 %v4669, %v639
    %v4764 = vmul.f32 %v4672, %v639
    %v4765 = vmul.f32 %v4675, %v639
    %v4766 = vmul.f32 %v4678, %v639
    %v4767 = vmul.f32 %v4681, %v639
    %v4768 = vmul.f32 %v4684, %v639
    %v4769 = vmul.f32 %v4687, %v639
    %v4770 = vmul.f32 %v4690, %v639
    %v4771 = vmul.f32 %v4693, %v639
    %v4772 = vmul.f32 %v4696, %v639
    %v4773 = vmul.f32 %v4699, %v639
    %v4774 = vmul.f32 %v4702, %v639
    %v4775 = vmul.f32 %v4705, %v639
    %v4776 = vmul.f32 %v4708, %v639
    %v4777 = vmul.f32 %v4711, %v639
    %v4778 = vmul.f32 %v4714, %v639
    %v4779 = vmul.f32 %v4717, %v639
    %v4780 = vmul.f32 %v4720, %v639
    %v4781 = vmul.f32 %v4723, %v639
    %v4782 = vmul.f32 %v4726, %v639
    %v4783 = vmul.f32 %v4729, %v639
    %v4784 = vmul.f32 %v4732, %v639
    %v4785 = vmul.f32 %v4735, %v639
    %v4786 = vmul.f32 %v4738, %v639
    %v4787 = vmul.f32 %v4741, %v639
    %v4788 = vmul.f32 %v4744, %v639
    %v4789 = vmul.f32 %v4747, %v639
    %v4790 = vmul.f32 %v4750, %v639
    %v4791 = vmul.f32 %v4753, %v639
    %v4792 = vmul.f32 %v4756, %v639
    %v4793 = vmul.f32 %v4759, %v639
    %v4794 = vmul.f32 %v4762, %v639
    %v4795 = vadd.f32 %v4763, 1e-05
    %v4796 = vadd.f32 %v4764, 1e-05
    %v4797 = vadd.f32 %v4765, 1e-05
    %v4798 = vadd.f32 %v4766, 1e-05
    %v4799 = vadd.f32 %v4767, 1e-05
    %v4800 = vadd.f32 %v4768, 1e-05
    %v4801 = vadd.f32 %v4769, 1e-05
    %v4802 = vadd.f32 %v4770, 1e-05
    %v4803 = vadd.f32 %v4771, 1e-05
    %v4804 = vadd.f32 %v4772, 1e-05
    %v4805 = vadd.f32 %v4773, 1e-05
    %v4806 = vadd.f32 %v4774, 1e-05
    %v4807 = vadd.f32 %v4775, 1e-05
    %v4808 = vadd.f32 %v4776, 1e-05
    %v4809 = vadd.f32 %v4777, 1e-05
    %v4810 = vadd.f32 %v4778, 1e-05
    %v4811 = vadd.f32 %v4779, 1e-05
    %v4812 = vadd.f32 %v4780, 1e-05
    %v4813 = vadd.f32 %v4781, 1e-05
    %v4814 = vadd.f32 %v4782, 1e-05
    %v4815 = vadd.f32 %v4783, 1e-05
    %v4816 = vadd.f32 %v4784, 1e-05
    %v4817 = vadd.f32 %v4785, 1e-05
    %v4818 = vadd.f32 %v4786, 1e-05
    %v4819 = vadd.f32 %v4787, 1e-05
    %v4820 = vadd.f32 %v4788, 1e-05
    %v4821 = vadd.f32 %v4789, 1e-05
    %v4822 = vadd.f32 %v4790, 1e-05
    %v4823 = vadd.f32 %v4791, 1e-05
    %v4824 = vadd.f32 %v4792, 1e-05
    %v4825 = vadd.f32 %v4793, 1e-05
    %v4826 = vadd.f32 %v4794, 1e-05
    %v4827 = vrsqrt.pop %v4795
    %v4828 = vrsqrt.pop %v4796
    %v4829 = vrsqrt.pop %v4797
    %v4830 = vrsqrt.pop %v4798
    %v4831 = vrsqrt.pop %v4799
    %v4832 = vrsqrt.pop %v4800
    %v4833 = vrsqrt.pop %v4801
    %v4834 = vrsqrt.pop %v4802
    %v4835 = vrsqrt.pop %v4803
    %v4836 = vrsqrt.pop %v4804
    %v4837 = vrsqrt.pop %v4805
    %v4838 = vrsqrt.pop %v4806
    %v4839 = vrsqrt.pop %v4807
    %v4840 = vrsqrt.pop %v4808
    %v4841 = vrsqrt.pop %v4809
    %v4842 = vrsqrt.pop %v4810
    %v4843 = vrsqrt.pop %v4811
    %v4844 = vrsqrt.pop %v4812
    %v4845 = vrsqrt.pop %v4813
    %v4846 = vrsqrt.pop %v4814
    %v4847 = vrsqrt.pop %v4815
    %v4848 = vrsqrt.pop %v4816
    %v4849 = vrsqrt.pop %v4817
    %v4850 = vrsqrt.pop %v4818
    %v4851 = vrsqrt.pop %v4819
    %v4852 = vrsqrt.pop %v4820
    %v4853 = vrsqrt.pop %v4821
    %v4854 = vrsqrt.pop %v4822
    %v4855 = vrsqrt.pop %v4823
    %v4856 = vrsqrt.pop %v4824
    %v4857 = vrsqrt.pop %v4825
    %v4858 = vrsqrt.pop %v4826
    %v4859 = vmul.f32 %v4603, %v4827
    %v4860 = vmul.f32 %v4604, %v4828
    %v4861 = vmul.f32 %v4605, %v4829
    %v4862 = vmul.f32 %v4606, %v4830
    %v4863 = vmul.f32 %v4607, %v4831
    %v4864 = vmul.f32 %v4608, %v4832
    %v4865 = vmul.f32 %v4609, %v4833
    %v4866 = vmul.f32 %v4610, %v4834
    %v4867 = vmul.f32 %v4611, %v4835
    %v4868 = vmul.f32 %v4612, %v4836
    %v4869 = vmul.f32 %v4613, %v4837
    %v4870 = vmul.f32 %v4614, %v4838
    %v4871 = vmul.f32 %v4615, %v4839
    %v4872 = vmul.f32 %v4616, %v4840
    %v4873 = vmul.f32 %v4617, %v4841
    %v4874 = vmul.f32 %v4618, %v4842
    %v4875 = vmul.f32 %v4619, %v4843
    %v4876 = vmul.f32 %v4620, %v4844
    %v4877 = vmul.f32 %v4621, %v4845
    %v4878 = vmul.f32 %v4622, %v4846
    %v4879 = vmul.f32 %v4623, %v4847
    %v4880 = vmul.f32 %v4624, %v4848
    %v4881 = vmul.f32 %v4625, %v4849
    %v4882 = vmul.f32 %v4626, %v4850
    %v4883 = vmul.f32 %v4627, %v4851
    %v4884 = vmul.f32 %v4628, %v4852
    %v4885 = vmul.f32 %v4629, %v4853
    %v4886 = vmul.f32 %v4630, %v4854
    %v4887 = vmul.f32 %v4631, %v4855
    %v4888 = vmul.f32 %v4632, %v4856
    %v4889 = vmul.f32 %v4633, %v4857
    %v4890 = vmul.f32 %v4634, %v4858
    %v4892 = vlaneseq
    %v4893 = vshrl.u32 %v4892, 7
    %v4894 = vsub.s32 0, %v4893
    %v4895 = vrot.slane %v4443, %v4894
    %v4897 = vmul.f32 %v4859, %v4895
    %v4898 = vmul.f32 %v4860, %v4895
    %v4899 = vmul.f32 %v4861, %v4895
    %v4900 = vmul.f32 %v4862, %v4895
    %v4901 = vmul.f32 %v4863, %v4895
    %v4902 = vmul.f32 %v4864, %v4895
    %v4903 = vmul.f32 %v4865, %v4895
    %v4904 = vmul.f32 %v4866, %v4895
    %v4905 = vmul.f32 %v4867, %v4895
    %v4906 = vmul.f32 %v4868, %v4895
    %v4907 = vmul.f32 %v4869, %v4895
    %v4908 = vmul.f32 %v4870, %v4895
    %v4909 = vmul.f32 %v4871, %v4895
    %v4910 = vmul.f32 %v4872, %v4895
    %v4911 = vmul.f32 %v4873, %v4895
    %v4912 = vmul.f32 %v4874, %v4895
    %v4913 = vmul.f32 %v4875, %v4895
    %v4914 = vmul.f32 %v4876, %v4895
    %v4915 = vmul.f32 %v4877, %v4895
    %v4916 = vmul.f32 %v4878, %v4895
    %v4917 = vmul.f32 %v4879, %v4895
    %v4918 = vmul.f32 %v4880, %v4895
    %v4919 = vmul.f32 %v4881, %v4895
    %v4920 = vmul.f32 %v4882, %v4895
    %v4921 = vmul.f32 %v4883, %v4895
    %v4922 = vmul.f32 %v4884, %v4895
    %v4923 = vmul.f32 %v4885, %v4895
    %v4924 = vmul.f32 %v4886, %v4895
    %v4925 = vmul.f32 %v4887, %v4895
    %v4926 = vmul.f32 %v4888, %v4895
    %v4927 = vmul.f32 %v4889, %v4895
    %v4928 = vmul.f32 %v4890, %v4895
    %v4930 = vlaneseq
    %v4931 = vshrl.u32 %v4930, 7
    %v4932 = vsub.s32 0, %v4931
    %v4933 = vrot.slane %v4445, %v4932
    %v4935 = vadd.f32 %v4897, %v4933
    %v4936 = vadd.f32 %v4898, %v4933
    %v4937 = vadd.f32 %v4899, %v4933
    %v4938 = vadd.f32 %v4900, %v4933
    %v4939 = vadd.f32 %v4901, %v4933
    %v4940 = vadd.f32 %v4902, %v4933
    %v4941 = vadd.f32 %v4903, %v4933
    %v4942 = vadd.f32 %v4904, %v4933
    %v4943 = vadd.f32 %v4905, %v4933
    %v4944 = vadd.f32 %v4906, %v4933
    %v4945 = vadd.f32 %v4907, %v4933
    %v4946 = vadd.f32 %v4908, %v4933
    %v4947 = vadd.f32 %v4909, %v4933
    %v4948 = vadd.f32 %v4910, %v4933
    %v4949 = vadd.f32 %v4911, %v4933
    %v4950 = vadd.f32 %v4912, %v4933
    %v4951 = vadd.f32 %v4913, %v4933
    %v4952 = vadd.f32 %v4914, %v4933
    %v4953 = vadd.f32 %v4915, %v4933
    %v4954 = vadd.f32 %v4916, %v4933
    %v4955 = vadd.f32 %v4917, %v4933
    %v4956 = vadd.f32 %v4918, %v4933
    %v4957 = vadd.f32 %v4919, %v4933
    %v4958 = vadd.f32 %v4920, %v4933
    %v4959 = vadd.f32 %v4921, %v4933
    %v4960 = vadd.f32 %v4922, %v4933
    %v4961 = vadd.f32 %v4923, %v4933
    %v4962 = vadd.f32 %v4924, %v4933
    %v4963 = vadd.f32 %v4925, %v4933
    %v4964 = vadd.f32 %v4926, %v4933
    %v4965 = vadd.f32 %v4927, %v4933
    %v4966 = vadd.f32 %v4928, %v4933
    %v4967 = vpack.c.bf16 %v4936, %v4935
    %v4968 = vpack.c.bf16 %v4938, %v4937
    %v4969 = vpack.c.bf16 %v4940, %v4939
    %v4970 = vpack.c.bf16 %v4942, %v4941
    %v4971 = vpack.c.bf16 %v4944, %v4943
    %v4972 = vpack.c.bf16 %v4946, %v4945
    %v4973 = vpack.c.bf16 %v4948, %v4947
    %v4974 = vpack.c.bf16 %v4950, %v4949
    %v4975 = vpack.c.bf16 %v4952, %v4951
    %v4976 = vpack.c.bf16 %v4954, %v4953
    %v4977 = vpack.c.bf16 %v4956, %v4955
    %v4978 = vpack.c.bf16 %v4958, %v4957
    %v4979 = vpack.c.bf16 %v4960, %v4959
    %v4980 = vpack.c.bf16 %v4962, %v4961
    %v4981 = vpack.c.bf16 %v4964, %v4963
    %v4982 = vpack.c.bf16 %v4966, %v4965
    %v4984 = vlaneseq
    %v4985 = vshrl.u32 %v4984, 7
    %v4986 = vsub.s32 0, %v4985
    %v4987 = vrot.slane %v4452, %v4986
    %v4993 = vunpack.c.l.b16 %v4447
    %v4994 = vunpack.c.l.b16 %v4448
    %v4995 = vunpack.c.l.b16 %v4449
    %v4996 = vunpack.c.l.b16 %v4450
    %v4997 = vpack.c.b16 %v4994, %v4993
    %v4998 = vpack.c.b16 %v4996, %v4995
    %v5002 = vsel %vm542, %v4967, 0
    %v5005 = vsel %vm542, %v4968, 0
    %v5008 = vsel %vm542, %v4969, 0
    %v5011 = vsel %vm542, %v4970, 0
    %v5014 = vsel %vm542, %v4971, 0
    %v5017 = vsel %vm542, %v4972, 0
    %v5020 = vsel %vm542, %v4973, 0
    %v5023 = vsel %vm542, %v4974, 0
    %v5026 = vsel %vm542, %v4975, 0
    %v5029 = vsel %vm542, %v4976, 0
    %v5032 = vsel %vm542, %v4977, 0
    %v5035 = vsel %vm542, %v4978, 0
    %v5038 = vsel %vm542, %v4979, 0
    %v5041 = vsel %vm542, %v4980, 0
    %v5044 = vsel %vm542, %v4981, 0
    %v5047 = vsel %vm542, %v4982, 0
    %5049 = vmatprep.subr.bf16.mxu0 0
    %5050 = vmatpush1.bf16.msra.mxu0 %v4997
    %5051 = vmatprep.subr.bf16.mxu0 0
    %5052 = vmatpush1.bf16.msra.mxu0 %v4998
    %5053 = vmatprep.subr.bf16.mxu0 0
    %5054 = vmatpush1.bf16.msra.mxu0 0
    %5055 = vmatprep.subr.bf16.mxu0 0
    %5056 = vmatpush1.bf16.msra.mxu0 0
    %5057 = vmatprep.subr.bf16.mxu0 0
    %5058 = vmatpush1.bf16.msra.mxu0 0
    %5059 = vmatprep.subr.bf16.mxu0 0
    %5060 = vmatpush1.bf16.msra.mxu0 0
    %5061 = vmatprep.subr.bf16.mxu0 0
    %5062 = vmatpush1.bf16.msra.mxu0 0
    %5063 = vmatprep.subr.bf16.mxu0 0
    %5064 = vmatpush1.bf16.msra.mxu0 0
    %5065 = vmatprep.subr.bf16.mxu0 0
    %5066 = vmatpush1.bf16.msra.mxu0 0
    %5067 = vmatprep.subr.bf16.mxu0 0
    %5068 = vmatpush1.bf16.msra.mxu0 0
    %5069 = vmatprep.subr.bf16.mxu0 0
    %5070 = vmatpush1.bf16.msra.mxu0 0
    %5071 = vmatprep.subr.bf16.mxu0 0
    %5072 = vmatpush1.bf16.msra.mxu0 0
    %5073 = vmatprep.subr.bf16.mxu0 0
    %5074 = vmatpush1.bf16.msra.mxu0 0
    %5075 = vmatprep.subr.bf16.mxu0 0
    %5076 = vmatpush1.bf16.msra.mxu0 0
    %5077 = vmatprep.subr.bf16.mxu0 0
    %5078 = vmatpush1.bf16.msra.mxu0 0
    %5079 = vmatprep.subr.bf16.mxu0 0
    %5080 = vmatpush1.bf16.msra.mxu0 0
    %5081 = vmatprep.mubr.bf16.mxu0 0
    %5082 = vmatmul.mubr.bf16.gmra.mrb[0].mxu0 %v5002
    %v5083 = vpop.f32.mrb[0].mxu0
    %v5084 = vadd.f32 %v4987, %v5083
    %v5085 = vpop.f32.mrb[0].mxu0
    %v5086 = vpop.f32.mrb[0].mxu0
    %v5087 = vadd.f32 %v4987, %v5086
    %v5088 = vpop.f32.mrb[0].mxu0
    %5089 = vmatprep.mubr.bf16.mxu0 0
    %5090 = vmatmul.mubr.bf16.gmra.mrb[0].mxu0 %v5005
    %v5091 = vpop.f32.mrb[0].mxu0
    %v5092 = vadd.f32 %v4987, %v5091
    %v5093 = vpop.f32.mrb[0].mxu0
    %v5094 = vpop.f32.mrb[0].mxu0
    %v5095 = vadd.f32 %v4987, %v5094
    %v5096 = vpop.f32.mrb[0].mxu0
    %5097 = vmatprep.mubr.bf16.mxu0 0
    %5098 = vmatmul.mubr.bf16.gmra.mrb[0].mxu0 %v5008
    %v5099 = vpop.f32.mrb[0].mxu0
    %v5100 = vadd.f32 %v4987, %v5099
    %v5101 = vpop.f32.mrb[0].mxu0
    %v5102 = vpop.f32.mrb[0].mxu0
    %v5103 = vadd.f32 %v4987, %v5102
    %v5104 = vpop.f32.mrb[0].mxu0
    %5105 = vmatprep.mubr.bf16.mxu0 0
    %5106 = vmatmul.mubr.bf16.gmra.mrb[0].mxu0 %v5011
    %v5107 = vpop.f32.mrb[0].mxu0
    %v5108 = vadd.f32 %v4987, %v5107
    %v5109 = vpop.f32.mrb[0].mxu0
    %v5110 = vpop.f32.mrb[0].mxu0
    %v5111 = vadd.f32 %v4987, %v5110
    %v5112 = vpop.f32.mrb[0].mxu0
    %5113 = vmatprep.mubr.bf16.mxu0 0
    %5114 = vmatmul.mubr.bf16.gmra.mrb[0].mxu0 %v5014
    %v5115 = vpop.f32.mrb[0].mxu0
    %v5116 = vadd.f32 %v4987, %v5115
    %v5117 = vpop.f32.mrb[0].mxu0
    %v5118 = vpop.f32.mrb[0].mxu0
    %v5119 = vadd.f32 %v4987, %v5118
    %v5120 = vpop.f32.mrb[0].mxu0
    %5121 = vmatprep.mubr.bf16.mxu0 0
    %5122 = vmatmul.mubr.bf16.gmra.mrb[0].mxu0 %v5017
    %v5123 = vpop.f32.mrb[0].mxu0
    %v5124 = vadd.f32 %v4987, %v5123
    %v5125 = vpop.f32.mrb[0].mxu0
    %v5126 = vpop.f32.mrb[0].mxu0
    %v5127 = vadd.f32 %v4987, %v5126
    %v5128 = vpop.f32.mrb[0].mxu0
    %5129 = vmatprep.mubr.bf16.mxu0 0
    %5130 = vmatmul.mubr.bf16.gmra.mrb[0].mxu0 %v5020
    %v5131 = vpop.f32.mrb[0].mxu0
    %v5132 = vadd.f32 %v4987, %v5131
    %v5133 = vpop.f32.mrb[0].mxu0
    %v5134 = vpop.f32.mrb[0].mxu0
    %v5135 = vadd.f32 %v4987, %v5134
    %v5136 = vpop.f32.mrb[0].mxu0
    %5137 = vmatprep.mubr.bf16.mxu0 0
    %5138 = vmatmul.mubr.bf16.gmra.mrb[0].mxu0 %v5023
    %v5139 = vpop.f32.mrb[0].mxu0
    %v5140 = vadd.f32 %v4987, %v5139
    %v5141 = vpop.f32.mrb[0].mxu0
    %v5142 = vpop.f32.mrb[0].mxu0
    %v5143 = vadd.f32 %v4987, %v5142
    %v5144 = vpop.f32.mrb[0].mxu0
    %5145 = vmatprep.mubr.bf16.mxu0 0
    %5146 = vmatmul.mubr.bf16.gmra.mrb[0].mxu0 %v5026
    %v5147 = vpop.f32.mrb[0].mxu0
    %v5148 = vadd.f32 %v4987, %v5147
    %v5149 = vpop.f32.mrb[0].mxu0
    %v5150 = vpop.f32.mrb[0].mxu0
    %v5151 = vadd.f32 %v4987, %v5150
    %v5152 = vpop.f32.mrb[0].mxu0
    %5153 = vmatprep.mubr.bf16.mxu0 0
    %5154 = vmatmul.mubr.bf16.gmra.mrb[0].mxu0 %v5029
    %v5155 = vpop.f32.mrb[0].mxu0
    %v5156 = vadd.f32 %v4987, %v5155
    %v5157 = vpop.f32.mrb[0].mxu0
    %v5158 = vpop.f32.mrb[0].mxu0
    %v5159 = vadd.f32 %v4987, %v5158
    %v5160 = vpop.f32.mrb[0].mxu0
    %5161 = vmatprep.mubr.bf16.mxu0 0
    %5162 = vmatmul.mubr.bf16.gmra.mrb[0].mxu0 %v5032
    %v5163 = vpop.f32.mrb[0].mxu0
    %v5164 = vadd.f32 %v4987, %v5163
    %v5165 = vpop.f32.mrb[0].mxu0
    %v5166 = vpop.f32.mrb[0].mxu0
    %v5167 = vadd.f32 %v4987, %v5166
    %v5168 = vpop.f32.mrb[0].mxu0
    %5169 = vmatprep.mubr.bf16.mxu0 0
    %5170 = vmatmul.mubr.bf16.gmra.mrb[0].mxu0 %v5035
    %v5171 = vpop.f32.mrb[0].mxu0
    %v5172 = vadd.f32 %v4987, %v5171
    %v5173 = vpop.f32.mrb[0].mxu0
    %v5174 = vpop.f32.mrb[0].mxu0
    %v5175 = vadd.f32 %v4987, %v5174
    %v5176 = vpop.f32.mrb[0].mxu0
    %5177 = vmatprep.mubr.bf16.mxu0 0
    %5178 = vmatmul.mubr.bf16.gmra.mrb[0].mxu0 %v5038
    %v5179 = vpop.f32.mrb[0].mxu0
    %v5180 = vadd.f32 %v4987, %v5179
    %v5181 = vpop.f32.mrb[0].mxu0
    %v5182 = vpop.f32.mrb[0].mxu0
    %v5183 = vadd.f32 %v4987, %v5182
    %v5184 = vpop.f32.mrb[0].mxu0
    %5185 = vmatprep.mubr.bf16.mxu0 0
    %5186 = vmatmul.mubr.bf16.gmra.mrb[0].mxu0 %v5041
    %v5187 = vpop.f32.mrb[0].mxu0
    %v5188 = vadd.f32 %v4987, %v5187
    %v5189 = vpop.f32.mrb[0].mxu0
    %v5190 = vpop.f32.mrb[0].mxu0
    %v5191 = vadd.f32 %v4987, %v5190
    %v5192 = vpop.f32.mrb[0].mxu0
    %5193 = vmatprep.mubr.bf16.mxu0 0
    %5194 = vmatmul.mubr.bf16.gmra.mrb[0].mxu0 %v5044
    %v5195 = vpop.f32.mrb[0].mxu0
    %v5196 = vadd.f32 %v4987, %v5195
    %v5197 = vpop.f32.mrb[0].mxu0
    %v5198 = vpop.f32.mrb[0].mxu0
    %v5199 = vadd.f32 %v4987, %v5198
    %v5200 = vpop.f32.mrb[0].mxu0
    %5201 = vmatprep.mubr.bf16.mxu0 0
    %5202 = vmatmul.mubr.bf16.gmra.mrb[0].mxu0 %v5047
    %v5203 = vpop.f32.mrb[0].mxu0
    %v5204 = vadd.f32 %v4987, %v5203
    %v5205 = vpop.f32.mrb[0].mxu0
    %v5206 = vpop.f32.mrb[0].mxu0
    %v5207 = vadd.f32 %v4987, %v5206
    %v5208 = vpop.f32.mrb[0].mxu0
    %5209 = vdwg.mxu0
    %v5211 = vlaneseq
    %v5212 = vshrl.u32 %v5211, 7
    %v5213 = vsub.s32 0, %v5212
    %v5214 = vrot.slane %v4459, %v5213
    %v5220 = vunpack.c.l.b16 %v4454
    %v5221 = vunpack.c.l.b16 %v4455
    %v5222 = vunpack.c.l.b16 %v4456
    %v5223 = vunpack.c.l.b16 %v4457
    %v5224 = vpack.c.b16 %v5221, %v5220
    %v5225 = vpack.c.b16 %v5223, %v5222
    %5228 = vmatprep.subr.bf16.mxu0 0
    %5229 = vmatpush1.bf16.msra.mxu0 %v5224
    %5230 = vmatprep.subr.bf16.mxu0 0
    %5231 = vmatpush1.bf16.msra.mxu0 %v5225
    %5232 = vmatprep.subr.bf16.mxu0 0
    %5233 = vmatpush1.bf16.msra.mxu0 0
    %5234 = vmatprep.subr.bf16.mxu0 0
    %5235 = vmatpush1.bf16.msra.mxu0 0
    %5236 = vmatprep.subr.bf16.mxu0 0
    %5237 = vmatpush1.bf16.msra.mxu0 0
    %5238 = vmatprep.subr.bf16.mxu0 0
    %5239 = vmatpush1.bf16.msra.mxu0 0
    %5240 = vmatprep.subr.bf16.mxu0 0
    %5241 = vmatpush1.bf16.msra.mxu0 0
    %5242 = vmatprep.subr.bf16.mxu0 0
    %5243 = vmatpush1.bf16.msra.mxu0 0
    %5244 = vmatprep.subr.bf16.mxu0 0
    %5245 = vmatpush1.bf16.msra.mxu0 0
    %5246 = vmatprep.subr.bf16.mxu0 0
    %5247 = vmatpush1.bf16.msra.mxu0 0
    %5248 = vmatprep.subr.bf16.mxu0 0
    %5249 = vmatpush1.bf16.msra.mxu0 0
    %5250 = vmatprep.subr.bf16.mxu0 0
    %5251 = vmatpush1.bf16.msra.mxu0 0
    %5252 = vmatprep.subr.bf16.mxu0 0
    %5253 = vmatpush1.bf16.msra.mxu0 0
    %5254 = vmatprep.subr.bf16.mxu0 0
    %5255 = vmatpush1.bf16.msra.mxu0 0
    %5256 = vmatprep.subr.bf16.mxu0 0
    %5257 = vmatpush1.bf16.msra.mxu0 0
    %5258 = vmatprep.subr.bf16.mxu0 0
    %5259 = vmatpush1.bf16.msra.mxu0 0
    %5260 = vmatprep.mubr.bf16.mxu0 0
    %5261 = vmatmul.mubr.bf16.gmra.mrb[0].mxu0 %v5002
    %v5262 = vpop.f32.mrb[0].mxu0
    %v5263 = vadd.f32 %v5214, %v5262
    %v5264 = vpop.f32.mrb[0].mxu0
    %v5265 = vpop.f32.mrb[0].mxu0
    %v5266 = vadd.f32 %v5214, %v5265
    %v5267 = vpop.f32.mrb[0].mxu0
    %5268 = vmatprep.mubr.bf16.mxu0 0
    %5269 = vmatmul.mubr.bf16.gmra.mrb[0].mxu0 %v5005
    %v5270 = vpop.f32.mrb[0].mxu0
    %v5271 = vadd.f32 %v5214, %v5270
    %v5272 = vpop.f32.mrb[0].mxu0
    %v5273 = vpop.f32.mrb[0].mxu0
    %v5274 = vadd.f32 %v5214, %v5273
    %v5275 = vpop.f32.mrb[0].mxu0
    %5276 = vmatprep.mubr.bf16.mxu0 0
    %5277 = vmatmul.mubr.bf16.gmra.mrb[0].mxu0 %v5008
    %v5278 = vpop.f32.mrb[0].mxu0
    %v5279 = vadd.f32 %v5214, %v5278
    %v5280 = vpop.f32.mrb[0].mxu0
    %v5281 = vpop.f32.mrb[0].mxu0
    %v5282 = vadd.f32 %v5214, %v5281
    %v5283 = vpop.f32.mrb[0].mxu0
    %5284 = vmatprep.mubr.bf16.mxu0 0
    %5285 = vmatmul.mubr.bf16.gmra.mrb[0].mxu0 %v5011
    %v5286 = vpop.f32.mrb[0].mxu0
    %v5287 = vadd.f32 %v5214, %v5286
    %v5288 = vpop.f32.mrb[0].mxu0
    %v5289 = vpop.f32.mrb[0].mxu0
    %v5290 = vadd.f32 %v5214, %v5289
    %v5291 = vpop.f32.mrb[0].mxu0
    %5292 = vmatprep.mubr.bf16.mxu0 0
    %5293 = vmatmul.mubr.bf16.gmra.mrb[0].mxu0 %v5014
    %v5294 = vpop.f32.mrb[0].mxu0
    %v5295 = vadd.f32 %v5214, %v5294
    %v5296 = vpop.f32.mrb[0].mxu0
    %v5297 = vpop.f32.mrb[0].mxu0
    %v5298 = vadd.f32 %v5214, %v5297
    %v5299 = vpop.f32.mrb[0].mxu0
    %5300 = vmatprep.mubr.bf16.mxu0 0
    %5301 = vmatmul.mubr.bf16.gmra.mrb[0].mxu0 %v5017
    %v5302 = vpop.f32.mrb[0].mxu0
    %v5303 = vadd.f32 %v5214, %v5302
    %v5304 = vpop.f32.mrb[0].mxu0
    %v5305 = vpop.f32.mrb[0].mxu0
    %v5306 = vadd.f32 %v5214, %v5305
    %v5307 = vpop.f32.mrb[0].mxu0
    %5308 = vmatprep.mubr.bf16.mxu0 0
    %5309 = vmatmul.mubr.bf16.gmra.mrb[0].mxu0 %v5020
    %v5310 = vpop.f32.mrb[0].mxu0
    %v5311 = vadd.f32 %v5214, %v5310
    %v5312 = vpop.f32.mrb[0].mxu0
    %v5313 = vpop.f32.mrb[0].mxu0
    %v5314 = vadd.f32 %v5214, %v5313
    %v5315 = vpop.f32.mrb[0].mxu0
    %5316 = vmatprep.mubr.bf16.mxu0 0
    %5317 = vmatmul.mubr.bf16.gmra.mrb[0].mxu0 %v5023
    %v5318 = vpop.f32.mrb[0].mxu0
    %v5319 = vadd.f32 %v5214, %v5318
    %v5320 = vpop.f32.mrb[0].mxu0
    %v5321 = vpop.f32.mrb[0].mxu0
    %v5322 = vadd.f32 %v5214, %v5321
    %v5323 = vpop.f32.mrb[0].mxu0
    %5324 = vmatprep.mubr.bf16.mxu0 0
    %5325 = vmatmul.mubr.bf16.gmra.mrb[0].mxu0 %v5026
    %v5326 = vpop.f32.mrb[0].mxu0
    %v5327 = vadd.f32 %v5214, %v5326
    %v5328 = vpop.f32.mrb[0].mxu0
    %v5329 = vpop.f32.mrb[0].mxu0
    %v5330 = vadd.f32 %v5214, %v5329
    %v5331 = vpop.f32.mrb[0].mxu0
    %5332 = vmatprep.mubr.bf16.mxu0 0
    %5333 = vmatmul.mubr.bf16.gmra.mrb[0].mxu0 %v5029
    %v5334 = vpop.f32.mrb[0].mxu0
    %v5335 = vadd.f32 %v5214, %v5334
    %v5336 = vpop.f32.mrb[0].mxu0
    %v5337 = vpop.f32.mrb[0].mxu0
    %v5338 = vadd.f32 %v5214, %v5337
    %v5339 = vpop.f32.mrb[0].mxu0
    %5340 = vmatprep.mubr.bf16.mxu0 0
    %5341 = vmatmul.mubr.bf16.gmra.mrb[0].mxu0 %v5032
    %v5342 = vpop.f32.mrb[0].mxu0
    %v5343 = vadd.f32 %v5214, %v5342
    %v5344 = vpop.f32.mrb[0].mxu0
    %v5345 = vpop.f32.mrb[0].mxu0
    %v5346 = vadd.f32 %v5214, %v5345
    %v5347 = vpop.f32.mrb[0].mxu0
    %5348 = vmatprep.mubr.bf16.mxu0 0
    %5349 = vmatmul.mubr.bf16.gmra.mrb[0].mxu0 %v5035
    %v5350 = vpop.f32.mrb[0].mxu0
    %v5351 = vadd.f32 %v5214, %v5350
    %v5352 = vpop.f32.mrb[0].mxu0
    %v5353 = vpop.f32.mrb[0].mxu0
    %v5354 = vadd.f32 %v5214, %v5353
    %v5355 = vpop.f32.mrb[0].mxu0
    %5356 = vmatprep.mubr.bf16.mxu0 0
    %5357 = vmatmul.mubr.bf16.gmra.mrb[0].mxu0 %v5038
    %v5358 = vpop.f32.mrb[0].mxu0
    %v5359 = vadd.f32 %v5214, %v5358
    %v5360 = vpop.f32.mrb[0].mxu0
    %v5361 = vpop.f32.mrb[0].mxu0
    %v5362 = vadd.f32 %v5214, %v5361
    %v5363 = vpop.f32.mrb[0].mxu0
    %5364 = vmatprep.mubr.bf16.mxu0 0
    %5365 = vmatmul.mubr.bf16.gmra.mrb[0].mxu0 %v5041
    %v5366 = vpop.f32.mrb[0].mxu0
    %v5367 = vadd.f32 %v5214, %v5366
    %v5368 = vpop.f32.mrb[0].mxu0
    %v5369 = vpop.f32.mrb[0].mxu0
    %v5370 = vadd.f32 %v5214, %v5369
    %v5371 = vpop.f32.mrb[0].mxu0
    %5372 = vmatprep.mubr.bf16.mxu0 0
    %5373 = vmatmul.mubr.bf16.gmra.mrb[0].mxu0 %v5044
    %v5374 = vpop.f32.mrb[0].mxu0
    %v5375 = vadd.f32 %v5214, %v5374
    %v5376 = vpop.f32.mrb[0].mxu0
    %v5377 = vpop.f32.mrb[0].mxu0
    %v5378 = vadd.f32 %v5214, %v5377
    %v5379 = vpop.f32.mrb[0].mxu0
    %5380 = vmatprep.mubr.bf16.mxu0 0
    %5381 = vmatmul.mubr.bf16.gmra.mrb[0].mxu0 %v5047
    %v5382 = vpop.f32.mrb[0].mxu0
    %v5383 = vadd.f32 %v5214, %v5382
    %v5384 = vpop.f32.mrb[0].mxu0
    %v5385 = vpop.f32.mrb[0].mxu0
    %v5386 = vadd.f32 %v5214, %v5385
    %v5387 = vpop.f32.mrb[0].mxu0
    %5388 = vdwg.mxu0
    %v5389 = vmax.f32 %v5084, 0.0
    %v5390 = vmax.f32 %v5087, 0.0
    %v5391 = vmax.f32 %v5092, 0.0
    %v5392 = vmax.f32 %v5095, 0.0
    %v5393 = vmax.f32 %v5100, 0.0
    %v5394 = vmax.f32 %v5103, 0.0
    %v5395 = vmax.f32 %v5108, 0.0
    %v5396 = vmax.f32 %v5111, 0.0
    %v5397 = vmax.f32 %v5116, 0.0
    %v5398 = vmax.f32 %v5119, 0.0
    %v5399 = vmax.f32 %v5124, 0.0
    %v5400 = vmax.f32 %v5127, 0.0
    %v5401 = vmax.f32 %v5132, 0.0
    %v5402 = vmax.f32 %v5135, 0.0
    %v5403 = vmax.f32 %v5140, 0.0
    %v5404 = vmax.f32 %v5143, 0.0
    %v5405 = vmax.f32 %v5148, 0.0
    %v5406 = vmax.f32 %v5151, 0.0
    %v5407 = vmax.f32 %v5156, 0.0
    %v5408 = vmax.f32 %v5159, 0.0
    %v5409 = vmax.f32 %v5164, 0.0
    %v5410 = vmax.f32 %v5167, 0.0
    %v5411 = vmax.f32 %v5172, 0.0
    %v5412 = vmax.f32 %v5175, 0.0
    %v5413 = vmax.f32 %v5180, 0.0
    %v5414 = vmax.f32 %v5183, 0.0
    %v5415 = vmax.f32 %v5188, 0.0
    %v5416 = vmax.f32 %v5191, 0.0
    %v5417 = vmax.f32 %v5196, 0.0
    %v5418 = vmax.f32 %v5199, 0.0
    %v5419 = vmax.f32 %v5204, 0.0
    %v5420 = vmax.f32 %v5207, 0.0
    %v5421 = vadd.f32 %v5389, %v5263
    %v5422 = vadd.f32 %v5390, %v5266
    %v5423 = vadd.f32 %v5391, %v5271
    %v5424 = vadd.f32 %v5392, %v5274
    %v5425 = vadd.f32 %v5393, %v5279
    %v5426 = vadd.f32 %v5394, %v5282
    %v5427 = vadd.f32 %v5395, %v5287
    %v5428 = vadd.f32 %v5396, %v5290
    %v5429 = vadd.f32 %v5397, %v5295
    %v5430 = vadd.f32 %v5398, %v5298
    %v5431 = vadd.f32 %v5399, %v5303
    %v5432 = vadd.f32 %v5400, %v5306
    %v5433 = vadd.f32 %v5401, %v5311
    %v5434 = vadd.f32 %v5402, %v5314
    %v5435 = vadd.f32 %v5403, %v5319
    %v5436 = vadd.f32 %v5404, %v5322
    %v5437 = vadd.f32 %v5405, %v5327
    %v5438 = vadd.f32 %v5406, %v5330
    %v5439 = vadd.f32 %v5407, %v5335
    %v5440 = vadd.f32 %v5408, %v5338
    %v5441 = vadd.f32 %v5409, %v5343
    %v5442 = vadd.f32 %v5410, %v5346
    %v5443 = vadd.f32 %v5411, %v5351
    %v5444 = vadd.f32 %v5412, %v5354
    %v5445 = vadd.f32 %v5413, %v5359
    %v5446 = vadd.f32 %v5414, %v5362
    %v5447 = vadd.f32 %v5415, %v5367
    %v5448 = vadd.f32 %v5416, %v5370
    %v5449 = vadd.f32 %v5417, %v5375
    %v5450 = vadd.f32 %v5418, %v5378
    %v5451 = vadd.f32 %v5419, %v5383
    %v5452 = vadd.f32 %v5420, %v5386
    %v5453 = vpack.c.bf16 %v5422, %v5421
    %v5454 = vpack.c.bf16 %v5424, %v5423
    %v5455 = vpack.c.bf16 %v5426, %v5425
    %v5456 = vpack.c.bf16 %v5428, %v5427
    %v5457 = vpack.c.bf16 %v5430, %v5429
    %v5458 = vpack.c.bf16 %v5432, %v5431
    %v5459 = vpack.c.bf16 %v5434, %v5433
    %v5460 = vpack.c.bf16 %v5436, %v5435
    %v5461 = vpack.c.bf16 %v5438, %v5437
    %v5462 = vpack.c.bf16 %v5440, %v5439
    %v5463 = vpack.c.bf16 %v5442, %v5441
    %v5464 = vpack.c.bf16 %v5444, %v5443
    %v5465 = vpack.c.bf16 %v5446, %v5445
    %v5466 = vpack.c.bf16 %v5448, %v5447
    %v5467 = vpack.c.bf16 %v5450, %v5449
    %v5468 = vpack.c.bf16 %v5452, %v5451
    %v5470 = vlaneseq
    %v5471 = vshrl.u32 %v5470, 7
    %v5472 = vsub.s32 0, %v5471
    %v5473 = vrot.slane %v4474, %v5472
    %v5487 = vunpack.c.l.b16 %v4461
    %v5488 = vunpack.c.l.b16 %v4462
    %v5489 = vunpack.c.l.b16 %v4463
    %v5490 = vunpack.c.l.b16 %v4464
    %v5491 = vunpack.c.l.b16 %v4465
    %v5492 = vunpack.c.l.b16 %v4466
    %v5493 = vunpack.c.l.b16 %v4467
    %v5494 = vunpack.c.l.b16 %v4468
    %v5495 = vunpack.c.l.b16 %v4469
    %v5496 = vunpack.c.l.b16 %v4470
    %v5497 = vunpack.c.l.b16 %v4471
    %v5498 = vunpack.c.l.b16 %v4472
    %v5499 = vpack.c.b16 %v5488, %v5487
    %v5500 = vpack.c.b16 %v5490, %v5489
    %v5501 = vpack.c.b16 %v5492, %v5491
    %v5502 = vpack.c.b16 %v5494, %v5493
    %v5503 = vpack.c.b16 %v5496, %v5495
    %v5504 = vpack.c.b16 %v5498, %v5497
    %v5512 = vsel %vm1580, %v5453, 0
    %v5515 = vsel %vm1580, %v5454, 0
    %v5518 = vsel %vm1580, %v5455, 0
    %v5521 = vsel %vm1580, %v5456, 0
    %v5524 = vsel %vm1580, %v5457, 0
    %v5527 = vsel %vm1580, %v5458, 0
    %v5530 = vsel %vm1580, %v5459, 0
    %v5533 = vsel %vm1580, %v5460, 0
    %v5536 = vsel %vm1580, %v5461, 0
    %v5539 = vsel %vm1580, %v5462, 0
    %v5542 = vsel %vm1580, %v5463, 0
    %v5545 = vsel %vm1580, %v5464, 0
    %v5548 = vsel %vm1580, %v5465, 0
    %v5551 = vsel %vm1580, %v5466, 0
    %v5554 = vsel %vm1580, %v5467, 0
    %v5557 = vsel %vm1580, %v5468, 0
    %5559 = vmatprep.subr.bf16.mxu0 0
    %5560 = vmatpush1.bf16.msra.mxu0 %v5499
    %5561 = vmatprep.subr.bf16.mxu0 0
    %5562 = vmatpush1.bf16.msra.mxu0 %v5500
    %5563 = vmatprep.subr.bf16.mxu0 0
    %5564 = vmatpush1.bf16.msra.mxu0 %v5501
    %5565 = vmatprep.subr.bf16.mxu0 0
    %5566 = vmatpush1.bf16.msra.mxu0 %v5502
    %5567 = vmatprep.subr.bf16.mxu0 0
    %5568 = vmatpush1.bf16.msra.mxu0 %v5503
    %5569 = vmatprep.subr.bf16.mxu0 0
    %5570 = vmatpush1.bf16.msra.mxu0 %v5504
    %5571 = vmatprep.subr.bf16.mxu0 0
    %5572 = vmatpush1.bf16.msra.mxu0 0
    %5573 = vmatprep.subr.bf16.mxu0 0
    %5574 = vmatpush1.bf16.msra.mxu0 0
    %5575 = vmatprep.subr.bf16.mxu0 0
    %5576 = vmatpush1.bf16.msra.mxu0 0
    %5577 = vmatprep.subr.bf16.mxu0 0
    %5578 = vmatpush1.bf16.msra.mxu0 0
    %5579 = vmatprep.subr.bf16.mxu0 0
    %5580 = vmatpush1.bf16.msra.mxu0 0
    %5581 = vmatprep.subr.bf16.mxu0 0
    %5582 = vmatpush1.bf16.msra.mxu0 0
    %5583 = vmatprep.subr.bf16.mxu0 0
    %5584 = vmatpush1.bf16.msra.mxu0 0
    %5585 = vmatprep.subr.bf16.mxu0 0
    %5586 = vmatpush1.bf16.msra.mxu0 0
    %5587 = vmatprep.subr.bf16.mxu0 0
    %5588 = vmatpush1.bf16.msra.mxu0 0
    %5589 = vmatprep.subr.bf16.mxu0 0
    %5590 = vmatpush1.bf16.msra.mxu0 0
    %5591 = vmatprep.mubr.bf16.mxu0 0
    %5592 = vmatmul.mubr.bf16.gmra.mrb[0].mxu0 %v5512
    %v5593 = vpop.f32.mrb[0].mxu0
    %v5594 = vadd.f32 %v5473, %v5593
    %v5595 = vpop.f32.mrb[0].mxu0
    %v5596 = vpop.f32.mrb[0].mxu0
    %v5597 = vadd.f32 %v5473, %v5596
    %v5598 = vpop.f32.mrb[0].mxu0
    %5599 = vmatprep.mubr.bf16.mxu0 0
    %5600 = vmatmul.mubr.bf16.gmra.mrb[0].mxu0 %v5515
    %v5601 = vpop.f32.mrb[0].mxu0
    %v5602 = vadd.f32 %v5473, %v5601
    %v5603 = vpop.f32.mrb[0].mxu0
    %v5604 = vpop.f32.mrb[0].mxu0
    %v5605 = vadd.f32 %v5473, %v5604
    %v5606 = vpop.f32.mrb[0].mxu0
    %5607 = vmatprep.mubr.bf16.mxu0 0
    %5608 = vmatmul.mubr.bf16.gmra.mrb[0].mxu0 %v5518
    %v5609 = vpop.f32.mrb[0].mxu0
    %v5610 = vadd.f32 %v5473, %v5609
    %v5611 = vpop.f32.mrb[0].mxu0
    %v5612 = vpop.f32.mrb[0].mxu0
    %v5613 = vadd.f32 %v5473, %v5612
    %v5614 = vpop.f32.mrb[0].mxu0
    %5615 = vmatprep.mubr.bf16.mxu0 0
    %5616 = vmatmul.mubr.bf16.gmra.mrb[0].mxu0 %v5521
    %v5617 = vpop.f32.mrb[0].mxu0
    %v5618 = vadd.f32 %v5473, %v5617
    %v5619 = vpop.f32.mrb[0].mxu0
    %v5620 = vpop.f32.mrb[0].mxu0
    %v5621 = vadd.f32 %v5473, %v5620
    %v5622 = vpop.f32.mrb[0].mxu0
    %5623 = vmatprep.mubr.bf16.mxu0 0
    %5624 = vmatmul.mubr.bf16.gmra.mrb[0].mxu0 %v5524
    %v5625 = vpop.f32.mrb[0].mxu0
    %v5626 = vadd.f32 %v5473, %v5625
    %v5627 = vpop.f32.mrb[0].mxu0
    %v5628 = vpop.f32.mrb[0].mxu0
    %v5629 = vadd.f32 %v5473, %v5628
    %v5630 = vpop.f32.mrb[0].mxu0
    %5631 = vmatprep.mubr.bf16.mxu0 0
    %5632 = vmatmul.mubr.bf16.gmra.mrb[0].mxu0 %v5527
    %v5633 = vpop.f32.mrb[0].mxu0
    %v5634 = vadd.f32 %v5473, %v5633
    %v5635 = vpop.f32.mrb[0].mxu0
    %v5636 = vpop.f32.mrb[0].mxu0
    %v5637 = vadd.f32 %v5473, %v5636
    %v5638 = vpop.f32.mrb[0].mxu0
    %5639 = vmatprep.mubr.bf16.mxu0 0
    %5640 = vmatmul.mubr.bf16.gmra.mrb[0].mxu0 %v5530
    %v5641 = vpop.f32.mrb[0].mxu0
    %v5642 = vadd.f32 %v5473, %v5641
    %v5643 = vpop.f32.mrb[0].mxu0
    %v5644 = vpop.f32.mrb[0].mxu0
    %v5645 = vadd.f32 %v5473, %v5644
    %v5646 = vpop.f32.mrb[0].mxu0
    %5647 = vmatprep.mubr.bf16.mxu0 0
    %5648 = vmatmul.mubr.bf16.gmra.mrb[0].mxu0 %v5533
    %v5649 = vpop.f32.mrb[0].mxu0
    %v5650 = vadd.f32 %v5473, %v5649
    %v5651 = vpop.f32.mrb[0].mxu0
    %v5652 = vpop.f32.mrb[0].mxu0
    %v5653 = vadd.f32 %v5473, %v5652
    %v5654 = vpop.f32.mrb[0].mxu0
    %5655 = vmatprep.mubr.bf16.mxu0 0
    %5656 = vmatmul.mubr.bf16.gmra.mrb[0].mxu0 %v5536
    %v5657 = vpop.f32.mrb[0].mxu0
    %v5658 = vadd.f32 %v5473, %v5657
    %v5659 = vpop.f32.mrb[0].mxu0
    %v5660 = vpop.f32.mrb[0].mxu0
    %v5661 = vadd.f32 %v5473, %v5660
    %v5662 = vpop.f32.mrb[0].mxu0
    %5663 = vmatprep.mubr.bf16.mxu0 0
    %5664 = vmatmul.mubr.bf16.gmra.mrb[0].mxu0 %v5539
    %v5665 = vpop.f32.mrb[0].mxu0
    %v5666 = vadd.f32 %v5473, %v5665
    %v5667 = vpop.f32.mrb[0].mxu0
    %v5668 = vpop.f32.mrb[0].mxu0
    %v5669 = vadd.f32 %v5473, %v5668
    %v5670 = vpop.f32.mrb[0].mxu0
    %5671 = vmatprep.mubr.bf16.mxu0 0
    %5672 = vmatmul.mubr.bf16.gmra.mrb[0].mxu0 %v5542
    %v5673 = vpop.f32.mrb[0].mxu0
    %v5674 = vadd.f32 %v5473, %v5673
    %v5675 = vpop.f32.mrb[0].mxu0
    %v5676 = vpop.f32.mrb[0].mxu0
    %v5677 = vadd.f32 %v5473, %v5676
    %v5678 = vpop.f32.mrb[0].mxu0
    %5679 = vmatprep.mubr.bf16.mxu0 0
    %5680 = vmatmul.mubr.bf16.gmra.mrb[0].mxu0 %v5545
    %v5681 = vpop.f32.mrb[0].mxu0
    %v5682 = vadd.f32 %v5473, %v5681
    %v5683 = vpop.f32.mrb[0].mxu0
    %v5684 = vpop.f32.mrb[0].mxu0
    %v5685 = vadd.f32 %v5473, %v5684
    %v5686 = vpop.f32.mrb[0].mxu0
    %5687 = vmatprep.mubr.bf16.mxu0 0
    %5688 = vmatmul.mubr.bf16.gmra.mrb[0].mxu0 %v5548
    %v5689 = vpop.f32.mrb[0].mxu0
    %v5690 = vadd.f32 %v5473, %v5689
    %v5691 = vpop.f32.mrb[0].mxu0
    %v5692 = vpop.f32.mrb[0].mxu0
    %v5693 = vadd.f32 %v5473, %v5692
    %v5694 = vpop.f32.mrb[0].mxu0
    %5695 = vmatprep.mubr.bf16.mxu0 0
    %5696 = vmatmul.mubr.bf16.gmra.mrb[0].mxu0 %v5551
    %v5697 = vpop.f32.mrb[0].mxu0
    %v5698 = vadd.f32 %v5473, %v5697
    %v5699 = vpop.f32.mrb[0].mxu0
    %v5700 = vpop.f32.mrb[0].mxu0
    %v5701 = vadd.f32 %v5473, %v5700
    %v5702 = vpop.f32.mrb[0].mxu0
    %5703 = vmatprep.mubr.bf16.mxu0 0
    %5704 = vmatmul.mubr.bf16.gmra.mrb[0].mxu0 %v5554
    %v5705 = vpop.f32.mrb[0].mxu0
    %v5706 = vadd.f32 %v5473, %v5705
    %v5707 = vpop.f32.mrb[0].mxu0
    %v5708 = vpop.f32.mrb[0].mxu0
    %v5709 = vadd.f32 %v5473, %v5708
    %v5710 = vpop.f32.mrb[0].mxu0
    %5711 = vmatprep.mubr.bf16.mxu0 0
    %5712 = vmatmul.mubr.bf16.gmra.mrb[0].mxu0 %v5557
    %v5713 = vpop.f32.mrb[0].mxu0
    %v5714 = vadd.f32 %v5473, %v5713
    %v5715 = vpop.f32.mrb[0].mxu0
    %v5716 = vpop.f32.mrb[0].mxu0
    %v5717 = vadd.f32 %v5473, %v5716
    %v5718 = vpop.f32.mrb[0].mxu0
    %5719 = vdwg.mxu0
    %v5720 = vadd.f32 %v4410, %v5594
    %v5721 = vadd.f32 %v4411, %v5597
    %v5722 = vadd.f32 %v4412, %v5602
    %v5723 = vadd.f32 %v4413, %v5605
    %v5724 = vadd.f32 %v4414, %v5610
    %v5725 = vadd.f32 %v4415, %v5613
    %v5726 = vadd.f32 %v4416, %v5618
    %v5727 = vadd.f32 %v4417, %v5621
    %v5728 = vadd.f32 %v4418, %v5626
    %v5729 = vadd.f32 %v4419, %v5629
    %v5730 = vadd.f32 %v4420, %v5634
    %v5731 = vadd.f32 %v4421, %v5637
    %v5732 = vadd.f32 %v4422, %v5642
    %v5733 = vadd.f32 %v4423, %v5645
    %v5734 = vadd.f32 %v4424, %v5650
    %v5735 = vadd.f32 %v4425, %v5653
    %v5736 = vadd.f32 %v4426, %v5658
    %v5737 = vadd.f32 %v4427, %v5661
    %v5738 = vadd.f32 %v4428, %v5666
    %v5739 = vadd.f32 %v4429, %v5669
    %v5740 = vadd.f32 %v4430, %v5674
    %v5741 = vadd.f32 %v4431, %v5677
    %v5742 = vadd.f32 %v4432, %v5682
    %v5743 = vadd.f32 %v4433, %v5685
    %v5744 = vadd.f32 %v4434, %v5690
    %v5745 = vadd.f32 %v4435, %v5693
    %v5746 = vadd.f32 %v4436, %v5698
    %v5747 = vadd.f32 %v4437, %v5701
    %v5748 = vadd.f32 %v4438, %v5706
    %v5749 = vadd.f32 %v4439, %v5709
    %v5750 = vadd.f32 %v4440, %v5714
    %v5751 = vadd.f32 %v4441, %v5717
    %v5752 = vld [vmem:[%s11] sm:$0x1]
    %v5753 = vld [vmem:[%s12] sm:$0x1]
    %v5754 = vsel %vm542, %v5720, 0.0
    %5755 = vadd.xlane.f32.xlu0 %v5754
    %v5756 = vpop.xlane.xlu0 %5755
    %v5757 = vsel %vm542, %v5721, 0.0
    %5758 = vadd.xlane.f32.xlu0 %v5757
    %v5759 = vpop.xlane.xlu0 %5758
    %v5760 = vsel %vm542, %v5722, 0.0
    %5761 = vadd.xlane.f32.xlu0 %v5760
    %v5762 = vpop.xlane.xlu0 %5761
    %v5763 = vsel %vm542, %v5723, 0.0
    %5764 = vadd.xlane.f32.xlu0 %v5763
    %v5765 = vpop.xlane.xlu0 %5764
    %v5766 = vsel %vm542, %v5724, 0.0
    %5767 = vadd.xlane.f32.xlu0 %v5766
    %v5768 = vpop.xlane.xlu0 %5767
    %v5769 = vsel %vm542, %v5725, 0.0
    %5770 = vadd.xlane.f32.xlu0 %v5769
    %v5771 = vpop.xlane.xlu0 %5770
    %v5772 = vsel %vm542, %v5726, 0.0
    %5773 = vadd.xlane.f32.xlu0 %v5772
    %v5774 = vpop.xlane.xlu0 %5773
    %v5775 = vsel %vm542, %v5727, 0.0
    %5776 = vadd.xlane.f32.xlu0 %v5775
    %v5777 = vpop.xlane.xlu0 %5776
    %v5778 = vsel %vm542, %v5728, 0.0
    %5779 = vadd.xlane.f32.xlu0 %v5778
    %v5780 = vpop.xlane.xlu0 %5779
    %v5781 = vsel %vm542, %v5729, 0.0
    %5782 = vadd.xlane.f32.xlu0 %v5781
    %v5783 = vpop.xlane.xlu0 %5782
    %v5784 = vsel %vm542, %v5730, 0.0
    %5785 = vadd.xlane.f32.xlu0 %v5784
    %v5786 = vpop.xlane.xlu0 %5785
    %v5787 = vsel %vm542, %v5731, 0.0
    %5788 = vadd.xlane.f32.xlu0 %v5787
    %v5789 = vpop.xlane.xlu0 %5788
    %v5790 = vsel %vm542, %v5732, 0.0
    %5791 = vadd.xlane.f32.xlu0 %v5790
    %v5792 = vpop.xlane.xlu0 %5791
    %v5793 = vsel %vm542, %v5733, 0.0
    %5794 = vadd.xlane.f32.xlu0 %v5793
    %v5795 = vpop.xlane.xlu0 %5794
    %v5796 = vsel %vm542, %v5734, 0.0
    %5797 = vadd.xlane.f32.xlu0 %v5796
    %v5798 = vpop.xlane.xlu0 %5797
    %v5799 = vsel %vm542, %v5735, 0.0
    %5800 = vadd.xlane.f32.xlu0 %v5799
    %v5801 = vpop.xlane.xlu0 %5800
    %v5802 = vsel %vm542, %v5736, 0.0
    %5803 = vadd.xlane.f32.xlu0 %v5802
    %v5804 = vpop.xlane.xlu0 %5803
    %v5805 = vsel %vm542, %v5737, 0.0
    %5806 = vadd.xlane.f32.xlu0 %v5805
    %v5807 = vpop.xlane.xlu0 %5806
    %v5808 = vsel %vm542, %v5738, 0.0
    %5809 = vadd.xlane.f32.xlu0 %v5808
    %v5810 = vpop.xlane.xlu0 %5809
    %v5811 = vsel %vm542, %v5739, 0.0
    %5812 = vadd.xlane.f32.xlu0 %v5811
    %v5813 = vpop.xlane.xlu0 %5812
    %v5814 = vsel %vm542, %v5740, 0.0
    %5815 = vadd.xlane.f32.xlu0 %v5814
    %v5816 = vpop.xlane.xlu0 %5815
    %v5817 = vsel %vm542, %v5741, 0.0
    %5818 = vadd.xlane.f32.xlu0 %v5817
    %v5819 = vpop.xlane.xlu0 %5818
    %v5820 = vsel %vm542, %v5742, 0.0
    %5821 = vadd.xlane.f32.xlu0 %v5820
    %v5822 = vpop.xlane.xlu0 %5821
    %v5823 = vsel %vm542, %v5743, 0.0
    %5824 = vadd.xlane.f32.xlu0 %v5823
    %v5825 = vpop.xlane.xlu0 %5824
    %v5826 = vsel %vm542, %v5744, 0.0
    %5827 = vadd.xlane.f32.xlu0 %v5826
    %v5828 = vpop.xlane.xlu0 %5827
    %v5829 = vsel %vm542, %v5745, 0.0
    %5830 = vadd.xlane.f32.xlu0 %v5829
    %v5831 = vpop.xlane.xlu0 %5830
    %v5832 = vsel %vm542, %v5746, 0.0
    %5833 = vadd.xlane.f32.xlu0 %v5832
    %v5834 = vpop.xlane.xlu0 %5833
    %v5835 = vsel %vm542, %v5747, 0.0
    %5836 = vadd.xlane.f32.xlu0 %v5835
    %v5837 = vpop.xlane.xlu0 %5836
    %v5838 = vsel %vm542, %v5748, 0.0
    %5839 = vadd.xlane.f32.xlu0 %v5838
    %v5840 = vpop.xlane.xlu0 %5839
    %v5841 = vsel %vm542, %v5749, 0.0
    %5842 = vadd.xlane.f32.xlu0 %v5841
    %v5843 = vpop.xlane.xlu0 %5842
    %v5844 = vsel %vm542, %v5750, 0.0
    %5845 = vadd.xlane.f32.xlu0 %v5844
    %v5846 = vpop.xlane.xlu0 %5845
    %v5847 = vsel %vm542, %v5751, 0.0
    %5848 = vadd.xlane.f32.xlu0 %v5847
    %v5849 = vpop.xlane.xlu0 %5848
    %v5850 = vmul.f32 %v5756, %v639
    %v5851 = vmul.f32 %v5759, %v639
    %v5852 = vmul.f32 %v5762, %v639
    %v5853 = vmul.f32 %v5765, %v639
    %v5854 = vmul.f32 %v5768, %v639
    %v5855 = vmul.f32 %v5771, %v639
    %v5856 = vmul.f32 %v5774, %v639
    %v5857 = vmul.f32 %v5777, %v639
    %v5858 = vmul.f32 %v5780, %v639
    %v5859 = vmul.f32 %v5783, %v639
    %v5860 = vmul.f32 %v5786, %v639
    %v5861 = vmul.f32 %v5789, %v639
    %v5862 = vmul.f32 %v5792, %v639
    %v5863 = vmul.f32 %v5795, %v639
    %v5864 = vmul.f32 %v5798, %v639
    %v5865 = vmul.f32 %v5801, %v639
    %v5866 = vmul.f32 %v5804, %v639
    %v5867 = vmul.f32 %v5807, %v639
    %v5868 = vmul.f32 %v5810, %v639
    %v5869 = vmul.f32 %v5813, %v639
    %v5870 = vmul.f32 %v5816, %v639
    %v5871 = vmul.f32 %v5819, %v639
    %v5872 = vmul.f32 %v5822, %v639
    %v5873 = vmul.f32 %v5825, %v639
    %v5874 = vmul.f32 %v5828, %v639
    %v5875 = vmul.f32 %v5831, %v639
    %v5876 = vmul.f32 %v5834, %v639
    %v5877 = vmul.f32 %v5837, %v639
    %v5878 = vmul.f32 %v5840, %v639
    %v5879 = vmul.f32 %v5843, %v639
    %v5880 = vmul.f32 %v5846, %v639
    %v5881 = vmul.f32 %v5849, %v639
    %v5882 = vsub.f32 %v5720, %v5850
    %v5883 = vsub.f32 %v5721, %v5851
    %v5884 = vsub.f32 %v5722, %v5852
    %v5885 = vsub.f32 %v5723, %v5853
    %v5886 = vsub.f32 %v5724, %v5854
    %v5887 = vsub.f32 %v5725, %v5855
    %v5888 = vsub.f32 %v5726, %v5856
    %v5889 = vsub.f32 %v5727, %v5857
    %v5890 = vsub.f32 %v5728, %v5858
    %v5891 = vsub.f32 %v5729, %v5859
    %v5892 = vsub.f32 %v5730, %v5860
    %v5893 = vsub.f32 %v5731, %v5861
    %v5894 = vsub.f32 %v5732, %v5862
    %v5895 = vsub.f32 %v5733, %v5863
    %v5896 = vsub.f32 %v5734, %v5864
    %v5897 = vsub.f32 %v5735, %v5865
    %v5898 = vsub.f32 %v5736, %v5866
    %v5899 = vsub.f32 %v5737, %v5867
    %v5900 = vsub.f32 %v5738, %v5868
    %v5901 = vsub.f32 %v5739, %v5869
    %v5902 = vsub.f32 %v5740, %v5870
    %v5903 = vsub.f32 %v5741, %v5871
    %v5904 = vsub.f32 %v5742, %v5872
    %v5905 = vsub.f32 %v5743, %v5873
    %v5906 = vsub.f32 %v5744, %v5874
    %v5907 = vsub.f32 %v5745, %v5875
    %v5908 = vsub.f32 %v5746, %v5876
    %v5909 = vsub.f32 %v5747, %v5877
    %v5910 = vsub.f32 %v5748, %v5878
    %v5911 = vsub.f32 %v5749, %v5879
    %v5912 = vsub.f32 %v5750, %v5880
    %v5913 = vsub.f32 %v5751, %v5881
    %v5914 = vmul.f32 %v5882, %v5882
    %v5915 = vmul.f32 %v5883, %v5883
    %v5916 = vmul.f32 %v5884, %v5884
    %v5917 = vmul.f32 %v5885, %v5885
    %v5918 = vmul.f32 %v5886, %v5886
    %v5919 = vmul.f32 %v5887, %v5887
    %v5920 = vmul.f32 %v5888, %v5888
    %v5921 = vmul.f32 %v5889, %v5889
    %v5922 = vmul.f32 %v5890, %v5890
    %v5923 = vmul.f32 %v5891, %v5891
    %v5924 = vmul.f32 %v5892, %v5892
    %v5925 = vmul.f32 %v5893, %v5893
    %v5926 = vmul.f32 %v5894, %v5894
    %v5927 = vmul.f32 %v5895, %v5895
    %v5928 = vmul.f32 %v5896, %v5896
    %v5929 = vmul.f32 %v5897, %v5897
    %v5930 = vmul.f32 %v5898, %v5898
    %v5931 = vmul.f32 %v5899, %v5899
    %v5932 = vmul.f32 %v5900, %v5900
    %v5933 = vmul.f32 %v5901, %v5901
    %v5934 = vmul.f32 %v5902, %v5902
    %v5935 = vmul.f32 %v5903, %v5903
    %v5936 = vmul.f32 %v5904, %v5904
    %v5937 = vmul.f32 %v5905, %v5905
    %v5938 = vmul.f32 %v5906, %v5906
    %v5939 = vmul.f32 %v5907, %v5907
    %v5940 = vmul.f32 %v5908, %v5908
    %v5941 = vmul.f32 %v5909, %v5909
    %v5942 = vmul.f32 %v5910, %v5910
    %v5943 = vmul.f32 %v5911, %v5911
    %v5944 = vmul.f32 %v5912, %v5912
    %v5945 = vmul.f32 %v5913, %v5913
    %v5946 = vsel %vm542, %v5914, 0.0
    %5947 = vadd.xlane.f32.xlu0 %v5946
    %v5948 = vpop.xlane.xlu0 %5947
    %v5949 = vsel %vm542, %v5915, 0.0
    %5950 = vadd.xlane.f32.xlu0 %v5949
    %v5951 = vpop.xlane.xlu0 %5950
    %v5952 = vsel %vm542, %v5916, 0.0
    %5953 = vadd.xlane.f32.xlu0 %v5952
    %v5954 = vpop.xlane.xlu0 %5953
    %v5955 = vsel %vm542, %v5917, 0.0
    %5956 = vadd.xlane.f32.xlu0 %v5955
    %v5957 = vpop.xlane.xlu0 %5956
    %v5958 = vsel %vm542, %v5918, 0.0
    %5959 = vadd.xlane.f32.xlu0 %v5958
    %v5960 = vpop.xlane.xlu0 %5959
    %v5961 = vsel %vm542, %v5919, 0.0
    %5962 = vadd.xlane.f32.xlu0 %v5961
    %v5963 = vpop.xlane.xlu0 %5962
    %v5964 = vsel %vm542, %v5920, 0.0
    %5965 = vadd.xlane.f32.xlu0 %v5964
    %v5966 = vpop.xlane.xlu0 %5965
    %v5967 = vsel %vm542, %v5921, 0.0
    %5968 = vadd.xlane.f32.xlu0 %v5967
    %v5969 = vpop.xlane.xlu0 %5968
    %v5970 = vsel %vm542, %v5922, 0.0
    %5971 = vadd.xlane.f32.xlu0 %v5970
    %v5972 = vpop.xlane.xlu0 %5971
    %v5973 = vsel %vm542, %v5923, 0.0
    %5974 = vadd.xlane.f32.xlu0 %v5973
    %v5975 = vpop.xlane.xlu0 %5974
    %v5976 = vsel %vm542, %v5924, 0.0
    %5977 = vadd.xlane.f32.xlu0 %v5976
    %v5978 = vpop.xlane.xlu0 %5977
    %v5979 = vsel %vm542, %v5925, 0.0
    %5980 = vadd.xlane.f32.xlu0 %v5979
    %v5981 = vpop.xlane.xlu0 %5980
    %v5982 = vsel %vm542, %v5926, 0.0
    %5983 = vadd.xlane.f32.xlu0 %v5982
    %v5984 = vpop.xlane.xlu0 %5983
    %v5985 = vsel %vm542, %v5927, 0.0
    %5986 = vadd.xlane.f32.xlu0 %v5985
    %v5987 = vpop.xlane.xlu0 %5986
    %v5988 = vsel %vm542, %v5928, 0.0
    %5989 = vadd.xlane.f32.xlu0 %v5988
    %v5990 = vpop.xlane.xlu0 %5989
    %v5991 = vsel %vm542, %v5929, 0.0
    %5992 = vadd.xlane.f32.xlu0 %v5991
    %v5993 = vpop.xlane.xlu0 %5992
    %v5994 = vsel %vm542, %v5930, 0.0
    %5995 = vadd.xlane.f32.xlu0 %v5994
    %v5996 = vpop.xlane.xlu0 %5995
    %v5997 = vsel %vm542, %v5931, 0.0
    %5998 = vadd.xlane.f32.xlu0 %v5997
    %v5999 = vpop.xlane.xlu0 %5998
    %v6000 = vsel %vm542, %v5932, 0.0
    %6001 = vadd.xlane.f32.xlu0 %v6000
    %v6002 = vpop.xlane.xlu0 %6001
    %v6003 = vsel %vm542, %v5933, 0.0
    %6004 = vadd.xlane.f32.xlu0 %v6003
    %v6005 = vpop.xlane.xlu0 %6004
    %v6006 = vsel %vm542, %v5934, 0.0
    %6007 = vadd.xlane.f32.xlu0 %v6006
    %v6008 = vpop.xlane.xlu0 %6007
    %v6009 = vsel %vm542, %v5935, 0.0
    %6010 = vadd.xlane.f32.xlu0 %v6009
    %v6011 = vpop.xlane.xlu0 %6010
    %v6012 = vsel %vm542, %v5936, 0.0
    %6013 = vadd.xlane.f32.xlu0 %v6012
    %v6014 = vpop.xlane.xlu0 %6013
    %v6015 = vsel %vm542, %v5937, 0.0
    %6016 = vadd.xlane.f32.xlu0 %v6015
    %v6017 = vpop.xlane.xlu0 %6016
    %v6018 = vsel %vm542, %v5938, 0.0
    %6019 = vadd.xlane.f32.xlu0 %v6018
    %v6020 = vpop.xlane.xlu0 %6019
    %v6021 = vsel %vm542, %v5939, 0.0
    %6022 = vadd.xlane.f32.xlu0 %v6021
    %v6023 = vpop.xlane.xlu0 %6022
    %v6024 = vsel %vm542, %v5940, 0.0
    %6025 = vadd.xlane.f32.xlu0 %v6024
    %v6026 = vpop.xlane.xlu0 %6025
    %v6027 = vsel %vm542, %v5941, 0.0
    %6028 = vadd.xlane.f32.xlu0 %v6027
    %v6029 = vpop.xlane.xlu0 %6028
    %v6030 = vsel %vm542, %v5942, 0.0
    %6031 = vadd.xlane.f32.xlu0 %v6030
    %v6032 = vpop.xlane.xlu0 %6031
    %v6033 = vsel %vm542, %v5943, 0.0
    %6034 = vadd.xlane.f32.xlu0 %v6033
    %v6035 = vpop.xlane.xlu0 %6034
    %v6036 = vsel %vm542, %v5944, 0.0
    %6037 = vadd.xlane.f32.xlu0 %v6036
    %v6038 = vpop.xlane.xlu0 %6037
    %v6039 = vsel %vm542, %v5945, 0.0
    %6040 = vadd.xlane.f32.xlu0 %v6039
    %v6041 = vpop.xlane.xlu0 %6040
    %v6042 = vmul.f32 %v5948, %v639
    %v6043 = vmul.f32 %v5951, %v639
    %v6044 = vmul.f32 %v5954, %v639
    %v6045 = vmul.f32 %v5957, %v639
    %v6046 = vmul.f32 %v5960, %v639
    %v6047 = vmul.f32 %v5963, %v639
    %v6048 = vmul.f32 %v5966, %v639
    %v6049 = vmul.f32 %v5969, %v639
    %v6050 = vmul.f32 %v5972, %v639
    %v6051 = vmul.f32 %v5975, %v639
    %v6052 = vmul.f32 %v5978, %v639
    %v6053 = vmul.f32 %v5981, %v639
    %v6054 = vmul.f32 %v5984, %v639
    %v6055 = vmul.f32 %v5987, %v639
    %v6056 = vmul.f32 %v5990, %v639
    %v6057 = vmul.f32 %v5993, %v639
    %v6058 = vmul.f32 %v5996, %v639
    %v6059 = vmul.f32 %v5999, %v639
    %v6060 = vmul.f32 %v6002, %v639
    %v6061 = vmul.f32 %v6005, %v639
    %v6062 = vmul.f32 %v6008, %v639
    %v6063 = vmul.f32 %v6011, %v639
    %v6064 = vmul.f32 %v6014, %v639
    %v6065 = vmul.f32 %v6017, %v639
    %v6066 = vmul.f32 %v6020, %v639
    %v6067 = vmul.f32 %v6023, %v639
    %v6068 = vmul.f32 %v6026, %v639
    %v6069 = vmul.f32 %v6029, %v639
    %v6070 = vmul.f32 %v6032, %v639
    %v6071 = vmul.f32 %v6035, %v639
    %v6072 = vmul.f32 %v6038, %v639
    %v6073 = vmul.f32 %v6041, %v639
    %v6074 = vadd.f32 %v6042, 1e-05
    %v6075 = vadd.f32 %v6043, 1e-05
    %v6076 = vadd.f32 %v6044, 1e-05
    %v6077 = vadd.f32 %v6045, 1e-05
    %v6078 = vadd.f32 %v6046, 1e-05
    %v6079 = vadd.f32 %v6047, 1e-05
    %v6080 = vadd.f32 %v6048, 1e-05
    %v6081 = vadd.f32 %v6049, 1e-05
    %v6082 = vadd.f32 %v6050, 1e-05
    %v6083 = vadd.f32 %v6051, 1e-05
    %v6084 = vadd.f32 %v6052, 1e-05
    %v6085 = vadd.f32 %v6053, 1e-05
    %v6086 = vadd.f32 %v6054, 1e-05
    %v6087 = vadd.f32 %v6055, 1e-05
    %v6088 = vadd.f32 %v6056, 1e-05
    %v6089 = vadd.f32 %v6057, 1e-05
    %v6090 = vadd.f32 %v6058, 1e-05
    %v6091 = vadd.f32 %v6059, 1e-05
    %v6092 = vadd.f32 %v6060, 1e-05
    %v6093 = vadd.f32 %v6061, 1e-05
    %v6094 = vadd.f32 %v6062, 1e-05
    %v6095 = vadd.f32 %v6063, 1e-05
    %v6096 = vadd.f32 %v6064, 1e-05
    %v6097 = vadd.f32 %v6065, 1e-05
    %v6098 = vadd.f32 %v6066, 1e-05
    %v6099 = vadd.f32 %v6067, 1e-05
    %v6100 = vadd.f32 %v6068, 1e-05
    %v6101 = vadd.f32 %v6069, 1e-05
    %v6102 = vadd.f32 %v6070, 1e-05
    %v6103 = vadd.f32 %v6071, 1e-05
    %v6104 = vadd.f32 %v6072, 1e-05
    %v6105 = vadd.f32 %v6073, 1e-05
    %v6106 = vrsqrt.pop %v6074
    %v6107 = vrsqrt.pop %v6075
    %v6108 = vrsqrt.pop %v6076
    %v6109 = vrsqrt.pop %v6077
    %v6110 = vrsqrt.pop %v6078
    %v6111 = vrsqrt.pop %v6079
    %v6112 = vrsqrt.pop %v6080
    %v6113 = vrsqrt.pop %v6081
    %v6114 = vrsqrt.pop %v6082
    %v6115 = vrsqrt.pop %v6083
    %v6116 = vrsqrt.pop %v6084
    %v6117 = vrsqrt.pop %v6085
    %v6118 = vrsqrt.pop %v6086
    %v6119 = vrsqrt.pop %v6087
    %v6120 = vrsqrt.pop %v6088
    %v6121 = vrsqrt.pop %v6089
    %v6122 = vrsqrt.pop %v6090
    %v6123 = vrsqrt.pop %v6091
    %v6124 = vrsqrt.pop %v6092
    %v6125 = vrsqrt.pop %v6093
    %v6126 = vrsqrt.pop %v6094
    %v6127 = vrsqrt.pop %v6095
    %v6128 = vrsqrt.pop %v6096
    %v6129 = vrsqrt.pop %v6097
    %v6130 = vrsqrt.pop %v6098
    %v6131 = vrsqrt.pop %v6099
    %v6132 = vrsqrt.pop %v6100
    %v6133 = vrsqrt.pop %v6101
    %v6134 = vrsqrt.pop %v6102
    %v6135 = vrsqrt.pop %v6103
    %v6136 = vrsqrt.pop %v6104
    %v6137 = vrsqrt.pop %v6105
    %v6138 = vmul.f32 %v5882, %v6106
    %v6139 = vmul.f32 %v5883, %v6107
    %v6140 = vmul.f32 %v5884, %v6108
    %v6141 = vmul.f32 %v5885, %v6109
    %v6142 = vmul.f32 %v5886, %v6110
    %v6143 = vmul.f32 %v5887, %v6111
    %v6144 = vmul.f32 %v5888, %v6112
    %v6145 = vmul.f32 %v5889, %v6113
    %v6146 = vmul.f32 %v5890, %v6114
    %v6147 = vmul.f32 %v5891, %v6115
    %v6148 = vmul.f32 %v5892, %v6116
    %v6149 = vmul.f32 %v5893, %v6117
    %v6150 = vmul.f32 %v5894, %v6118
    %v6151 = vmul.f32 %v5895, %v6119
    %v6152 = vmul.f32 %v5896, %v6120
    %v6153 = vmul.f32 %v5897, %v6121
    %v6154 = vmul.f32 %v5898, %v6122
    %v6155 = vmul.f32 %v5899, %v6123
    %v6156 = vmul.f32 %v5900, %v6124
    %v6157 = vmul.f32 %v5901, %v6125
    %v6158 = vmul.f32 %v5902, %v6126
    %v6159 = vmul.f32 %v5903, %v6127
    %v6160 = vmul.f32 %v5904, %v6128
    %v6161 = vmul.f32 %v5905, %v6129
    %v6162 = vmul.f32 %v5906, %v6130
    %v6163 = vmul.f32 %v5907, %v6131
    %v6164 = vmul.f32 %v5908, %v6132
    %v6165 = vmul.f32 %v5909, %v6133
    %v6166 = vmul.f32 %v5910, %v6134
    %v6167 = vmul.f32 %v5911, %v6135
    %v6168 = vmul.f32 %v5912, %v6136
    %v6169 = vmul.f32 %v5913, %v6137
    %v6171 = vlaneseq
    %v6172 = vshrl.u32 %v6171, 7
    %v6173 = vsub.s32 0, %v6172
    %v6174 = vrot.slane %v5752, %v6173
    %v6176 = vmul.f32 %v6138, %v6174
    %v6177 = vmul.f32 %v6139, %v6174
    %v6178 = vmul.f32 %v6140, %v6174
    %v6179 = vmul.f32 %v6141, %v6174
    %v6180 = vmul.f32 %v6142, %v6174
    %v6181 = vmul.f32 %v6143, %v6174
    %v6182 = vmul.f32 %v6144, %v6174
    %v6183 = vmul.f32 %v6145, %v6174
    %v6184 = vmul.f32 %v6146, %v6174
    %v6185 = vmul.f32 %v6147, %v6174
    %v6186 = vmul.f32 %v6148, %v6174
    %v6187 = vmul.f32 %v6149, %v6174
    %v6188 = vmul.f32 %v6150, %v6174
    %v6189 = vmul.f32 %v6151, %v6174
    %v6190 = vmul.f32 %v6152, %v6174
    %v6191 = vmul.f32 %v6153, %v6174
    %v6192 = vmul.f32 %v6154, %v6174
    %v6193 = vmul.f32 %v6155, %v6174
    %v6194 = vmul.f32 %v6156, %v6174
    %v6195 = vmul.f32 %v6157, %v6174
    %v6196 = vmul.f32 %v6158, %v6174
    %v6197 = vmul.f32 %v6159, %v6174
    %v6198 = vmul.f32 %v6160, %v6174
    %v6199 = vmul.f32 %v6161, %v6174
    %v6200 = vmul.f32 %v6162, %v6174
    %v6201 = vmul.f32 %v6163, %v6174
    %v6202 = vmul.f32 %v6164, %v6174
    %v6203 = vmul.f32 %v6165, %v6174
    %v6204 = vmul.f32 %v6166, %v6174
    %v6205 = vmul.f32 %v6167, %v6174
    %v6206 = vmul.f32 %v6168, %v6174
    %v6207 = vmul.f32 %v6169, %v6174
    %v6209 = vlaneseq
    %v6210 = vshrl.u32 %v6209, 7
    %v6211 = vsub.s32 0, %v6210
    %v6212 = vrot.slane %v5753, %v6211
    %v6214 = vadd.f32 %v6176, %v6212
    %v6215 = vadd.f32 %v6177, %v6212
    %v6216 = vadd.f32 %v6178, %v6212
    %v6217 = vadd.f32 %v6179, %v6212
    %v6218 = vadd.f32 %v6180, %v6212
    %v6219 = vadd.f32 %v6181, %v6212
    %v6220 = vadd.f32 %v6182, %v6212
    %v6221 = vadd.f32 %v6183, %v6212
    %v6222 = vadd.f32 %v6184, %v6212
    %v6223 = vadd.f32 %v6185, %v6212
    %v6224 = vadd.f32 %v6186, %v6212
    %v6225 = vadd.f32 %v6187, %v6212
    %v6226 = vadd.f32 %v6188, %v6212
    %v6227 = vadd.f32 %v6189, %v6212
    %v6228 = vadd.f32 %v6190, %v6212
    %v6229 = vadd.f32 %v6191, %v6212
    %v6230 = vadd.f32 %v6192, %v6212
    %v6231 = vadd.f32 %v6193, %v6212
    %v6232 = vadd.f32 %v6194, %v6212
    %v6233 = vadd.f32 %v6195, %v6212
    %v6234 = vadd.f32 %v6196, %v6212
    %v6235 = vadd.f32 %v6197, %v6212
    %v6236 = vadd.f32 %v6198, %v6212
    %v6237 = vadd.f32 %v6199, %v6212
    %v6238 = vadd.f32 %v6200, %v6212
    %v6239 = vadd.f32 %v6201, %v6212
    %v6240 = vadd.f32 %v6202, %v6212
    %v6241 = vadd.f32 %v6203, %v6212
    %v6242 = vadd.f32 %v6204, %v6212
    %v6243 = vadd.f32 %v6205, %v6212
    %v6244 = vadd.f32 %v6206, %v6212
    %v6245 = vadd.f32 %v6207, %v6212
    %v6246 = vpack.c.bf16 %v6215, %v6214
    %v6247 = vpack.c.bf16 %v6217, %v6216
    %v6248 = vpack.c.bf16 %v6219, %v6218
    %v6249 = vpack.c.bf16 %v6221, %v6220
    %v6250 = vpack.c.bf16 %v6223, %v6222
    %v6251 = vpack.c.bf16 %v6225, %v6224
    %v6252 = vpack.c.bf16 %v6227, %v6226
    %v6253 = vpack.c.bf16 %v6229, %v6228
    %v6254 = vpack.c.bf16 %v6231, %v6230
    %v6255 = vpack.c.bf16 %v6233, %v6232
    %v6256 = vpack.c.bf16 %v6235, %v6234
    %v6257 = vpack.c.bf16 %v6237, %v6236
    %v6258 = vpack.c.bf16 %v6239, %v6238
    %v6259 = vpack.c.bf16 %v6241, %v6240
    %v6260 = vpack.c.bf16 %v6243, %v6242
    %v6261 = vpack.c.bf16 %v6245, %v6244
    %v6262 = vld [vmem:[%s13] sm:$0xf]
    %v6263 = vld [vmem:[%s13 + $0x4] sm:$0xf]
    %v6264 = vld [vmem:[%s13 + $0x8] sm:$0xf]
    %v6265 = vld [vmem:[%s13 + $0xc] sm:$0xf]
    %v6266 = vld [vmem:[%s14] sm:$0x1]
    %v6268 = vlaneseq
    %v6269 = vshrl.u32 %v6268, 7
    %v6270 = vsub.s32 0, %v6269
    %v6271 = vrot.slane %v6266, %v6270
    %v6277 = vunpack.c.l.b16 %v6262
    %v6278 = vunpack.c.l.b16 %v6263
    %v6279 = vunpack.c.l.b16 %v6264
    %v6280 = vunpack.c.l.b16 %v6265
    %v6281 = vpack.c.b16 %v6278, %v6277
    %v6282 = vpack.c.b16 %v6280, %v6279
    %v6286 = vsel %vm542, %v6246, 0
    %v6289 = vsel %vm542, %v6247, 0
    %v6292 = vsel %vm542, %v6248, 0
    %v6295 = vsel %vm542, %v6249, 0
    %v6298 = vsel %vm542, %v6250, 0
    %v6301 = vsel %vm542, %v6251, 0
    %v6304 = vsel %vm542, %v6252, 0
    %v6307 = vsel %vm542, %v6253, 0
    %v6310 = vsel %vm542, %v6254, 0
    %v6313 = vsel %vm542, %v6255, 0
    %v6316 = vsel %vm542, %v6256, 0
    %v6319 = vsel %vm542, %v6257, 0
    %v6322 = vsel %vm542, %v6258, 0
    %v6325 = vsel %vm542, %v6259, 0
    %v6328 = vsel %vm542, %v6260, 0
    %v6331 = vsel %vm542, %v6261, 0
    %6333 = vmatprep.subr.bf16.mxu0 0
    %6334 = vmatpush1.bf16.msra.mxu0 %v6281
    %6335 = vmatprep.subr.bf16.mxu0 0
    %6336 = vmatpush1.bf16.msra.mxu0 %v6282
    %6337 = vmatprep.subr.bf16.mxu0 0
    %6338 = vmatpush1.bf16.msra.mxu0 0
    %6339 = vmatprep.subr.bf16.mxu0 0
    %6340 = vmatpush1.bf16.msra.mxu0 0
    %6341 = vmatprep.subr.bf16.mxu0 0
    %6342 = vmatpush1.bf16.msra.mxu0 0
    %6343 = vmatprep.subr.bf16.mxu0 0
    %6344 = vmatpush1.bf16.msra.mxu0 0
    %6345 = vmatprep.subr.bf16.mxu0 0
    %6346 = vmatpush1.bf16.msra.mxu0 0
    %6347 = vmatprep.subr.bf16.mxu0 0
    %6348 = vmatpush1.bf16.msra.mxu0 0
    %6349 = vmatprep.subr.bf16.mxu0 0
    %6350 = vmatpush1.bf16.msra.mxu0 0
    %6351 = vmatprep.subr.bf16.mxu0 0
    %6352 = vmatpush1.bf16.msra.mxu0 0
    %6353 = vmatprep.subr.bf16.mxu0 0
    %6354 = vmatpush1.bf16.msra.mxu0 0
    %6355 = vmatprep.subr.bf16.mxu0 0
    %6356 = vmatpush1.bf16.msra.mxu0 0
    %6357 = vmatprep.subr.bf16.mxu0 0
    %6358 = vmatpush1.bf16.msra.mxu0 0
    %6359 = vmatprep.subr.bf16.mxu0 0
    %6360 = vmatpush1.bf16.msra.mxu0 0
    %6361 = vmatprep.subr.bf16.mxu0 0
    %6362 = vmatpush1.bf16.msra.mxu0 0
    %6363 = vmatprep.subr.bf16.mxu0 0
    %6364 = vmatpush1.bf16.msra.mxu0 0
    %6365 = vmatprep.mubr.bf16.mxu0 0
    %6366 = vmatmul.mubr.bf16.gmra.mrb[0].mxu0 %v6286
    %v6367 = vpop.f32.mrb[0].mxu0
    %v6368 = vadd.f32 %v6271, %v6367
    %v6369 = vpop.f32.mrb[0].mxu0
    %v6370 = vpop.f32.mrb[0].mxu0
    %v6371 = vadd.f32 %v6271, %v6370
    %v6372 = vpop.f32.mrb[0].mxu0
    %6373 = vmatprep.mubr.bf16.mxu0 0
    %6374 = vmatmul.mubr.bf16.gmra.mrb[0].mxu0 %v6289
    %v6375 = vpop.f32.mrb[0].mxu0
    %v6376 = vadd.f32 %v6271, %v6375
    %v6377 = vpop.f32.mrb[0].mxu0
    %v6378 = vpop.f32.mrb[0].mxu0
    %v6379 = vadd.f32 %v6271, %v6378
    %v6380 = vpop.f32.mrb[0].mxu0
    %6381 = vmatprep.mubr.bf16.mxu0 0
    %6382 = vmatmul.mubr.bf16.gmra.mrb[0].mxu0 %v6292
    %v6383 = vpop.f32.mrb[0].mxu0
    %v6384 = vadd.f32 %v6271, %v6383
    %v6385 = vpop.f32.mrb[0].mxu0
    %v6386 = vpop.f32.mrb[0].mxu0
    %v6387 = vadd.f32 %v6271, %v6386
    %v6388 = vpop.f32.mrb[0].mxu0
    %6389 = vmatprep.mubr.bf16.mxu0 0
    %6390 = vmatmul.mubr.bf16.gmra.mrb[0].mxu0 %v6295
    %v6391 = vpop.f32.mrb[0].mxu0
    %v6392 = vadd.f32 %v6271, %v6391
    %v6393 = vpop.f32.mrb[0].mxu0
    %v6394 = vpop.f32.mrb[0].mxu0
    %v6395 = vadd.f32 %v6271, %v6394
    %v6396 = vpop.f32.mrb[0].mxu0
    %6397 = vmatprep.mubr.bf16.mxu0 0
    %6398 = vmatmul.mubr.bf16.gmra.mrb[0].mxu0 %v6298
    %v6399 = vpop.f32.mrb[0].mxu0
    %v6400 = vadd.f32 %v6271, %v6399
    %v6401 = vpop.f32.mrb[0].mxu0
    %v6402 = vpop.f32.mrb[0].mxu0
    %v6403 = vadd.f32 %v6271, %v6402
    %v6404 = vpop.f32.mrb[0].mxu0
    %6405 = vmatprep.mubr.bf16.mxu0 0
    %6406 = vmatmul.mubr.bf16.gmra.mrb[0].mxu0 %v6301
    %v6407 = vpop.f32.mrb[0].mxu0
    %v6408 = vadd.f32 %v6271, %v6407
    %v6409 = vpop.f32.mrb[0].mxu0
    %v6410 = vpop.f32.mrb[0].mxu0
    %v6411 = vadd.f32 %v6271, %v6410
    %v6412 = vpop.f32.mrb[0].mxu0
    %6413 = vmatprep.mubr.bf16.mxu0 0
    %6414 = vmatmul.mubr.bf16.gmra.mrb[0].mxu0 %v6304
    %v6415 = vpop.f32.mrb[0].mxu0
    %v6416 = vadd.f32 %v6271, %v6415
    %v6417 = vpop.f32.mrb[0].mxu0
    %v6418 = vpop.f32.mrb[0].mxu0
    %v6419 = vadd.f32 %v6271, %v6418
    %v6420 = vpop.f32.mrb[0].mxu0
    %6421 = vmatprep.mubr.bf16.mxu0 0
    %6422 = vmatmul.mubr.bf16.gmra.mrb[0].mxu0 %v6307
    %v6423 = vpop.f32.mrb[0].mxu0
    %v6424 = vadd.f32 %v6271, %v6423
    %v6425 = vpop.f32.mrb[0].mxu0
    %v6426 = vpop.f32.mrb[0].mxu0
    %v6427 = vadd.f32 %v6271, %v6426
    %v6428 = vpop.f32.mrb[0].mxu0
    %6429 = vmatprep.mubr.bf16.mxu0 0
    %6430 = vmatmul.mubr.bf16.gmra.mrb[0].mxu0 %v6310
    %v6431 = vpop.f32.mrb[0].mxu0
    %v6432 = vadd.f32 %v6271, %v6431
    %v6433 = vpop.f32.mrb[0].mxu0
    %v6434 = vpop.f32.mrb[0].mxu0
    %v6435 = vadd.f32 %v6271, %v6434
    %v6436 = vpop.f32.mrb[0].mxu0
    %6437 = vmatprep.mubr.bf16.mxu0 0
    %6438 = vmatmul.mubr.bf16.gmra.mrb[0].mxu0 %v6313
    %v6439 = vpop.f32.mrb[0].mxu0
    %v6440 = vadd.f32 %v6271, %v6439
    %v6441 = vpop.f32.mrb[0].mxu0
    %v6442 = vpop.f32.mrb[0].mxu0
    %v6443 = vadd.f32 %v6271, %v6442
    %v6444 = vpop.f32.mrb[0].mxu0
    %6445 = vmatprep.mubr.bf16.mxu0 0
    %6446 = vmatmul.mubr.bf16.gmra.mrb[0].mxu0 %v6316
    %v6447 = vpop.f32.mrb[0].mxu0
    %v6448 = vadd.f32 %v6271, %v6447
    %v6449 = vpop.f32.mrb[0].mxu0
    %v6450 = vpop.f32.mrb[0].mxu0
    %v6451 = vadd.f32 %v6271, %v6450
    %v6452 = vpop.f32.mrb[0].mxu0
    %6453 = vmatprep.mubr.bf16.mxu0 0
    %6454 = vmatmul.mubr.bf16.gmra.mrb[0].mxu0 %v6319
    %v6455 = vpop.f32.mrb[0].mxu0
    %v6456 = vadd.f32 %v6271, %v6455
    %v6457 = vpop.f32.mrb[0].mxu0
    %v6458 = vpop.f32.mrb[0].mxu0
    %v6459 = vadd.f32 %v6271, %v6458
    %v6460 = vpop.f32.mrb[0].mxu0
    %6461 = vmatprep.mubr.bf16.mxu0 0
    %6462 = vmatmul.mubr.bf16.gmra.mrb[0].mxu0 %v6322
    %v6463 = vpop.f32.mrb[0].mxu0
    %v6464 = vadd.f32 %v6271, %v6463
    %v6465 = vpop.f32.mrb[0].mxu0
    %v6466 = vpop.f32.mrb[0].mxu0
    %v6467 = vadd.f32 %v6271, %v6466
    %v6468 = vpop.f32.mrb[0].mxu0
    %6469 = vmatprep.mubr.bf16.mxu0 0
    %6470 = vmatmul.mubr.bf16.gmra.mrb[0].mxu0 %v6325
    %v6471 = vpop.f32.mrb[0].mxu0
    %v6472 = vadd.f32 %v6271, %v6471
    %v6473 = vpop.f32.mrb[0].mxu0
    %v6474 = vpop.f32.mrb[0].mxu0
    %v6475 = vadd.f32 %v6271, %v6474
    %v6476 = vpop.f32.mrb[0].mxu0
    %6477 = vmatprep.mubr.bf16.mxu0 0
    %6478 = vmatmul.mubr.bf16.gmra.mrb[0].mxu0 %v6328
    %v6479 = vpop.f32.mrb[0].mxu0
    %v6480 = vadd.f32 %v6271, %v6479
    %v6481 = vpop.f32.mrb[0].mxu0
    %v6482 = vpop.f32.mrb[0].mxu0
    %v6483 = vadd.f32 %v6271, %v6482
    %v6484 = vpop.f32.mrb[0].mxu0
    %6485 = vmatprep.mubr.bf16.mxu0 0
    %6486 = vmatmul.mubr.bf16.gmra.mrb[0].mxu0 %v6331
    %v6487 = vpop.f32.mrb[0].mxu0
    %v6488 = vadd.f32 %v6271, %v6487
    %v6489 = vpop.f32.mrb[0].mxu0
    %v6490 = vpop.f32.mrb[0].mxu0
    %v6491 = vadd.f32 %v6271, %v6490
    %v6492 = vpop.f32.mrb[0].mxu0
    %6493 = vdwg.mxu0
    %6494 = vst [vmem:[#allocation2] sm:$0xff] %v6368
    %6495 = vst [vmem:[#allocation2 + $0x8] sm:$0xff] %v6371
    %6496 = vst [vmem:[#allocation2 + $0x10] sm:$0xff] %v6376
    %6497 = vst [vmem:[#allocation2 + $0x18] sm:$0xff] %v6379
    %6498 = vst [vmem:[#allocation2 + $0x20] sm:$0xff] %v6384
    %6499 = vst [vmem:[#allocation2 + $0x28] sm:$0xff] %v6387
    %6500 = vst [vmem:[#allocation2 + $0x30] sm:$0xff] %v6392
    %6501 = vst [vmem:[#allocation2 + $0x38] sm:$0xff] %v6395
    %6502 = vst [vmem:[#allocation2 + $0x40] sm:$0xff] %v6400
    %6503 = vst [vmem:[#allocation2 + $0x48] sm:$0xff] %v6403
    %6504 = vst [vmem:[#allocation2 + $0x50] sm:$0xff] %v6408
    %6505 = vst [vmem:[#allocation2 + $0x58] sm:$0xff] %v6411
    %6506 = vst [vmem:[#allocation2 + $0x60] sm:$0xff] %v6416
    %6507 = vst [vmem:[#allocation2 + $0x68] sm:$0xff] %v6419
    %6508 = vst [vmem:[#allocation2 + $0x70] sm:$0xff] %v6424
    %6509 = vst [vmem:[#allocation2 + $0x78] sm:$0xff] %v6427
    %6510 = vst [vmem:[#allocation2 + $0x80] sm:$0xff] %v6432
    %6511 = vst [vmem:[#allocation2 + $0x88] sm:$0xff] %v6435
    %6512 = vst [vmem:[#allocation2 + $0x90] sm:$0xff] %v6440
    %6513 = vst [vmem:[#allocation2 + $0x98] sm:$0xff] %v6443
    %6514 = vst [vmem:[#allocation2 + $0xa0] sm:$0xff] %v6448
    %6515 = vst [vmem:[#allocation2 + $0xa8] sm:$0xff] %v6451
    %6516 = vst [vmem:[#allocation2 + $0xb0] sm:$0xff] %v6456
    %6517 = vst [vmem:[#allocation2 + $0xb8] sm:$0xff] %v6459
    %6518 = vst [vmem:[#allocation2 + $0xc0] sm:$0xff] %v6464
    %6519 = vst [vmem:[#allocation2 + $0xc8] sm:$0xff] %v6467
    %6520 = vst [vmem:[#allocation2 + $0xd0] sm:$0xff] %v6472
    %6521 = vst [vmem:[#allocation2 + $0xd8] sm:$0xff] %v6475
    %6522 = vst [vmem:[#allocation2 + $0xe0] sm:$0xff] %v6480
    %6523 = vst [vmem:[#allocation2 + $0xe8] sm:$0xff] %v6483
    %6524 = vst [vmem:[#allocation2 + $0xf0] sm:$0xff] %v6488
    %6525 = vst [vmem:[#allocation2 + $0xf8] sm:$0xff] %v6491
    // Predicated region
    $region62: #{tpu_custom_call.1} parent=1 // pred_check
      _
    $region63: #{tpu_custom_call.1} parent=1 // pred_check_branch
      %6527 = sbr.rel (0) target = $region65
    $region64: #{tpu_custom_call.1} parent=1 // pred_region
      %s6529 = ssub.s32 4096, 4096
      %6530 = vsyncadd [#allocation3], %s6529
      %s6531 = sshll.u32 [#allocation2], 4
      %s6532 = int_to_ptr.vmem [resolvable:$true] %s6531
      %6537 = dma.vmem_to_hbm [thread:$0]  %s6532, 4096, %s15, [#allocation3], 128, 128, 8
    $region65: #{tpu_custom_call.1} parent=1 // pred_fallthru
      _
    // Predicated region
    $region66: #{tpu_custom_call.1} parent=1 // pred_check
      _
    $region67: #{tpu_custom_call.1} parent=1 // pred_check_branch
      %6539 = sbr.rel (0) target = $region69
    $region68: #{tpu_custom_call.1} parent=1 // pred_region
      %6540 = dma.done [#allocation3], 4096
    $region69: #{tpu_custom_call.1} parent=1 // pred_fallthru
      _
    %6541 = vsyncpa [#allocation3], 1

</llo_original>
